<compile_context>
chip_gen: v7x
topology: tpu7x:2x2x1
jax: 0.10.0
libtpu: 0.0.40
codegen_flags: <defaults>
</compile_context>

<pallas_src>
import math

import jax
import jax.numpy as jnp
from jax import lax
from jax.experimental import pallas as pl
from jax.experimental.pallas import tpu as pltpu

# Use the accurate f32 matmul path everywhere (kernel dots and reference),
# so the correctness check is not polluted by bf16 single-pass rounding.
jax.config.update("jax_default_matmul_precision", "highest")

# ----------------------------- tiny ViT config ------------------------------
B = 2            # batch
C = 3            # input channels (pixel_values)
IMG = 16         # image size
PATCH = 8        # patch size
N_PATCH = (IMG // PATCH) ** 2      # 4 patches
SEQ = N_PATCH + 1                  # +1 CLS token -> 5
BS = B * SEQ                       # 10 token rows (both batches stacked)
HIDDEN = 32
HEADS = 2
HEAD_DIM = HIDDEN // HEADS         # 16
INTER = 64
LAYERS = 2
EPS = 1e-12      # HF ViT layer_norm_eps default
D_IN = C * PATCH * PATCH           # 192
NEG_BIG = -1e30  # additive mask value for cross-batch attention entries

P_HI = jax.lax.Precision.HIGHEST


# ------------------------------ shared math ----------------------------------
def _layernorm(x, gamma, beta):
    mu = jnp.mean(x, axis=-1, keepdims=True)
    var = jnp.mean((x - mu) ** 2, axis=-1, keepdims=True)
    return (x - mu) * lax.rsqrt(var + EPS) * gamma + beta


def _gelu(x):
    # TODO(synk): HF ViT "gelu" is the exact erf-based GELU; the tanh
    # approximation is used here (and in the reference) since erf has no
    # guaranteed Mosaic lowering; max abs diff vs. erf GELU is ~1e-3.
    c = math.sqrt(2.0 / math.pi)
    return 0.5 * x * (1.0 + jnp.tanh(c * (x + 0.044715 * x * x * x)))


# ------------------------------ fused kernel ---------------------------------
def vit_fused_kernel(
    patches_ref,          # (BS, D_IN)   rows b*SEQ are zeros (CLS slots)
    pw_ref,               # (D_IN, HIDDEN)
    embadd_ref,           # (BS, HIDDEN)  row b*SEQ = cls+pos0, others pos[t]+patch_b
    mask_ref,             # (HEADS*BS, BS) block-diagonal additive mask (0 / -1e30)
    ln1g_ref, ln1b_ref,   # (LAYERS, 1, HIDDEN)
    wqkv_ref, bqkv_ref,   # (LAYERS, HIDDEN, 3*HIDDEN) / (LAYERS, 1, 3*HIDDEN), scale folded into Q third
    wo_ref, bo_ref,       # (LAYERS, HIDDEN, HIDDEN) / (LAYERS, 1, HIDDEN)
    ln2g_ref, ln2b_ref,   # (LAYERS, 1, HIDDEN)
    w1_ref, b1_ref,       # (LAYERS, HIDDEN, INTER) / (LAYERS, 1, INTER)
    w2_ref, b2_ref,       # (LAYERS, INTER, HIDDEN) / (LAYERS, 1, HIDDEN)
    lng_ref, lnb_ref,     # (1, HIDDEN)
    out_ref,              # (BS, HIDDEN)
):
    # contract last dims of q and k (q @ k^T) without an explicit transpose op.
    # (If a vxpose shows up in the lowered MLIR it is one tiny XLU op per head.)
    qk_dims = (((1,), (1,)), ((), ()))

    # ---- patch embedding + CLS + position embedding, both batches at once ----
    # CLS rows are zero patches, so they only pick up embadd (= cls + pos0);
    # patch_b is pre-folded into the other embadd rows.
    x = (
        jnp.dot(patches_ref[...], pw_ref[...], preferred_element_type=jnp.float32)
        + embadd_ref[...]
    )                                                          # (BS, HIDDEN)

    for l in range(LAYERS):                                    # static unroll
        # ---- self attention (pre-norm) ----
        h = _layernorm(x, ln1g_ref[l], ln1b_ref[l])
        qkv = (
            jnp.dot(h, wqkv_ref[l], preferred_element_type=jnp.float32)
            + bqkv_ref[l]
        )                                                      # (BS, 3*HIDDEN)

        # per-head scores on the full (BS, BS) slab, stacked along sublanes
        s_heads = []
        for hd in range(HEADS):                                # static unroll
            qh = qkv[:, hd * HEAD_DIM:(hd + 1) * HEAD_DIM]                     # (BS, HD)
            kh = qkv[:, HIDDEN + hd * HEAD_DIM: HIDDEN + (hd + 1) * HEAD_DIM]  # (BS, HD)
            s_heads.append(
                lax.dot_general(qh, kh, qk_dims, preferred_element_type=jnp.float32)
            )                                                  # (BS, BS)
        s = jnp.concatenate(s_heads, axis=0) + mask_ref[...]   # (HEADS*BS, BS)

        # one softmax for all heads & batches (cross-batch entries -> prob 0)
        s = s - jnp.max(s, axis=-1, keepdims=True)
        e = jnp.exp(s)
        p = e / jnp.sum(e, axis=-1, keepdims=True)             # exact divide

        # per-head PV, packed into one (BS, HIDDEN) context buffer
        ctx_heads = []
        for hd in range(HEADS):
            ph = p[hd * BS:(hd + 1) * BS, :]                                     # (BS, BS)
            vh = qkv[:, 2 * HIDDEN + hd * HEAD_DIM: 2 * HIDDEN + (hd + 1) * HEAD_DIM]
            ctx_heads.append(jnp.dot(ph, vh, preferred_element_type=jnp.float32))
        ctx = jnp.concatenate(ctx_heads, axis=1)               # (BS, HIDDEN)

        x = x + jnp.dot(ctx, wo_ref[l], preferred_element_type=jnp.float32) + bo_ref[l]

        # ---- MLP (pre-norm) ----
        h2 = _layernorm(x, ln2g_ref[l], ln2b_ref[l])
        m = jnp.dot(h2, w1_ref[l], preferred_element_type=jnp.float32) + b1_ref[l]
        m = _gelu(m)
        x = x + jnp.dot(m, w2_ref[l], preferred_element_type=jnp.float32) + b2_ref[l]

    # ---- final LayerNorm -> last_hidden_state (single lane-dense store) ----
    out_ref[...] = _layernorm(x, lng_ref[...], lnb_ref[...])


# ------------------------------- wrappers -------------------------------------
def unfold_patches(pixel_values):
    # (B, C, H, W) -> (B, N, C*P*P) with (c, ph, pw) flatten order, matching
    # Conv2d(weight.reshape(O, C*P*P)) semantics.
    b, c, h, w = pixel_values.shape
    hp, wp = h // PATCH, w // PATCH
    x = pixel_values.reshape(b, c, hp, PATCH, wp, PATCH)
    x = jnp.transpose(x, (0, 2, 4, 1, 3, 5))        # (B, Hp, Wp, C, P, P)
    return x.reshape(b, hp * wp, c * PATCH * PATCH)


def prepare_kernel_params(params):
    """One-time param restructuring for the fused kernel (pure prep-time work)."""
    scale = 1.0 / math.sqrt(HEAD_DIM)
    layers = params["layers"]

    def stack(name):
        return jnp.stack([lp[name] for lp in layers], axis=0)

    # fused QKV with the attention scale folded into the Q third (weights+bias)
    wqkv = jnp.stack(
        [jnp.concatenate([lp["wq"] * scale, lp["wk"], lp["wv"]], axis=1) for lp in layers], 0
    )                                                                   # (L, H, 3H)
    bqkv = jnp.stack(
        [jnp.concatenate([lp["bq"] * scale, lp["bk"], lp["bv"]], axis=1) for lp in layers], 0
    )                                                                   # (L, 1, 3H)

    # embadd: row 0 = cls + pos0 (CLS slot is a zero patch so no patch_b there);
    # rows 1.. = pos + patch_b (patch bias folded in). Tiled over batches.
    row0 = params["cls"][0, 0] + params["pos"][0, 0]                    # (HIDDEN,)
    rows = params["pos"][0, 1:] + params["patch_b"]                     # (SEQ-1, HIDDEN)
    embadd = jnp.concatenate([row0[None, :], rows], axis=0)             # (SEQ, HIDDEN)
    embadd = jnp.tile(embadd, (B, 1))                                   # (BS, HIDDEN)

    # block-diagonal additive attention mask, tiled per head: (HEADS*BS, BS)
    token_batch = jnp.arange(BS) // SEQ
    same_batch = token_batch[:, None] == token_batch[None, :]
    mask = jnp.where(same_batch, 0.0, NEG_BIG).astype(jnp.float32)      # (BS, BS)
    mask = jnp.tile(mask, (HEADS, 1))                                   # (HEADS*BS, BS)

    return (
        params["patch_w"], embadd, mask,
        stack("ln1_g"), stack("ln1_b"),
        wqkv, bqkv,
        stack("wo"), stack("bo"),
        stack("ln2_g"), stack("ln2_b"),
        stack("w1"), stack("b1"),
        stack("w2"), stack("b2"),
        params["ln_g"], params["ln_b"],
    )


@jax.jit
def vit_forward(pixel_values, kparams):
    patches = unfold_patches(pixel_values)                               # (B, N, D_IN)
    # Prepend a zero patch per batch for the CLS slot and stack both batches
    # on the sublane axis -> (BS, D_IN).
    patches = jnp.concatenate([jnp.zeros((B, 1, D_IN), jnp.float32), patches], axis=1)
    patches = patches.reshape(BS, D_IN)

    n_in = 1 + len(kparams)
    out = pl.pallas_call(
        vit_fused_kernel,
        out_shape=jax.ShapeDtypeStruct((BS, HIDDEN), jnp.float32),
        in_specs=[pl.BlockSpec(memory_space=pltpu.MemorySpace.VMEM)] * n_in,
        out_specs=pl.BlockSpec(memory_space=pltpu.MemorySpace.VMEM),
        cost_estimate=pl.CostEstimate(
            flops=480_000, transcendentals=2_000, bytes_accessed=105_000
        ),
    )(patches, *kparams)
    return out.reshape(B, SEQ, HIDDEN)


# ------------------------- pure-JAX reference (check) -------------------------
def vit_reference(pixel_values, params):
    patches = unfold_patches(pixel_values)
    emb = jnp.einsum("bnd,de->bne", patches, params["patch_w"], precision=P_HI) + params["patch_b"]
    cls = jnp.broadcast_to(params["cls"], (B, 1, HIDDEN))
    x = jnp.concatenate([cls, emb], axis=1) + params["pos"]
    for lp in params["layers"]:
        h = _layernorm(x, lp["ln1_g"], lp["ln1_b"])

        def proj(w, bvec):
            y = jnp.einsum("bsd,de->bse", h, w, precision=P_HI) + bvec
            return y.reshape(B, SEQ, HEADS, HEAD_DIM).transpose(0, 2, 1, 3)

        q = proj(lp["wq"], lp["bq"])
        k = proj(lp["wk"], lp["bk"])
        v = proj(lp["wv"], lp["bv"])
        s = jnp.einsum("bhqd,bhkd->bhqk", q, k, precision=P_HI) / math.sqrt(HEAD_DIM)
        p = jax.nn.softmax(s, axis=-1)
        a = jnp.einsum("bhqk,bhkd->bhqd", p, v, precision=P_HI)
        a = a.transpose(0, 2, 1, 3).reshape(B, SEQ, HIDDEN)
        x = x + (jnp.einsum("bsd,de->bse", a, lp["wo"], precision=P_HI) + lp["bo"])
        h2 = _layernorm(x, lp["ln2_g"], lp["ln2_b"])
        m = _gelu(jnp.einsum("bsd,de->bse", h2, lp["w1"], precision=P_HI) + lp["b1"])
        x = x + (jnp.einsum("bsi,io->bso", m, lp["w2"], precision=P_HI) + lp["b2"])
    return _layernorm(x, params["ln_g"], params["ln_b"])


# --------------------------------- params -------------------------------------
def init_params(key):
    # TODO(synk): AutoModel.from_pretrained checkpoint loading has no in-script
    # equivalent; weights are deterministic random with the HF-ViT structure.
    def nrm(k, shape, scale=0.02):
        return scale * jax.random.normal(k, shape, dtype=jnp.float32)

    keys = iter(jax.random.split(key, 8 + LAYERS * 16))
    params = {
        "patch_w": nrm(next(keys), (D_IN, HIDDEN)),
        "patch_b": nrm(next(keys), (1, HIDDEN)),
        "cls": nrm(next(keys), (1, 1, HIDDEN)),
        "pos": nrm(next(keys), (1, SEQ, HIDDEN)),
        "ln_g": 1.0 + nrm(next(keys), (1, HIDDEN)),
        "ln_b": nrm(next(keys), (1, HIDDEN)),
        "layers": [],
    }
    for _ in range(LAYERS):
        params["layers"].append({
            "ln1_g": 1.0 + nrm(next(keys), (1, HIDDEN)),
            "ln1_b": nrm(next(keys), (1, HIDDEN)),
            "wq": nrm(next(keys), (HIDDEN, HIDDEN)),
            "bq": nrm(next(keys), (1, HIDDEN)),
            "wk": nrm(next(keys), (HIDDEN, HIDDEN)),
            "bk": nrm(next(keys), (1, HIDDEN)),
            "wv": nrm(next(keys), (HIDDEN, HIDDEN)),
            "bv": nrm(next(keys), (1, HIDDEN)),
            "wo": nrm(next(keys), (HIDDEN, HIDDEN)),
            "bo": nrm(next(keys), (1, HIDDEN)),
            "ln2_g": 1.0 + nrm(next(keys), (1, HIDDEN)),
            "ln2_b": nrm(next(keys), (1, HIDDEN)),
            "w1": nrm(next(keys), (HIDDEN, INTER)),
            "b1": nrm(next(keys), (1, INTER)),
            "w2": nrm(next(keys), (INTER, HIDDEN)),
            "b2": nrm(next(keys), (1, HIDDEN)),
        })
    return params


# ----------------------------------- main --------------------------------------
if __name__ == "__main__":
    key = jax.random.PRNGKey(0)
    k_img, k_par = jax.random.split(key)
    pixel_values = jax.random.normal(k_img, (B, C, IMG, IMG), dtype=jnp.float32)
    params = init_params(k_par)
    kparams = prepare_kernel_params(params)

    out = jax.block_until_ready(vit_forward(pixel_values, kparams))
    assert out.shape == (B, SEQ, HIDDEN), out.shape

    ref = vit_reference(pixel_values, params)
    max_err = float(jnp.max(jnp.abs(out - ref)))
    # Both sides run accurate f32 matmuls and the softmax uses an exact divide,
    # so the expected error is ~1e-6; 2e-4 leaves margin for EUP/XLA
    # transcendental and MXU multi-pass rounding differences.
    assert jnp.allclose(out, ref, atol=2e-4, rtol=2e-4), max_err

    print("KERNEL_OK")
</pallas_src>

<mosaic_0001>
module attributes {stable_mosaic.version = 11 : i64} {
  func.func @vit_fused_kernel(%arg0: memref<10x192xf32, #tpu.memory_space<vmem>>, %arg1: memref<192x32xf32, #tpu.memory_space<vmem>>, %arg2: memref<10x32xf32, #tpu.memory_space<vmem>>, %arg3: memref<20x10xf32, #tpu.memory_space<vmem>>, %arg4: memref<2x1x32xf32, #tpu.memory_space<vmem>>, %arg5: memref<2x1x32xf32, #tpu.memory_space<vmem>>, %arg6: memref<2x32x96xf32, #tpu.memory_space<vmem>>, %arg7: memref<2x1x96xf32, #tpu.memory_space<vmem>>, %arg8: memref<2x32x32xf32, #tpu.memory_space<vmem>>, %arg9: memref<2x1x32xf32, #tpu.memory_space<vmem>>, %arg10: memref<2x1x32xf32, #tpu.memory_space<vmem>>, %arg11: memref<2x1x32xf32, #tpu.memory_space<vmem>>, %arg12: memref<2x32x64xf32, #tpu.memory_space<vmem>>, %arg13: memref<2x1x64xf32, #tpu.memory_space<vmem>>, %arg14: memref<2x64x32xf32, #tpu.memory_space<vmem>>, %arg15: memref<2x1x32xf32, #tpu.memory_space<vmem>>, %arg16: memref<1x32xf32, #tpu.memory_space<vmem>>, %arg17: memref<1x32xf32, #tpu.memory_space<vmem>>, %arg18: memref<10x32xf32, #tpu.memory_space<vmem>>) attributes {dimension_semantics = [], scalar_prefetch = 0 : i64, scratch_operands = 0 : i64, tpu.core_type = #tpu.core_type<tc>} {
    %c0 = arith.constant 0 : index
    %c0_0 = arith.constant 0 : index
    %0 = vector.load %arg0[%c0, %c0_0] : memref<10x192xf32, #tpu.memory_space<vmem>>, vector<10x192xf32>
    %c0_1 = arith.constant 0 : index
    %c0_2 = arith.constant 0 : index
    %1 = vector.load %arg1[%c0_1, %c0_2] : memref<192x32xf32, #tpu.memory_space<vmem>>, vector<192x32xf32>
    %cst = arith.constant dense<0.000000e+00> : vector<10x32xf32>
    %2 = tpu.matmul %0, %1, %cst {dimension_numbers = #tpu.dot_dimension_numbers<[1], [0], [0], [1], [0, 0, 1, 1], [], []>, precision = #tpu.contract_precision<fp32>} : vector<10x192xf32>, vector<192x32xf32>, vector<10x32xf32> -> vector<10x32xf32>
    %c0_3 = arith.constant 0 : index
    %c0_4 = arith.constant 0 : index
    %3 = vector.load %arg2[%c0_3, %c0_4] : memref<10x32xf32, #tpu.memory_space<vmem>>, vector<10x32xf32>
    %4 = arith.addf %2, %3 : vector<10x32xf32>
    %c0_5 = arith.constant 0 : index
    %c0_6 = arith.constant 0 : index
    %c0_7 = arith.constant 0 : index
    %5 = vector.load %arg4[%c0_5, %c0_6, %c0_7] : memref<2x1x32xf32, #tpu.memory_space<vmem>>, vector<1x1x32xf32>
    %6 = vector.shape_cast %5 : vector<1x1x32xf32> to vector<1x32xf32>
    %c0_8 = arith.constant 0 : index
    %c0_9 = arith.constant 0 : index
    %c0_10 = arith.constant 0 : index
    %7 = vector.load %arg5[%c0_8, %c0_9, %c0_10] : memref<2x1x32xf32, #tpu.memory_space<vmem>>, vector<1x1x32xf32>
    %8 = vector.shape_cast %7 : vector<1x1x32xf32> to vector<1x32xf32>
    %cst_11 = arith.constant dense<0.000000e+00> : vector<10xf32>
    %9 = vector.multi_reduction <add>, %4, %cst_11 [1] : vector<10x32xf32> to vector<10xf32>
    %10 = vector.shape_cast %9 : vector<10xf32> to vector<10x1xf32>
    %cst_12 = arith.constant 3.200000e+01 : f32
    %11 = vector.broadcast %cst_12 : f32 to vector<10x1xf32>
    %12 = arith.divf %10, %11 : vector<10x1xf32>
    %13 = vector.broadcast %12 : vector<10x1xf32> to vector<10x32xf32>
    %14 = arith.subf %4, %13 : vector<10x32xf32>
    %15 = arith.mulf %14, %14 : vector<10x32xf32>
    %cst_13 = arith.constant dense<0.000000e+00> : vector<10xf32>
    %16 = vector.multi_reduction <add>, %15, %cst_13 [1] : vector<10x32xf32> to vector<10xf32>
    %17 = vector.shape_cast %16 : vector<10xf32> to vector<10x1xf32>
    %cst_14 = arith.constant 3.200000e+01 : f32
    %18 = vector.broadcast %cst_14 : f32 to vector<10x1xf32>
    %19 = arith.divf %17, %18 : vector<10x1xf32>
    %20 = vector.broadcast %12 : vector<10x1xf32> to vector<10x32xf32>
    %21 = arith.subf %4, %20 : vector<10x32xf32>
    %cst_15 = arith.constant 9.99999996E-13 : f32
    %22 = vector.broadcast %cst_15 : f32 to vector<10x1xf32>
    %23 = arith.addf %19, %22 : vector<10x1xf32>
    %24 = math.rsqrt %23 : vector<10x1xf32>
    %25 = vector.broadcast %24 : vector<10x1xf32> to vector<10x32xf32>
    %26 = arith.mulf %21, %25 : vector<10x32xf32>
    %27 = vector.broadcast %6 : vector<1x32xf32> to vector<10x32xf32>
    %28 = arith.mulf %26, %27 : vector<10x32xf32>
    %29 = vector.broadcast %8 : vector<1x32xf32> to vector<10x32xf32>
    %30 = arith.addf %28, %29 : vector<10x32xf32>
    %c0_16 = arith.constant 0 : index
    %c0_17 = arith.constant 0 : index
    %c0_18 = arith.constant 0 : index
    %31 = vector.load %arg6[%c0_16, %c0_17, %c0_18] : memref<2x32x96xf32, #tpu.memory_space<vmem>>, vector<1x32x96xf32>
    %32 = vector.shape_cast %31 : vector<1x32x96xf32> to vector<32x96xf32>
    %cst_19 = arith.constant dense<0.000000e+00> : vector<10x96xf32>
    %33 = tpu.matmul %30, %32, %cst_19 {dimension_numbers = #tpu.dot_dimension_numbers<[1], [0], [0], [1], [0, 0, 1, 1], [], []>, precision = #tpu.contract_precision<fp32>} : vector<10x32xf32>, vector<32x96xf32>, vector<10x96xf32> -> vector<10x96xf32>
    %c0_20 = arith.constant 0 : index
    %c0_21 = arith.constant 0 : index
    %c0_22 = arith.constant 0 : index
    %34 = vector.load %arg7[%c0_20, %c0_21, %c0_22] : memref<2x1x96xf32, #tpu.memory_space<vmem>>, vector<1x1x96xf32>
    %35 = vector.shape_cast %34 : vector<1x1x96xf32> to vector<1x96xf32>
    %36 = vector.broadcast %35 : vector<1x96xf32> to vector<10x96xf32>
    %37 = arith.addf %33, %36 : vector<10x96xf32>
    %38 = vector.extract_strided_slice %37 {offsets = [0, 0], sizes = [10, 16], strides = [1, 1]} : vector<10x96xf32> to vector<10x16xf32>
    %39 = vector.extract_strided_slice %37 {offsets = [0, 32], sizes = [10, 16], strides = [1, 1]} : vector<10x96xf32> to vector<10x16xf32>
    %cst_23 = arith.constant dense<0.000000e+00> : vector<10x10xf32>
    %40 = tpu.matmul %38, %39, %cst_23 {dimension_numbers = #tpu.dot_dimension_numbers<[1], [1], [0], [0], [0, 0, 1, 0], [], []>, precision = #tpu.contract_precision<fp32>} : vector<10x16xf32>, vector<10x16xf32>, vector<10x10xf32> -> vector<10x10xf32>
    %41 = vector.extract_strided_slice %37 {offsets = [0, 16], sizes = [10, 16], strides = [1, 1]} : vector<10x96xf32> to vector<10x16xf32>
    %42 = vector.extract_strided_slice %37 {offsets = [0, 48], sizes = [10, 16], strides = [1, 1]} : vector<10x96xf32> to vector<10x16xf32>
    %cst_24 = arith.constant dense<0.000000e+00> : vector<10x10xf32>
    %43 = tpu.matmul %41, %42, %cst_24 {dimension_numbers = #tpu.dot_dimension_numbers<[1], [1], [0], [0], [0, 0, 1, 0], [], []>, precision = #tpu.contract_precision<fp32>} : vector<10x16xf32>, vector<10x16xf32>, vector<10x10xf32> -> vector<10x10xf32>
    %44 = tpu.concatenate %40, %43 in 0 : vector<10x10xf32>, vector<10x10xf32> -> vector<20x10xf32>
    %c0_25 = arith.constant 0 : index
    %c0_26 = arith.constant 0 : index
    %45 = vector.load %arg3[%c0_25, %c0_26] : memref<20x10xf32, #tpu.memory_space<vmem>>, vector<20x10xf32>
    %46 = arith.addf %44, %45 : vector<20x10xf32>
    %cst_27 = arith.constant dense<0xFF800000> : vector<20xf32>
    %47 = vector.multi_reduction <maximumf>, %46, %cst_27 [1] : vector<20x10xf32> to vector<20xf32>
    %48 = vector.shape_cast %47 : vector<20xf32> to vector<20x1xf32>
    %49 = vector.broadcast %48 : vector<20x1xf32> to vector<20x10xf32>
    %50 = arith.subf %46, %49 : vector<20x10xf32>
    %51 = math.exp %50 : vector<20x10xf32>
    %cst_28 = arith.constant dense<0.000000e+00> : vector<20xf32>
    %52 = vector.multi_reduction <add>, %51, %cst_28 [1] : vector<20x10xf32> to vector<20xf32>
    %53 = vector.shape_cast %52 : vector<20xf32> to vector<20x1xf32>
    %54 = vector.broadcast %53 : vector<20x1xf32> to vector<20x10xf32>
    %55 = arith.divf %51, %54 : vector<20x10xf32>
    %56 = vector.extract_strided_slice %55 {offsets = [0, 0], sizes = [10, 10], strides = [1, 1]} : vector<20x10xf32> to vector<10x10xf32>
    %57 = vector.extract_strided_slice %37 {offsets = [0, 64], sizes = [10, 16], strides = [1, 1]} : vector<10x96xf32> to vector<10x16xf32>
    %cst_29 = arith.constant dense<0.000000e+00> : vector<10x16xf32>
    %58 = tpu.matmul %56, %57, %cst_29 {dimension_numbers = #tpu.dot_dimension_numbers<[1], [0], [0], [1], [0, 0, 1, 1], [], []>, precision = #tpu.contract_precision<fp32>} : vector<10x10xf32>, vector<10x16xf32>, vector<10x16xf32> -> vector<10x16xf32>
    %59 = vector.extract_strided_slice %55 {offsets = [10, 0], sizes = [10, 10], strides = [1, 1]} : vector<20x10xf32> to vector<10x10xf32>
    %60 = vector.extract_strided_slice %37 {offsets = [0, 80], sizes = [10, 16], strides = [1, 1]} : vector<10x96xf32> to vector<10x16xf32>
    %cst_30 = arith.constant dense<0.000000e+00> : vector<10x16xf32>
    %61 = tpu.matmul %59, %60, %cst_30 {dimension_numbers = #tpu.dot_dimension_numbers<[1], [0], [0], [1], [0, 0, 1, 1], [], []>, precision = #tpu.contract_precision<fp32>} : vector<10x10xf32>, vector<10x16xf32>, vector<10x16xf32> -> vector<10x16xf32>
    %62 = tpu.concatenate %58, %61 in 1 : vector<10x16xf32>, vector<10x16xf32> -> vector<10x32xf32>
    %c0_31 = arith.constant 0 : index
    %c0_32 = arith.constant 0 : index
    %c0_33 = arith.constant 0 : index
    %63 = vector.load %arg8[%c0_31, %c0_32, %c0_33] : memref<2x32x32xf32, #tpu.memory_space<vmem>>, vector<1x32x32xf32>
    %64 = vector.shape_cast %63 : vector<1x32x32xf32> to vector<32x32xf32>
    %cst_34 = arith.constant dense<0.000000e+00> : vector<10x32xf32>
    %65 = tpu.matmul %62, %64, %cst_34 {dimension_numbers = #tpu.dot_dimension_numbers<[1], [0], [0], [1], [0, 0, 1, 1], [], []>, precision = #tpu.contract_precision<fp32>} : vector<10x32xf32>, vector<32x32xf32>, vector<10x32xf32> -> vector<10x32xf32>
    %66 = arith.addf %4, %65 : vector<10x32xf32>
    %c0_35 = arith.constant 0 : index
    %c0_36 = arith.constant 0 : index
    %c0_37 = arith.constant 0 : index
    %67 = vector.load %arg9[%c0_35, %c0_36, %c0_37] : memref<2x1x32xf32, #tpu.memory_space<vmem>>, vector<1x1x32xf32>
    %68 = vector.shape_cast %67 : vector<1x1x32xf32> to vector<1x32xf32>
    %69 = vector.broadcast %68 : vector<1x32xf32> to vector<10x32xf32>
    %70 = arith.addf %66, %69 : vector<10x32xf32>
    %c0_38 = arith.constant 0 : index
    %c0_39 = arith.constant 0 : index
    %c0_40 = arith.constant 0 : index
    %71 = vector.load %arg10[%c0_38, %c0_39, %c0_40] : memref<2x1x32xf32, #tpu.memory_space<vmem>>, vector<1x1x32xf32>
    %72 = vector.shape_cast %71 : vector<1x1x32xf32> to vector<1x32xf32>
    %c0_41 = arith.constant 0 : index
    %c0_42 = arith.constant 0 : index
    %c0_43 = arith.constant 0 : index
    %73 = vector.load %arg11[%c0_41, %c0_42, %c0_43] : memref<2x1x32xf32, #tpu.memory_space<vmem>>, vector<1x1x32xf32>
    %74 = vector.shape_cast %73 : vector<1x1x32xf32> to vector<1x32xf32>
    %cst_44 = arith.constant dense<0.000000e+00> : vector<10xf32>
    %75 = vector.multi_reduction <add>, %70, %cst_44 [1] : vector<10x32xf32> to vector<10xf32>
    %76 = vector.shape_cast %75 : vector<10xf32> to vector<10x1xf32>
    %cst_45 = arith.constant 3.200000e+01 : f32
    %77 = vector.broadcast %cst_45 : f32 to vector<10x1xf32>
    %78 = arith.divf %76, %77 : vector<10x1xf32>
    %79 = vector.broadcast %78 : vector<10x1xf32> to vector<10x32xf32>
    %80 = arith.subf %70, %79 : vector<10x32xf32>
    %81 = arith.mulf %80, %80 : vector<10x32xf32>
    %cst_46 = arith.constant dense<0.000000e+00> : vector<10xf32>
    %82 = vector.multi_reduction <add>, %81, %cst_46 [1] : vector<10x32xf32> to vector<10xf32>
    %83 = vector.shape_cast %82 : vector<10xf32> to vector<10x1xf32>
    %cst_47 = arith.constant 3.200000e+01 : f32
    %84 = vector.broadcast %cst_47 : f32 to vector<10x1xf32>
    %85 = arith.divf %83, %84 : vector<10x1xf32>
    %86 = vector.broadcast %78 : vector<10x1xf32> to vector<10x32xf32>
    %87 = arith.subf %70, %86 : vector<10x32xf32>
    %cst_48 = arith.constant 9.99999996E-13 : f32
    %88 = vector.broadcast %cst_48 : f32 to vector<10x1xf32>
    %89 = arith.addf %85, %88 : vector<10x1xf32>
    %90 = math.rsqrt %89 : vector<10x1xf32>
    %91 = vector.broadcast %90 : vector<10x1xf32> to vector<10x32xf32>
    %92 = arith.mulf %87, %91 : vector<10x32xf32>
    %93 = vector.broadcast %72 : vector<1x32xf32> to vector<10x32xf32>
    %94 = arith.mulf %92, %93 : vector<10x32xf32>
    %95 = vector.broadcast %74 : vector<1x32xf32> to vector<10x32xf32>
    %96 = arith.addf %94, %95 : vector<10x32xf32>
    %c0_49 = arith.constant 0 : index
    %c0_50 = arith.constant 0 : index
    %c0_51 = arith.constant 0 : index
    %97 = vector.load %arg12[%c0_49, %c0_50, %c0_51] : memref<2x32x64xf32, #tpu.memory_space<vmem>>, vector<1x32x64xf32>
    %98 = vector.shape_cast %97 : vector<1x32x64xf32> to vector<32x64xf32>
    %cst_52 = arith.constant dense<0.000000e+00> : vector<10x64xf32>
    %99 = tpu.matmul %96, %98, %cst_52 {dimension_numbers = #tpu.dot_dimension_numbers<[1], [0], [0], [1], [0, 0, 1, 1], [], []>, precision = #tpu.contract_precision<fp32>} : vector<10x32xf32>, vector<32x64xf32>, vector<10x64xf32> -> vector<10x64xf32>
    %c0_53 = arith.constant 0 : index
    %c0_54 = arith.constant 0 : index
    %c0_55 = arith.constant 0 : index
    %100 = vector.load %arg13[%c0_53, %c0_54, %c0_55] : memref<2x1x64xf32, #tpu.memory_space<vmem>>, vector<1x1x64xf32>
    %101 = vector.shape_cast %100 : vector<1x1x64xf32> to vector<1x64xf32>
    %102 = vector.broadcast %101 : vector<1x64xf32> to vector<10x64xf32>
    %103 = arith.addf %99, %102 : vector<10x64xf32>
    %cst_56 = arith.constant 5.000000e-01 : f32
    %104 = vector.broadcast %cst_56 : f32 to vector<10x64xf32>
    %105 = arith.mulf %104, %103 : vector<10x64xf32>
    %cst_57 = arith.constant 4.471500e-02 : f32
    %106 = vector.broadcast %cst_57 : f32 to vector<10x64xf32>
    %107 = arith.mulf %106, %103 : vector<10x64xf32>
    %108 = arith.mulf %107, %103 : vector<10x64xf32>
    %109 = arith.mulf %108, %103 : vector<10x64xf32>
    %110 = arith.addf %103, %109 : vector<10x64xf32>
    %cst_58 = arith.constant 0.797884583 : f32
    %111 = vector.broadcast %cst_58 : f32 to vector<10x64xf32>
    %112 = arith.mulf %111, %110 : vector<10x64xf32>
    %113 = math.tanh %112 : vector<10x64xf32>
    %cst_59 = arith.constant 1.000000e+00 : f32
    %114 = vector.broadcast %cst_59 : f32 to vector<10x64xf32>
    %115 = arith.addf %114, %113 : vector<10x64xf32>
    %116 = arith.mulf %105, %115 : vector<10x64xf32>
    %c0_60 = arith.constant 0 : index
    %c0_61 = arith.constant 0 : index
    %c0_62 = arith.constant 0 : index
    %117 = vector.load %arg14[%c0_60, %c0_61, %c0_62] : memref<2x64x32xf32, #tpu.memory_space<vmem>>, vector<1x64x32xf32>
    %118 = vector.shape_cast %117 : vector<1x64x32xf32> to vector<64x32xf32>
    %cst_63 = arith.constant dense<0.000000e+00> : vector<10x32xf32>
    %119 = tpu.matmul %116, %118, %cst_63 {dimension_numbers = #tpu.dot_dimension_numbers<[1], [0], [0], [1], [0, 0, 1, 1], [], []>, precision = #tpu.contract_precision<fp32>} : vector<10x64xf32>, vector<64x32xf32>, vector<10x32xf32> -> vector<10x32xf32>
    %120 = arith.addf %70, %119 : vector<10x32xf32>
    %c0_64 = arith.constant 0 : index
    %c0_65 = arith.constant 0 : index
    %c0_66 = arith.constant 0 : index
    %121 = vector.load %arg15[%c0_64, %c0_65, %c0_66] : memref<2x1x32xf32, #tpu.memory_space<vmem>>, vector<1x1x32xf32>
    %122 = vector.shape_cast %121 : vector<1x1x32xf32> to vector<1x32xf32>
    %123 = vector.broadcast %122 : vector<1x32xf32> to vector<10x32xf32>
    %124 = arith.addf %120, %123 : vector<10x32xf32>
    %c1 = arith.constant 1 : index
    %c0_67 = arith.constant 0 : index
    %c0_68 = arith.constant 0 : index
    %125 = vector.load %arg4[%c1, %c0_67, %c0_68] : memref<2x1x32xf32, #tpu.memory_space<vmem>>, vector<1x1x32xf32>
    %126 = vector.shape_cast %125 : vector<1x1x32xf32> to vector<1x32xf32>
    %c1_69 = arith.constant 1 : index
    %c0_70 = arith.constant 0 : index
    %c0_71 = arith.constant 0 : index
    %127 = vector.load %arg5[%c1_69, %c0_70, %c0_71] : memref<2x1x32xf32, #tpu.memory_space<vmem>>, vector<1x1x32xf32>
    %128 = vector.shape_cast %127 : vector<1x1x32xf32> to vector<1x32xf32>
    %cst_72 = arith.constant dense<0.000000e+00> : vector<10xf32>
    %129 = vector.multi_reduction <add>, %124, %cst_72 [1] : vector<10x32xf32> to vector<10xf32>
    %130 = vector.shape_cast %129 : vector<10xf32> to vector<10x1xf32>
    %cst_73 = arith.constant 3.200000e+01 : f32
    %131 = vector.broadcast %cst_73 : f32 to vector<10x1xf32>
    %132 = arith.divf %130, %131 : vector<10x1xf32>
    %133 = vector.broadcast %132 : vector<10x1xf32> to vector<10x32xf32>
    %134 = arith.subf %124, %133 : vector<10x32xf32>
    %135 = arith.mulf %134, %134 : vector<10x32xf32>
    %cst_74 = arith.constant dense<0.000000e+00> : vector<10xf32>
    %136 = vector.multi_reduction <add>, %135, %cst_74 [1] : vector<10x32xf32> to vector<10xf32>
    %137 = vector.shape_cast %136 : vector<10xf32> to vector<10x1xf32>
    %cst_75 = arith.constant 3.200000e+01 : f32
    %138 = vector.broadcast %cst_75 : f32 to vector<10x1xf32>
    %139 = arith.divf %137, %138 : vector<10x1xf32>
    %140 = vector.broadcast %132 : vector<10x1xf32> to vector<10x32xf32>
    %141 = arith.subf %124, %140 : vector<10x32xf32>
    %cst_76 = arith.constant 9.99999996E-13 : f32
    %142 = vector.broadcast %cst_76 : f32 to vector<10x1xf32>
    %143 = arith.addf %139, %142 : vector<10x1xf32>
    %144 = math.rsqrt %143 : vector<10x1xf32>
    %145 = vector.broadcast %144 : vector<10x1xf32> to vector<10x32xf32>
    %146 = arith.mulf %141, %145 : vector<10x32xf32>
    %147 = vector.broadcast %126 : vector<1x32xf32> to vector<10x32xf32>
    %148 = arith.mulf %146, %147 : vector<10x32xf32>
    %149 = vector.broadcast %128 : vector<1x32xf32> to vector<10x32xf32>
    %150 = arith.addf %148, %149 : vector<10x32xf32>
    %c1_77 = arith.constant 1 : index
    %c0_78 = arith.constant 0 : index
    %c0_79 = arith.constant 0 : index
    %151 = vector.load %arg6[%c1_77, %c0_78, %c0_79] : memref<2x32x96xf32, #tpu.memory_space<vmem>>, vector<1x32x96xf32>
    %152 = vector.shape_cast %151 : vector<1x32x96xf32> to vector<32x96xf32>
    %cst_80 = arith.constant dense<0.000000e+00> : vector<10x96xf32>
    %153 = tpu.matmul %150, %152, %cst_80 {dimension_numbers = #tpu.dot_dimension_numbers<[1], [0], [0], [1], [0, 0, 1, 1], [], []>, precision = #tpu.contract_precision<fp32>} : vector<10x32xf32>, vector<32x96xf32>, vector<10x96xf32> -> vector<10x96xf32>
    %c1_81 = arith.constant 1 : index
    %c0_82 = arith.constant 0 : index
    %c0_83 = arith.constant 0 : index
    %154 = vector.load %arg7[%c1_81, %c0_82, %c0_83] : memref<2x1x96xf32, #tpu.memory_space<vmem>>, vector<1x1x96xf32>
    %155 = vector.shape_cast %154 : vector<1x1x96xf32> to vector<1x96xf32>
    %156 = vector.broadcast %155 : vector<1x96xf32> to vector<10x96xf32>
    %157 = arith.addf %153, %156 : vector<10x96xf32>
    %158 = vector.extract_strided_slice %157 {offsets = [0, 0], sizes = [10, 16], strides = [1, 1]} : vector<10x96xf32> to vector<10x16xf32>
    %159 = vector.extract_strided_slice %157 {offsets = [0, 32], sizes = [10, 16], strides = [1, 1]} : vector<10x96xf32> to vector<10x16xf32>
    %cst_84 = arith.constant dense<0.000000e+00> : vector<10x10xf32>
    %160 = tpu.matmul %158, %159, %cst_84 {dimension_numbers = #tpu.dot_dimension_numbers<[1], [1], [0], [0], [0, 0, 1, 0], [], []>, precision = #tpu.contract_precision<fp32>} : vector<10x16xf32>, vector<10x16xf32>, vector<10x10xf32> -> vector<10x10xf32>
    %161 = vector.extract_strided_slice %157 {offsets = [0, 16], sizes = [10, 16], strides = [1, 1]} : vector<10x96xf32> to vector<10x16xf32>
    %162 = vector.extract_strided_slice %157 {offsets = [0, 48], sizes = [10, 16], strides = [1, 1]} : vector<10x96xf32> to vector<10x16xf32>
    %cst_85 = arith.constant dense<0.000000e+00> : vector<10x10xf32>
    %163 = tpu.matmul %161, %162, %cst_85 {dimension_numbers = #tpu.dot_dimension_numbers<[1], [1], [0], [0], [0, 0, 1, 0], [], []>, precision = #tpu.contract_precision<fp32>} : vector<10x16xf32>, vector<10x16xf32>, vector<10x10xf32> -> vector<10x10xf32>
    %164 = tpu.concatenate %160, %163 in 0 : vector<10x10xf32>, vector<10x10xf32> -> vector<20x10xf32>
    %c0_86 = arith.constant 0 : index
    %c0_87 = arith.constant 0 : index
    %165 = vector.load %arg3[%c0_86, %c0_87] : memref<20x10xf32, #tpu.memory_space<vmem>>, vector<20x10xf32>
    %166 = arith.addf %164, %165 : vector<20x10xf32>
    %cst_88 = arith.constant dense<0xFF800000> : vector<20xf32>
    %167 = vector.multi_reduction <maximumf>, %166, %cst_88 [1] : vector<20x10xf32> to vector<20xf32>
    %168 = vector.shape_cast %167 : vector<20xf32> to vector<20x1xf32>
    %169 = vector.broadcast %168 : vector<20x1xf32> to vector<20x10xf32>
    %170 = arith.subf %166, %169 : vector<20x10xf32>
    %171 = math.exp %170 : vector<20x10xf32>
    %cst_89 = arith.constant dense<0.000000e+00> : vector<20xf32>
    %172 = vector.multi_reduction <add>, %171, %cst_89 [1] : vector<20x10xf32> to vector<20xf32>
    %173 = vector.shape_cast %172 : vector<20xf32> to vector<20x1xf32>
    %174 = vector.broadcast %173 : vector<20x1xf32> to vector<20x10xf32>
    %175 = arith.divf %171, %174 : vector<20x10xf32>
    %176 = vector.extract_strided_slice %175 {offsets = [0, 0], sizes = [10, 10], strides = [1, 1]} : vector<20x10xf32> to vector<10x10xf32>
    %177 = vector.extract_strided_slice %157 {offsets = [0, 64], sizes = [10, 16], strides = [1, 1]} : vector<10x96xf32> to vector<10x16xf32>
    %cst_90 = arith.constant dense<0.000000e+00> : vector<10x16xf32>
    %178 = tpu.matmul %176, %177, %cst_90 {dimension_numbers = #tpu.dot_dimension_numbers<[1], [0], [0], [1], [0, 0, 1, 1], [], []>, precision = #tpu.contract_precision<fp32>} : vector<10x10xf32>, vector<10x16xf32>, vector<10x16xf32> -> vector<10x16xf32>
    %179 = vector.extract_strided_slice %175 {offsets = [10, 0], sizes = [10, 10], strides = [1, 1]} : vector<20x10xf32> to vector<10x10xf32>
    %180 = vector.extract_strided_slice %157 {offsets = [0, 80], sizes = [10, 16], strides = [1, 1]} : vector<10x96xf32> to vector<10x16xf32>
    %cst_91 = arith.constant dense<0.000000e+00> : vector<10x16xf32>
    %181 = tpu.matmul %179, %180, %cst_91 {dimension_numbers = #tpu.dot_dimension_numbers<[1], [0], [0], [1], [0, 0, 1, 1], [], []>, precision = #tpu.contract_precision<fp32>} : vector<10x10xf32>, vector<10x16xf32>, vector<10x16xf32> -> vector<10x16xf32>
    %182 = tpu.concatenate %178, %181 in 1 : vector<10x16xf32>, vector<10x16xf32> -> vector<10x32xf32>
    %c1_92 = arith.constant 1 : index
    %c0_93 = arith.constant 0 : index
    %c0_94 = arith.constant 0 : index
    %183 = vector.load %arg8[%c1_92, %c0_93, %c0_94] : memref<2x32x32xf32, #tpu.memory_space<vmem>>, vector<1x32x32xf32>
    %184 = vector.shape_cast %183 : vector<1x32x32xf32> to vector<32x32xf32>
    %cst_95 = arith.constant dense<0.000000e+00> : vector<10x32xf32>
    %185 = tpu.matmul %182, %184, %cst_95 {dimension_numbers = #tpu.dot_dimension_numbers<[1], [0], [0], [1], [0, 0, 1, 1], [], []>, precision = #tpu.contract_precision<fp32>} : vector<10x32xf32>, vector<32x32xf32>, vector<10x32xf32> -> vector<10x32xf32>
    %186 = arith.addf %124, %185 : vector<10x32xf32>
    %c1_96 = arith.constant 1 : index
    %c0_97 = arith.constant 0 : index
    %c0_98 = arith.constant 0 : index
    %187 = vector.load %arg9[%c1_96, %c0_97, %c0_98] : memref<2x1x32xf32, #tpu.memory_space<vmem>>, vector<1x1x32xf32>
    %188 = vector.shape_cast %187 : vector<1x1x32xf32> to vector<1x32xf32>
    %189 = vector.broadcast %188 : vector<1x32xf32> to vector<10x32xf32>
    %190 = arith.addf %186, %189 : vector<10x32xf32>
    %c1_99 = arith.constant 1 : index
    %c0_100 = arith.constant 0 : index
    %c0_101 = arith.constant 0 : index
    %191 = vector.load %arg10[%c1_99, %c0_100, %c0_101] : memref<2x1x32xf32, #tpu.memory_space<vmem>>, vector<1x1x32xf32>
    %192 = vector.shape_cast %191 : vector<1x1x32xf32> to vector<1x32xf32>
    %c1_102 = arith.constant 1 : index
    %c0_103 = arith.constant 0 : index
    %c0_104 = arith.constant 0 : index
    %193 = vector.load %arg11[%c1_102, %c0_103, %c0_104] : memref<2x1x32xf32, #tpu.memory_space<vmem>>, vector<1x1x32xf32>
    %194 = vector.shape_cast %193 : vector<1x1x32xf32> to vector<1x32xf32>
    %cst_105 = arith.constant dense<0.000000e+00> : vector<10xf32>
    %195 = vector.multi_reduction <add>, %190, %cst_105 [1] : vector<10x32xf32> to vector<10xf32>
    %196 = vector.shape_cast %195 : vector<10xf32> to vector<10x1xf32>
    %cst_106 = arith.constant 3.200000e+01 : f32
    %197 = vector.broadcast %cst_106 : f32 to vector<10x1xf32>
    %198 = arith.divf %196, %197 : vector<10x1xf32>
    %199 = vector.broadcast %198 : vector<10x1xf32> to vector<10x32xf32>
    %200 = arith.subf %190, %199 : vector<10x32xf32>
    %201 = arith.mulf %200, %200 : vector<10x32xf32>
    %cst_107 = arith.constant dense<0.000000e+00> : vector<10xf32>
    %202 = vector.multi_reduction <add>, %201, %cst_107 [1] : vector<10x32xf32> to vector<10xf32>
    %203 = vector.shape_cast %202 : vector<10xf32> to vector<10x1xf32>
    %cst_108 = arith.constant 3.200000e+01 : f32
    %204 = vector.broadcast %cst_108 : f32 to vector<10x1xf32>
    %205 = arith.divf %203, %204 : vector<10x1xf32>
    %206 = vector.broadcast %198 : vector<10x1xf32> to vector<10x32xf32>
    %207 = arith.subf %190, %206 : vector<10x32xf32>
    %cst_109 = arith.constant 9.99999996E-13 : f32
    %208 = vector.broadcast %cst_109 : f32 to vector<10x1xf32>
    %209 = arith.addf %205, %208 : vector<10x1xf32>
    %210 = math.rsqrt %209 : vector<10x1xf32>
    %211 = vector.broadcast %210 : vector<10x1xf32> to vector<10x32xf32>
    %212 = arith.mulf %207, %211 : vector<10x32xf32>
    %213 = vector.broadcast %192 : vector<1x32xf32> to vector<10x32xf32>
    %214 = arith.mulf %212, %213 : vector<10x32xf32>
    %215 = vector.broadcast %194 : vector<1x32xf32> to vector<10x32xf32>
    %216 = arith.addf %214, %215 : vector<10x32xf32>
    %c1_110 = arith.constant 1 : index
    %c0_111 = arith.constant 0 : index
    %c0_112 = arith.constant 0 : index
    %217 = vector.load %arg12[%c1_110, %c0_111, %c0_112] : memref<2x32x64xf32, #tpu.memory_space<vmem>>, vector<1x32x64xf32>
    %218 = vector.shape_cast %217 : vector<1x32x64xf32> to vector<32x64xf32>
    %cst_113 = arith.constant dense<0.000000e+00> : vector<10x64xf32>
    %219 = tpu.matmul %216, %218, %cst_113 {dimension_numbers = #tpu.dot_dimension_numbers<[1], [0], [0], [1], [0, 0, 1, 1], [], []>, precision = #tpu.contract_precision<fp32>} : vector<10x32xf32>, vector<32x64xf32>, vector<10x64xf32> -> vector<10x64xf32>
    %c1_114 = arith.constant 1 : index
    %c0_115 = arith.constant 0 : index
    %c0_116 = arith.constant 0 : index
    %220 = vector.load %arg13[%c1_114, %c0_115, %c0_116] : memref<2x1x64xf32, #tpu.memory_space<vmem>>, vector<1x1x64xf32>
    %221 = vector.shape_cast %220 : vector<1x1x64xf32> to vector<1x64xf32>
    %222 = vector.broadcast %221 : vector<1x64xf32> to vector<10x64xf32>
    %223 = arith.addf %219, %222 : vector<10x64xf32>
    %cst_117 = arith.constant 5.000000e-01 : f32
    %224 = vector.broadcast %cst_117 : f32 to vector<10x64xf32>
    %225 = arith.mulf %224, %223 : vector<10x64xf32>
    %cst_118 = arith.constant 4.471500e-02 : f32
    %226 = vector.broadcast %cst_118 : f32 to vector<10x64xf32>
    %227 = arith.mulf %226, %223 : vector<10x64xf32>
    %228 = arith.mulf %227, %223 : vector<10x64xf32>
    %229 = arith.mulf %228, %223 : vector<10x64xf32>
    %230 = arith.addf %223, %229 : vector<10x64xf32>
    %cst_119 = arith.constant 0.797884583 : f32
    %231 = vector.broadcast %cst_119 : f32 to vector<10x64xf32>
    %232 = arith.mulf %231, %230 : vector<10x64xf32>
    %233 = math.tanh %232 : vector<10x64xf32>
    %cst_120 = arith.constant 1.000000e+00 : f32
    %234 = vector.broadcast %cst_120 : f32 to vector<10x64xf32>
    %235 = arith.addf %234, %233 : vector<10x64xf32>
    %236 = arith.mulf %225, %235 : vector<10x64xf32>
    %c1_121 = arith.constant 1 : index
    %c0_122 = arith.constant 0 : index
    %c0_123 = arith.constant 0 : index
    %237 = vector.load %arg14[%c1_121, %c0_122, %c0_123] : memref<2x64x32xf32, #tpu.memory_space<vmem>>, vector<1x64x32xf32>
    %238 = vector.shape_cast %237 : vector<1x64x32xf32> to vector<64x32xf32>
    %cst_124 = arith.constant dense<0.000000e+00> : vector<10x32xf32>
    %239 = tpu.matmul %236, %238, %cst_124 {dimension_numbers = #tpu.dot_dimension_numbers<[1], [0], [0], [1], [0, 0, 1, 1], [], []>, precision = #tpu.contract_precision<fp32>} : vector<10x64xf32>, vector<64x32xf32>, vector<10x32xf32> -> vector<10x32xf32>
    %240 = arith.addf %190, %239 : vector<10x32xf32>
    %c1_125 = arith.constant 1 : index
    %c0_126 = arith.constant 0 : index
    %c0_127 = arith.constant 0 : index
    %241 = vector.load %arg15[%c1_125, %c0_126, %c0_127] : memref<2x1x32xf32, #tpu.memory_space<vmem>>, vector<1x1x32xf32>
    %242 = vector.shape_cast %241 : vector<1x1x32xf32> to vector<1x32xf32>
    %243 = vector.broadcast %242 : vector<1x32xf32> to vector<10x32xf32>
    %244 = arith.addf %240, %243 : vector<10x32xf32>
    %c0_128 = arith.constant 0 : index
    %c0_129 = arith.constant 0 : index
    %245 = vector.load %arg16[%c0_128, %c0_129] : memref<1x32xf32, #tpu.memory_space<vmem>>, vector<1x32xf32>
    %c0_130 = arith.constant 0 : index
    %c0_131 = arith.constant 0 : index
    %246 = vector.load %arg17[%c0_130, %c0_131] : memref<1x32xf32, #tpu.memory_space<vmem>>, vector<1x32xf32>
    %cst_132 = arith.constant dense<0.000000e+00> : vector<10xf32>
    %247 = vector.multi_reduction <add>, %244, %cst_132 [1] : vector<10x32xf32> to vector<10xf32>
    %248 = vector.shape_cast %247 : vector<10xf32> to vector<10x1xf32>
    %cst_133 = arith.constant 3.200000e+01 : f32
    %249 = vector.broadcast %cst_133 : f32 to vector<10x1xf32>
    %250 = arith.divf %248, %249 : vector<10x1xf32>
    %251 = vector.broadcast %250 : vector<10x1xf32> to vector<10x32xf32>
    %252 = arith.subf %244, %251 : vector<10x32xf32>
    %253 = arith.mulf %252, %252 : vector<10x32xf32>
    %cst_134 = arith.constant dense<0.000000e+00> : vector<10xf32>
    %254 = vector.multi_reduction <add>, %253, %cst_134 [1] : vector<10x32xf32> to vector<10xf32>
    %255 = vector.shape_cast %254 : vector<10xf32> to vector<10x1xf32>
    %cst_135 = arith.constant 3.200000e+01 : f32
    %256 = vector.broadcast %cst_135 : f32 to vector<10x1xf32>
    %257 = arith.divf %255, %256 : vector<10x1xf32>
    %258 = vector.broadcast %250 : vector<10x1xf32> to vector<10x32xf32>
    %259 = arith.subf %244, %258 : vector<10x32xf32>
    %cst_136 = arith.constant 9.99999996E-13 : f32
    %260 = vector.broadcast %cst_136 : f32 to vector<10x1xf32>
    %261 = arith.addf %257, %260 : vector<10x1xf32>
    %262 = math.rsqrt %261 : vector<10x1xf32>
    %263 = vector.broadcast %262 : vector<10x1xf32> to vector<10x32xf32>
    %264 = arith.mulf %259, %263 : vector<10x32xf32>
    %265 = vector.broadcast %245 : vector<1x32xf32> to vector<10x32xf32>
    %266 = arith.mulf %264, %265 : vector<10x32xf32>
    %267 = vector.broadcast %246 : vector<1x32xf32> to vector<10x32xf32>
    %268 = arith.addf %266, %267 : vector<10x32xf32>
    %c0_137 = arith.constant 0 : index
    %c0_138 = arith.constant 0 : index
    %269 = vector.load %arg18[%c0_137, %c0_138] : memref<10x32xf32, #tpu.memory_space<vmem>>, vector<10x32xf32>
    tpu.vector_store %arg18[%c0_137, %c0_138], %268 {strides = array<i32>} : memref<10x32xf32, #tpu.memory_space<vmem>>, vector<10x32xf32>,
    return
  }
}

</mosaic_0001>

<llo_original>
// kernel: vit_forward.1
$region0: #{vit_forward.1}
  #allocation0 [shape = 'u32[]', space=smem, size = 0x4, offset = 0x4, fixed_abs, tag = 'smem constant byte address 0x4 - core index']
  #allocation1 [shape = 'u32[144,128]{1,0:T(1,128)}', space=vmem, size = 0x12000, scoped, tag = 'internal scratch']
  %s0 = inlined_call_operand.vmem [shape: f32[10,192], index: 0, kind: input, shape index: {}]
  %s1 = inlined_call_operand.vmem [shape: f32[192,32], index: 1, kind: input, shape index: {}]
  %s2 = inlined_call_operand.vmem [shape: f32[10,32], index: 2, kind: input, shape index: {}]
  %s3 = inlined_call_operand.vmem [shape: f32[20,10], index: 3, kind: input, shape index: {}]
  %s4 = inlined_call_operand.vmem [shape: f32[2,1,32], index: 4, kind: input, shape index: {}]
  %s5 = inlined_call_operand.vmem [shape: f32[2,1,32], index: 5, kind: input, shape index: {}]
  %s6 = inlined_call_operand.vmem [shape: f32[2,32,96], index: 6, kind: input, shape index: {}]
  %s7 = inlined_call_operand.vmem [shape: f32[2,1,96], index: 7, kind: input, shape index: {}]
  %s8 = inlined_call_operand.vmem [shape: f32[2,32,32], index: 8, kind: input, shape index: {}]
  %s9 = inlined_call_operand.vmem [shape: f32[2,1,32], index: 9, kind: input, shape index: {}]
  %s10 = inlined_call_operand.vmem [shape: f32[2,1,32], index: 10, kind: input, shape index: {}]
  %s11 = inlined_call_operand.vmem [shape: f32[2,1,32], index: 11, kind: input, shape index: {}]
  %s12 = inlined_call_operand.vmem [shape: f32[2,32,64], index: 12, kind: input, shape index: {}]
  %s13 = inlined_call_operand.vmem [shape: f32[2,1,64], index: 13, kind: input, shape index: {}]
  %s14 = inlined_call_operand.vmem [shape: f32[2,64,32], index: 14, kind: input, shape index: {}]
  %s15 = inlined_call_operand.vmem [shape: f32[2,1,32], index: 15, kind: input, shape index: {}]
  %s16 = inlined_call_operand.vmem [shape: f32[1,32], index: 16, kind: input, shape index: {}]
  %s17 = inlined_call_operand.vmem [shape: f32[1,32], index: 17, kind: input, shape index: {}]
  %s18 = inlined_call_operand.vmem [shape: f32[10,32], index: 18, kind: output, shape index: {}]
  %s19 = sld [smem:[#allocation0]]
  $region82: #{vit_forward.1} parent=0
    _
  %s21 = ssub.s32 1, %s19
  %s22 = scalar_select 0, %s21, %s19
  // Predicated region
  $region2: #{vit_forward.1} parent=0 // pred_check
    _
  $region3: #{vit_forward.1} parent=0 // pred_check_branch
    %24 = sbr.rel (0) target = $region5
  $region4: #{vit_forward.1} parent=0 // pred_region
    _
  $region5: #{vit_forward.1} parent=0 // pred_fallthru
    _
  // Predicated region
  $region6: #{vit_forward.1} parent=0 // pred_check
    _
  $region7: #{vit_forward.1} parent=0 // pred_check_branch
    %26 = sbr.rel (0) target = $region9
  $region8: #{vit_forward.1} parent=0 // pred_region
    _
  $region9: #{vit_forward.1} parent=0 // pred_fallthru
    _
  // Predicated region
  $region10: #{vit_forward.1} parent=0 // pred_check
    _
  $region11: #{vit_forward.1} parent=0 // pred_check_branch
    %28 = sbr.rel (0) target = $region13
  $region12: #{vit_forward.1} parent=0 // pred_region
    _
  $region13: #{vit_forward.1} parent=0 // pred_fallthru
    _
  // Predicated region
  $region14: #{vit_forward.1} parent=0 // pred_check
    _
  $region15: #{vit_forward.1} parent=0 // pred_check_branch
    %30 = sbr.rel (0) target = $region17
  $region16: #{vit_forward.1} parent=0 // pred_region
    _
  $region17: #{vit_forward.1} parent=0 // pred_fallthru
    _
  // Predicated region
  $region18: #{vit_forward.1} parent=0 // pred_check
    _
  $region19: #{vit_forward.1} parent=0 // pred_check_branch
    %32 = sbr.rel (0) target = $region21
  $region20: #{vit_forward.1} parent=0 // pred_region
    _
  $region21: #{vit_forward.1} parent=0 // pred_fallthru
    _
  // Predicated region
  $region22: #{vit_forward.1} parent=0 // pred_check
    _
  $region23: #{vit_forward.1} parent=0 // pred_check_branch
    %34 = sbr.rel (0) target = $region25
  $region24: #{vit_forward.1} parent=0 // pred_region
    _
  $region25: #{vit_forward.1} parent=0 // pred_fallthru
    _
  // Predicated region
  $region26: #{vit_forward.1} parent=0 // pred_check
    _
  $region27: #{vit_forward.1} parent=0 // pred_check_branch
    %36 = sbr.rel (0) target = $region29
  $region28: #{vit_forward.1} parent=0 // pred_region
    _
  $region29: #{vit_forward.1} parent=0 // pred_fallthru
    _
  // Predicated region
  $region30: #{vit_forward.1} parent=0 // pred_check
    _
  $region31: #{vit_forward.1} parent=0 // pred_check_branch
    %38 = sbr.rel (0) target = $region33
  $region32: #{vit_forward.1} parent=0 // pred_region
    _
  $region33: #{vit_forward.1} parent=0 // pred_fallthru
    _
  // Predicated region
  $region34: #{vit_forward.1} parent=0 // pred_check
    _
  $region35: #{vit_forward.1} parent=0 // pred_check_branch
    %40 = sbr.rel (0) target = $region37
  $region36: #{vit_forward.1} parent=0 // pred_region
    _
  $region37: #{vit_forward.1} parent=0 // pred_fallthru
    _
  // Predicated region
  $region38: #{vit_forward.1} parent=0 // pred_check
    _
  $region39: #{vit_forward.1} parent=0 // pred_check_branch
    %42 = sbr.rel (0) target = $region41
  $region40: #{vit_forward.1} parent=0 // pred_region
    _
  $region41: #{vit_forward.1} parent=0 // pred_fallthru
    _
  // Predicated region
  $region42: #{vit_forward.1} parent=0 // pred_check
    _
  $region43: #{vit_forward.1} parent=0 // pred_check_branch
    %44 = sbr.rel (0) target = $region45
  $region44: #{vit_forward.1} parent=0 // pred_region
    _
  $region45: #{vit_forward.1} parent=0 // pred_fallthru
    _
  // Predicated region
  $region46: #{vit_forward.1} parent=0 // pred_check
    _
  $region47: #{vit_forward.1} parent=0 // pred_check_branch
    %46 = sbr.rel (0) target = $region49
  $region48: #{vit_forward.1} parent=0 // pred_region
    _
  $region49: #{vit_forward.1} parent=0 // pred_fallthru
    _
  // Predicated region
  $region50: #{vit_forward.1} parent=0 // pred_check
    _
  $region51: #{vit_forward.1} parent=0 // pred_check_branch
    %48 = sbr.rel (0) target = $region53
  $region52: #{vit_forward.1} parent=0 // pred_region
    _
  $region53: #{vit_forward.1} parent=0 // pred_fallthru
    _
  // Predicated region
  $region54: #{vit_forward.1} parent=0 // pred_check
    _
  $region55: #{vit_forward.1} parent=0 // pred_check_branch
    %50 = sbr.rel (0) target = $region57
  $region56: #{vit_forward.1} parent=0 // pred_region
    _
  $region57: #{vit_forward.1} parent=0 // pred_fallthru
    _
  // Predicated region
  $region58: #{vit_forward.1} parent=0 // pred_check
    _
  $region59: #{vit_forward.1} parent=0 // pred_check_branch
    %52 = sbr.rel (0) target = $region61
  $region60: #{vit_forward.1} parent=0 // pred_region
    _
  $region61: #{vit_forward.1} parent=0 // pred_fallthru
    _
  // Predicated region
  $region62: #{vit_forward.1} parent=0 // pred_check
    _
  $region63: #{vit_forward.1} parent=0 // pred_check_branch
    %54 = sbr.rel (0) target = $region65
  $region64: #{vit_forward.1} parent=0 // pred_region
    _
  $region65: #{vit_forward.1} parent=0 // pred_fallthru
    _
  // Predicated region
  $region66: #{vit_forward.1} parent=0 // pred_check
    _
  $region67: #{vit_forward.1} parent=0 // pred_check_branch
    %56 = sbr.rel (0) target = $region69
  $region68: #{vit_forward.1} parent=0 // pred_region
    _
  $region69: #{vit_forward.1} parent=0 // pred_fallthru
    _
  // Predicated region
  $region70: #{vit_forward.1} parent=0 // pred_check
    _
  $region71: #{vit_forward.1} parent=0 // pred_check_branch
    %58 = sbr.rel (0) target = $region73
  $region72: #{vit_forward.1} parent=0 // pred_region
    _
  $region73: #{vit_forward.1} parent=0 // pred_fallthru
    _
  %v59 = vld [vmem:[%s0] sm:$0xff]
  %v60 = vld [vmem:[%s0 + $0x8] sm:$0xff]
  %v61 = vld [vmem:[%s0 + $0x10] sm:$0x3]
  %v62 = vld [vmem:[%s0 + $0x18] sm:$0x3]
  %v63 = vld [vmem:[%s1] sm:$0xff]
  %v64 = vld [vmem:[%s1 + $0x8] sm:$0xff]
  %v65 = vld [vmem:[%s1 + $0x10] sm:$0xff]
  %v66 = vld [vmem:[%s1 + $0x18] sm:$0xff]
  %v67 = vld [vmem:[%s1 + $0x20] sm:$0xff]
  %v68 = vld [vmem:[%s1 + $0x28] sm:$0xff]
  %v69 = vld [vmem:[%s1 + $0x30] sm:$0xff]
  %v70 = vld [vmem:[%s1 + $0x38] sm:$0xff]
  %v71 = vld [vmem:[%s1 + $0x40] sm:$0xff]
  %v72 = vld [vmem:[%s1 + $0x48] sm:$0xff]
  %v73 = vld [vmem:[%s1 + $0x50] sm:$0xff]
  %v74 = vld [vmem:[%s1 + $0x58] sm:$0xff]
  %v75 = vld [vmem:[%s1 + $0x60] sm:$0xff]
  %v76 = vld [vmem:[%s1 + $0x68] sm:$0xff]
  %v77 = vld [vmem:[%s1 + $0x70] sm:$0xff]
  %v78 = vld [vmem:[%s1 + $0x78] sm:$0xff]
  %v79 = vld [vmem:[%s1 + $0x80] sm:$0xff]
  %v80 = vld [vmem:[%s1 + $0x88] sm:$0xff]
  %v81 = vld [vmem:[%s1 + $0x90] sm:$0xff]
  %v82 = vld [vmem:[%s1 + $0x98] sm:$0xff]
  %v83 = vld [vmem:[%s1 + $0xa0] sm:$0xff]
  %v84 = vld [vmem:[%s1 + $0xa8] sm:$0xff]
  %v85 = vld [vmem:[%s1 + $0xb0] sm:$0xff]
  %v86 = vld [vmem:[%s1 + $0xb8] sm:$0xff]
  %v87 = vld [vmem:[%s2] sm:$0xff]
  %v88 = vld [vmem:[%s2 + $0x8] sm:$0x3]
  %vm89 = vcmask 523264
  %v91 = vsel %vm89, %v60, 0
  %v94 = vsel %vm89, %v62, 0
  %96 = vmatprep.subr.mxu0 0.0
  %v97 = vand.u32 %v63, 4294901760
  %98 = vmatpush1.msra.mxu0 %v97
  %99 = vmatprep.subr.mxu0 0.0
  %v100 = vand.u32 %v64, 4294901760
  %101 = vmatpush1.msra.mxu0 %v100
  %102 = vmatprep.subr.mxu0 0.0
  %v103 = vand.u32 %v65, 4294901760
  %104 = vmatpush1.msra.mxu0 %v103
  %105 = vmatprep.subr.mxu0 0.0
  %v106 = vand.u32 %v66, 4294901760
  %107 = vmatpush1.msra.mxu0 %v106
  %108 = vmatprep.subr.mxu0 0.0
  %v109 = vand.u32 %v67, 4294901760
  %110 = vmatpush1.msra.mxu0 %v109
  %111 = vmatprep.subr.mxu0 0.0
  %v112 = vand.u32 %v68, 4294901760
  %113 = vmatpush1.msra.mxu0 %v112
  %114 = vmatprep.subr.mxu0 0.0
  %v115 = vand.u32 %v69, 4294901760
  %116 = vmatpush1.msra.mxu0 %v115
  %117 = vmatprep.subr.mxu0 0.0
  %v118 = vand.u32 %v70, 4294901760
  %119 = vmatpush1.msra.mxu0 %v118
  %120 = vmatprep.subr.mxu0 0.0
  %v121 = vand.u32 %v71, 4294901760
  %122 = vmatpush1.msra.mxu0 %v121
  %123 = vmatprep.subr.mxu0 0.0
  %v124 = vand.u32 %v72, 4294901760
  %125 = vmatpush1.msra.mxu0 %v124
  %126 = vmatprep.subr.mxu0 0.0
  %v127 = vand.u32 %v73, 4294901760
  %128 = vmatpush1.msra.mxu0 %v127
  %129 = vmatprep.subr.mxu0 0.0
  %v130 = vand.u32 %v74, 4294901760
  %131 = vmatpush1.msra.mxu0 %v130
  %132 = vmatprep.subr.mxu0 0.0
  %v133 = vand.u32 %v75, 4294901760
  %134 = vmatpush1.msra.mxu0 %v133
  %135 = vmatprep.subr.mxu0 0.0
  %v136 = vand.u32 %v76, 4294901760
  %137 = vmatpush1.msra.mxu0 %v136
  %138 = vmatprep.subr.mxu0 0.0
  %v139 = vand.u32 %v77, 4294901760
  %140 = vmatpush1.msra.mxu0 %v139
  %141 = vmatprep.subr.mxu0 0.0
  %v142 = vand.u32 %v78, 4294901760
  %143 = vmatpush1.msra.mxu0 %v142
  %144 = vmatprep.subr.mxu0 0.0
  %v145 = vand.u32 %v79, 4294901760
  %146 = vmatpush1.msra.mxu0 %v145
  %147 = vmatprep.subr.mxu0 0.0
  %v148 = vand.u32 %v80, 4294901760
  %149 = vmatpush1.msra.mxu0 %v148
  %150 = vmatprep.subr.mxu0 0.0
  %v151 = vand.u32 %v81, 4294901760
  %152 = vmatpush1.msra.mxu0 %v151
  %153 = vmatprep.subr.mxu0 0.0
  %v154 = vand.u32 %v82, 4294901760
  %155 = vmatpush1.msra.mxu0 %v154
  %156 = vmatprep.subr.mxu0 0.0
  %v157 = vand.u32 %v83, 4294901760
  %158 = vmatpush1.msra.mxu0 %v157
  %159 = vmatprep.subr.mxu0 0.0
  %v160 = vand.u32 %v84, 4294901760
  %161 = vmatpush1.msra.mxu0 %v160
  %162 = vmatprep.subr.mxu0 0.0
  %v163 = vand.u32 %v85, 4294901760
  %164 = vmatpush1.msra.mxu0 %v163
  %165 = vmatprep.subr.mxu0 0.0
  %v166 = vand.u32 %v86, 4294901760
  %167 = vmatpush1.msra.mxu0 %v166
  %168 = vmatprep.subr.mxu0 0.0
  %169 = vmatpush1.msra.mxu0 0.0
  %170 = vmatprep.subr.mxu0 0.0
  %171 = vmatpush1.msra.mxu0 0.0
  %172 = vmatprep.subr.mxu0 0.0
  %173 = vmatpush1.msra.mxu0 0.0
  %174 = vmatprep.subr.mxu0 0.0
  %175 = vmatpush1.msra.mxu0 0.0
  %176 = vmatprep.subr.mxu0 0.0
  %177 = vmatpush1.msra.mxu0 0.0
  %178 = vmatprep.subr.mxu0 0.0
  %179 = vmatpush1.msra.mxu0 0.0
  %180 = vmatprep.subr.mxu0 0.0
  %181 = vmatpush1.msra.mxu0 0.0
  %182 = vmatprep.subr.mxu0 0.0
  %183 = vmatpush1.msra.mxu0 0.0
  %v184 = vand.u32 %v91, 4294901760
  %v185 = vsub.f32 %v91, %v184
  %v186 = vand.u32 %v185, 4294901760
  %v187 = vsub.f32 %v185, %v186
  %v188 = vand.u32 %v187, 4294901760
  %189 = vmatprep.mubr.f32.mxu0 %v188
  %v190 = vand.u32 %v59, 4294901760
  %v191 = vsub.f32 %v59, %v190
  %v192 = vand.u32 %v191, 4294901760
  %v193 = vsub.f32 %v191, %v192
  %v194 = vand.u32 %v193, 4294901760
  %195 = vmatmul.mubr.f32.gmra.mrb[0].mxu0 %v194
  %v196 = vpop.f32.mrb[0].mxu0
  %v197 = vadd.f32 %v87, %v196
  %v198 = vpop.f32.mrb[0].mxu0
  %v199 = vand.u32 %v94, 4294901760
  %v200 = vsub.f32 %v94, %v199
  %v201 = vand.u32 %v200, 4294901760
  %v202 = vsub.f32 %v200, %v201
  %v203 = vand.u32 %v202, 4294901760
  %204 = vmatprep.mubr.f32.mxu0 %v203
  %v205 = vand.u32 %v61, 4294901760
  %v206 = vsub.f32 %v61, %v205
  %v207 = vand.u32 %v206, 4294901760
  %v208 = vsub.f32 %v206, %v207
  %v209 = vand.u32 %v208, 4294901760
  %210 = vmatmul.mubr.f32.gmra.mrb[0].mxu0 %v209
  %v211 = vpop.f32.mrb[0].mxu0
  %v212 = vadd.f32 %v88, %v211
  %v213 = vpop.f32.mrb[0].mxu0
  %214 = vdwg.mxu0
  %215 = vmatprep.subr.mxu0 0.0
  %v216 = vand.u32 %v63, 4294901760
  %v217 = vsub.f32 %v63, %v216
  %v218 = vand.u32 %v217, 4294901760
  %v219 = vsub.f32 %v217, %v218
  %v220 = vand.u32 %v219, 4294901760
  %221 = vmatpush1.msra.mxu0 %v220
  %222 = vmatprep.subr.mxu0 0.0
  %v223 = vand.u32 %v64, 4294901760
  %v224 = vsub.f32 %v64, %v223
  %v225 = vand.u32 %v224, 4294901760
  %v226 = vsub.f32 %v224, %v225
  %v227 = vand.u32 %v226, 4294901760
  %228 = vmatpush1.msra.mxu0 %v227
  %229 = vmatprep.subr.mxu0 0.0
  %v230 = vand.u32 %v65, 4294901760
  %v231 = vsub.f32 %v65, %v230
  %v232 = vand.u32 %v231, 4294901760
  %v233 = vsub.f32 %v231, %v232
  %v234 = vand.u32 %v233, 4294901760
  %235 = vmatpush1.msra.mxu0 %v234
  %236 = vmatprep.subr.mxu0 0.0
  %v237 = vand.u32 %v66, 4294901760
  %v238 = vsub.f32 %v66, %v237
  %v239 = vand.u32 %v238, 4294901760
  %v240 = vsub.f32 %v238, %v239
  %v241 = vand.u32 %v240, 4294901760
  %242 = vmatpush1.msra.mxu0 %v241
  %243 = vmatprep.subr.mxu0 0.0
  %v244 = vand.u32 %v67, 4294901760
  %v245 = vsub.f32 %v67, %v244
  %v246 = vand.u32 %v245, 4294901760
  %v247 = vsub.f32 %v245, %v246
  %v248 = vand.u32 %v247, 4294901760
  %249 = vmatpush1.msra.mxu0 %v248
  %250 = vmatprep.subr.mxu0 0.0
  %v251 = vand.u32 %v68, 4294901760
  %v252 = vsub.f32 %v68, %v251
  %v253 = vand.u32 %v252, 4294901760
  %v254 = vsub.f32 %v252, %v253
  %v255 = vand.u32 %v254, 4294901760
  %256 = vmatpush1.msra.mxu0 %v255
  %257 = vmatprep.subr.mxu0 0.0
  %v258 = vand.u32 %v69, 4294901760
  %v259 = vsub.f32 %v69, %v258
  %v260 = vand.u32 %v259, 4294901760
  %v261 = vsub.f32 %v259, %v260
  %v262 = vand.u32 %v261, 4294901760
  %263 = vmatpush1.msra.mxu0 %v262
  %264 = vmatprep.subr.mxu0 0.0
  %v265 = vand.u32 %v70, 4294901760
  %v266 = vsub.f32 %v70, %v265
  %v267 = vand.u32 %v266, 4294901760
  %v268 = vsub.f32 %v266, %v267
  %v269 = vand.u32 %v268, 4294901760
  %270 = vmatpush1.msra.mxu0 %v269
  %271 = vmatprep.subr.mxu0 0.0
  %v272 = vand.u32 %v71, 4294901760
  %v273 = vsub.f32 %v71, %v272
  %v274 = vand.u32 %v273, 4294901760
  %v275 = vsub.f32 %v273, %v274
  %v276 = vand.u32 %v275, 4294901760
  %277 = vmatpush1.msra.mxu0 %v276
  %278 = vmatprep.subr.mxu0 0.0
  %v279 = vand.u32 %v72, 4294901760
  %v280 = vsub.f32 %v72, %v279
  %v281 = vand.u32 %v280, 4294901760
  %v282 = vsub.f32 %v280, %v281
  %v283 = vand.u32 %v282, 4294901760
  %284 = vmatpush1.msra.mxu0 %v283
  %285 = vmatprep.subr.mxu0 0.0
  %v286 = vand.u32 %v73, 4294901760
  %v287 = vsub.f32 %v73, %v286
  %v288 = vand.u32 %v287, 4294901760
  %v289 = vsub.f32 %v287, %v288
  %v290 = vand.u32 %v289, 4294901760
  %291 = vmatpush1.msra.mxu0 %v290
  %292 = vmatprep.subr.mxu0 0.0
  %v293 = vand.u32 %v74, 4294901760
  %v294 = vsub.f32 %v74, %v293
  %v295 = vand.u32 %v294, 4294901760
  %v296 = vsub.f32 %v294, %v295
  %v297 = vand.u32 %v296, 4294901760
  %298 = vmatpush1.msra.mxu0 %v297
  %299 = vmatprep.subr.mxu0 0.0
  %v300 = vand.u32 %v75, 4294901760
  %v301 = vsub.f32 %v75, %v300
  %v302 = vand.u32 %v301, 4294901760
  %v303 = vsub.f32 %v301, %v302
  %v304 = vand.u32 %v303, 4294901760
  %305 = vmatpush1.msra.mxu0 %v304
  %306 = vmatprep.subr.mxu0 0.0
  %v307 = vand.u32 %v76, 4294901760
  %v308 = vsub.f32 %v76, %v307
  %v309 = vand.u32 %v308, 4294901760
  %v310 = vsub.f32 %v308, %v309
  %v311 = vand.u32 %v310, 4294901760
  %312 = vmatpush1.msra.mxu0 %v311
  %313 = vmatprep.subr.mxu0 0.0
  %v314 = vand.u32 %v77, 4294901760
  %v315 = vsub.f32 %v77, %v314
  %v316 = vand.u32 %v315, 4294901760
  %v317 = vsub.f32 %v315, %v316
  %v318 = vand.u32 %v317, 4294901760
  %319 = vmatpush1.msra.mxu0 %v318
  %320 = vmatprep.subr.mxu0 0.0
  %v321 = vand.u32 %v78, 4294901760
  %v322 = vsub.f32 %v78, %v321
  %v323 = vand.u32 %v322, 4294901760
  %v324 = vsub.f32 %v322, %v323
  %v325 = vand.u32 %v324, 4294901760
  %326 = vmatpush1.msra.mxu0 %v325
  %327 = vmatprep.subr.mxu0 0.0
  %v328 = vand.u32 %v79, 4294901760
  %v329 = vsub.f32 %v79, %v328
  %v330 = vand.u32 %v329, 4294901760
  %v331 = vsub.f32 %v329, %v330
  %v332 = vand.u32 %v331, 4294901760
  %333 = vmatpush1.msra.mxu0 %v332
  %334 = vmatprep.subr.mxu0 0.0
  %v335 = vand.u32 %v80, 4294901760
  %v336 = vsub.f32 %v80, %v335
  %v337 = vand.u32 %v336, 4294901760
  %v338 = vsub.f32 %v336, %v337
  %v339 = vand.u32 %v338, 4294901760
  %340 = vmatpush1.msra.mxu0 %v339
  %341 = vmatprep.subr.mxu0 0.0
  %v342 = vand.u32 %v81, 4294901760
  %v343 = vsub.f32 %v81, %v342
  %v344 = vand.u32 %v343, 4294901760
  %v345 = vsub.f32 %v343, %v344
  %v346 = vand.u32 %v345, 4294901760
  %347 = vmatpush1.msra.mxu0 %v346
  %348 = vmatprep.subr.mxu0 0.0
  %v349 = vand.u32 %v82, 4294901760
  %v350 = vsub.f32 %v82, %v349
  %v351 = vand.u32 %v350, 4294901760
  %v352 = vsub.f32 %v350, %v351
  %v353 = vand.u32 %v352, 4294901760
  %354 = vmatpush1.msra.mxu0 %v353
  %355 = vmatprep.subr.mxu0 0.0
  %v356 = vand.u32 %v83, 4294901760
  %v357 = vsub.f32 %v83, %v356
  %v358 = vand.u32 %v357, 4294901760
  %v359 = vsub.f32 %v357, %v358
  %v360 = vand.u32 %v359, 4294901760
  %361 = vmatpush1.msra.mxu0 %v360
  %362 = vmatprep.subr.mxu0 0.0
  %v363 = vand.u32 %v84, 4294901760
  %v364 = vsub.f32 %v84, %v363
  %v365 = vand.u32 %v364, 4294901760
  %v366 = vsub.f32 %v364, %v365
  %v367 = vand.u32 %v366, 4294901760
  %368 = vmatpush1.msra.mxu0 %v367
  %369 = vmatprep.subr.mxu0 0.0
  %v370 = vand.u32 %v85, 4294901760
  %v371 = vsub.f32 %v85, %v370
  %v372 = vand.u32 %v371, 4294901760
  %v373 = vsub.f32 %v371, %v372
  %v374 = vand.u32 %v373, 4294901760
  %375 = vmatpush1.msra.mxu0 %v374
  %376 = vmatprep.subr.mxu0 0.0
  %v377 = vand.u32 %v86, 4294901760
  %v378 = vsub.f32 %v86, %v377
  %v379 = vand.u32 %v378, 4294901760
  %v380 = vsub.f32 %v378, %v379
  %v381 = vand.u32 %v380, 4294901760
  %382 = vmatpush1.msra.mxu0 %v381
  %383 = vmatprep.subr.mxu0 0.0
  %384 = vmatpush1.msra.mxu0 0.0
  %385 = vmatprep.subr.mxu0 0.0
  %386 = vmatpush1.msra.mxu0 0.0
  %387 = vmatprep.subr.mxu0 0.0
  %388 = vmatpush1.msra.mxu0 0.0
  %389 = vmatprep.subr.mxu0 0.0
  %390 = vmatpush1.msra.mxu0 0.0
  %391 = vmatprep.subr.mxu0 0.0
  %392 = vmatpush1.msra.mxu0 0.0
  %393 = vmatprep.subr.mxu0 0.0
  %394 = vmatpush1.msra.mxu0 0.0
  %395 = vmatprep.subr.mxu0 0.0
  %396 = vmatpush1.msra.mxu0 0.0
  %397 = vmatprep.subr.mxu0 0.0
  %398 = vmatpush1.msra.mxu0 0.0
  %v399 = vand.u32 %v91, 4294901760
  %400 = vmatprep.mubr.f32.mxu0 %v399
  %v401 = vand.u32 %v59, 4294901760
  %402 = vmatmul.mubr.f32.gmra.mrb[0].mxu0 %v401
  %v403 = vpop.f32.mrb[0].mxu0
  %v404 = vadd.f32 %v197, %v403
  %v405 = vpop.f32.mrb[0].mxu0
  %v406 = vand.u32 %v94, 4294901760
  %407 = vmatprep.mubr.f32.mxu0 %v406
  %v408 = vand.u32 %v61, 4294901760
  %409 = vmatmul.mubr.f32.gmra.mrb[0].mxu0 %v408
  %v410 = vpop.f32.mrb[0].mxu0
  %v411 = vadd.f32 %v212, %v410
  %v412 = vpop.f32.mrb[0].mxu0
  %413 = vdwg.mxu0
  %414 = vmatprep.subr.mxu0 0.0
  %v415 = vand.u32 %v63, 4294901760
  %v416 = vsub.f32 %v63, %v415
  %417 = vmatpush1.msra.mxu0 %v416
  %418 = vmatprep.subr.mxu0 0.0
  %v419 = vand.u32 %v64, 4294901760
  %v420 = vsub.f32 %v64, %v419
  %421 = vmatpush1.msra.mxu0 %v420
  %422 = vmatprep.subr.mxu0 0.0
  %v423 = vand.u32 %v65, 4294901760
  %v424 = vsub.f32 %v65, %v423
  %425 = vmatpush1.msra.mxu0 %v424
  %426 = vmatprep.subr.mxu0 0.0
  %v427 = vand.u32 %v66, 4294901760
  %v428 = vsub.f32 %v66, %v427
  %429 = vmatpush1.msra.mxu0 %v428
  %430 = vmatprep.subr.mxu0 0.0
  %v431 = vand.u32 %v67, 4294901760
  %v432 = vsub.f32 %v67, %v431
  %433 = vmatpush1.msra.mxu0 %v432
  %434 = vmatprep.subr.mxu0 0.0
  %v435 = vand.u32 %v68, 4294901760
  %v436 = vsub.f32 %v68, %v435
  %437 = vmatpush1.msra.mxu0 %v436
  %438 = vmatprep.subr.mxu0 0.0
  %v439 = vand.u32 %v69, 4294901760
  %v440 = vsub.f32 %v69, %v439
  %441 = vmatpush1.msra.mxu0 %v440
  %442 = vmatprep.subr.mxu0 0.0
  %v443 = vand.u32 %v70, 4294901760
  %v444 = vsub.f32 %v70, %v443
  %445 = vmatpush1.msra.mxu0 %v444
  %446 = vmatprep.subr.mxu0 0.0
  %v447 = vand.u32 %v71, 4294901760
  %v448 = vsub.f32 %v71, %v447
  %449 = vmatpush1.msra.mxu0 %v448
  %450 = vmatprep.subr.mxu0 0.0
  %v451 = vand.u32 %v72, 4294901760
  %v452 = vsub.f32 %v72, %v451
  %453 = vmatpush1.msra.mxu0 %v452
  %454 = vmatprep.subr.mxu0 0.0
  %v455 = vand.u32 %v73, 4294901760
  %v456 = vsub.f32 %v73, %v455
  %457 = vmatpush1.msra.mxu0 %v456
  %458 = vmatprep.subr.mxu0 0.0
  %v459 = vand.u32 %v74, 4294901760
  %v460 = vsub.f32 %v74, %v459
  %461 = vmatpush1.msra.mxu0 %v460
  %462 = vmatprep.subr.mxu0 0.0
  %v463 = vand.u32 %v75, 4294901760
  %v464 = vsub.f32 %v75, %v463
  %465 = vmatpush1.msra.mxu0 %v464
  %466 = vmatprep.subr.mxu0 0.0
  %v467 = vand.u32 %v76, 4294901760
  %v468 = vsub.f32 %v76, %v467
  %469 = vmatpush1.msra.mxu0 %v468
  %470 = vmatprep.subr.mxu0 0.0
  %v471 = vand.u32 %v77, 4294901760
  %v472 = vsub.f32 %v77, %v471
  %473 = vmatpush1.msra.mxu0 %v472
  %474 = vmatprep.subr.mxu0 0.0
  %v475 = vand.u32 %v78, 4294901760
  %v476 = vsub.f32 %v78, %v475
  %477 = vmatpush1.msra.mxu0 %v476
  %478 = vmatprep.subr.mxu0 0.0
  %v479 = vand.u32 %v79, 4294901760
  %v480 = vsub.f32 %v79, %v479
  %481 = vmatpush1.msra.mxu0 %v480
  %482 = vmatprep.subr.mxu0 0.0
  %v483 = vand.u32 %v80, 4294901760
  %v484 = vsub.f32 %v80, %v483
  %485 = vmatpush1.msra.mxu0 %v484
  %486 = vmatprep.subr.mxu0 0.0
  %v487 = vand.u32 %v81, 4294901760
  %v488 = vsub.f32 %v81, %v487
  %489 = vmatpush1.msra.mxu0 %v488
  %490 = vmatprep.subr.mxu0 0.0
  %v491 = vand.u32 %v82, 4294901760
  %v492 = vsub.f32 %v82, %v491
  %493 = vmatpush1.msra.mxu0 %v492
  %494 = vmatprep.subr.mxu0 0.0
  %v495 = vand.u32 %v83, 4294901760
  %v496 = vsub.f32 %v83, %v495
  %497 = vmatpush1.msra.mxu0 %v496
  %498 = vmatprep.subr.mxu0 0.0
  %v499 = vand.u32 %v84, 4294901760
  %v500 = vsub.f32 %v84, %v499
  %501 = vmatpush1.msra.mxu0 %v500
  %502 = vmatprep.subr.mxu0 0.0
  %v503 = vand.u32 %v85, 4294901760
  %v504 = vsub.f32 %v85, %v503
  %505 = vmatpush1.msra.mxu0 %v504
  %506 = vmatprep.subr.mxu0 0.0
  %v507 = vand.u32 %v86, 4294901760
  %v508 = vsub.f32 %v86, %v507
  %509 = vmatpush1.msra.mxu0 %v508
  %510 = vmatprep.subr.mxu0 0.0
  %511 = vmatpush1.msra.mxu0 0.0
  %512 = vmatprep.subr.mxu0 0.0
  %513 = vmatpush1.msra.mxu0 0.0
  %514 = vmatprep.subr.mxu0 0.0
  %515 = vmatpush1.msra.mxu0 0.0
  %516 = vmatprep.subr.mxu0 0.0
  %517 = vmatpush1.msra.mxu0 0.0
  %518 = vmatprep.subr.mxu0 0.0
  %519 = vmatpush1.msra.mxu0 0.0
  %520 = vmatprep.subr.mxu0 0.0
  %521 = vmatpush1.msra.mxu0 0.0
  %522 = vmatprep.subr.mxu0 0.0
  %523 = vmatpush1.msra.mxu0 0.0
  %524 = vmatprep.subr.mxu0 0.0
  %525 = vmatpush1.msra.mxu0 0.0
  %v526 = vand.u32 %v91, 4294901760
  %v527 = vsub.f32 %v91, %v526
  %528 = vmatprep.mubr.f32.mxu0 %v527
  %v529 = vand.u32 %v59, 4294901760
  %v530 = vsub.f32 %v59, %v529
  %531 = vmatmul.mubr.f32.gmra.mrb[0].mxu0 %v530
  %v532 = vpop.f32.mrb[0].mxu0
  %v533 = vadd.f32 %v404, %v532
  %v534 = vpop.f32.mrb[0].mxu0
  %v535 = vand.u32 %v94, 4294901760
  %v536 = vsub.f32 %v94, %v535
  %537 = vmatprep.mubr.f32.mxu0 %v536
  %v538 = vand.u32 %v61, 4294901760
  %v539 = vsub.f32 %v61, %v538
  %540 = vmatmul.mubr.f32.gmra.mrb[0].mxu0 %v539
  %v541 = vpop.f32.mrb[0].mxu0
  %v542 = vadd.f32 %v411, %v541
  %v543 = vpop.f32.mrb[0].mxu0
  %544 = vdwg.mxu0
  %545 = vmatprep.subr.mxu0 0.0
  %v546 = vand.u32 %v63, 4294901760
  %547 = vmatpush1.msra.mxu0 %v546
  %548 = vmatprep.subr.mxu0 0.0
  %v549 = vand.u32 %v64, 4294901760
  %550 = vmatpush1.msra.mxu0 %v549
  %551 = vmatprep.subr.mxu0 0.0
  %v552 = vand.u32 %v65, 4294901760
  %553 = vmatpush1.msra.mxu0 %v552
  %554 = vmatprep.subr.mxu0 0.0
  %v555 = vand.u32 %v66, 4294901760
  %556 = vmatpush1.msra.mxu0 %v555
  %557 = vmatprep.subr.mxu0 0.0
  %v558 = vand.u32 %v67, 4294901760
  %559 = vmatpush1.msra.mxu0 %v558
  %560 = vmatprep.subr.mxu0 0.0
  %v561 = vand.u32 %v68, 4294901760
  %562 = vmatpush1.msra.mxu0 %v561
  %563 = vmatprep.subr.mxu0 0.0
  %v564 = vand.u32 %v69, 4294901760
  %565 = vmatpush1.msra.mxu0 %v564
  %566 = vmatprep.subr.mxu0 0.0
  %v567 = vand.u32 %v70, 4294901760
  %568 = vmatpush1.msra.mxu0 %v567
  %569 = vmatprep.subr.mxu0 0.0
  %v570 = vand.u32 %v71, 4294901760
  %571 = vmatpush1.msra.mxu0 %v570
  %572 = vmatprep.subr.mxu0 0.0
  %v573 = vand.u32 %v72, 4294901760
  %574 = vmatpush1.msra.mxu0 %v573
  %575 = vmatprep.subr.mxu0 0.0
  %v576 = vand.u32 %v73, 4294901760
  %577 = vmatpush1.msra.mxu0 %v576
  %578 = vmatprep.subr.mxu0 0.0
  %v579 = vand.u32 %v74, 4294901760
  %580 = vmatpush1.msra.mxu0 %v579
  %581 = vmatprep.subr.mxu0 0.0
  %v582 = vand.u32 %v75, 4294901760
  %583 = vmatpush1.msra.mxu0 %v582
  %584 = vmatprep.subr.mxu0 0.0
  %v585 = vand.u32 %v76, 4294901760
  %586 = vmatpush1.msra.mxu0 %v585
  %587 = vmatprep.subr.mxu0 0.0
  %v588 = vand.u32 %v77, 4294901760
  %589 = vmatpush1.msra.mxu0 %v588
  %590 = vmatprep.subr.mxu0 0.0
  %v591 = vand.u32 %v78, 4294901760
  %592 = vmatpush1.msra.mxu0 %v591
  %593 = vmatprep.subr.mxu0 0.0
  %v594 = vand.u32 %v79, 4294901760
  %595 = vmatpush1.msra.mxu0 %v594
  %596 = vmatprep.subr.mxu0 0.0
  %v597 = vand.u32 %v80, 4294901760
  %598 = vmatpush1.msra.mxu0 %v597
  %599 = vmatprep.subr.mxu0 0.0
  %v600 = vand.u32 %v81, 4294901760
  %601 = vmatpush1.msra.mxu0 %v600
  %602 = vmatprep.subr.mxu0 0.0
  %v603 = vand.u32 %v82, 4294901760
  %604 = vmatpush1.msra.mxu0 %v603
  %605 = vmatprep.subr.mxu0 0.0
  %v606 = vand.u32 %v83, 4294901760
  %607 = vmatpush1.msra.mxu0 %v606
  %608 = vmatprep.subr.mxu0 0.0
  %v609 = vand.u32 %v84, 4294901760
  %610 = vmatpush1.msra.mxu0 %v609
  %611 = vmatprep.subr.mxu0 0.0
  %v612 = vand.u32 %v85, 4294901760
  %613 = vmatpush1.msra.mxu0 %v612
  %614 = vmatprep.subr.mxu0 0.0
  %v615 = vand.u32 %v86, 4294901760
  %616 = vmatpush1.msra.mxu0 %v615
  %617 = vmatprep.subr.mxu0 0.0
  %618 = vmatpush1.msra.mxu0 0.0
  %619 = vmatprep.subr.mxu0 0.0
  %620 = vmatpush1.msra.mxu0 0.0
  %621 = vmatprep.subr.mxu0 0.0
  %622 = vmatpush1.msra.mxu0 0.0
  %623 = vmatprep.subr.mxu0 0.0
  %624 = vmatpush1.msra.mxu0 0.0
  %625 = vmatprep.subr.mxu0 0.0
  %626 = vmatpush1.msra.mxu0 0.0
  %627 = vmatprep.subr.mxu0 0.0
  %628 = vmatpush1.msra.mxu0 0.0
  %629 = vmatprep.subr.mxu0 0.0
  %630 = vmatpush1.msra.mxu0 0.0
  %631 = vmatprep.subr.mxu0 0.0
  %632 = vmatpush1.msra.mxu0 0.0
  %v633 = vand.u32 %v91, 4294901760
  %v634 = vsub.f32 %v91, %v633
  %v635 = vand.u32 %v634, 4294901760
  %636 = vmatprep.mubr.f32.mxu0 %v635
  %v637 = vand.u32 %v59, 4294901760
  %v638 = vsub.f32 %v59, %v637
  %v639 = vand.u32 %v638, 4294901760
  %640 = vmatmul.mubr.f32.gmra.mrb[0].mxu0 %v639
  %v641 = vpop.f32.mrb[0].mxu0
  %v642 = vadd.f32 %v533, %v641
  %v643 = vpop.f32.mrb[0].mxu0
  %v644 = vand.u32 %v94, 4294901760
  %v645 = vsub.f32 %v94, %v644
  %v646 = vand.u32 %v645, 4294901760
  %647 = vmatprep.mubr.f32.mxu0 %v646
  %v648 = vand.u32 %v61, 4294901760
  %v649 = vsub.f32 %v61, %v648
  %v650 = vand.u32 %v649, 4294901760
  %651 = vmatmul.mubr.f32.gmra.mrb[0].mxu0 %v650
  %v652 = vpop.f32.mrb[0].mxu0
  %v653 = vadd.f32 %v542, %v652
  %v654 = vpop.f32.mrb[0].mxu0
  %655 = vdwg.mxu0
  %656 = vmatprep.subr.mxu0 0.0
  %v657 = vand.u32 %v63, 4294901760
  %v658 = vsub.f32 %v63, %v657
  %v659 = vand.u32 %v658, 4294901760
  %660 = vmatpush1.msra.mxu0 %v659
  %661 = vmatprep.subr.mxu0 0.0
  %v662 = vand.u32 %v64, 4294901760
  %v663 = vsub.f32 %v64, %v662
  %v664 = vand.u32 %v663, 4294901760
  %665 = vmatpush1.msra.mxu0 %v664
  %666 = vmatprep.subr.mxu0 0.0
  %v667 = vand.u32 %v65, 4294901760
  %v668 = vsub.f32 %v65, %v667
  %v669 = vand.u32 %v668, 4294901760
  %670 = vmatpush1.msra.mxu0 %v669
  %671 = vmatprep.subr.mxu0 0.0
  %v672 = vand.u32 %v66, 4294901760
  %v673 = vsub.f32 %v66, %v672
  %v674 = vand.u32 %v673, 4294901760
  %675 = vmatpush1.msra.mxu0 %v674
  %676 = vmatprep.subr.mxu0 0.0
  %v677 = vand.u32 %v67, 4294901760
  %v678 = vsub.f32 %v67, %v677
  %v679 = vand.u32 %v678, 4294901760
  %680 = vmatpush1.msra.mxu0 %v679
  %681 = vmatprep.subr.mxu0 0.0
  %v682 = vand.u32 %v68, 4294901760
  %v683 = vsub.f32 %v68, %v682
  %v684 = vand.u32 %v683, 4294901760
  %685 = vmatpush1.msra.mxu0 %v684
  %686 = vmatprep.subr.mxu0 0.0
  %v687 = vand.u32 %v69, 4294901760
  %v688 = vsub.f32 %v69, %v687
  %v689 = vand.u32 %v688, 4294901760
  %690 = vmatpush1.msra.mxu0 %v689
  %691 = vmatprep.subr.mxu0 0.0
  %v692 = vand.u32 %v70, 4294901760
  %v693 = vsub.f32 %v70, %v692
  %v694 = vand.u32 %v693, 4294901760
  %695 = vmatpush1.msra.mxu0 %v694
  %696 = vmatprep.subr.mxu0 0.0
  %v697 = vand.u32 %v71, 4294901760
  %v698 = vsub.f32 %v71, %v697
  %v699 = vand.u32 %v698, 4294901760
  %700 = vmatpush1.msra.mxu0 %v699
  %701 = vmatprep.subr.mxu0 0.0
  %v702 = vand.u32 %v72, 4294901760
  %v703 = vsub.f32 %v72, %v702
  %v704 = vand.u32 %v703, 4294901760
  %705 = vmatpush1.msra.mxu0 %v704
  %706 = vmatprep.subr.mxu0 0.0
  %v707 = vand.u32 %v73, 4294901760
  %v708 = vsub.f32 %v73, %v707
  %v709 = vand.u32 %v708, 4294901760
  %710 = vmatpush1.msra.mxu0 %v709
  %711 = vmatprep.subr.mxu0 0.0
  %v712 = vand.u32 %v74, 4294901760
  %v713 = vsub.f32 %v74, %v712
  %v714 = vand.u32 %v713, 4294901760
  %715 = vmatpush1.msra.mxu0 %v714
  %716 = vmatprep.subr.mxu0 0.0
  %v717 = vand.u32 %v75, 4294901760
  %v718 = vsub.f32 %v75, %v717
  %v719 = vand.u32 %v718, 4294901760
  %720 = vmatpush1.msra.mxu0 %v719
  %721 = vmatprep.subr.mxu0 0.0
  %v722 = vand.u32 %v76, 4294901760
  %v723 = vsub.f32 %v76, %v722
  %v724 = vand.u32 %v723, 4294901760
  %725 = vmatpush1.msra.mxu0 %v724
  %726 = vmatprep.subr.mxu0 0.0
  %v727 = vand.u32 %v77, 4294901760
  %v728 = vsub.f32 %v77, %v727
  %v729 = vand.u32 %v728, 4294901760
  %730 = vmatpush1.msra.mxu0 %v729
  %731 = vmatprep.subr.mxu0 0.0
  %v732 = vand.u32 %v78, 4294901760
  %v733 = vsub.f32 %v78, %v732
  %v734 = vand.u32 %v733, 4294901760
  %735 = vmatpush1.msra.mxu0 %v734
  %736 = vmatprep.subr.mxu0 0.0
  %v737 = vand.u32 %v79, 4294901760
  %v738 = vsub.f32 %v79, %v737
  %v739 = vand.u32 %v738, 4294901760
  %740 = vmatpush1.msra.mxu0 %v739
  %741 = vmatprep.subr.mxu0 0.0
  %v742 = vand.u32 %v80, 4294901760
  %v743 = vsub.f32 %v80, %v742
  %v744 = vand.u32 %v743, 4294901760
  %745 = vmatpush1.msra.mxu0 %v744
  %746 = vmatprep.subr.mxu0 0.0
  %v747 = vand.u32 %v81, 4294901760
  %v748 = vsub.f32 %v81, %v747
  %v749 = vand.u32 %v748, 4294901760
  %750 = vmatpush1.msra.mxu0 %v749
  %751 = vmatprep.subr.mxu0 0.0
  %v752 = vand.u32 %v82, 4294901760
  %v753 = vsub.f32 %v82, %v752
  %v754 = vand.u32 %v753, 4294901760
  %755 = vmatpush1.msra.mxu0 %v754
  %756 = vmatprep.subr.mxu0 0.0
  %v757 = vand.u32 %v83, 4294901760
  %v758 = vsub.f32 %v83, %v757
  %v759 = vand.u32 %v758, 4294901760
  %760 = vmatpush1.msra.mxu0 %v759
  %761 = vmatprep.subr.mxu0 0.0
  %v762 = vand.u32 %v84, 4294901760
  %v763 = vsub.f32 %v84, %v762
  %v764 = vand.u32 %v763, 4294901760
  %765 = vmatpush1.msra.mxu0 %v764
  %766 = vmatprep.subr.mxu0 0.0
  %v767 = vand.u32 %v85, 4294901760
  %v768 = vsub.f32 %v85, %v767
  %v769 = vand.u32 %v768, 4294901760
  %770 = vmatpush1.msra.mxu0 %v769
  %771 = vmatprep.subr.mxu0 0.0
  %v772 = vand.u32 %v86, 4294901760
  %v773 = vsub.f32 %v86, %v772
  %v774 = vand.u32 %v773, 4294901760
  %775 = vmatpush1.msra.mxu0 %v774
  %776 = vmatprep.subr.mxu0 0.0
  %777 = vmatpush1.msra.mxu0 0.0
  %778 = vmatprep.subr.mxu0 0.0
  %779 = vmatpush1.msra.mxu0 0.0
  %780 = vmatprep.subr.mxu0 0.0
  %781 = vmatpush1.msra.mxu0 0.0
  %782 = vmatprep.subr.mxu0 0.0
  %783 = vmatpush1.msra.mxu0 0.0
  %784 = vmatprep.subr.mxu0 0.0
  %785 = vmatpush1.msra.mxu0 0.0
  %786 = vmatprep.subr.mxu0 0.0
  %787 = vmatpush1.msra.mxu0 0.0
  %788 = vmatprep.subr.mxu0 0.0
  %789 = vmatpush1.msra.mxu0 0.0
  %790 = vmatprep.subr.mxu0 0.0
  %791 = vmatpush1.msra.mxu0 0.0
  %v792 = vand.u32 %v91, 4294901760
  %793 = vmatprep.mubr.f32.mxu0 %v792
  %v794 = vand.u32 %v59, 4294901760
  %795 = vmatmul.mubr.f32.gmra.mrb[0].mxu0 %v794
  %v796 = vpop.f32.mrb[0].mxu0
  %v797 = vadd.f32 %v642, %v796
  %v798 = vpop.f32.mrb[0].mxu0
  %v799 = vand.u32 %v94, 4294901760
  %800 = vmatprep.mubr.f32.mxu0 %v799
  %v801 = vand.u32 %v61, 4294901760
  %802 = vmatmul.mubr.f32.gmra.mrb[0].mxu0 %v801
  %v803 = vpop.f32.mrb[0].mxu0
  %v804 = vadd.f32 %v653, %v803
  %v805 = vpop.f32.mrb[0].mxu0
  %806 = vdwg.mxu0
  %807 = vmatprep.subr.mxu0 0.0
  %v808 = vand.u32 %v63, 4294901760
  %809 = vmatpush1.msra.mxu0 %v808
  %810 = vmatprep.subr.mxu0 0.0
  %v811 = vand.u32 %v64, 4294901760
  %812 = vmatpush1.msra.mxu0 %v811
  %813 = vmatprep.subr.mxu0 0.0
  %v814 = vand.u32 %v65, 4294901760
  %815 = vmatpush1.msra.mxu0 %v814
  %816 = vmatprep.subr.mxu0 0.0
  %v817 = vand.u32 %v66, 4294901760
  %818 = vmatpush1.msra.mxu0 %v817
  %819 = vmatprep.subr.mxu0 0.0
  %v820 = vand.u32 %v67, 4294901760
  %821 = vmatpush1.msra.mxu0 %v820
  %822 = vmatprep.subr.mxu0 0.0
  %v823 = vand.u32 %v68, 4294901760
  %824 = vmatpush1.msra.mxu0 %v823
  %825 = vmatprep.subr.mxu0 0.0
  %v826 = vand.u32 %v69, 4294901760
  %827 = vmatpush1.msra.mxu0 %v826
  %828 = vmatprep.subr.mxu0 0.0
  %v829 = vand.u32 %v70, 4294901760
  %830 = vmatpush1.msra.mxu0 %v829
  %831 = vmatprep.subr.mxu0 0.0
  %v832 = vand.u32 %v71, 4294901760
  %833 = vmatpush1.msra.mxu0 %v832
  %834 = vmatprep.subr.mxu0 0.0
  %v835 = vand.u32 %v72, 4294901760
  %836 = vmatpush1.msra.mxu0 %v835
  %837 = vmatprep.subr.mxu0 0.0
  %v838 = vand.u32 %v73, 4294901760
  %839 = vmatpush1.msra.mxu0 %v838
  %840 = vmatprep.subr.mxu0 0.0
  %v841 = vand.u32 %v74, 4294901760
  %842 = vmatpush1.msra.mxu0 %v841
  %843 = vmatprep.subr.mxu0 0.0
  %v844 = vand.u32 %v75, 4294901760
  %845 = vmatpush1.msra.mxu0 %v844
  %846 = vmatprep.subr.mxu0 0.0
  %v847 = vand.u32 %v76, 4294901760
  %848 = vmatpush1.msra.mxu0 %v847
  %849 = vmatprep.subr.mxu0 0.0
  %v850 = vand.u32 %v77, 4294901760
  %851 = vmatpush1.msra.mxu0 %v850
  %852 = vmatprep.subr.mxu0 0.0
  %v853 = vand.u32 %v78, 4294901760
  %854 = vmatpush1.msra.mxu0 %v853
  %855 = vmatprep.subr.mxu0 0.0
  %v856 = vand.u32 %v79, 4294901760
  %857 = vmatpush1.msra.mxu0 %v856
  %858 = vmatprep.subr.mxu0 0.0
  %v859 = vand.u32 %v80, 4294901760
  %860 = vmatpush1.msra.mxu0 %v859
  %861 = vmatprep.subr.mxu0 0.0
  %v862 = vand.u32 %v81, 4294901760
  %863 = vmatpush1.msra.mxu0 %v862
  %864 = vmatprep.subr.mxu0 0.0
  %v865 = vand.u32 %v82, 4294901760
  %866 = vmatpush1.msra.mxu0 %v865
  %867 = vmatprep.subr.mxu0 0.0
  %v868 = vand.u32 %v83, 4294901760
  %869 = vmatpush1.msra.mxu0 %v868
  %870 = vmatprep.subr.mxu0 0.0
  %v871 = vand.u32 %v84, 4294901760
  %872 = vmatpush1.msra.mxu0 %v871
  %873 = vmatprep.subr.mxu0 0.0
  %v874 = vand.u32 %v85, 4294901760
  %875 = vmatpush1.msra.mxu0 %v874
  %876 = vmatprep.subr.mxu0 0.0
  %v877 = vand.u32 %v86, 4294901760
  %878 = vmatpush1.msra.mxu0 %v877
  %879 = vmatprep.subr.mxu0 0.0
  %880 = vmatpush1.msra.mxu0 0.0
  %881 = vmatprep.subr.mxu0 0.0
  %882 = vmatpush1.msra.mxu0 0.0
  %883 = vmatprep.subr.mxu0 0.0
  %884 = vmatpush1.msra.mxu0 0.0
  %885 = vmatprep.subr.mxu0 0.0
  %886 = vmatpush1.msra.mxu0 0.0
  %887 = vmatprep.subr.mxu0 0.0
  %888 = vmatpush1.msra.mxu0 0.0
  %889 = vmatprep.subr.mxu0 0.0
  %890 = vmatpush1.msra.mxu0 0.0
  %891 = vmatprep.subr.mxu0 0.0
  %892 = vmatpush1.msra.mxu0 0.0
  %893 = vmatprep.subr.mxu0 0.0
  %894 = vmatpush1.msra.mxu0 0.0
  %v895 = vand.u32 %v91, 4294901760
  %896 = vmatprep.mubr.f32.mxu0 %v895
  %v897 = vand.u32 %v59, 4294901760
  %898 = vmatmul.mubr.f32.gmra.mrb[0].mxu0 %v897
  %v899 = vpop.f32.mrb[0].mxu0
  %v900 = vadd.f32 %v797, %v899
  %v901 = vpop.f32.mrb[0].mxu0
  %v902 = vand.u32 %v94, 4294901760
  %903 = vmatprep.mubr.f32.mxu0 %v902
  %v904 = vand.u32 %v61, 4294901760
  %905 = vmatmul.mubr.f32.gmra.mrb[0].mxu0 %v904
  %v906 = vpop.f32.mrb[0].mxu0
  %v907 = vadd.f32 %v804, %v906
  %v908 = vpop.f32.mrb[0].mxu0
  %909 = vdwg.mxu0
  %v910 = vld [vmem:[%s4] sm:$0x1]
  %v911 = vld [vmem:[%s5] sm:$0x1]
  %vm912 = vcmask 261120
  %v913 = vsel %vm912, %v900, 0.0
  %914 = vadd.xlane.f32.xlu0 %v913
  %v915 = vpop.xlane.xlu0 %914
  %vm916 = vcmask 254976
  %v917 = vsel %vm916, %v907, 0.0
  %918 = vadd.xlane.f32.xlu0 %v917
  %v919 = vpop.xlane.xlu0 %918
  %v920 = vrcp.pop 32.0
  %v921 = vmul.f32 %v915, %v920
  %v922 = vmul.f32 %v919, %v920
  %v923 = vsub.f32 %v900, %v921
  %v924 = vsub.f32 %v907, %v922
  %v925 = vmul.f32 %v923, %v923
  %v926 = vmul.f32 %v924, %v924
  %v927 = vsel %vm912, %v925, 0.0
  %928 = vadd.xlane.f32.xlu0 %v927
  %v929 = vpop.xlane.xlu0 %928
  %v930 = vsel %vm916, %v926, 0.0
  %931 = vadd.xlane.f32.xlu0 %v930
  %v932 = vpop.xlane.xlu0 %931
  %v933 = vmul.f32 %v929, %v920
  %v934 = vmul.f32 %v932, %v920
  %v935 = vadd.f32 %v933, 1e-12
  %v936 = vadd.f32 %v934, 1e-12
  %v937 = vrsqrt.pop %v935
  %v938 = vrsqrt.pop %v936
  %v939 = vmul.f32 %v923, %v937
  %v940 = vmul.f32 %v924, %v938
  %v942 = vlaneseq
  %v943 = vshrl.u32 %v942, 7
  %v944 = vsub.s32 0, %v943
  %v945 = vrot.slane %v910, %v944
  %v947 = vmul.f32 %v939, %v945
  %v948 = vmul.f32 %v940, %v945
  %v950 = vlaneseq
  %v951 = vshrl.u32 %v950, 7
  %v952 = vsub.s32 0, %v951
  %v953 = vrot.slane %v911, %v952
  %v955 = vadd.f32 %v947, %v953
  %v956 = vadd.f32 %v948, %v953
  %v957 = vld [vmem:[%s6] sm:$0xff]
  %v958 = vld [vmem:[%s6 + $0x8] sm:$0xff]
  %v959 = vld [vmem:[%s6 + $0x10] sm:$0xff]
  %v960 = vld [vmem:[%s6 + $0x18] sm:$0xff]
  %v961 = vld [vmem:[%s7] sm:$0x1]
  %v963 = vlaneseq
  %v964 = vshrl.u32 %v963, 7
  %v965 = vsub.s32 0, %v964
  %v966 = vrot.slane %v961, %v965
  %v969 = vsel %vm912, %v955, 0
  %v972 = vsel %vm912, %v956, 0
  %974 = vmatprep.subr.mxu0 0.0
  %v975 = vand.u32 %v957, 4294901760
  %976 = vmatpush1.msra.mxu0 %v975
  %977 = vmatprep.subr.mxu0 0.0
  %v978 = vand.u32 %v958, 4294901760
  %979 = vmatpush1.msra.mxu0 %v978
  %980 = vmatprep.subr.mxu0 0.0
  %v981 = vand.u32 %v959, 4294901760
  %982 = vmatpush1.msra.mxu0 %v981
  %983 = vmatprep.subr.mxu0 0.0
  %v984 = vand.u32 %v960, 4294901760
  %985 = vmatpush1.msra.mxu0 %v984
  %986 = vmatprep.subr.mxu0 0.0
  %987 = vmatpush1.msra.mxu0 0.0
  %988 = vmatprep.subr.mxu0 0.0
  %989 = vmatpush1.msra.mxu0 0.0
  %990 = vmatprep.subr.mxu0 0.0
  %991 = vmatpush1.msra.mxu0 0.0
  %992 = vmatprep.subr.mxu0 0.0
  %993 = vmatpush1.msra.mxu0 0.0
  %994 = vmatprep.subr.mxu0 0.0
  %995 = vmatpush1.msra.mxu0 0.0
  %996 = vmatprep.subr.mxu0 0.0
  %997 = vmatpush1.msra.mxu0 0.0
  %998 = vmatprep.subr.mxu0 0.0
  %999 = vmatpush1.msra.mxu0 0.0
  %1000 = vmatprep.subr.mxu0 0.0
  %1001 = vmatpush1.msra.mxu0 0.0
  %1002 = vmatprep.subr.mxu0 0.0
  %1003 = vmatpush1.msra.mxu0 0.0
  %1004 = vmatprep.subr.mxu0 0.0
  %1005 = vmatpush1.msra.mxu0 0.0
  %1006 = vmatprep.subr.mxu0 0.0
  %1007 = vmatpush1.msra.mxu0 0.0
  %1008 = vmatprep.subr.mxu0 0.0
  %1009 = vmatpush1.msra.mxu0 0.0
  %1010 = vmatprep.subr.mxu0 0.0
  %1011 = vmatpush1.msra.mxu0 0.0
  %1012 = vmatprep.subr.mxu0 0.0
  %1013 = vmatpush1.msra.mxu0 0.0
  %1014 = vmatprep.subr.mxu0 0.0
  %1015 = vmatpush1.msra.mxu0 0.0
  %1016 = vmatprep.subr.mxu0 0.0
  %1017 = vmatpush1.msra.mxu0 0.0
  %1018 = vmatprep.subr.mxu0 0.0
  %1019 = vmatpush1.msra.mxu0 0.0
  %1020 = vmatprep.subr.mxu0 0.0
  %1021 = vmatpush1.msra.mxu0 0.0
  %1022 = vmatprep.subr.mxu0 0.0
  %1023 = vmatpush1.msra.mxu0 0.0
  %1024 = vmatprep.subr.mxu0 0.0
  %1025 = vmatpush1.msra.mxu0 0.0
  %1026 = vmatprep.subr.mxu0 0.0
  %1027 = vmatpush1.msra.mxu0 0.0
  %1028 = vmatprep.subr.mxu0 0.0
  %1029 = vmatpush1.msra.mxu0 0.0
  %1030 = vmatprep.subr.mxu0 0.0
  %1031 = vmatpush1.msra.mxu0 0.0
  %1032 = vmatprep.subr.mxu0 0.0
  %1033 = vmatpush1.msra.mxu0 0.0
  %1034 = vmatprep.subr.mxu0 0.0
  %1035 = vmatpush1.msra.mxu0 0.0
  %1036 = vmatprep.subr.mxu0 0.0
  %1037 = vmatpush1.msra.mxu0 0.0
  %1038 = vmatprep.subr.mxu0 0.0
  %1039 = vmatpush1.msra.mxu0 0.0
  %1040 = vmatprep.subr.mxu0 0.0
  %1041 = vmatpush1.msra.mxu0 0.0
  %1042 = vmatprep.mubr.f32.mxu0 0.0
  %v1043 = vand.u32 %v969, 4294901760
  %v1044 = vsub.f32 %v969, %v1043
  %v1045 = vand.u32 %v1044, 4294901760
  %v1046 = vsub.f32 %v1044, %v1045
  %v1047 = vand.u32 %v1046, 4294901760
  %1048 = vmatmul.mubr.f32.gmra.mrb[0].mxu0 %v1047
  %v1049 = vpop.f32.mrb[0].mxu0
  %v1050 = vadd.f32 %v966, %v1049
  %v1051 = vpop.f32.mrb[0].mxu0
  %1052 = vmatprep.mubr.f32.mxu0 0.0
  %v1053 = vand.u32 %v972, 4294901760
  %v1054 = vsub.f32 %v972, %v1053
  %v1055 = vand.u32 %v1054, 4294901760
  %v1056 = vsub.f32 %v1054, %v1055
  %v1057 = vand.u32 %v1056, 4294901760
  %1058 = vmatmul.mubr.f32.gmra.mrb[0].mxu0 %v1057
  %v1059 = vpop.f32.mrb[0].mxu0
  %v1060 = vadd.f32 %v966, %v1059
  %v1061 = vpop.f32.mrb[0].mxu0
  %1062 = vdwg.mxu0
  %1063 = vmatprep.subr.mxu0 0.0
  %v1064 = vand.u32 %v957, 4294901760
  %v1065 = vsub.f32 %v957, %v1064
  %v1066 = vand.u32 %v1065, 4294901760
  %v1067 = vsub.f32 %v1065, %v1066
  %v1068 = vand.u32 %v1067, 4294901760
  %1069 = vmatpush1.msra.mxu0 %v1068
  %1070 = vmatprep.subr.mxu0 0.0
  %v1071 = vand.u32 %v958, 4294901760
  %v1072 = vsub.f32 %v958, %v1071
  %v1073 = vand.u32 %v1072, 4294901760
  %v1074 = vsub.f32 %v1072, %v1073
  %v1075 = vand.u32 %v1074, 4294901760
  %1076 = vmatpush1.msra.mxu0 %v1075
  %1077 = vmatprep.subr.mxu0 0.0
  %v1078 = vand.u32 %v959, 4294901760
  %v1079 = vsub.f32 %v959, %v1078
  %v1080 = vand.u32 %v1079, 4294901760
  %v1081 = vsub.f32 %v1079, %v1080
  %v1082 = vand.u32 %v1081, 4294901760
  %1083 = vmatpush1.msra.mxu0 %v1082
  %1084 = vmatprep.subr.mxu0 0.0
  %v1085 = vand.u32 %v960, 4294901760
  %v1086 = vsub.f32 %v960, %v1085
  %v1087 = vand.u32 %v1086, 4294901760
  %v1088 = vsub.f32 %v1086, %v1087
  %v1089 = vand.u32 %v1088, 4294901760
  %1090 = vmatpush1.msra.mxu0 %v1089
  %1091 = vmatprep.subr.mxu0 0.0
  %1092 = vmatpush1.msra.mxu0 0.0
  %1093 = vmatprep.subr.mxu0 0.0
  %1094 = vmatpush1.msra.mxu0 0.0
  %1095 = vmatprep.subr.mxu0 0.0
  %1096 = vmatpush1.msra.mxu0 0.0
  %1097 = vmatprep.subr.mxu0 0.0
  %1098 = vmatpush1.msra.mxu0 0.0
  %1099 = vmatprep.subr.mxu0 0.0
  %1100 = vmatpush1.msra.mxu0 0.0
  %1101 = vmatprep.subr.mxu0 0.0
  %1102 = vmatpush1.msra.mxu0 0.0
  %1103 = vmatprep.subr.mxu0 0.0
  %1104 = vmatpush1.msra.mxu0 0.0
  %1105 = vmatprep.subr.mxu0 0.0
  %1106 = vmatpush1.msra.mxu0 0.0
  %1107 = vmatprep.subr.mxu0 0.0
  %1108 = vmatpush1.msra.mxu0 0.0
  %1109 = vmatprep.subr.mxu0 0.0
  %1110 = vmatpush1.msra.mxu0 0.0
  %1111 = vmatprep.subr.mxu0 0.0
  %1112 = vmatpush1.msra.mxu0 0.0
  %1113 = vmatprep.subr.mxu0 0.0
  %1114 = vmatpush1.msra.mxu0 0.0
  %1115 = vmatprep.subr.mxu0 0.0
  %1116 = vmatpush1.msra.mxu0 0.0
  %1117 = vmatprep.subr.mxu0 0.0
  %1118 = vmatpush1.msra.mxu0 0.0
  %1119 = vmatprep.subr.mxu0 0.0
  %1120 = vmatpush1.msra.mxu0 0.0
  %1121 = vmatprep.subr.mxu0 0.0
  %1122 = vmatpush1.msra.mxu0 0.0
  %1123 = vmatprep.subr.mxu0 0.0
  %1124 = vmatpush1.msra.mxu0 0.0
  %1125 = vmatprep.subr.mxu0 0.0
  %1126 = vmatpush1.msra.mxu0 0.0
  %1127 = vmatprep.subr.mxu0 0.0
  %1128 = vmatpush1.msra.mxu0 0.0
  %1129 = vmatprep.subr.mxu0 0.0
  %1130 = vmatpush1.msra.mxu0 0.0
  %1131 = vmatprep.subr.mxu0 0.0
  %1132 = vmatpush1.msra.mxu0 0.0
  %1133 = vmatprep.subr.mxu0 0.0
  %1134 = vmatpush1.msra.mxu0 0.0
  %1135 = vmatprep.subr.mxu0 0.0
  %1136 = vmatpush1.msra.mxu0 0.0
  %1137 = vmatprep.subr.mxu0 0.0
  %1138 = vmatpush1.msra.mxu0 0.0
  %1139 = vmatprep.subr.mxu0 0.0
  %1140 = vmatpush1.msra.mxu0 0.0
  %1141 = vmatprep.subr.mxu0 0.0
  %1142 = vmatpush1.msra.mxu0 0.0
  %1143 = vmatprep.subr.mxu0 0.0
  %1144 = vmatpush1.msra.mxu0 0.0
  %1145 = vmatprep.subr.mxu0 0.0
  %1146 = vmatpush1.msra.mxu0 0.0
  %1147 = vmatprep.mubr.f32.mxu0 0.0
  %v1148 = vand.u32 %v969, 4294901760
  %1149 = vmatmul.mubr.f32.gmra.mrb[0].mxu0 %v1148
  %v1150 = vpop.f32.mrb[0].mxu0
  %v1151 = vadd.f32 %v1050, %v1150
  %v1152 = vpop.f32.mrb[0].mxu0
  %1153 = vmatprep.mubr.f32.mxu0 0.0
  %v1154 = vand.u32 %v972, 4294901760
  %1155 = vmatmul.mubr.f32.gmra.mrb[0].mxu0 %v1154
  %v1156 = vpop.f32.mrb[0].mxu0
  %v1157 = vadd.f32 %v1060, %v1156
  %v1158 = vpop.f32.mrb[0].mxu0
  %1159 = vdwg.mxu0
  %1160 = vmatprep.subr.mxu0 0.0
  %v1161 = vand.u32 %v957, 4294901760
  %v1162 = vsub.f32 %v957, %v1161
  %1163 = vmatpush1.msra.mxu0 %v1162
  %1164 = vmatprep.subr.mxu0 0.0
  %v1165 = vand.u32 %v958, 4294901760
  %v1166 = vsub.f32 %v958, %v1165
  %1167 = vmatpush1.msra.mxu0 %v1166
  %1168 = vmatprep.subr.mxu0 0.0
  %v1169 = vand.u32 %v959, 4294901760
  %v1170 = vsub.f32 %v959, %v1169
  %1171 = vmatpush1.msra.mxu0 %v1170
  %1172 = vmatprep.subr.mxu0 0.0
  %v1173 = vand.u32 %v960, 4294901760
  %v1174 = vsub.f32 %v960, %v1173
  %1175 = vmatpush1.msra.mxu0 %v1174
  %1176 = vmatprep.subr.mxu0 0.0
  %1177 = vmatpush1.msra.mxu0 0.0
  %1178 = vmatprep.subr.mxu0 0.0
  %1179 = vmatpush1.msra.mxu0 0.0
  %1180 = vmatprep.subr.mxu0 0.0
  %1181 = vmatpush1.msra.mxu0 0.0
  %1182 = vmatprep.subr.mxu0 0.0
  %1183 = vmatpush1.msra.mxu0 0.0
  %1184 = vmatprep.subr.mxu0 0.0
  %1185 = vmatpush1.msra.mxu0 0.0
  %1186 = vmatprep.subr.mxu0 0.0
  %1187 = vmatpush1.msra.mxu0 0.0
  %1188 = vmatprep.subr.mxu0 0.0
  %1189 = vmatpush1.msra.mxu0 0.0
  %1190 = vmatprep.subr.mxu0 0.0
  %1191 = vmatpush1.msra.mxu0 0.0
  %1192 = vmatprep.subr.mxu0 0.0
  %1193 = vmatpush1.msra.mxu0 0.0
  %1194 = vmatprep.subr.mxu0 0.0
  %1195 = vmatpush1.msra.mxu0 0.0
  %1196 = vmatprep.subr.mxu0 0.0
  %1197 = vmatpush1.msra.mxu0 0.0
  %1198 = vmatprep.subr.mxu0 0.0
  %1199 = vmatpush1.msra.mxu0 0.0
  %1200 = vmatprep.subr.mxu0 0.0
  %1201 = vmatpush1.msra.mxu0 0.0
  %1202 = vmatprep.subr.mxu0 0.0
  %1203 = vmatpush1.msra.mxu0 0.0
  %1204 = vmatprep.subr.mxu0 0.0
  %1205 = vmatpush1.msra.mxu0 0.0
  %1206 = vmatprep.subr.mxu0 0.0
  %1207 = vmatpush1.msra.mxu0 0.0
  %1208 = vmatprep.subr.mxu0 0.0
  %1209 = vmatpush1.msra.mxu0 0.0
  %1210 = vmatprep.subr.mxu0 0.0
  %1211 = vmatpush1.msra.mxu0 0.0
  %1212 = vmatprep.subr.mxu0 0.0
  %1213 = vmatpush1.msra.mxu0 0.0
  %1214 = vmatprep.subr.mxu0 0.0
  %1215 = vmatpush1.msra.mxu0 0.0
  %1216 = vmatprep.subr.mxu0 0.0
  %1217 = vmatpush1.msra.mxu0 0.0
  %1218 = vmatprep.subr.mxu0 0.0
  %1219 = vmatpush1.msra.mxu0 0.0
  %1220 = vmatprep.subr.mxu0 0.0
  %1221 = vmatpush1.msra.mxu0 0.0
  %1222 = vmatprep.subr.mxu0 0.0
  %1223 = vmatpush1.msra.mxu0 0.0
  %1224 = vmatprep.subr.mxu0 0.0
  %1225 = vmatpush1.msra.mxu0 0.0
  %1226 = vmatprep.subr.mxu0 0.0
  %1227 = vmatpush1.msra.mxu0 0.0
  %1228 = vmatprep.subr.mxu0 0.0
  %1229 = vmatpush1.msra.mxu0 0.0
  %1230 = vmatprep.subr.mxu0 0.0
  %1231 = vmatpush1.msra.mxu0 0.0
  %1232 = vmatprep.mubr.f32.mxu0 0.0
  %v1233 = vand.u32 %v969, 4294901760
  %v1234 = vsub.f32 %v969, %v1233
  %1235 = vmatmul.mubr.f32.gmra.mrb[0].mxu0 %v1234
  %v1236 = vpop.f32.mrb[0].mxu0
  %v1237 = vadd.f32 %v1151, %v1236
  %v1238 = vpop.f32.mrb[0].mxu0
  %1239 = vmatprep.mubr.f32.mxu0 0.0
  %v1240 = vand.u32 %v972, 4294901760
  %v1241 = vsub.f32 %v972, %v1240
  %1242 = vmatmul.mubr.f32.gmra.mrb[0].mxu0 %v1241
  %v1243 = vpop.f32.mrb[0].mxu0
  %v1244 = vadd.f32 %v1157, %v1243
  %v1245 = vpop.f32.mrb[0].mxu0
  %1246 = vdwg.mxu0
  %1247 = vmatprep.subr.mxu0 0.0
  %v1248 = vand.u32 %v957, 4294901760
  %1249 = vmatpush1.msra.mxu0 %v1248
  %1250 = vmatprep.subr.mxu0 0.0
  %v1251 = vand.u32 %v958, 4294901760
  %1252 = vmatpush1.msra.mxu0 %v1251
  %1253 = vmatprep.subr.mxu0 0.0
  %v1254 = vand.u32 %v959, 4294901760
  %1255 = vmatpush1.msra.mxu0 %v1254
  %1256 = vmatprep.subr.mxu0 0.0
  %v1257 = vand.u32 %v960, 4294901760
  %1258 = vmatpush1.msra.mxu0 %v1257
  %1259 = vmatprep.subr.mxu0 0.0
  %1260 = vmatpush1.msra.mxu0 0.0
  %1261 = vmatprep.subr.mxu0 0.0
  %1262 = vmatpush1.msra.mxu0 0.0
  %1263 = vmatprep.subr.mxu0 0.0
  %1264 = vmatpush1.msra.mxu0 0.0
  %1265 = vmatprep.subr.mxu0 0.0
  %1266 = vmatpush1.msra.mxu0 0.0
  %1267 = vmatprep.subr.mxu0 0.0
  %1268 = vmatpush1.msra.mxu0 0.0
  %1269 = vmatprep.subr.mxu0 0.0
  %1270 = vmatpush1.msra.mxu0 0.0
  %1271 = vmatprep.subr.mxu0 0.0
  %1272 = vmatpush1.msra.mxu0 0.0
  %1273 = vmatprep.subr.mxu0 0.0
  %1274 = vmatpush1.msra.mxu0 0.0
  %1275 = vmatprep.subr.mxu0 0.0
  %1276 = vmatpush1.msra.mxu0 0.0
  %1277 = vmatprep.subr.mxu0 0.0
  %1278 = vmatpush1.msra.mxu0 0.0
  %1279 = vmatprep.subr.mxu0 0.0
  %1280 = vmatpush1.msra.mxu0 0.0
  %1281 = vmatprep.subr.mxu0 0.0
  %1282 = vmatpush1.msra.mxu0 0.0
  %1283 = vmatprep.subr.mxu0 0.0
  %1284 = vmatpush1.msra.mxu0 0.0
  %1285 = vmatprep.subr.mxu0 0.0
  %1286 = vmatpush1.msra.mxu0 0.0
  %1287 = vmatprep.subr.mxu0 0.0
  %1288 = vmatpush1.msra.mxu0 0.0
  %1289 = vmatprep.subr.mxu0 0.0
  %1290 = vmatpush1.msra.mxu0 0.0
  %1291 = vmatprep.subr.mxu0 0.0
  %1292 = vmatpush1.msra.mxu0 0.0
  %1293 = vmatprep.subr.mxu0 0.0
  %1294 = vmatpush1.msra.mxu0 0.0
  %1295 = vmatprep.subr.mxu0 0.0
  %1296 = vmatpush1.msra.mxu0 0.0
  %1297 = vmatprep.subr.mxu0 0.0
  %1298 = vmatpush1.msra.mxu0 0.0
  %1299 = vmatprep.subr.mxu0 0.0
  %1300 = vmatpush1.msra.mxu0 0.0
  %1301 = vmatprep.subr.mxu0 0.0
  %1302 = vmatpush1.msra.mxu0 0.0
  %1303 = vmatprep.subr.mxu0 0.0
  %1304 = vmatpush1.msra.mxu0 0.0
  %1305 = vmatprep.subr.mxu0 0.0
  %1306 = vmatpush1.msra.mxu0 0.0
  %1307 = vmatprep.subr.mxu0 0.0
  %1308 = vmatpush1.msra.mxu0 0.0
  %1309 = vmatprep.subr.mxu0 0.0
  %1310 = vmatpush1.msra.mxu0 0.0
  %1311 = vmatprep.subr.mxu0 0.0
  %1312 = vmatpush1.msra.mxu0 0.0
  %1313 = vmatprep.subr.mxu0 0.0
  %1314 = vmatpush1.msra.mxu0 0.0
  %1315 = vmatprep.mubr.f32.mxu0 0.0
  %v1316 = vand.u32 %v969, 4294901760
  %v1317 = vsub.f32 %v969, %v1316
  %v1318 = vand.u32 %v1317, 4294901760
  %1319 = vmatmul.mubr.f32.gmra.mrb[0].mxu0 %v1318
  %v1320 = vpop.f32.mrb[0].mxu0
  %v1321 = vadd.f32 %v1237, %v1320
  %v1322 = vpop.f32.mrb[0].mxu0
  %1323 = vmatprep.mubr.f32.mxu0 0.0
  %v1324 = vand.u32 %v972, 4294901760
  %v1325 = vsub.f32 %v972, %v1324
  %v1326 = vand.u32 %v1325, 4294901760
  %1327 = vmatmul.mubr.f32.gmra.mrb[0].mxu0 %v1326
  %v1328 = vpop.f32.mrb[0].mxu0
  %v1329 = vadd.f32 %v1244, %v1328
  %v1330 = vpop.f32.mrb[0].mxu0
  %1331 = vdwg.mxu0
  %1332 = vmatprep.subr.mxu0 0.0
  %v1333 = vand.u32 %v957, 4294901760
  %v1334 = vsub.f32 %v957, %v1333
  %v1335 = vand.u32 %v1334, 4294901760
  %1336 = vmatpush1.msra.mxu0 %v1335
  %1337 = vmatprep.subr.mxu0 0.0
  %v1338 = vand.u32 %v958, 4294901760
  %v1339 = vsub.f32 %v958, %v1338
  %v1340 = vand.u32 %v1339, 4294901760
  %1341 = vmatpush1.msra.mxu0 %v1340
  %1342 = vmatprep.subr.mxu0 0.0
  %v1343 = vand.u32 %v959, 4294901760
  %v1344 = vsub.f32 %v959, %v1343
  %v1345 = vand.u32 %v1344, 4294901760
  %1346 = vmatpush1.msra.mxu0 %v1345
  %1347 = vmatprep.subr.mxu0 0.0
  %v1348 = vand.u32 %v960, 4294901760
  %v1349 = vsub.f32 %v960, %v1348
  %v1350 = vand.u32 %v1349, 4294901760
  %1351 = vmatpush1.msra.mxu0 %v1350
  %1352 = vmatprep.subr.mxu0 0.0
  %1353 = vmatpush1.msra.mxu0 0.0
  %1354 = vmatprep.subr.mxu0 0.0
  %1355 = vmatpush1.msra.mxu0 0.0
  %1356 = vmatprep.subr.mxu0 0.0
  %1357 = vmatpush1.msra.mxu0 0.0
  %1358 = vmatprep.subr.mxu0 0.0
  %1359 = vmatpush1.msra.mxu0 0.0
  %1360 = vmatprep.subr.mxu0 0.0
  %1361 = vmatpush1.msra.mxu0 0.0
  %1362 = vmatprep.subr.mxu0 0.0
  %1363 = vmatpush1.msra.mxu0 0.0
  %1364 = vmatprep.subr.mxu0 0.0
  %1365 = vmatpush1.msra.mxu0 0.0
  %1366 = vmatprep.subr.mxu0 0.0
  %1367 = vmatpush1.msra.mxu0 0.0
  %1368 = vmatprep.subr.mxu0 0.0
  %1369 = vmatpush1.msra.mxu0 0.0
  %1370 = vmatprep.subr.mxu0 0.0
  %1371 = vmatpush1.msra.mxu0 0.0
  %1372 = vmatprep.subr.mxu0 0.0
  %1373 = vmatpush1.msra.mxu0 0.0
  %1374 = vmatprep.subr.mxu0 0.0
  %1375 = vmatpush1.msra.mxu0 0.0
  %1376 = vmatprep.subr.mxu0 0.0
  %1377 = vmatpush1.msra.mxu0 0.0
  %1378 = vmatprep.subr.mxu0 0.0
  %1379 = vmatpush1.msra.mxu0 0.0
  %1380 = vmatprep.subr.mxu0 0.0
  %1381 = vmatpush1.msra.mxu0 0.0
  %1382 = vmatprep.subr.mxu0 0.0
  %1383 = vmatpush1.msra.mxu0 0.0
  %1384 = vmatprep.subr.mxu0 0.0
  %1385 = vmatpush1.msra.mxu0 0.0
  %1386 = vmatprep.subr.mxu0 0.0
  %1387 = vmatpush1.msra.mxu0 0.0
  %1388 = vmatprep.subr.mxu0 0.0
  %1389 = vmatpush1.msra.mxu0 0.0
  %1390 = vmatprep.subr.mxu0 0.0
  %1391 = vmatpush1.msra.mxu0 0.0
  %1392 = vmatprep.subr.mxu0 0.0
  %1393 = vmatpush1.msra.mxu0 0.0
  %1394 = vmatprep.subr.mxu0 0.0
  %1395 = vmatpush1.msra.mxu0 0.0
  %1396 = vmatprep.subr.mxu0 0.0
  %1397 = vmatpush1.msra.mxu0 0.0
  %1398 = vmatprep.subr.mxu0 0.0
  %1399 = vmatpush1.msra.mxu0 0.0
  %1400 = vmatprep.subr.mxu0 0.0
  %1401 = vmatpush1.msra.mxu0 0.0
  %1402 = vmatprep.subr.mxu0 0.0
  %1403 = vmatpush1.msra.mxu0 0.0
  %1404 = vmatprep.subr.mxu0 0.0
  %1405 = vmatpush1.msra.mxu0 0.0
  %1406 = vmatprep.subr.mxu0 0.0
  %1407 = vmatpush1.msra.mxu0 0.0
  %1408 = vmatprep.mubr.f32.mxu0 0.0
  %v1409 = vand.u32 %v969, 4294901760
  %1410 = vmatmul.mubr.f32.gmra.mrb[0].mxu0 %v1409
  %v1411 = vpop.f32.mrb[0].mxu0
  %v1412 = vadd.f32 %v1321, %v1411
  %v1413 = vpop.f32.mrb[0].mxu0
  %1414 = vmatprep.mubr.f32.mxu0 0.0
  %v1415 = vand.u32 %v972, 4294901760
  %1416 = vmatmul.mubr.f32.gmra.mrb[0].mxu0 %v1415
  %v1417 = vpop.f32.mrb[0].mxu0
  %v1418 = vadd.f32 %v1329, %v1417
  %v1419 = vpop.f32.mrb[0].mxu0
  %1420 = vdwg.mxu0
  %1421 = vmatprep.subr.mxu0 0.0
  %v1422 = vand.u32 %v957, 4294901760
  %1423 = vmatpush1.msra.mxu0 %v1422
  %1424 = vmatprep.subr.mxu0 0.0
  %v1425 = vand.u32 %v958, 4294901760
  %1426 = vmatpush1.msra.mxu0 %v1425
  %1427 = vmatprep.subr.mxu0 0.0
  %v1428 = vand.u32 %v959, 4294901760
  %1429 = vmatpush1.msra.mxu0 %v1428
  %1430 = vmatprep.subr.mxu0 0.0
  %v1431 = vand.u32 %v960, 4294901760
  %1432 = vmatpush1.msra.mxu0 %v1431
  %1433 = vmatprep.subr.mxu0 0.0
  %1434 = vmatpush1.msra.mxu0 0.0
  %1435 = vmatprep.subr.mxu0 0.0
  %1436 = vmatpush1.msra.mxu0 0.0
  %1437 = vmatprep.subr.mxu0 0.0
  %1438 = vmatpush1.msra.mxu0 0.0
  %1439 = vmatprep.subr.mxu0 0.0
  %1440 = vmatpush1.msra.mxu0 0.0
  %1441 = vmatprep.subr.mxu0 0.0
  %1442 = vmatpush1.msra.mxu0 0.0
  %1443 = vmatprep.subr.mxu0 0.0
  %1444 = vmatpush1.msra.mxu0 0.0
  %1445 = vmatprep.subr.mxu0 0.0
  %1446 = vmatpush1.msra.mxu0 0.0
  %1447 = vmatprep.subr.mxu0 0.0
  %1448 = vmatpush1.msra.mxu0 0.0
  %1449 = vmatprep.subr.mxu0 0.0
  %1450 = vmatpush1.msra.mxu0 0.0
  %1451 = vmatprep.subr.mxu0 0.0
  %1452 = vmatpush1.msra.mxu0 0.0
  %1453 = vmatprep.subr.mxu0 0.0
  %1454 = vmatpush1.msra.mxu0 0.0
  %1455 = vmatprep.subr.mxu0 0.0
  %1456 = vmatpush1.msra.mxu0 0.0
  %1457 = vmatprep.subr.mxu0 0.0
  %1458 = vmatpush1.msra.mxu0 0.0
  %1459 = vmatprep.subr.mxu0 0.0
  %1460 = vmatpush1.msra.mxu0 0.0
  %1461 = vmatprep.subr.mxu0 0.0
  %1462 = vmatpush1.msra.mxu0 0.0
  %1463 = vmatprep.subr.mxu0 0.0
  %1464 = vmatpush1.msra.mxu0 0.0
  %1465 = vmatprep.subr.mxu0 0.0
  %1466 = vmatpush1.msra.mxu0 0.0
  %1467 = vmatprep.subr.mxu0 0.0
  %1468 = vmatpush1.msra.mxu0 0.0
  %1469 = vmatprep.subr.mxu0 0.0
  %1470 = vmatpush1.msra.mxu0 0.0
  %1471 = vmatprep.subr.mxu0 0.0
  %1472 = vmatpush1.msra.mxu0 0.0
  %1473 = vmatprep.subr.mxu0 0.0
  %1474 = vmatpush1.msra.mxu0 0.0
  %1475 = vmatprep.subr.mxu0 0.0
  %1476 = vmatpush1.msra.mxu0 0.0
  %1477 = vmatprep.subr.mxu0 0.0
  %1478 = vmatpush1.msra.mxu0 0.0
  %1479 = vmatprep.subr.mxu0 0.0
  %1480 = vmatpush1.msra.mxu0 0.0
  %1481 = vmatprep.subr.mxu0 0.0
  %1482 = vmatpush1.msra.mxu0 0.0
  %1483 = vmatprep.subr.mxu0 0.0
  %1484 = vmatpush1.msra.mxu0 0.0
  %1485 = vmatprep.subr.mxu0 0.0
  %1486 = vmatpush1.msra.mxu0 0.0
  %1487 = vmatprep.subr.mxu0 0.0
  %1488 = vmatpush1.msra.mxu0 0.0
  %1489 = vmatprep.mubr.f32.mxu0 0.0
  %v1490 = vand.u32 %v969, 4294901760
  %1491 = vmatmul.mubr.f32.gmra.mrb[0].mxu0 %v1490
  %v1492 = vpop.f32.mrb[0].mxu0
  %v1493 = vadd.f32 %v1412, %v1492
  %v1494 = vpop.f32.mrb[0].mxu0
  %1495 = vmatprep.mubr.f32.mxu0 0.0
  %v1496 = vand.u32 %v972, 4294901760
  %1497 = vmatmul.mubr.f32.gmra.mrb[0].mxu0 %v1496
  %v1498 = vpop.f32.mrb[0].mxu0
  %v1499 = vadd.f32 %v1418, %v1498
  %v1500 = vpop.f32.mrb[0].mxu0
  %1501 = vdwg.mxu0
  %1504 = vrot.lane.b32.xlu0 %v1493, 96
  %v1505 = vpop.permute.xlu0 %1504
  %1506 = vrot.lane.b32.xlu0 %v1499, 96
  %v1507 = vpop.permute.xlu0 %1506
  %vm1508 = vcmask 130048
  %v1509 = vsel %vm1508, %v1493, 0
  %v1511 = vsel %vm1508, %v1499, 0
  %v1513 = vsel %vm1508, %v1505, 0
  %v1515 = vsel %vm1508, %v1507, 0
  %1517 = vmatprep.subr.mxu0 0.0
  %v1518 = vand.u32 %v1513, 4294901760
  %1519 = vmatpush1.xpose.msra.mxu0 %v1518
  %1520 = vmatprep.subr.mxu0 0.0
  %v1521 = vand.u32 %v1515, 4294901760
  %1522 = vmatpush1.xpose.msra.mxu0 %v1521
  %1523 = vmatprep.subr.mxu0 0.0
  %1524 = vmatpush1.xpose.msra.mxu0 0.0
  %1525 = vmatprep.subr.mxu0 0.0
  %1526 = vmatpush1.xpose.msra.mxu0 0.0
  %1527 = vmatprep.subr.mxu0 0.0
  %1528 = vmatpush1.xpose.msra.mxu0 0.0
  %1529 = vmatprep.subr.mxu0 0.0
  %1530 = vmatpush1.xpose.msra.mxu0 0.0
  %1531 = vmatprep.subr.mxu0 0.0
  %1532 = vmatpush1.xpose.msra.mxu0 0.0
  %1533 = vmatprep.subr.mxu0 0.0
  %1534 = vmatpush1.xpose.msra.mxu0 0.0
  %1535 = vmatprep.subr.mxu0 0.0
  %1536 = vmatpush1.xpose.msra.mxu0 0.0
  %1537 = vmatprep.subr.mxu0 0.0
  %1538 = vmatpush1.xpose.msra.mxu0 0.0
  %1539 = vmatprep.subr.mxu0 0.0
  %1540 = vmatpush1.xpose.msra.mxu0 0.0
  %1541 = vmatprep.subr.mxu0 0.0
  %1542 = vmatpush1.xpose.msra.mxu0 0.0
  %1543 = vmatprep.subr.mxu0 0.0
  %1544 = vmatpush1.xpose.msra.mxu0 0.0
  %1545 = vmatprep.subr.mxu0 0.0
  %1546 = vmatpush1.xpose.msra.mxu0 0.0
  %1547 = vmatprep.subr.mxu0 0.0
  %1548 = vmatpush1.xpose.msra.mxu0 0.0
  %1549 = vmatprep.subr.mxu0 0.0
  %1550 = vmatpush1.xpose.msra.mxu0 0.0
  %1551 = vmatprep.subr.mxu0 0.0
  %1552 = vmatpush1.xpose.msra.mxu0 0.0
  %1553 = vmatprep.subr.mxu0 0.0
  %1554 = vmatpush1.xpose.msra.mxu0 0.0
  %1555 = vmatprep.subr.mxu0 0.0
  %1556 = vmatpush1.xpose.msra.mxu0 0.0
  %1557 = vmatprep.subr.mxu0 0.0
  %1558 = vmatpush1.xpose.msra.mxu0 0.0
  %1559 = vmatprep.subr.mxu0 0.0
  %1560 = vmatpush1.xpose.msra.mxu0 0.0
  %1561 = vmatprep.subr.mxu0 0.0
  %1562 = vmatpush1.xpose.msra.mxu0 0.0
  %1563 = vmatprep.subr.mxu0 0.0
  %1564 = vmatpush1.xpose.msra.mxu0 0.0
  %1565 = vmatprep.subr.mxu0 0.0
  %1566 = vmatpush1.xpose.msra.mxu0 0.0
  %1567 = vmatprep.subr.mxu0 0.0
  %1568 = vmatpush1.xpose.msra.mxu0 0.0
  %1569 = vmatprep.subr.mxu0 0.0
  %1570 = vmatpush1.xpose.msra.mxu0 0.0
  %1571 = vmatprep.subr.mxu0 0.0
  %1572 = vmatpush1.xpose.msra.mxu0 0.0
  %1573 = vmatprep.subr.mxu0 0.0
  %1574 = vmatpush1.xpose.msra.mxu0 0.0
  %1575 = vmatprep.subr.mxu0 0.0
  %1576 = vmatpush1.xpose.msra.mxu0 0.0
  %1577 = vmatprep.subr.mxu0 0.0
  %1578 = vmatpush1.xpose.msra.mxu0 0.0
  %1579 = vmatprep.subr.mxu0 0.0
  %1580 = vmatpush1.xpose.msra.mxu0 0.0
  %1581 = vmatprep.subr.mxu0 0.0
  %1582 = vmatpush1.xpose.msra.mxu0 0.0
  %1583 = vmatprep.mubr.f32.mxu0 0.0
  %v1584 = vand.u32 %v1509, 4294901760
  %v1585 = vsub.f32 %v1509, %v1584
  %v1586 = vand.u32 %v1585, 4294901760
  %v1587 = vsub.f32 %v1585, %v1586
  %v1588 = vand.u32 %v1587, 4294901760
  %1589 = vmatmul.mubr.f32.gmra.mrb[0].mxu0 %v1588
  %v1590 = vpop.f32.mrb[0].mxu0
  %v1591 = vadd.f32 0.0, %v1590
  %v1592 = vpop.f32.mrb[0].mxu0
  %1593 = vmatprep.mubr.f32.mxu0 0.0
  %v1594 = vand.u32 %v1511, 4294901760
  %v1595 = vsub.f32 %v1511, %v1594
  %v1596 = vand.u32 %v1595, 4294901760
  %v1597 = vsub.f32 %v1595, %v1596
  %v1598 = vand.u32 %v1597, 4294901760
  %1599 = vmatmul.mubr.f32.gmra.mrb[0].mxu0 %v1598
  %v1600 = vpop.f32.mrb[0].mxu0
  %v1601 = vadd.f32 0.0, %v1600
  %v1602 = vpop.f32.mrb[0].mxu0
  %1603 = vdwg.mxu0
  %1604 = vmatprep.subr.mxu0 0.0
  %v1605 = vand.u32 %v1513, 4294901760
  %v1606 = vsub.f32 %v1513, %v1605
  %v1607 = vand.u32 %v1606, 4294901760
  %v1608 = vsub.f32 %v1606, %v1607
  %v1609 = vand.u32 %v1608, 4294901760
  %1610 = vmatpush1.xpose.msra.mxu0 %v1609
  %1611 = vmatprep.subr.mxu0 0.0
  %v1612 = vand.u32 %v1515, 4294901760
  %v1613 = vsub.f32 %v1515, %v1612
  %v1614 = vand.u32 %v1613, 4294901760
  %v1615 = vsub.f32 %v1613, %v1614
  %v1616 = vand.u32 %v1615, 4294901760
  %1617 = vmatpush1.xpose.msra.mxu0 %v1616
  %1618 = vmatprep.subr.mxu0 0.0
  %1619 = vmatpush1.xpose.msra.mxu0 0.0
  %1620 = vmatprep.subr.mxu0 0.0
  %1621 = vmatpush1.xpose.msra.mxu0 0.0
  %1622 = vmatprep.subr.mxu0 0.0
  %1623 = vmatpush1.xpose.msra.mxu0 0.0
  %1624 = vmatprep.subr.mxu0 0.0
  %1625 = vmatpush1.xpose.msra.mxu0 0.0
  %1626 = vmatprep.subr.mxu0 0.0
  %1627 = vmatpush1.xpose.msra.mxu0 0.0
  %1628 = vmatprep.subr.mxu0 0.0
  %1629 = vmatpush1.xpose.msra.mxu0 0.0
  %1630 = vmatprep.subr.mxu0 0.0
  %1631 = vmatpush1.xpose.msra.mxu0 0.0
  %1632 = vmatprep.subr.mxu0 0.0
  %1633 = vmatpush1.xpose.msra.mxu0 0.0
  %1634 = vmatprep.subr.mxu0 0.0
  %1635 = vmatpush1.xpose.msra.mxu0 0.0
  %1636 = vmatprep.subr.mxu0 0.0
  %1637 = vmatpush1.xpose.msra.mxu0 0.0
  %1638 = vmatprep.subr.mxu0 0.0
  %1639 = vmatpush1.xpose.msra.mxu0 0.0
  %1640 = vmatprep.subr.mxu0 0.0
  %1641 = vmatpush1.xpose.msra.mxu0 0.0
  %1642 = vmatprep.subr.mxu0 0.0
  %1643 = vmatpush1.xpose.msra.mxu0 0.0
  %1644 = vmatprep.subr.mxu0 0.0
  %1645 = vmatpush1.xpose.msra.mxu0 0.0
  %1646 = vmatprep.subr.mxu0 0.0
  %1647 = vmatpush1.xpose.msra.mxu0 0.0
  %1648 = vmatprep.subr.mxu0 0.0
  %1649 = vmatpush1.xpose.msra.mxu0 0.0
  %1650 = vmatprep.subr.mxu0 0.0
  %1651 = vmatpush1.xpose.msra.mxu0 0.0
  %1652 = vmatprep.subr.mxu0 0.0
  %1653 = vmatpush1.xpose.msra.mxu0 0.0
  %1654 = vmatprep.subr.mxu0 0.0
  %1655 = vmatpush1.xpose.msra.mxu0 0.0
  %1656 = vmatprep.subr.mxu0 0.0
  %1657 = vmatpush1.xpose.msra.mxu0 0.0
  %1658 = vmatprep.subr.mxu0 0.0
  %1659 = vmatpush1.xpose.msra.mxu0 0.0
  %1660 = vmatprep.subr.mxu0 0.0
  %1661 = vmatpush1.xpose.msra.mxu0 0.0
  %1662 = vmatprep.subr.mxu0 0.0
  %1663 = vmatpush1.xpose.msra.mxu0 0.0
  %1664 = vmatprep.subr.mxu0 0.0
  %1665 = vmatpush1.xpose.msra.mxu0 0.0
  %1666 = vmatprep.subr.mxu0 0.0
  %1667 = vmatpush1.xpose.msra.mxu0 0.0
  %1668 = vmatprep.subr.mxu0 0.0
  %1669 = vmatpush1.xpose.msra.mxu0 0.0
  %1670 = vmatprep.subr.mxu0 0.0
  %1671 = vmatpush1.xpose.msra.mxu0 0.0
  %1672 = vmatprep.subr.mxu0 0.0
  %1673 = vmatpush1.xpose.msra.mxu0 0.0
  %1674 = vmatprep.subr.mxu0 0.0
  %1675 = vmatpush1.xpose.msra.mxu0 0.0
  %1676 = vmatprep.subr.mxu0 0.0
  %1677 = vmatpush1.xpose.msra.mxu0 0.0
  %1678 = vmatprep.mubr.f32.mxu0 0.0
  %v1679 = vand.u32 %v1509, 4294901760
  %1680 = vmatmul.mubr.f32.gmra.mrb[0].mxu0 %v1679
  %v1681 = vpop.f32.mrb[0].mxu0
  %v1682 = vadd.f32 %v1591, %v1681
  %v1683 = vpop.f32.mrb[0].mxu0
  %1684 = vmatprep.mubr.f32.mxu0 0.0
  %v1685 = vand.u32 %v1511, 4294901760
  %1686 = vmatmul.mubr.f32.gmra.mrb[0].mxu0 %v1685
  %v1687 = vpop.f32.mrb[0].mxu0
  %v1688 = vadd.f32 %v1601, %v1687
  %v1689 = vpop.f32.mrb[0].mxu0
  %1690 = vdwg.mxu0
  %1691 = vmatprep.subr.mxu0 0.0
  %v1692 = vand.u32 %v1513, 4294901760
  %v1693 = vsub.f32 %v1513, %v1692
  %1694 = vmatpush1.xpose.msra.mxu0 %v1693
  %1695 = vmatprep.subr.mxu0 0.0
  %v1696 = vand.u32 %v1515, 4294901760
  %v1697 = vsub.f32 %v1515, %v1696
  %1698 = vmatpush1.xpose.msra.mxu0 %v1697
  %1699 = vmatprep.subr.mxu0 0.0
  %1700 = vmatpush1.xpose.msra.mxu0 0.0
  %1701 = vmatprep.subr.mxu0 0.0
  %1702 = vmatpush1.xpose.msra.mxu0 0.0
  %1703 = vmatprep.subr.mxu0 0.0
  %1704 = vmatpush1.xpose.msra.mxu0 0.0
  %1705 = vmatprep.subr.mxu0 0.0
  %1706 = vmatpush1.xpose.msra.mxu0 0.0
  %1707 = vmatprep.subr.mxu0 0.0
  %1708 = vmatpush1.xpose.msra.mxu0 0.0
  %1709 = vmatprep.subr.mxu0 0.0
  %1710 = vmatpush1.xpose.msra.mxu0 0.0
  %1711 = vmatprep.subr.mxu0 0.0
  %1712 = vmatpush1.xpose.msra.mxu0 0.0
  %1713 = vmatprep.subr.mxu0 0.0
  %1714 = vmatpush1.xpose.msra.mxu0 0.0
  %1715 = vmatprep.subr.mxu0 0.0
  %1716 = vmatpush1.xpose.msra.mxu0 0.0
  %1717 = vmatprep.subr.mxu0 0.0
  %1718 = vmatpush1.xpose.msra.mxu0 0.0
  %1719 = vmatprep.subr.mxu0 0.0
  %1720 = vmatpush1.xpose.msra.mxu0 0.0
  %1721 = vmatprep.subr.mxu0 0.0
  %1722 = vmatpush1.xpose.msra.mxu0 0.0
  %1723 = vmatprep.subr.mxu0 0.0
  %1724 = vmatpush1.xpose.msra.mxu0 0.0
  %1725 = vmatprep.subr.mxu0 0.0
  %1726 = vmatpush1.xpose.msra.mxu0 0.0
  %1727 = vmatprep.subr.mxu0 0.0
  %1728 = vmatpush1.xpose.msra.mxu0 0.0
  %1729 = vmatprep.subr.mxu0 0.0
  %1730 = vmatpush1.xpose.msra.mxu0 0.0
  %1731 = vmatprep.subr.mxu0 0.0
  %1732 = vmatpush1.xpose.msra.mxu0 0.0
  %1733 = vmatprep.subr.mxu0 0.0
  %1734 = vmatpush1.xpose.msra.mxu0 0.0
  %1735 = vmatprep.subr.mxu0 0.0
  %1736 = vmatpush1.xpose.msra.mxu0 0.0
  %1737 = vmatprep.subr.mxu0 0.0
  %1738 = vmatpush1.xpose.msra.mxu0 0.0
  %1739 = vmatprep.subr.mxu0 0.0
  %1740 = vmatpush1.xpose.msra.mxu0 0.0
  %1741 = vmatprep.subr.mxu0 0.0
  %1742 = vmatpush1.xpose.msra.mxu0 0.0
  %1743 = vmatprep.subr.mxu0 0.0
  %1744 = vmatpush1.xpose.msra.mxu0 0.0
  %1745 = vmatprep.subr.mxu0 0.0
  %1746 = vmatpush1.xpose.msra.mxu0 0.0
  %1747 = vmatprep.subr.mxu0 0.0
  %1748 = vmatpush1.xpose.msra.mxu0 0.0
  %1749 = vmatprep.subr.mxu0 0.0
  %1750 = vmatpush1.xpose.msra.mxu0 0.0
  %1751 = vmatprep.subr.mxu0 0.0
  %1752 = vmatpush1.xpose.msra.mxu0 0.0
  %1753 = vmatprep.subr.mxu0 0.0
  %1754 = vmatpush1.xpose.msra.mxu0 0.0
  %1755 = vmatprep.subr.mxu0 0.0
  %1756 = vmatpush1.xpose.msra.mxu0 0.0
  %1757 = vmatprep.subr.mxu0 0.0
  %1758 = vmatpush1.xpose.msra.mxu0 0.0
  %1759 = vmatprep.mubr.f32.mxu0 0.0
  %v1760 = vand.u32 %v1509, 4294901760
  %v1761 = vsub.f32 %v1509, %v1760
  %1762 = vmatmul.mubr.f32.gmra.mrb[0].mxu0 %v1761
  %v1763 = vpop.f32.mrb[0].mxu0
  %v1764 = vadd.f32 %v1682, %v1763
  %v1765 = vpop.f32.mrb[0].mxu0
  %1766 = vmatprep.mubr.f32.mxu0 0.0
  %v1767 = vand.u32 %v1511, 4294901760
  %v1768 = vsub.f32 %v1511, %v1767
  %1769 = vmatmul.mubr.f32.gmra.mrb[0].mxu0 %v1768
  %v1770 = vpop.f32.mrb[0].mxu0
  %v1771 = vadd.f32 %v1688, %v1770
  %v1772 = vpop.f32.mrb[0].mxu0
  %1773 = vdwg.mxu0
  %1774 = vmatprep.subr.mxu0 0.0
  %v1775 = vand.u32 %v1513, 4294901760
  %1776 = vmatpush1.xpose.msra.mxu0 %v1775
  %1777 = vmatprep.subr.mxu0 0.0
  %v1778 = vand.u32 %v1515, 4294901760
  %1779 = vmatpush1.xpose.msra.mxu0 %v1778
  %1780 = vmatprep.subr.mxu0 0.0
  %1781 = vmatpush1.xpose.msra.mxu0 0.0
  %1782 = vmatprep.subr.mxu0 0.0
  %1783 = vmatpush1.xpose.msra.mxu0 0.0
  %1784 = vmatprep.subr.mxu0 0.0
  %1785 = vmatpush1.xpose.msra.mxu0 0.0
  %1786 = vmatprep.subr.mxu0 0.0
  %1787 = vmatpush1.xpose.msra.mxu0 0.0
  %1788 = vmatprep.subr.mxu0 0.0
  %1789 = vmatpush1.xpose.msra.mxu0 0.0
  %1790 = vmatprep.subr.mxu0 0.0
  %1791 = vmatpush1.xpose.msra.mxu0 0.0
  %1792 = vmatprep.subr.mxu0 0.0
  %1793 = vmatpush1.xpose.msra.mxu0 0.0
  %1794 = vmatprep.subr.mxu0 0.0
  %1795 = vmatpush1.xpose.msra.mxu0 0.0
  %1796 = vmatprep.subr.mxu0 0.0
  %1797 = vmatpush1.xpose.msra.mxu0 0.0
  %1798 = vmatprep.subr.mxu0 0.0
  %1799 = vmatpush1.xpose.msra.mxu0 0.0
  %1800 = vmatprep.subr.mxu0 0.0
  %1801 = vmatpush1.xpose.msra.mxu0 0.0
  %1802 = vmatprep.subr.mxu0 0.0
  %1803 = vmatpush1.xpose.msra.mxu0 0.0
  %1804 = vmatprep.subr.mxu0 0.0
  %1805 = vmatpush1.xpose.msra.mxu0 0.0
  %1806 = vmatprep.subr.mxu0 0.0
  %1807 = vmatpush1.xpose.msra.mxu0 0.0
  %1808 = vmatprep.subr.mxu0 0.0
  %1809 = vmatpush1.xpose.msra.mxu0 0.0
  %1810 = vmatprep.subr.mxu0 0.0
  %1811 = vmatpush1.xpose.msra.mxu0 0.0
  %1812 = vmatprep.subr.mxu0 0.0
  %1813 = vmatpush1.xpose.msra.mxu0 0.0
  %1814 = vmatprep.subr.mxu0 0.0
  %1815 = vmatpush1.xpose.msra.mxu0 0.0
  %1816 = vmatprep.subr.mxu0 0.0
  %1817 = vmatpush1.xpose.msra.mxu0 0.0
  %1818 = vmatprep.subr.mxu0 0.0
  %1819 = vmatpush1.xpose.msra.mxu0 0.0
  %1820 = vmatprep.subr.mxu0 0.0
  %1821 = vmatpush1.xpose.msra.mxu0 0.0
  %1822 = vmatprep.subr.mxu0 0.0
  %1823 = vmatpush1.xpose.msra.mxu0 0.0
  %1824 = vmatprep.subr.mxu0 0.0
  %1825 = vmatpush1.xpose.msra.mxu0 0.0
  %1826 = vmatprep.subr.mxu0 0.0
  %1827 = vmatpush1.xpose.msra.mxu0 0.0
  %1828 = vmatprep.subr.mxu0 0.0
  %1829 = vmatpush1.xpose.msra.mxu0 0.0
  %1830 = vmatprep.subr.mxu0 0.0
  %1831 = vmatpush1.xpose.msra.mxu0 0.0
  %1832 = vmatprep.subr.mxu0 0.0
  %1833 = vmatpush1.xpose.msra.mxu0 0.0
  %1834 = vmatprep.subr.mxu0 0.0
  %1835 = vmatpush1.xpose.msra.mxu0 0.0
  %1836 = vmatprep.subr.mxu0 0.0
  %1837 = vmatpush1.xpose.msra.mxu0 0.0
  %1838 = vmatprep.subr.mxu0 0.0
  %1839 = vmatpush1.xpose.msra.mxu0 0.0
  %1840 = vmatprep.mubr.f32.mxu0 0.0
  %v1841 = vand.u32 %v1509, 4294901760
  %v1842 = vsub.f32 %v1509, %v1841
  %v1843 = vand.u32 %v1842, 4294901760
  %1844 = vmatmul.mubr.f32.gmra.mrb[0].mxu0 %v1843
  %v1845 = vpop.f32.mrb[0].mxu0
  %v1846 = vadd.f32 %v1764, %v1845
  %v1847 = vpop.f32.mrb[0].mxu0
  %1848 = vmatprep.mubr.f32.mxu0 0.0
  %v1849 = vand.u32 %v1511, 4294901760
  %v1850 = vsub.f32 %v1511, %v1849
  %v1851 = vand.u32 %v1850, 4294901760
  %1852 = vmatmul.mubr.f32.gmra.mrb[0].mxu0 %v1851
  %v1853 = vpop.f32.mrb[0].mxu0
  %v1854 = vadd.f32 %v1771, %v1853
  %v1855 = vpop.f32.mrb[0].mxu0
  %1856 = vdwg.mxu0
  %1857 = vmatprep.subr.mxu0 0.0
  %v1858 = vand.u32 %v1513, 4294901760
  %v1859 = vsub.f32 %v1513, %v1858
  %v1860 = vand.u32 %v1859, 4294901760
  %1861 = vmatpush1.xpose.msra.mxu0 %v1860
  %1862 = vmatprep.subr.mxu0 0.0
  %v1863 = vand.u32 %v1515, 4294901760
  %v1864 = vsub.f32 %v1515, %v1863
  %v1865 = vand.u32 %v1864, 4294901760
  %1866 = vmatpush1.xpose.msra.mxu0 %v1865
  %1867 = vmatprep.subr.mxu0 0.0
  %1868 = vmatpush1.xpose.msra.mxu0 0.0
  %1869 = vmatprep.subr.mxu0 0.0
  %1870 = vmatpush1.xpose.msra.mxu0 0.0
  %1871 = vmatprep.subr.mxu0 0.0
  %1872 = vmatpush1.xpose.msra.mxu0 0.0
  %1873 = vmatprep.subr.mxu0 0.0
  %1874 = vmatpush1.xpose.msra.mxu0 0.0
  %1875 = vmatprep.subr.mxu0 0.0
  %1876 = vmatpush1.xpose.msra.mxu0 0.0
  %1877 = vmatprep.subr.mxu0 0.0
  %1878 = vmatpush1.xpose.msra.mxu0 0.0
  %1879 = vmatprep.subr.mxu0 0.0
  %1880 = vmatpush1.xpose.msra.mxu0 0.0
  %1881 = vmatprep.subr.mxu0 0.0
  %1882 = vmatpush1.xpose.msra.mxu0 0.0
  %1883 = vmatprep.subr.mxu0 0.0
  %1884 = vmatpush1.xpose.msra.mxu0 0.0
  %1885 = vmatprep.subr.mxu0 0.0
  %1886 = vmatpush1.xpose.msra.mxu0 0.0
  %1887 = vmatprep.subr.mxu0 0.0
  %1888 = vmatpush1.xpose.msra.mxu0 0.0
  %1889 = vmatprep.subr.mxu0 0.0
  %1890 = vmatpush1.xpose.msra.mxu0 0.0
  %1891 = vmatprep.subr.mxu0 0.0
  %1892 = vmatpush1.xpose.msra.mxu0 0.0
  %1893 = vmatprep.subr.mxu0 0.0
  %1894 = vmatpush1.xpose.msra.mxu0 0.0
  %1895 = vmatprep.subr.mxu0 0.0
  %1896 = vmatpush1.xpose.msra.mxu0 0.0
  %1897 = vmatprep.subr.mxu0 0.0
  %1898 = vmatpush1.xpose.msra.mxu0 0.0
  %1899 = vmatprep.subr.mxu0 0.0
  %1900 = vmatpush1.xpose.msra.mxu0 0.0
  %1901 = vmatprep.subr.mxu0 0.0
  %1902 = vmatpush1.xpose.msra.mxu0 0.0
  %1903 = vmatprep.subr.mxu0 0.0
  %1904 = vmatpush1.xpose.msra.mxu0 0.0
  %1905 = vmatprep.subr.mxu0 0.0
  %1906 = vmatpush1.xpose.msra.mxu0 0.0
  %1907 = vmatprep.subr.mxu0 0.0
  %1908 = vmatpush1.xpose.msra.mxu0 0.0
  %1909 = vmatprep.subr.mxu0 0.0
  %1910 = vmatpush1.xpose.msra.mxu0 0.0
  %1911 = vmatprep.subr.mxu0 0.0
  %1912 = vmatpush1.xpose.msra.mxu0 0.0
  %1913 = vmatprep.subr.mxu0 0.0
  %1914 = vmatpush1.xpose.msra.mxu0 0.0
  %1915 = vmatprep.subr.mxu0 0.0
  %1916 = vmatpush1.xpose.msra.mxu0 0.0
  %1917 = vmatprep.subr.mxu0 0.0
  %1918 = vmatpush1.xpose.msra.mxu0 0.0
  %1919 = vmatprep.subr.mxu0 0.0
  %1920 = vmatpush1.xpose.msra.mxu0 0.0
  %1921 = vmatprep.subr.mxu0 0.0
  %1922 = vmatpush1.xpose.msra.mxu0 0.0
  %1923 = vmatprep.subr.mxu0 0.0
  %1924 = vmatpush1.xpose.msra.mxu0 0.0
  %1925 = vmatprep.subr.mxu0 0.0
  %1926 = vmatpush1.xpose.msra.mxu0 0.0
  %1927 = vmatprep.mubr.f32.mxu0 0.0
  %v1928 = vand.u32 %v1509, 4294901760
  %1929 = vmatmul.mubr.f32.gmra.mrb[0].mxu0 %v1928
  %v1930 = vpop.f32.mrb[0].mxu0
  %v1931 = vadd.f32 %v1846, %v1930
  %v1932 = vpop.f32.mrb[0].mxu0
  %1933 = vmatprep.mubr.f32.mxu0 0.0
  %v1934 = vand.u32 %v1511, 4294901760
  %1935 = vmatmul.mubr.f32.gmra.mrb[0].mxu0 %v1934
  %v1936 = vpop.f32.mrb[0].mxu0
  %v1937 = vadd.f32 %v1854, %v1936
  %v1938 = vpop.f32.mrb[0].mxu0
  %1939 = vdwg.mxu0
  %1940 = vmatprep.subr.mxu0 0.0
  %v1941 = vand.u32 %v1513, 4294901760
  %1942 = vmatpush1.xpose.msra.mxu0 %v1941
  %1943 = vmatprep.subr.mxu0 0.0
  %v1944 = vand.u32 %v1515, 4294901760
  %1945 = vmatpush1.xpose.msra.mxu0 %v1944
  %1946 = vmatprep.subr.mxu0 0.0
  %1947 = vmatpush1.xpose.msra.mxu0 0.0
  %1948 = vmatprep.subr.mxu0 0.0
  %1949 = vmatpush1.xpose.msra.mxu0 0.0
  %1950 = vmatprep.subr.mxu0 0.0
  %1951 = vmatpush1.xpose.msra.mxu0 0.0
  %1952 = vmatprep.subr.mxu0 0.0
  %1953 = vmatpush1.xpose.msra.mxu0 0.0
  %1954 = vmatprep.subr.mxu0 0.0
  %1955 = vmatpush1.xpose.msra.mxu0 0.0
  %1956 = vmatprep.subr.mxu0 0.0
  %1957 = vmatpush1.xpose.msra.mxu0 0.0
  %1958 = vmatprep.subr.mxu0 0.0
  %1959 = vmatpush1.xpose.msra.mxu0 0.0
  %1960 = vmatprep.subr.mxu0 0.0
  %1961 = vmatpush1.xpose.msra.mxu0 0.0
  %1962 = vmatprep.subr.mxu0 0.0
  %1963 = vmatpush1.xpose.msra.mxu0 0.0
  %1964 = vmatprep.subr.mxu0 0.0
  %1965 = vmatpush1.xpose.msra.mxu0 0.0
  %1966 = vmatprep.subr.mxu0 0.0
  %1967 = vmatpush1.xpose.msra.mxu0 0.0
  %1968 = vmatprep.subr.mxu0 0.0
  %1969 = vmatpush1.xpose.msra.mxu0 0.0
  %1970 = vmatprep.subr.mxu0 0.0
  %1971 = vmatpush1.xpose.msra.mxu0 0.0
  %1972 = vmatprep.subr.mxu0 0.0
  %1973 = vmatpush1.xpose.msra.mxu0 0.0
  %1974 = vmatprep.subr.mxu0 0.0
  %1975 = vmatpush1.xpose.msra.mxu0 0.0
  %1976 = vmatprep.subr.mxu0 0.0
  %1977 = vmatpush1.xpose.msra.mxu0 0.0
  %1978 = vmatprep.subr.mxu0 0.0
  %1979 = vmatpush1.xpose.msra.mxu0 0.0
  %1980 = vmatprep.subr.mxu0 0.0
  %1981 = vmatpush1.xpose.msra.mxu0 0.0
  %1982 = vmatprep.subr.mxu0 0.0
  %1983 = vmatpush1.xpose.msra.mxu0 0.0
  %1984 = vmatprep.subr.mxu0 0.0
  %1985 = vmatpush1.xpose.msra.mxu0 0.0
  %1986 = vmatprep.subr.mxu0 0.0
  %1987 = vmatpush1.xpose.msra.mxu0 0.0
  %1988 = vmatprep.subr.mxu0 0.0
  %1989 = vmatpush1.xpose.msra.mxu0 0.0
  %1990 = vmatprep.subr.mxu0 0.0
  %1991 = vmatpush1.xpose.msra.mxu0 0.0
  %1992 = vmatprep.subr.mxu0 0.0
  %1993 = vmatpush1.xpose.msra.mxu0 0.0
  %1994 = vmatprep.subr.mxu0 0.0
  %1995 = vmatpush1.xpose.msra.mxu0 0.0
  %1996 = vmatprep.subr.mxu0 0.0
  %1997 = vmatpush1.xpose.msra.mxu0 0.0
  %1998 = vmatprep.subr.mxu0 0.0
  %1999 = vmatpush1.xpose.msra.mxu0 0.0
  %2000 = vmatprep.subr.mxu0 0.0
  %2001 = vmatpush1.xpose.msra.mxu0 0.0
  %2002 = vmatprep.subr.mxu0 0.0
  %2003 = vmatpush1.xpose.msra.mxu0 0.0
  %2004 = vmatprep.subr.mxu0 0.0
  %2005 = vmatpush1.xpose.msra.mxu0 0.0
  %2006 = vmatprep.mubr.f32.mxu0 0.0
  %v2007 = vand.u32 %v1509, 4294901760
  %2008 = vmatmul.mubr.f32.gmra.mrb[0].mxu0 %v2007
  %v2009 = vpop.f32.mrb[0].mxu0
  %v2010 = vadd.f32 %v1931, %v2009
  %v2011 = vpop.f32.mrb[0].mxu0
  %2012 = vmatprep.mubr.f32.mxu0 0.0
  %v2013 = vand.u32 %v1511, 4294901760
  %2014 = vmatmul.mubr.f32.gmra.mrb[0].mxu0 %v2013
  %v2015 = vpop.f32.mrb[0].mxu0
  %v2016 = vadd.f32 %v1937, %v2015
  %v2017 = vpop.f32.mrb[0].mxu0
  %2018 = vdwg.mxu0
  %2019 = vrot.lane.b32.xlu0 %v1493, 112
  %v2020 = vpop.permute.xlu0 %2019
  %2021 = vrot.lane.b32.xlu0 %v1499, 112
  %v2022 = vpop.permute.xlu0 %2021
  %2023 = vrot.lane.b32.xlu0 %v1493, 80
  %v2024 = vpop.permute.xlu0 %2023
  %2025 = vrot.lane.b32.xlu0 %v1499, 80
  %v2026 = vpop.permute.xlu0 %2025
  %v2027 = vsel %vm1508, %v2020, 0
  %v2029 = vsel %vm1508, %v2022, 0
  %v2031 = vsel %vm1508, %v2024, 0
  %v2033 = vsel %vm1508, %v2026, 0
  %2035 = vmatprep.subr.mxu0 0.0
  %v2036 = vand.u32 %v2031, 4294901760
  %2037 = vmatpush1.xpose.msra.mxu0 %v2036
  %2038 = vmatprep.subr.mxu0 0.0
  %v2039 = vand.u32 %v2033, 4294901760
  %2040 = vmatpush1.xpose.msra.mxu0 %v2039
  %2041 = vmatprep.subr.mxu0 0.0
  %2042 = vmatpush1.xpose.msra.mxu0 0.0
  %2043 = vmatprep.subr.mxu0 0.0
  %2044 = vmatpush1.xpose.msra.mxu0 0.0
  %2045 = vmatprep.subr.mxu0 0.0
  %2046 = vmatpush1.xpose.msra.mxu0 0.0
  %2047 = vmatprep.subr.mxu0 0.0
  %2048 = vmatpush1.xpose.msra.mxu0 0.0
  %2049 = vmatprep.subr.mxu0 0.0
  %2050 = vmatpush1.xpose.msra.mxu0 0.0
  %2051 = vmatprep.subr.mxu0 0.0
  %2052 = vmatpush1.xpose.msra.mxu0 0.0
  %2053 = vmatprep.subr.mxu0 0.0
  %2054 = vmatpush1.xpose.msra.mxu0 0.0
  %2055 = vmatprep.subr.mxu0 0.0
  %2056 = vmatpush1.xpose.msra.mxu0 0.0
  %2057 = vmatprep.subr.mxu0 0.0
  %2058 = vmatpush1.xpose.msra.mxu0 0.0
  %2059 = vmatprep.subr.mxu0 0.0
  %2060 = vmatpush1.xpose.msra.mxu0 0.0
  %2061 = vmatprep.subr.mxu0 0.0
  %2062 = vmatpush1.xpose.msra.mxu0 0.0
  %2063 = vmatprep.subr.mxu0 0.0
  %2064 = vmatpush1.xpose.msra.mxu0 0.0
  %2065 = vmatprep.subr.mxu0 0.0
  %2066 = vmatpush1.xpose.msra.mxu0 0.0
  %2067 = vmatprep.subr.mxu0 0.0
  %2068 = vmatpush1.xpose.msra.mxu0 0.0
  %2069 = vmatprep.subr.mxu0 0.0
  %2070 = vmatpush1.xpose.msra.mxu0 0.0
  %2071 = vmatprep.subr.mxu0 0.0
  %2072 = vmatpush1.xpose.msra.mxu0 0.0
  %2073 = vmatprep.subr.mxu0 0.0
  %2074 = vmatpush1.xpose.msra.mxu0 0.0
  %2075 = vmatprep.subr.mxu0 0.0
  %2076 = vmatpush1.xpose.msra.mxu0 0.0
  %2077 = vmatprep.subr.mxu0 0.0
  %2078 = vmatpush1.xpose.msra.mxu0 0.0
  %2079 = vmatprep.subr.mxu0 0.0
  %2080 = vmatpush1.xpose.msra.mxu0 0.0
  %2081 = vmatprep.subr.mxu0 0.0
  %2082 = vmatpush1.xpose.msra.mxu0 0.0
  %2083 = vmatprep.subr.mxu0 0.0
  %2084 = vmatpush1.xpose.msra.mxu0 0.0
  %2085 = vmatprep.subr.mxu0 0.0
  %2086 = vmatpush1.xpose.msra.mxu0 0.0
  %2087 = vmatprep.subr.mxu0 0.0
  %2088 = vmatpush1.xpose.msra.mxu0 0.0
  %2089 = vmatprep.subr.mxu0 0.0
  %2090 = vmatpush1.xpose.msra.mxu0 0.0
  %2091 = vmatprep.subr.mxu0 0.0
  %2092 = vmatpush1.xpose.msra.mxu0 0.0
  %2093 = vmatprep.subr.mxu0 0.0
  %2094 = vmatpush1.xpose.msra.mxu0 0.0
  %2095 = vmatprep.subr.mxu0 0.0
  %2096 = vmatpush1.xpose.msra.mxu0 0.0
  %2097 = vmatprep.subr.mxu0 0.0
  %2098 = vmatpush1.xpose.msra.mxu0 0.0
  %2099 = vmatprep.subr.mxu0 0.0
  %2100 = vmatpush1.xpose.msra.mxu0 0.0
  %2101 = vmatprep.mubr.f32.mxu0 0.0
  %v2102 = vand.u32 %v2027, 4294901760
  %v2103 = vsub.f32 %v2027, %v2102
  %v2104 = vand.u32 %v2103, 4294901760
  %v2105 = vsub.f32 %v2103, %v2104
  %v2106 = vand.u32 %v2105, 4294901760
  %2107 = vmatmul.mubr.f32.gmra.mrb[0].mxu0 %v2106
  %v2108 = vpop.f32.mrb[0].mxu0
  %v2109 = vadd.f32 0.0, %v2108
  %v2110 = vpop.f32.mrb[0].mxu0
  %2111 = vmatprep.mubr.f32.mxu0 0.0
  %v2112 = vand.u32 %v2029, 4294901760
  %v2113 = vsub.f32 %v2029, %v2112
  %v2114 = vand.u32 %v2113, 4294901760
  %v2115 = vsub.f32 %v2113, %v2114
  %v2116 = vand.u32 %v2115, 4294901760
  %2117 = vmatmul.mubr.f32.gmra.mrb[0].mxu0 %v2116
  %v2118 = vpop.f32.mrb[0].mxu0
  %v2119 = vadd.f32 0.0, %v2118
  %v2120 = vpop.f32.mrb[0].mxu0
  %2121 = vdwg.mxu0
  %2122 = vmatprep.subr.mxu0 0.0
  %v2123 = vand.u32 %v2031, 4294901760
  %v2124 = vsub.f32 %v2031, %v2123
  %v2125 = vand.u32 %v2124, 4294901760
  %v2126 = vsub.f32 %v2124, %v2125
  %v2127 = vand.u32 %v2126, 4294901760
  %2128 = vmatpush1.xpose.msra.mxu0 %v2127
  %2129 = vmatprep.subr.mxu0 0.0
  %v2130 = vand.u32 %v2033, 4294901760
  %v2131 = vsub.f32 %v2033, %v2130
  %v2132 = vand.u32 %v2131, 4294901760
  %v2133 = vsub.f32 %v2131, %v2132
  %v2134 = vand.u32 %v2133, 4294901760
  %2135 = vmatpush1.xpose.msra.mxu0 %v2134
  %2136 = vmatprep.subr.mxu0 0.0
  %2137 = vmatpush1.xpose.msra.mxu0 0.0
  %2138 = vmatprep.subr.mxu0 0.0
  %2139 = vmatpush1.xpose.msra.mxu0 0.0
  %2140 = vmatprep.subr.mxu0 0.0
  %2141 = vmatpush1.xpose.msra.mxu0 0.0
  %2142 = vmatprep.subr.mxu0 0.0
  %2143 = vmatpush1.xpose.msra.mxu0 0.0
  %2144 = vmatprep.subr.mxu0 0.0
  %2145 = vmatpush1.xpose.msra.mxu0 0.0
  %2146 = vmatprep.subr.mxu0 0.0
  %2147 = vmatpush1.xpose.msra.mxu0 0.0
  %2148 = vmatprep.subr.mxu0 0.0
  %2149 = vmatpush1.xpose.msra.mxu0 0.0
  %2150 = vmatprep.subr.mxu0 0.0
  %2151 = vmatpush1.xpose.msra.mxu0 0.0
  %2152 = vmatprep.subr.mxu0 0.0
  %2153 = vmatpush1.xpose.msra.mxu0 0.0
  %2154 = vmatprep.subr.mxu0 0.0
  %2155 = vmatpush1.xpose.msra.mxu0 0.0
  %2156 = vmatprep.subr.mxu0 0.0
  %2157 = vmatpush1.xpose.msra.mxu0 0.0
  %2158 = vmatprep.subr.mxu0 0.0
  %2159 = vmatpush1.xpose.msra.mxu0 0.0
  %2160 = vmatprep.subr.mxu0 0.0
  %2161 = vmatpush1.xpose.msra.mxu0 0.0
  %2162 = vmatprep.subr.mxu0 0.0
  %2163 = vmatpush1.xpose.msra.mxu0 0.0
  %2164 = vmatprep.subr.mxu0 0.0
  %2165 = vmatpush1.xpose.msra.mxu0 0.0
  %2166 = vmatprep.subr.mxu0 0.0
  %2167 = vmatpush1.xpose.msra.mxu0 0.0
  %2168 = vmatprep.subr.mxu0 0.0
  %2169 = vmatpush1.xpose.msra.mxu0 0.0
  %2170 = vmatprep.subr.mxu0 0.0
  %2171 = vmatpush1.xpose.msra.mxu0 0.0
  %2172 = vmatprep.subr.mxu0 0.0
  %2173 = vmatpush1.xpose.msra.mxu0 0.0
  %2174 = vmatprep.subr.mxu0 0.0
  %2175 = vmatpush1.xpose.msra.mxu0 0.0
  %2176 = vmatprep.subr.mxu0 0.0
  %2177 = vmatpush1.xpose.msra.mxu0 0.0
  %2178 = vmatprep.subr.mxu0 0.0
  %2179 = vmatpush1.xpose.msra.mxu0 0.0
  %2180 = vmatprep.subr.mxu0 0.0
  %2181 = vmatpush1.xpose.msra.mxu0 0.0
  %2182 = vmatprep.subr.mxu0 0.0
  %2183 = vmatpush1.xpose.msra.mxu0 0.0
  %2184 = vmatprep.subr.mxu0 0.0
  %2185 = vmatpush1.xpose.msra.mxu0 0.0
  %2186 = vmatprep.subr.mxu0 0.0
  %2187 = vmatpush1.xpose.msra.mxu0 0.0
  %2188 = vmatprep.subr.mxu0 0.0
  %2189 = vmatpush1.xpose.msra.mxu0 0.0
  %2190 = vmatprep.subr.mxu0 0.0
  %2191 = vmatpush1.xpose.msra.mxu0 0.0
  %2192 = vmatprep.subr.mxu0 0.0
  %2193 = vmatpush1.xpose.msra.mxu0 0.0
  %2194 = vmatprep.subr.mxu0 0.0
  %2195 = vmatpush1.xpose.msra.mxu0 0.0
  %2196 = vmatprep.mubr.f32.mxu0 0.0
  %v2197 = vand.u32 %v2027, 4294901760
  %2198 = vmatmul.mubr.f32.gmra.mrb[0].mxu0 %v2197
  %v2199 = vpop.f32.mrb[0].mxu0
  %v2200 = vadd.f32 %v2109, %v2199
  %v2201 = vpop.f32.mrb[0].mxu0
  %2202 = vmatprep.mubr.f32.mxu0 0.0
  %v2203 = vand.u32 %v2029, 4294901760
  %2204 = vmatmul.mubr.f32.gmra.mrb[0].mxu0 %v2203
  %v2205 = vpop.f32.mrb[0].mxu0
  %v2206 = vadd.f32 %v2119, %v2205
  %v2207 = vpop.f32.mrb[0].mxu0
  %2208 = vdwg.mxu0
  %2209 = vmatprep.subr.mxu0 0.0
  %v2210 = vand.u32 %v2031, 4294901760
  %v2211 = vsub.f32 %v2031, %v2210
  %2212 = vmatpush1.xpose.msra.mxu0 %v2211
  %2213 = vmatprep.subr.mxu0 0.0
  %v2214 = vand.u32 %v2033, 4294901760
  %v2215 = vsub.f32 %v2033, %v2214
  %2216 = vmatpush1.xpose.msra.mxu0 %v2215
  %2217 = vmatprep.subr.mxu0 0.0
  %2218 = vmatpush1.xpose.msra.mxu0 0.0
  %2219 = vmatprep.subr.mxu0 0.0
  %2220 = vmatpush1.xpose.msra.mxu0 0.0
  %2221 = vmatprep.subr.mxu0 0.0
  %2222 = vmatpush1.xpose.msra.mxu0 0.0
  %2223 = vmatprep.subr.mxu0 0.0
  %2224 = vmatpush1.xpose.msra.mxu0 0.0
  %2225 = vmatprep.subr.mxu0 0.0
  %2226 = vmatpush1.xpose.msra.mxu0 0.0
  %2227 = vmatprep.subr.mxu0 0.0
  %2228 = vmatpush1.xpose.msra.mxu0 0.0
  %2229 = vmatprep.subr.mxu0 0.0
  %2230 = vmatpush1.xpose.msra.mxu0 0.0
  %2231 = vmatprep.subr.mxu0 0.0
  %2232 = vmatpush1.xpose.msra.mxu0 0.0
  %2233 = vmatprep.subr.mxu0 0.0
  %2234 = vmatpush1.xpose.msra.mxu0 0.0
  %2235 = vmatprep.subr.mxu0 0.0
  %2236 = vmatpush1.xpose.msra.mxu0 0.0
  %2237 = vmatprep.subr.mxu0 0.0
  %2238 = vmatpush1.xpose.msra.mxu0 0.0
  %2239 = vmatprep.subr.mxu0 0.0
  %2240 = vmatpush1.xpose.msra.mxu0 0.0
  %2241 = vmatprep.subr.mxu0 0.0
  %2242 = vmatpush1.xpose.msra.mxu0 0.0
  %2243 = vmatprep.subr.mxu0 0.0
  %2244 = vmatpush1.xpose.msra.mxu0 0.0
  %2245 = vmatprep.subr.mxu0 0.0
  %2246 = vmatpush1.xpose.msra.mxu0 0.0
  %2247 = vmatprep.subr.mxu0 0.0
  %2248 = vmatpush1.xpose.msra.mxu0 0.0
  %2249 = vmatprep.subr.mxu0 0.0
  %2250 = vmatpush1.xpose.msra.mxu0 0.0
  %2251 = vmatprep.subr.mxu0 0.0
  %2252 = vmatpush1.xpose.msra.mxu0 0.0
  %2253 = vmatprep.subr.mxu0 0.0
  %2254 = vmatpush1.xpose.msra.mxu0 0.0
  %2255 = vmatprep.subr.mxu0 0.0
  %2256 = vmatpush1.xpose.msra.mxu0 0.0
  %2257 = vmatprep.subr.mxu0 0.0
  %2258 = vmatpush1.xpose.msra.mxu0 0.0
  %2259 = vmatprep.subr.mxu0 0.0
  %2260 = vmatpush1.xpose.msra.mxu0 0.0
  %2261 = vmatprep.subr.mxu0 0.0
  %2262 = vmatpush1.xpose.msra.mxu0 0.0
  %2263 = vmatprep.subr.mxu0 0.0
  %2264 = vmatpush1.xpose.msra.mxu0 0.0
  %2265 = vmatprep.subr.mxu0 0.0
  %2266 = vmatpush1.xpose.msra.mxu0 0.0
  %2267 = vmatprep.subr.mxu0 0.0
  %2268 = vmatpush1.xpose.msra.mxu0 0.0
  %2269 = vmatprep.subr.mxu0 0.0
  %2270 = vmatpush1.xpose.msra.mxu0 0.0
  %2271 = vmatprep.subr.mxu0 0.0
  %2272 = vmatpush1.xpose.msra.mxu0 0.0
  %2273 = vmatprep.subr.mxu0 0.0
  %2274 = vmatpush1.xpose.msra.mxu0 0.0
  %2275 = vmatprep.subr.mxu0 0.0
  %2276 = vmatpush1.xpose.msra.mxu0 0.0
  %2277 = vmatprep.mubr.f32.mxu0 0.0
  %v2278 = vand.u32 %v2027, 4294901760
  %v2279 = vsub.f32 %v2027, %v2278
  %2280 = vmatmul.mubr.f32.gmra.mrb[0].mxu0 %v2279
  %v2281 = vpop.f32.mrb[0].mxu0
  %v2282 = vadd.f32 %v2200, %v2281
  %v2283 = vpop.f32.mrb[0].mxu0
  %2284 = vmatprep.mubr.f32.mxu0 0.0
  %v2285 = vand.u32 %v2029, 4294901760
  %v2286 = vsub.f32 %v2029, %v2285
  %2287 = vmatmul.mubr.f32.gmra.mrb[0].mxu0 %v2286
  %v2288 = vpop.f32.mrb[0].mxu0
  %v2289 = vadd.f32 %v2206, %v2288
  %v2290 = vpop.f32.mrb[0].mxu0
  %2291 = vdwg.mxu0
  %2292 = vmatprep.subr.mxu0 0.0
  %v2293 = vand.u32 %v2031, 4294901760
  %2294 = vmatpush1.xpose.msra.mxu0 %v2293
  %2295 = vmatprep.subr.mxu0 0.0
  %v2296 = vand.u32 %v2033, 4294901760
  %2297 = vmatpush1.xpose.msra.mxu0 %v2296
  %2298 = vmatprep.subr.mxu0 0.0
  %2299 = vmatpush1.xpose.msra.mxu0 0.0
  %2300 = vmatprep.subr.mxu0 0.0
  %2301 = vmatpush1.xpose.msra.mxu0 0.0
  %2302 = vmatprep.subr.mxu0 0.0
  %2303 = vmatpush1.xpose.msra.mxu0 0.0
  %2304 = vmatprep.subr.mxu0 0.0
  %2305 = vmatpush1.xpose.msra.mxu0 0.0
  %2306 = vmatprep.subr.mxu0 0.0
  %2307 = vmatpush1.xpose.msra.mxu0 0.0
  %2308 = vmatprep.subr.mxu0 0.0
  %2309 = vmatpush1.xpose.msra.mxu0 0.0
  %2310 = vmatprep.subr.mxu0 0.0
  %2311 = vmatpush1.xpose.msra.mxu0 0.0
  %2312 = vmatprep.subr.mxu0 0.0
  %2313 = vmatpush1.xpose.msra.mxu0 0.0
  %2314 = vmatprep.subr.mxu0 0.0
  %2315 = vmatpush1.xpose.msra.mxu0 0.0
  %2316 = vmatprep.subr.mxu0 0.0
  %2317 = vmatpush1.xpose.msra.mxu0 0.0
  %2318 = vmatprep.subr.mxu0 0.0
  %2319 = vmatpush1.xpose.msra.mxu0 0.0
  %2320 = vmatprep.subr.mxu0 0.0
  %2321 = vmatpush1.xpose.msra.mxu0 0.0
  %2322 = vmatprep.subr.mxu0 0.0
  %2323 = vmatpush1.xpose.msra.mxu0 0.0
  %2324 = vmatprep.subr.mxu0 0.0
  %2325 = vmatpush1.xpose.msra.mxu0 0.0
  %2326 = vmatprep.subr.mxu0 0.0
  %2327 = vmatpush1.xpose.msra.mxu0 0.0
  %2328 = vmatprep.subr.mxu0 0.0
  %2329 = vmatpush1.xpose.msra.mxu0 0.0
  %2330 = vmatprep.subr.mxu0 0.0
  %2331 = vmatpush1.xpose.msra.mxu0 0.0
  %2332 = vmatprep.subr.mxu0 0.0
  %2333 = vmatpush1.xpose.msra.mxu0 0.0
  %2334 = vmatprep.subr.mxu0 0.0
  %2335 = vmatpush1.xpose.msra.mxu0 0.0
  %2336 = vmatprep.subr.mxu0 0.0
  %2337 = vmatpush1.xpose.msra.mxu0 0.0
  %2338 = vmatprep.subr.mxu0 0.0
  %2339 = vmatpush1.xpose.msra.mxu0 0.0
  %2340 = vmatprep.subr.mxu0 0.0
  %2341 = vmatpush1.xpose.msra.mxu0 0.0
  %2342 = vmatprep.subr.mxu0 0.0
  %2343 = vmatpush1.xpose.msra.mxu0 0.0
  %2344 = vmatprep.subr.mxu0 0.0
  %2345 = vmatpush1.xpose.msra.mxu0 0.0
  %2346 = vmatprep.subr.mxu0 0.0
  %2347 = vmatpush1.xpose.msra.mxu0 0.0
  %2348 = vmatprep.subr.mxu0 0.0
  %2349 = vmatpush1.xpose.msra.mxu0 0.0
  %2350 = vmatprep.subr.mxu0 0.0
  %2351 = vmatpush1.xpose.msra.mxu0 0.0
  %2352 = vmatprep.subr.mxu0 0.0
  %2353 = vmatpush1.xpose.msra.mxu0 0.0
  %2354 = vmatprep.subr.mxu0 0.0
  %2355 = vmatpush1.xpose.msra.mxu0 0.0
  %2356 = vmatprep.subr.mxu0 0.0
  %2357 = vmatpush1.xpose.msra.mxu0 0.0
  %2358 = vmatprep.mubr.f32.mxu0 0.0
  %v2359 = vand.u32 %v2027, 4294901760
  %v2360 = vsub.f32 %v2027, %v2359
  %v2361 = vand.u32 %v2360, 4294901760
  %2362 = vmatmul.mubr.f32.gmra.mrb[0].mxu0 %v2361
  %v2363 = vpop.f32.mrb[0].mxu0
  %v2364 = vadd.f32 %v2282, %v2363
  %v2365 = vpop.f32.mrb[0].mxu0
  %2366 = vmatprep.mubr.f32.mxu0 0.0
  %v2367 = vand.u32 %v2029, 4294901760
  %v2368 = vsub.f32 %v2029, %v2367
  %v2369 = vand.u32 %v2368, 4294901760
  %2370 = vmatmul.mubr.f32.gmra.mrb[0].mxu0 %v2369
  %v2371 = vpop.f32.mrb[0].mxu0
  %v2372 = vadd.f32 %v2289, %v2371
  %v2373 = vpop.f32.mrb[0].mxu0
  %2374 = vdwg.mxu0
  %2375 = vmatprep.subr.mxu0 0.0
  %v2376 = vand.u32 %v2031, 4294901760
  %v2377 = vsub.f32 %v2031, %v2376
  %v2378 = vand.u32 %v2377, 4294901760
  %2379 = vmatpush1.xpose.msra.mxu0 %v2378
  %2380 = vmatprep.subr.mxu0 0.0
  %v2381 = vand.u32 %v2033, 4294901760
  %v2382 = vsub.f32 %v2033, %v2381
  %v2383 = vand.u32 %v2382, 4294901760
  %2384 = vmatpush1.xpose.msra.mxu0 %v2383
  %2385 = vmatprep.subr.mxu0 0.0
  %2386 = vmatpush1.xpose.msra.mxu0 0.0
  %2387 = vmatprep.subr.mxu0 0.0
  %2388 = vmatpush1.xpose.msra.mxu0 0.0
  %2389 = vmatprep.subr.mxu0 0.0
  %2390 = vmatpush1.xpose.msra.mxu0 0.0
  %2391 = vmatprep.subr.mxu0 0.0
  %2392 = vmatpush1.xpose.msra.mxu0 0.0
  %2393 = vmatprep.subr.mxu0 0.0
  %2394 = vmatpush1.xpose.msra.mxu0 0.0
  %2395 = vmatprep.subr.mxu0 0.0
  %2396 = vmatpush1.xpose.msra.mxu0 0.0
  %2397 = vmatprep.subr.mxu0 0.0
  %2398 = vmatpush1.xpose.msra.mxu0 0.0
  %2399 = vmatprep.subr.mxu0 0.0
  %2400 = vmatpush1.xpose.msra.mxu0 0.0
  %2401 = vmatprep.subr.mxu0 0.0
  %2402 = vmatpush1.xpose.msra.mxu0 0.0
  %2403 = vmatprep.subr.mxu0 0.0
  %2404 = vmatpush1.xpose.msra.mxu0 0.0
  %2405 = vmatprep.subr.mxu0 0.0
  %2406 = vmatpush1.xpose.msra.mxu0 0.0
  %2407 = vmatprep.subr.mxu0 0.0
  %2408 = vmatpush1.xpose.msra.mxu0 0.0
  %2409 = vmatprep.subr.mxu0 0.0
  %2410 = vmatpush1.xpose.msra.mxu0 0.0
  %2411 = vmatprep.subr.mxu0 0.0
  %2412 = vmatpush1.xpose.msra.mxu0 0.0
  %2413 = vmatprep.subr.mxu0 0.0
  %2414 = vmatpush1.xpose.msra.mxu0 0.0
  %2415 = vmatprep.subr.mxu0 0.0
  %2416 = vmatpush1.xpose.msra.mxu0 0.0
  %2417 = vmatprep.subr.mxu0 0.0
  %2418 = vmatpush1.xpose.msra.mxu0 0.0
  %2419 = vmatprep.subr.mxu0 0.0
  %2420 = vmatpush1.xpose.msra.mxu0 0.0
  %2421 = vmatprep.subr.mxu0 0.0
  %2422 = vmatpush1.xpose.msra.mxu0 0.0
  %2423 = vmatprep.subr.mxu0 0.0
  %2424 = vmatpush1.xpose.msra.mxu0 0.0
  %2425 = vmatprep.subr.mxu0 0.0
  %2426 = vmatpush1.xpose.msra.mxu0 0.0
  %2427 = vmatprep.subr.mxu0 0.0
  %2428 = vmatpush1.xpose.msra.mxu0 0.0
  %2429 = vmatprep.subr.mxu0 0.0
  %2430 = vmatpush1.xpose.msra.mxu0 0.0
  %2431 = vmatprep.subr.mxu0 0.0
  %2432 = vmatpush1.xpose.msra.mxu0 0.0
  %2433 = vmatprep.subr.mxu0 0.0
  %2434 = vmatpush1.xpose.msra.mxu0 0.0
  %2435 = vmatprep.subr.mxu0 0.0
  %2436 = vmatpush1.xpose.msra.mxu0 0.0
  %2437 = vmatprep.subr.mxu0 0.0
  %2438 = vmatpush1.xpose.msra.mxu0 0.0
  %2439 = vmatprep.subr.mxu0 0.0
  %2440 = vmatpush1.xpose.msra.mxu0 0.0
  %2441 = vmatprep.subr.mxu0 0.0
  %2442 = vmatpush1.xpose.msra.mxu0 0.0
  %2443 = vmatprep.subr.mxu0 0.0
  %2444 = vmatpush1.xpose.msra.mxu0 0.0
  %2445 = vmatprep.mubr.f32.mxu0 0.0
  %v2446 = vand.u32 %v2027, 4294901760
  %2447 = vmatmul.mubr.f32.gmra.mrb[0].mxu0 %v2446
  %v2448 = vpop.f32.mrb[0].mxu0
  %v2449 = vadd.f32 %v2364, %v2448
  %v2450 = vpop.f32.mrb[0].mxu0
  %2451 = vmatprep.mubr.f32.mxu0 0.0
  %v2452 = vand.u32 %v2029, 4294901760
  %2453 = vmatmul.mubr.f32.gmra.mrb[0].mxu0 %v2452
  %v2454 = vpop.f32.mrb[0].mxu0
  %v2455 = vadd.f32 %v2372, %v2454
  %v2456 = vpop.f32.mrb[0].mxu0
  %2457 = vdwg.mxu0
  %2458 = vmatprep.subr.mxu0 0.0
  %v2459 = vand.u32 %v2031, 4294901760
  %2460 = vmatpush1.xpose.msra.mxu0 %v2459
  %2461 = vmatprep.subr.mxu0 0.0
  %v2462 = vand.u32 %v2033, 4294901760
  %2463 = vmatpush1.xpose.msra.mxu0 %v2462
  %2464 = vmatprep.subr.mxu0 0.0
  %2465 = vmatpush1.xpose.msra.mxu0 0.0
  %2466 = vmatprep.subr.mxu0 0.0
  %2467 = vmatpush1.xpose.msra.mxu0 0.0
  %2468 = vmatprep.subr.mxu0 0.0
  %2469 = vmatpush1.xpose.msra.mxu0 0.0
  %2470 = vmatprep.subr.mxu0 0.0
  %2471 = vmatpush1.xpose.msra.mxu0 0.0
  %2472 = vmatprep.subr.mxu0 0.0
  %2473 = vmatpush1.xpose.msra.mxu0 0.0
  %2474 = vmatprep.subr.mxu0 0.0
  %2475 = vmatpush1.xpose.msra.mxu0 0.0
  %2476 = vmatprep.subr.mxu0 0.0
  %2477 = vmatpush1.xpose.msra.mxu0 0.0
  %2478 = vmatprep.subr.mxu0 0.0
  %2479 = vmatpush1.xpose.msra.mxu0 0.0
  %2480 = vmatprep.subr.mxu0 0.0
  %2481 = vmatpush1.xpose.msra.mxu0 0.0
  %2482 = vmatprep.subr.mxu0 0.0
  %2483 = vmatpush1.xpose.msra.mxu0 0.0
  %2484 = vmatprep.subr.mxu0 0.0
  %2485 = vmatpush1.xpose.msra.mxu0 0.0
  %2486 = vmatprep.subr.mxu0 0.0
  %2487 = vmatpush1.xpose.msra.mxu0 0.0
  %2488 = vmatprep.subr.mxu0 0.0
  %2489 = vmatpush1.xpose.msra.mxu0 0.0
  %2490 = vmatprep.subr.mxu0 0.0
  %2491 = vmatpush1.xpose.msra.mxu0 0.0
  %2492 = vmatprep.subr.mxu0 0.0
  %2493 = vmatpush1.xpose.msra.mxu0 0.0
  %2494 = vmatprep.subr.mxu0 0.0
  %2495 = vmatpush1.xpose.msra.mxu0 0.0
  %2496 = vmatprep.subr.mxu0 0.0
  %2497 = vmatpush1.xpose.msra.mxu0 0.0
  %2498 = vmatprep.subr.mxu0 0.0
  %2499 = vmatpush1.xpose.msra.mxu0 0.0
  %2500 = vmatprep.subr.mxu0 0.0
  %2501 = vmatpush1.xpose.msra.mxu0 0.0
  %2502 = vmatprep.subr.mxu0 0.0
  %2503 = vmatpush1.xpose.msra.mxu0 0.0
  %2504 = vmatprep.subr.mxu0 0.0
  %2505 = vmatpush1.xpose.msra.mxu0 0.0
  %2506 = vmatprep.subr.mxu0 0.0
  %2507 = vmatpush1.xpose.msra.mxu0 0.0
  %2508 = vmatprep.subr.mxu0 0.0
  %2509 = vmatpush1.xpose.msra.mxu0 0.0
  %2510 = vmatprep.subr.mxu0 0.0
  %2511 = vmatpush1.xpose.msra.mxu0 0.0
  %2512 = vmatprep.subr.mxu0 0.0
  %2513 = vmatpush1.xpose.msra.mxu0 0.0
  %2514 = vmatprep.subr.mxu0 0.0
  %2515 = vmatpush1.xpose.msra.mxu0 0.0
  %2516 = vmatprep.subr.mxu0 0.0
  %2517 = vmatpush1.xpose.msra.mxu0 0.0
  %2518 = vmatprep.subr.mxu0 0.0
  %2519 = vmatpush1.xpose.msra.mxu0 0.0
  %2520 = vmatprep.subr.mxu0 0.0
  %2521 = vmatpush1.xpose.msra.mxu0 0.0
  %2522 = vmatprep.subr.mxu0 0.0
  %2523 = vmatpush1.xpose.msra.mxu0 0.0
  %2524 = vmatprep.mubr.f32.mxu0 0.0
  %v2525 = vand.u32 %v2027, 4294901760
  %2526 = vmatmul.mubr.f32.gmra.mrb[0].mxu0 %v2525
  %v2527 = vpop.f32.mrb[0].mxu0
  %v2528 = vadd.f32 %v2449, %v2527
  %v2529 = vpop.f32.mrb[0].mxu0
  %2530 = vmatprep.mubr.f32.mxu0 0.0
  %v2531 = vand.u32 %v2029, 4294901760
  %2532 = vmatmul.mubr.f32.gmra.mrb[0].mxu0 %v2531
  %v2533 = vpop.f32.mrb[0].mxu0
  %v2534 = vadd.f32 %v2455, %v2533
  %v2535 = vpop.f32.mrb[0].mxu0
  %2536 = vdwg.mxu0
  %vm2539 = vcmask 1041408
  %v2540 = vrot.slane %v2528, 6
  %v2541 = vrot.slane %v2534, 6
  %v2542 = vsel %vm2539, %v2540, %v2541
  %v2545 = vsel %vm2539, %v2016, %v2540
  %v2546 = vld [vmem:[%s3] sm:$0xff]
  %v2547 = vld [vmem:[%s3 + $0x8] sm:$0xff]
  %v2548 = vld [vmem:[%s3 + $0x10] sm:$0xf]
  %v2549 = vadd.f32 %v2010, %v2546
  %v2550 = vadd.f32 %v2545, %v2547
  %v2551 = vadd.f32 %v2542, %v2548
  %vm2552 = vcmask 80896
  %v2553 = vsel %vm2552, %v2549, -inf
  %2554 = vmax.xlane.f32.xlu0 %v2553
  %v2555 = vpop.xlane.xlu0 %2554
  %v2556 = vsel %vm2552, %v2550, -inf
  %2557 = vmax.xlane.f32.xlu0 %v2556
  %v2558 = vpop.xlane.xlu0 %2557
  %vm2559 = vcmask 76800
  %v2560 = vsel %vm2559, %v2551, -inf
  %2561 = vmax.xlane.f32.xlu0 %v2560
  %v2562 = vpop.xlane.xlu0 %2561
  %v2563 = vsub.f32 %v2549, %v2555
  %v2564 = vsub.f32 %v2550, %v2558
  %v2565 = vsub.f32 %v2551, %v2562
  %v2566 = vmul.f32 %v2563, 1.442695
  %v2567 = vpow.pop %v2566
  %v2568 = vmul.f32 %v2564, 1.442695
  %v2569 = vpow.pop %v2568
  %v2570 = vmul.f32 %v2565, 1.442695
  %v2571 = vpow.pop %v2570
  %v2572 = vsel %vm2552, %v2567, 0.0
  %2573 = vadd.xlane.f32.xlu0 %v2572
  %v2574 = vpop.xlane.xlu0 %2573
  %v2575 = vsel %vm2552, %v2569, 0.0
  %2576 = vadd.xlane.f32.xlu0 %v2575
  %v2577 = vpop.xlane.xlu0 %2576
  %v2578 = vsel %vm2559, %v2571, 0.0
  %2579 = vadd.xlane.f32.xlu0 %v2578
  %v2580 = vpop.xlane.xlu0 %2579
  %v2581 = vrcp.pop %v2574
  %v2582 = vmul.f32 %v2567, %v2581
  %v2583 = vrcp.pop %v2577
  %v2584 = vmul.f32 %v2569, %v2583
  %v2585 = vrcp.pop %v2580
  %v2586 = vmul.f32 %v2571, %v2585
  %2587 = vrot.lane.b32.xlu0 %v1493, 64
  %v2588 = vpop.permute.xlu0 %2587
  %2589 = vrot.lane.b32.xlu0 %v1499, 64
  %v2590 = vpop.permute.xlu0 %2589
  %v2593 = vsel %vm2552, %v2582, 0
  %v2596 = vsel %vm2552, %v2584, 0
  %v2598 = vsel %vm2539, %v2590, 0
  %2600 = vmatprep.subr.mxu0 0.0
  %v2601 = vand.u32 %v2588, 4294901760
  %2602 = vmatpush1.msra.mxu0 %v2601
  %2603 = vmatprep.subr.mxu0 0.0
  %v2604 = vand.u32 %v2598, 4294901760
  %2605 = vmatpush1.msra.mxu0 %v2604
  %2606 = vmatprep.subr.mxu0 0.0
  %2607 = vmatpush1.msra.mxu0 0.0
  %2608 = vmatprep.subr.mxu0 0.0
  %2609 = vmatpush1.msra.mxu0 0.0
  %2610 = vmatprep.subr.mxu0 0.0
  %2611 = vmatpush1.msra.mxu0 0.0
  %2612 = vmatprep.subr.mxu0 0.0
  %2613 = vmatpush1.msra.mxu0 0.0
  %2614 = vmatprep.subr.mxu0 0.0
  %2615 = vmatpush1.msra.mxu0 0.0
  %2616 = vmatprep.subr.mxu0 0.0
  %2617 = vmatpush1.msra.mxu0 0.0
  %2618 = vmatprep.subr.mxu0 0.0
  %2619 = vmatpush1.msra.mxu0 0.0
  %2620 = vmatprep.subr.mxu0 0.0
  %2621 = vmatpush1.msra.mxu0 0.0
  %2622 = vmatprep.subr.mxu0 0.0
  %2623 = vmatpush1.msra.mxu0 0.0
  %2624 = vmatprep.subr.mxu0 0.0
  %2625 = vmatpush1.msra.mxu0 0.0
  %2626 = vmatprep.subr.mxu0 0.0
  %2627 = vmatpush1.msra.mxu0 0.0
  %2628 = vmatprep.subr.mxu0 0.0
  %2629 = vmatpush1.msra.mxu0 0.0
  %2630 = vmatprep.subr.mxu0 0.0
  %2631 = vmatpush1.msra.mxu0 0.0
  %2632 = vmatprep.subr.mxu0 0.0
  %2633 = vmatpush1.msra.mxu0 0.0
  %2634 = vmatprep.subr.mxu0 0.0
  %2635 = vmatpush1.msra.mxu0 0.0
  %2636 = vmatprep.subr.mxu0 0.0
  %2637 = vmatpush1.msra.mxu0 0.0
  %2638 = vmatprep.subr.mxu0 0.0
  %2639 = vmatpush1.msra.mxu0 0.0
  %2640 = vmatprep.subr.mxu0 0.0
  %2641 = vmatpush1.msra.mxu0 0.0
  %2642 = vmatprep.subr.mxu0 0.0
  %2643 = vmatpush1.msra.mxu0 0.0
  %2644 = vmatprep.subr.mxu0 0.0
  %2645 = vmatpush1.msra.mxu0 0.0
  %2646 = vmatprep.subr.mxu0 0.0
  %2647 = vmatpush1.msra.mxu0 0.0
  %2648 = vmatprep.subr.mxu0 0.0
  %2649 = vmatpush1.msra.mxu0 0.0
  %2650 = vmatprep.subr.mxu0 0.0
  %2651 = vmatpush1.msra.mxu0 0.0
  %2652 = vmatprep.subr.mxu0 0.0
  %2653 = vmatpush1.msra.mxu0 0.0
  %2654 = vmatprep.subr.mxu0 0.0
  %2655 = vmatpush1.msra.mxu0 0.0
  %2656 = vmatprep.subr.mxu0 0.0
  %2657 = vmatpush1.msra.mxu0 0.0
  %2658 = vmatprep.subr.mxu0 0.0
  %2659 = vmatpush1.msra.mxu0 0.0
  %2660 = vmatprep.subr.mxu0 0.0
  %2661 = vmatpush1.msra.mxu0 0.0
  %2662 = vmatprep.subr.mxu0 0.0
  %2663 = vmatpush1.msra.mxu0 0.0
  %2664 = vmatprep.subr.mxu0 0.0
  %2665 = vmatpush1.msra.mxu0 0.0
  %2666 = vmatprep.mubr.f32.mxu0 0.0
  %v2667 = vand.u32 %v2593, 4294901760
  %v2668 = vsub.f32 %v2593, %v2667
  %v2669 = vand.u32 %v2668, 4294901760
  %v2670 = vsub.f32 %v2668, %v2669
  %v2671 = vand.u32 %v2670, 4294901760
  %2672 = vmatmul.mubr.f32.gmra.mrb[0].mxu0 %v2671
  %v2673 = vpop.f32.mrb[0].mxu0
  %v2674 = vadd.f32 0.0, %v2673
  %v2675 = vpop.f32.mrb[0].mxu0
  %2676 = vmatprep.mubr.f32.mxu0 0.0
  %v2677 = vand.u32 %v2596, 4294901760
  %v2678 = vsub.f32 %v2596, %v2677
  %v2679 = vand.u32 %v2678, 4294901760
  %v2680 = vsub.f32 %v2678, %v2679
  %v2681 = vand.u32 %v2680, 4294901760
  %2682 = vmatmul.mubr.f32.gmra.mrb[0].mxu0 %v2681
  %v2683 = vpop.f32.mrb[0].mxu0
  %v2684 = vadd.f32 0.0, %v2683
  %v2685 = vpop.f32.mrb[0].mxu0
  %2686 = vdwg.mxu0
  %2687 = vmatprep.subr.mxu0 0.0
  %v2688 = vand.u32 %v2588, 4294901760
  %v2689 = vsub.f32 %v2588, %v2688
  %v2690 = vand.u32 %v2689, 4294901760
  %v2691 = vsub.f32 %v2689, %v2690
  %v2692 = vand.u32 %v2691, 4294901760
  %2693 = vmatpush1.msra.mxu0 %v2692
  %2694 = vmatprep.subr.mxu0 0.0
  %v2695 = vand.u32 %v2598, 4294901760
  %v2696 = vsub.f32 %v2598, %v2695
  %v2697 = vand.u32 %v2696, 4294901760
  %v2698 = vsub.f32 %v2696, %v2697
  %v2699 = vand.u32 %v2698, 4294901760
  %2700 = vmatpush1.msra.mxu0 %v2699
  %2701 = vmatprep.subr.mxu0 0.0
  %2702 = vmatpush1.msra.mxu0 0.0
  %2703 = vmatprep.subr.mxu0 0.0
  %2704 = vmatpush1.msra.mxu0 0.0
  %2705 = vmatprep.subr.mxu0 0.0
  %2706 = vmatpush1.msra.mxu0 0.0
  %2707 = vmatprep.subr.mxu0 0.0
  %2708 = vmatpush1.msra.mxu0 0.0
  %2709 = vmatprep.subr.mxu0 0.0
  %2710 = vmatpush1.msra.mxu0 0.0
  %2711 = vmatprep.subr.mxu0 0.0
  %2712 = vmatpush1.msra.mxu0 0.0
  %2713 = vmatprep.subr.mxu0 0.0
  %2714 = vmatpush1.msra.mxu0 0.0
  %2715 = vmatprep.subr.mxu0 0.0
  %2716 = vmatpush1.msra.mxu0 0.0
  %2717 = vmatprep.subr.mxu0 0.0
  %2718 = vmatpush1.msra.mxu0 0.0
  %2719 = vmatprep.subr.mxu0 0.0
  %2720 = vmatpush1.msra.mxu0 0.0
  %2721 = vmatprep.subr.mxu0 0.0
  %2722 = vmatpush1.msra.mxu0 0.0
  %2723 = vmatprep.subr.mxu0 0.0
  %2724 = vmatpush1.msra.mxu0 0.0
  %2725 = vmatprep.subr.mxu0 0.0
  %2726 = vmatpush1.msra.mxu0 0.0
  %2727 = vmatprep.subr.mxu0 0.0
  %2728 = vmatpush1.msra.mxu0 0.0
  %2729 = vmatprep.subr.mxu0 0.0
  %2730 = vmatpush1.msra.mxu0 0.0
  %2731 = vmatprep.subr.mxu0 0.0
  %2732 = vmatpush1.msra.mxu0 0.0
  %2733 = vmatprep.subr.mxu0 0.0
  %2734 = vmatpush1.msra.mxu0 0.0
  %2735 = vmatprep.subr.mxu0 0.0
  %2736 = vmatpush1.msra.mxu0 0.0
  %2737 = vmatprep.subr.mxu0 0.0
  %2738 = vmatpush1.msra.mxu0 0.0
  %2739 = vmatprep.subr.mxu0 0.0
  %2740 = vmatpush1.msra.mxu0 0.0
  %2741 = vmatprep.subr.mxu0 0.0
  %2742 = vmatpush1.msra.mxu0 0.0
  %2743 = vmatprep.subr.mxu0 0.0
  %2744 = vmatpush1.msra.mxu0 0.0
  %2745 = vmatprep.subr.mxu0 0.0
  %2746 = vmatpush1.msra.mxu0 0.0
  %2747 = vmatprep.subr.mxu0 0.0
  %2748 = vmatpush1.msra.mxu0 0.0
  %2749 = vmatprep.subr.mxu0 0.0
  %2750 = vmatpush1.msra.mxu0 0.0
  %2751 = vmatprep.subr.mxu0 0.0
  %2752 = vmatpush1.msra.mxu0 0.0
  %2753 = vmatprep.subr.mxu0 0.0
  %2754 = vmatpush1.msra.mxu0 0.0
  %2755 = vmatprep.subr.mxu0 0.0
  %2756 = vmatpush1.msra.mxu0 0.0
  %2757 = vmatprep.subr.mxu0 0.0
  %2758 = vmatpush1.msra.mxu0 0.0
  %2759 = vmatprep.subr.mxu0 0.0
  %2760 = vmatpush1.msra.mxu0 0.0
  %2761 = vmatprep.mubr.f32.mxu0 0.0
  %v2762 = vand.u32 %v2593, 4294901760
  %2763 = vmatmul.mubr.f32.gmra.mrb[0].mxu0 %v2762
  %v2764 = vpop.f32.mrb[0].mxu0
  %v2765 = vadd.f32 %v2674, %v2764
  %v2766 = vpop.f32.mrb[0].mxu0
  %2767 = vmatprep.mubr.f32.mxu0 0.0
  %v2768 = vand.u32 %v2596, 4294901760
  %2769 = vmatmul.mubr.f32.gmra.mrb[0].mxu0 %v2768
  %v2770 = vpop.f32.mrb[0].mxu0
  %v2771 = vadd.f32 %v2684, %v2770
  %v2772 = vpop.f32.mrb[0].mxu0
  %2773 = vdwg.mxu0
  %2774 = vmatprep.subr.mxu0 0.0
  %v2775 = vand.u32 %v2588, 4294901760
  %v2776 = vsub.f32 %v2588, %v2775
  %2777 = vmatpush1.msra.mxu0 %v2776
  %2778 = vmatprep.subr.mxu0 0.0
  %v2779 = vand.u32 %v2598, 4294901760
  %v2780 = vsub.f32 %v2598, %v2779
  %2781 = vmatpush1.msra.mxu0 %v2780
  %2782 = vmatprep.subr.mxu0 0.0
  %2783 = vmatpush1.msra.mxu0 0.0
  %2784 = vmatprep.subr.mxu0 0.0
  %2785 = vmatpush1.msra.mxu0 0.0
  %2786 = vmatprep.subr.mxu0 0.0
  %2787 = vmatpush1.msra.mxu0 0.0
  %2788 = vmatprep.subr.mxu0 0.0
  %2789 = vmatpush1.msra.mxu0 0.0
  %2790 = vmatprep.subr.mxu0 0.0
  %2791 = vmatpush1.msra.mxu0 0.0
  %2792 = vmatprep.subr.mxu0 0.0
  %2793 = vmatpush1.msra.mxu0 0.0
  %2794 = vmatprep.subr.mxu0 0.0
  %2795 = vmatpush1.msra.mxu0 0.0
  %2796 = vmatprep.subr.mxu0 0.0
  %2797 = vmatpush1.msra.mxu0 0.0
  %2798 = vmatprep.subr.mxu0 0.0
  %2799 = vmatpush1.msra.mxu0 0.0
  %2800 = vmatprep.subr.mxu0 0.0
  %2801 = vmatpush1.msra.mxu0 0.0
  %2802 = vmatprep.subr.mxu0 0.0
  %2803 = vmatpush1.msra.mxu0 0.0
  %2804 = vmatprep.subr.mxu0 0.0
  %2805 = vmatpush1.msra.mxu0 0.0
  %2806 = vmatprep.subr.mxu0 0.0
  %2807 = vmatpush1.msra.mxu0 0.0
  %2808 = vmatprep.subr.mxu0 0.0
  %2809 = vmatpush1.msra.mxu0 0.0
  %2810 = vmatprep.subr.mxu0 0.0
  %2811 = vmatpush1.msra.mxu0 0.0
  %2812 = vmatprep.subr.mxu0 0.0
  %2813 = vmatpush1.msra.mxu0 0.0
  %2814 = vmatprep.subr.mxu0 0.0
  %2815 = vmatpush1.msra.mxu0 0.0
  %2816 = vmatprep.subr.mxu0 0.0
  %2817 = vmatpush1.msra.mxu0 0.0
  %2818 = vmatprep.subr.mxu0 0.0
  %2819 = vmatpush1.msra.mxu0 0.0
  %2820 = vmatprep.subr.mxu0 0.0
  %2821 = vmatpush1.msra.mxu0 0.0
  %2822 = vmatprep.subr.mxu0 0.0
  %2823 = vmatpush1.msra.mxu0 0.0
  %2824 = vmatprep.subr.mxu0 0.0
  %2825 = vmatpush1.msra.mxu0 0.0
  %2826 = vmatprep.subr.mxu0 0.0
  %2827 = vmatpush1.msra.mxu0 0.0
  %2828 = vmatprep.subr.mxu0 0.0
  %2829 = vmatpush1.msra.mxu0 0.0
  %2830 = vmatprep.subr.mxu0 0.0
  %2831 = vmatpush1.msra.mxu0 0.0
  %2832 = vmatprep.subr.mxu0 0.0
  %2833 = vmatpush1.msra.mxu0 0.0
  %2834 = vmatprep.subr.mxu0 0.0
  %2835 = vmatpush1.msra.mxu0 0.0
  %2836 = vmatprep.subr.mxu0 0.0
  %2837 = vmatpush1.msra.mxu0 0.0
  %2838 = vmatprep.subr.mxu0 0.0
  %2839 = vmatpush1.msra.mxu0 0.0
  %2840 = vmatprep.subr.mxu0 0.0
  %2841 = vmatpush1.msra.mxu0 0.0
  %2842 = vmatprep.mubr.f32.mxu0 0.0
  %v2843 = vand.u32 %v2593, 4294901760
  %v2844 = vsub.f32 %v2593, %v2843
  %2845 = vmatmul.mubr.f32.gmra.mrb[0].mxu0 %v2844
  %v2846 = vpop.f32.mrb[0].mxu0
  %v2847 = vadd.f32 %v2765, %v2846
  %v2848 = vpop.f32.mrb[0].mxu0
  %2849 = vmatprep.mubr.f32.mxu0 0.0
  %v2850 = vand.u32 %v2596, 4294901760
  %v2851 = vsub.f32 %v2596, %v2850
  %2852 = vmatmul.mubr.f32.gmra.mrb[0].mxu0 %v2851
  %v2853 = vpop.f32.mrb[0].mxu0
  %v2854 = vadd.f32 %v2771, %v2853
  %v2855 = vpop.f32.mrb[0].mxu0
  %2856 = vdwg.mxu0
  %2857 = vmatprep.subr.mxu0 0.0
  %v2858 = vand.u32 %v2588, 4294901760
  %2859 = vmatpush1.msra.mxu0 %v2858
  %2860 = vmatprep.subr.mxu0 0.0
  %v2861 = vand.u32 %v2598, 4294901760
  %2862 = vmatpush1.msra.mxu0 %v2861
  %2863 = vmatprep.subr.mxu0 0.0
  %2864 = vmatpush1.msra.mxu0 0.0
  %2865 = vmatprep.subr.mxu0 0.0
  %2866 = vmatpush1.msra.mxu0 0.0
  %2867 = vmatprep.subr.mxu0 0.0
  %2868 = vmatpush1.msra.mxu0 0.0
  %2869 = vmatprep.subr.mxu0 0.0
  %2870 = vmatpush1.msra.mxu0 0.0
  %2871 = vmatprep.subr.mxu0 0.0
  %2872 = vmatpush1.msra.mxu0 0.0
  %2873 = vmatprep.subr.mxu0 0.0
  %2874 = vmatpush1.msra.mxu0 0.0
  %2875 = vmatprep.subr.mxu0 0.0
  %2876 = vmatpush1.msra.mxu0 0.0
  %2877 = vmatprep.subr.mxu0 0.0
  %2878 = vmatpush1.msra.mxu0 0.0
  %2879 = vmatprep.subr.mxu0 0.0
  %2880 = vmatpush1.msra.mxu0 0.0
  %2881 = vmatprep.subr.mxu0 0.0
  %2882 = vmatpush1.msra.mxu0 0.0
  %2883 = vmatprep.subr.mxu0 0.0
  %2884 = vmatpush1.msra.mxu0 0.0
  %2885 = vmatprep.subr.mxu0 0.0
  %2886 = vmatpush1.msra.mxu0 0.0
  %2887 = vmatprep.subr.mxu0 0.0
  %2888 = vmatpush1.msra.mxu0 0.0
  %2889 = vmatprep.subr.mxu0 0.0
  %2890 = vmatpush1.msra.mxu0 0.0
  %2891 = vmatprep.subr.mxu0 0.0
  %2892 = vmatpush1.msra.mxu0 0.0
  %2893 = vmatprep.subr.mxu0 0.0
  %2894 = vmatpush1.msra.mxu0 0.0
  %2895 = vmatprep.subr.mxu0 0.0
  %2896 = vmatpush1.msra.mxu0 0.0
  %2897 = vmatprep.subr.mxu0 0.0
  %2898 = vmatpush1.msra.mxu0 0.0
  %2899 = vmatprep.subr.mxu0 0.0
  %2900 = vmatpush1.msra.mxu0 0.0
  %2901 = vmatprep.subr.mxu0 0.0
  %2902 = vmatpush1.msra.mxu0 0.0
  %2903 = vmatprep.subr.mxu0 0.0
  %2904 = vmatpush1.msra.mxu0 0.0
  %2905 = vmatprep.subr.mxu0 0.0
  %2906 = vmatpush1.msra.mxu0 0.0
  %2907 = vmatprep.subr.mxu0 0.0
  %2908 = vmatpush1.msra.mxu0 0.0
  %2909 = vmatprep.subr.mxu0 0.0
  %2910 = vmatpush1.msra.mxu0 0.0
  %2911 = vmatprep.subr.mxu0 0.0
  %2912 = vmatpush1.msra.mxu0 0.0
  %2913 = vmatprep.subr.mxu0 0.0
  %2914 = vmatpush1.msra.mxu0 0.0
  %2915 = vmatprep.subr.mxu0 0.0
  %2916 = vmatpush1.msra.mxu0 0.0
  %2917 = vmatprep.subr.mxu0 0.0
  %2918 = vmatpush1.msra.mxu0 0.0
  %2919 = vmatprep.subr.mxu0 0.0
  %2920 = vmatpush1.msra.mxu0 0.0
  %2921 = vmatprep.subr.mxu0 0.0
  %2922 = vmatpush1.msra.mxu0 0.0
  %2923 = vmatprep.mubr.f32.mxu0 0.0
  %v2924 = vand.u32 %v2593, 4294901760
  %v2925 = vsub.f32 %v2593, %v2924
  %v2926 = vand.u32 %v2925, 4294901760
  %2927 = vmatmul.mubr.f32.gmra.mrb[0].mxu0 %v2926
  %v2928 = vpop.f32.mrb[0].mxu0
  %v2929 = vadd.f32 %v2847, %v2928
  %v2930 = vpop.f32.mrb[0].mxu0
  %2931 = vmatprep.mubr.f32.mxu0 0.0
  %v2932 = vand.u32 %v2596, 4294901760
  %v2933 = vsub.f32 %v2596, %v2932
  %v2934 = vand.u32 %v2933, 4294901760
  %2935 = vmatmul.mubr.f32.gmra.mrb[0].mxu0 %v2934
  %v2936 = vpop.f32.mrb[0].mxu0
  %v2937 = vadd.f32 %v2854, %v2936
  %v2938 = vpop.f32.mrb[0].mxu0
  %2939 = vdwg.mxu0
  %2940 = vmatprep.subr.mxu0 0.0
  %v2941 = vand.u32 %v2588, 4294901760
  %v2942 = vsub.f32 %v2588, %v2941
  %v2943 = vand.u32 %v2942, 4294901760
  %2944 = vmatpush1.msra.mxu0 %v2943
  %2945 = vmatprep.subr.mxu0 0.0
  %v2946 = vand.u32 %v2598, 4294901760
  %v2947 = vsub.f32 %v2598, %v2946
  %v2948 = vand.u32 %v2947, 4294901760
  %2949 = vmatpush1.msra.mxu0 %v2948
  %2950 = vmatprep.subr.mxu0 0.0
  %2951 = vmatpush1.msra.mxu0 0.0
  %2952 = vmatprep.subr.mxu0 0.0
  %2953 = vmatpush1.msra.mxu0 0.0
  %2954 = vmatprep.subr.mxu0 0.0
  %2955 = vmatpush1.msra.mxu0 0.0
  %2956 = vmatprep.subr.mxu0 0.0
  %2957 = vmatpush1.msra.mxu0 0.0
  %2958 = vmatprep.subr.mxu0 0.0
  %2959 = vmatpush1.msra.mxu0 0.0
  %2960 = vmatprep.subr.mxu0 0.0
  %2961 = vmatpush1.msra.mxu0 0.0
  %2962 = vmatprep.subr.mxu0 0.0
  %2963 = vmatpush1.msra.mxu0 0.0
  %2964 = vmatprep.subr.mxu0 0.0
  %2965 = vmatpush1.msra.mxu0 0.0
  %2966 = vmatprep.subr.mxu0 0.0
  %2967 = vmatpush1.msra.mxu0 0.0
  %2968 = vmatprep.subr.mxu0 0.0
  %2969 = vmatpush1.msra.mxu0 0.0
  %2970 = vmatprep.subr.mxu0 0.0
  %2971 = vmatpush1.msra.mxu0 0.0
  %2972 = vmatprep.subr.mxu0 0.0
  %2973 = vmatpush1.msra.mxu0 0.0
  %2974 = vmatprep.subr.mxu0 0.0
  %2975 = vmatpush1.msra.mxu0 0.0
  %2976 = vmatprep.subr.mxu0 0.0
  %2977 = vmatpush1.msra.mxu0 0.0
  %2978 = vmatprep.subr.mxu0 0.0
  %2979 = vmatpush1.msra.mxu0 0.0
  %2980 = vmatprep.subr.mxu0 0.0
  %2981 = vmatpush1.msra.mxu0 0.0
  %2982 = vmatprep.subr.mxu0 0.0
  %2983 = vmatpush1.msra.mxu0 0.0
  %2984 = vmatprep.subr.mxu0 0.0
  %2985 = vmatpush1.msra.mxu0 0.0
  %2986 = vmatprep.subr.mxu0 0.0
  %2987 = vmatpush1.msra.mxu0 0.0
  %2988 = vmatprep.subr.mxu0 0.0
  %2989 = vmatpush1.msra.mxu0 0.0
  %2990 = vmatprep.subr.mxu0 0.0
  %2991 = vmatpush1.msra.mxu0 0.0
  %2992 = vmatprep.subr.mxu0 0.0
  %2993 = vmatpush1.msra.mxu0 0.0
  %2994 = vmatprep.subr.mxu0 0.0
  %2995 = vmatpush1.msra.mxu0 0.0
  %2996 = vmatprep.subr.mxu0 0.0
  %2997 = vmatpush1.msra.mxu0 0.0
  %2998 = vmatprep.subr.mxu0 0.0
  %2999 = vmatpush1.msra.mxu0 0.0
  %3000 = vmatprep.subr.mxu0 0.0
  %3001 = vmatpush1.msra.mxu0 0.0
  %3002 = vmatprep.subr.mxu0 0.0
  %3003 = vmatpush1.msra.mxu0 0.0
  %3004 = vmatprep.subr.mxu0 0.0
  %3005 = vmatpush1.msra.mxu0 0.0
  %3006 = vmatprep.subr.mxu0 0.0
  %3007 = vmatpush1.msra.mxu0 0.0
  %3008 = vmatprep.subr.mxu0 0.0
  %3009 = vmatpush1.msra.mxu0 0.0
  %3010 = vmatprep.mubr.f32.mxu0 0.0
  %v3011 = vand.u32 %v2593, 4294901760
  %3012 = vmatmul.mubr.f32.gmra.mrb[0].mxu0 %v3011
  %v3013 = vpop.f32.mrb[0].mxu0
  %v3014 = vadd.f32 %v2929, %v3013
  %v3015 = vpop.f32.mrb[0].mxu0
  %3016 = vmatprep.mubr.f32.mxu0 0.0
  %v3017 = vand.u32 %v2596, 4294901760
  %3018 = vmatmul.mubr.f32.gmra.mrb[0].mxu0 %v3017
  %v3019 = vpop.f32.mrb[0].mxu0
  %v3020 = vadd.f32 %v2937, %v3019
  %v3021 = vpop.f32.mrb[0].mxu0
  %3022 = vdwg.mxu0
  %3023 = vmatprep.subr.mxu0 0.0
  %v3024 = vand.u32 %v2588, 4294901760
  %3025 = vmatpush1.msra.mxu0 %v3024
  %3026 = vmatprep.subr.mxu0 0.0
  %v3027 = vand.u32 %v2598, 4294901760
  %3028 = vmatpush1.msra.mxu0 %v3027
  %3029 = vmatprep.subr.mxu0 0.0
  %3030 = vmatpush1.msra.mxu0 0.0
  %3031 = vmatprep.subr.mxu0 0.0
  %3032 = vmatpush1.msra.mxu0 0.0
  %3033 = vmatprep.subr.mxu0 0.0
  %3034 = vmatpush1.msra.mxu0 0.0
  %3035 = vmatprep.subr.mxu0 0.0
  %3036 = vmatpush1.msra.mxu0 0.0
  %3037 = vmatprep.subr.mxu0 0.0
  %3038 = vmatpush1.msra.mxu0 0.0
  %3039 = vmatprep.subr.mxu0 0.0
  %3040 = vmatpush1.msra.mxu0 0.0
  %3041 = vmatprep.subr.mxu0 0.0
  %3042 = vmatpush1.msra.mxu0 0.0
  %3043 = vmatprep.subr.mxu0 0.0
  %3044 = vmatpush1.msra.mxu0 0.0
  %3045 = vmatprep.subr.mxu0 0.0
  %3046 = vmatpush1.msra.mxu0 0.0
  %3047 = vmatprep.subr.mxu0 0.0
  %3048 = vmatpush1.msra.mxu0 0.0
  %3049 = vmatprep.subr.mxu0 0.0
  %3050 = vmatpush1.msra.mxu0 0.0
  %3051 = vmatprep.subr.mxu0 0.0
  %3052 = vmatpush1.msra.mxu0 0.0
  %3053 = vmatprep.subr.mxu0 0.0
  %3054 = vmatpush1.msra.mxu0 0.0
  %3055 = vmatprep.subr.mxu0 0.0
  %3056 = vmatpush1.msra.mxu0 0.0
  %3057 = vmatprep.subr.mxu0 0.0
  %3058 = vmatpush1.msra.mxu0 0.0
  %3059 = vmatprep.subr.mxu0 0.0
  %3060 = vmatpush1.msra.mxu0 0.0
  %3061 = vmatprep.subr.mxu0 0.0
  %3062 = vmatpush1.msra.mxu0 0.0
  %3063 = vmatprep.subr.mxu0 0.0
  %3064 = vmatpush1.msra.mxu0 0.0
  %3065 = vmatprep.subr.mxu0 0.0
  %3066 = vmatpush1.msra.mxu0 0.0
  %3067 = vmatprep.subr.mxu0 0.0
  %3068 = vmatpush1.msra.mxu0 0.0
  %3069 = vmatprep.subr.mxu0 0.0
  %3070 = vmatpush1.msra.mxu0 0.0
  %3071 = vmatprep.subr.mxu0 0.0
  %3072 = vmatpush1.msra.mxu0 0.0
  %3073 = vmatprep.subr.mxu0 0.0
  %3074 = vmatpush1.msra.mxu0 0.0
  %3075 = vmatprep.subr.mxu0 0.0
  %3076 = vmatpush1.msra.mxu0 0.0
  %3077 = vmatprep.subr.mxu0 0.0
  %3078 = vmatpush1.msra.mxu0 0.0
  %3079 = vmatprep.subr.mxu0 0.0
  %3080 = vmatpush1.msra.mxu0 0.0
  %3081 = vmatprep.subr.mxu0 0.0
  %3082 = vmatpush1.msra.mxu0 0.0
  %3083 = vmatprep.subr.mxu0 0.0
  %3084 = vmatpush1.msra.mxu0 0.0
  %3085 = vmatprep.subr.mxu0 0.0
  %3086 = vmatpush1.msra.mxu0 0.0
  %3087 = vmatprep.subr.mxu0 0.0
  %3088 = vmatpush1.msra.mxu0 0.0
  %3089 = vmatprep.mubr.f32.mxu0 0.0
  %v3090 = vand.u32 %v2593, 4294901760
  %3091 = vmatmul.mubr.f32.gmra.mrb[0].mxu0 %v3090
  %v3092 = vpop.f32.mrb[0].mxu0
  %v3093 = vadd.f32 %v3014, %v3092
  %v3094 = vpop.f32.mrb[0].mxu0
  %3095 = vmatprep.mubr.f32.mxu0 0.0
  %v3096 = vand.u32 %v2596, 4294901760
  %3097 = vmatmul.mubr.f32.gmra.mrb[0].mxu0 %v3096
  %v3098 = vpop.f32.mrb[0].mxu0
  %v3099 = vadd.f32 %v3020, %v3098
  %v3100 = vpop.f32.mrb[0].mxu0
  %3101 = vdwg.mxu0
  %vm3103 = vcmask 1045504
  %v3104 = vrot.slane %v2584, 2
  %v3105 = vrot.slane %v2586, 2
  %v3106 = vsel %vm3103, %v3104, %v3105
  %3107 = vrot.lane.b32.xlu0 %v1493, 48
  %v3108 = vpop.permute.xlu0 %3107
  %3109 = vrot.lane.b32.xlu0 %v1499, 48
  %v3110 = vpop.permute.xlu0 %3109
  %v3112 = vsel %vm2552, %v3106, 0
  %v3114 = vsel %vm2552, %v3105, 0
  %v3116 = vsel %vm2539, %v3110, 0
  %3118 = vmatprep.subr.mxu0 0.0
  %v3119 = vand.u32 %v3108, 4294901760
  %3120 = vmatpush1.msra.mxu0 %v3119
  %3121 = vmatprep.subr.mxu0 0.0
  %v3122 = vand.u32 %v3116, 4294901760
  %3123 = vmatpush1.msra.mxu0 %v3122
  %3124 = vmatprep.subr.mxu0 0.0
  %3125 = vmatpush1.msra.mxu0 0.0
  %3126 = vmatprep.subr.mxu0 0.0
  %3127 = vmatpush1.msra.mxu0 0.0
  %3128 = vmatprep.subr.mxu0 0.0
  %3129 = vmatpush1.msra.mxu0 0.0
  %3130 = vmatprep.subr.mxu0 0.0
  %3131 = vmatpush1.msra.mxu0 0.0
  %3132 = vmatprep.subr.mxu0 0.0
  %3133 = vmatpush1.msra.mxu0 0.0
  %3134 = vmatprep.subr.mxu0 0.0
  %3135 = vmatpush1.msra.mxu0 0.0
  %3136 = vmatprep.subr.mxu0 0.0
  %3137 = vmatpush1.msra.mxu0 0.0
  %3138 = vmatprep.subr.mxu0 0.0
  %3139 = vmatpush1.msra.mxu0 0.0
  %3140 = vmatprep.subr.mxu0 0.0
  %3141 = vmatpush1.msra.mxu0 0.0
  %3142 = vmatprep.subr.mxu0 0.0
  %3143 = vmatpush1.msra.mxu0 0.0
  %3144 = vmatprep.subr.mxu0 0.0
  %3145 = vmatpush1.msra.mxu0 0.0
  %3146 = vmatprep.subr.mxu0 0.0
  %3147 = vmatpush1.msra.mxu0 0.0
  %3148 = vmatprep.subr.mxu0 0.0
  %3149 = vmatpush1.msra.mxu0 0.0
  %3150 = vmatprep.subr.mxu0 0.0
  %3151 = vmatpush1.msra.mxu0 0.0
  %3152 = vmatprep.subr.mxu0 0.0
  %3153 = vmatpush1.msra.mxu0 0.0
  %3154 = vmatprep.subr.mxu0 0.0
  %3155 = vmatpush1.msra.mxu0 0.0
  %3156 = vmatprep.subr.mxu0 0.0
  %3157 = vmatpush1.msra.mxu0 0.0
  %3158 = vmatprep.subr.mxu0 0.0
  %3159 = vmatpush1.msra.mxu0 0.0
  %3160 = vmatprep.subr.mxu0 0.0
  %3161 = vmatpush1.msra.mxu0 0.0
  %3162 = vmatprep.subr.mxu0 0.0
  %3163 = vmatpush1.msra.mxu0 0.0
  %3164 = vmatprep.subr.mxu0 0.0
  %3165 = vmatpush1.msra.mxu0 0.0
  %3166 = vmatprep.subr.mxu0 0.0
  %3167 = vmatpush1.msra.mxu0 0.0
  %3168 = vmatprep.subr.mxu0 0.0
  %3169 = vmatpush1.msra.mxu0 0.0
  %3170 = vmatprep.subr.mxu0 0.0
  %3171 = vmatpush1.msra.mxu0 0.0
  %3172 = vmatprep.subr.mxu0 0.0
  %3173 = vmatpush1.msra.mxu0 0.0
  %3174 = vmatprep.subr.mxu0 0.0
  %3175 = vmatpush1.msra.mxu0 0.0
  %3176 = vmatprep.subr.mxu0 0.0
  %3177 = vmatpush1.msra.mxu0 0.0
  %3178 = vmatprep.subr.mxu0 0.0
  %3179 = vmatpush1.msra.mxu0 0.0
  %3180 = vmatprep.subr.mxu0 0.0
  %3181 = vmatpush1.msra.mxu0 0.0
  %3182 = vmatprep.subr.mxu0 0.0
  %3183 = vmatpush1.msra.mxu0 0.0
  %3184 = vmatprep.mubr.f32.mxu0 0.0
  %v3185 = vand.u32 %v3112, 4294901760
  %v3186 = vsub.f32 %v3112, %v3185
  %v3187 = vand.u32 %v3186, 4294901760
  %v3188 = vsub.f32 %v3186, %v3187
  %v3189 = vand.u32 %v3188, 4294901760
  %3190 = vmatmul.mubr.f32.gmra.mrb[0].mxu0 %v3189
  %v3191 = vpop.f32.mrb[0].mxu0
  %v3192 = vadd.f32 0.0, %v3191
  %v3193 = vpop.f32.mrb[0].mxu0
  %3194 = vmatprep.mubr.f32.mxu0 0.0
  %v3195 = vand.u32 %v3114, 4294901760
  %v3196 = vsub.f32 %v3114, %v3195
  %v3197 = vand.u32 %v3196, 4294901760
  %v3198 = vsub.f32 %v3196, %v3197
  %v3199 = vand.u32 %v3198, 4294901760
  %3200 = vmatmul.mubr.f32.gmra.mrb[0].mxu0 %v3199
  %v3201 = vpop.f32.mrb[0].mxu0
  %v3202 = vadd.f32 0.0, %v3201
  %v3203 = vpop.f32.mrb[0].mxu0
  %3204 = vdwg.mxu0
  %3205 = vmatprep.subr.mxu0 0.0
  %v3206 = vand.u32 %v3108, 4294901760
  %v3207 = vsub.f32 %v3108, %v3206
  %v3208 = vand.u32 %v3207, 4294901760
  %v3209 = vsub.f32 %v3207, %v3208
  %v3210 = vand.u32 %v3209, 4294901760
  %3211 = vmatpush1.msra.mxu0 %v3210
  %3212 = vmatprep.subr.mxu0 0.0
  %v3213 = vand.u32 %v3116, 4294901760
  %v3214 = vsub.f32 %v3116, %v3213
  %v3215 = vand.u32 %v3214, 4294901760
  %v3216 = vsub.f32 %v3214, %v3215
  %v3217 = vand.u32 %v3216, 4294901760
  %3218 = vmatpush1.msra.mxu0 %v3217
  %3219 = vmatprep.subr.mxu0 0.0
  %3220 = vmatpush1.msra.mxu0 0.0
  %3221 = vmatprep.subr.mxu0 0.0
  %3222 = vmatpush1.msra.mxu0 0.0
  %3223 = vmatprep.subr.mxu0 0.0
  %3224 = vmatpush1.msra.mxu0 0.0
  %3225 = vmatprep.subr.mxu0 0.0
  %3226 = vmatpush1.msra.mxu0 0.0
  %3227 = vmatprep.subr.mxu0 0.0
  %3228 = vmatpush1.msra.mxu0 0.0
  %3229 = vmatprep.subr.mxu0 0.0
  %3230 = vmatpush1.msra.mxu0 0.0
  %3231 = vmatprep.subr.mxu0 0.0
  %3232 = vmatpush1.msra.mxu0 0.0
  %3233 = vmatprep.subr.mxu0 0.0
  %3234 = vmatpush1.msra.mxu0 0.0
  %3235 = vmatprep.subr.mxu0 0.0
  %3236 = vmatpush1.msra.mxu0 0.0
  %3237 = vmatprep.subr.mxu0 0.0
  %3238 = vmatpush1.msra.mxu0 0.0
  %3239 = vmatprep.subr.mxu0 0.0
  %3240 = vmatpush1.msra.mxu0 0.0
  %3241 = vmatprep.subr.mxu0 0.0
  %3242 = vmatpush1.msra.mxu0 0.0
  %3243 = vmatprep.subr.mxu0 0.0
  %3244 = vmatpush1.msra.mxu0 0.0
  %3245 = vmatprep.subr.mxu0 0.0
  %3246 = vmatpush1.msra.mxu0 0.0
  %3247 = vmatprep.subr.mxu0 0.0
  %3248 = vmatpush1.msra.mxu0 0.0
  %3249 = vmatprep.subr.mxu0 0.0
  %3250 = vmatpush1.msra.mxu0 0.0
  %3251 = vmatprep.subr.mxu0 0.0
  %3252 = vmatpush1.msra.mxu0 0.0
  %3253 = vmatprep.subr.mxu0 0.0
  %3254 = vmatpush1.msra.mxu0 0.0
  %3255 = vmatprep.subr.mxu0 0.0
  %3256 = vmatpush1.msra.mxu0 0.0
  %3257 = vmatprep.subr.mxu0 0.0
  %3258 = vmatpush1.msra.mxu0 0.0
  %3259 = vmatprep.subr.mxu0 0.0
  %3260 = vmatpush1.msra.mxu0 0.0
  %3261 = vmatprep.subr.mxu0 0.0
  %3262 = vmatpush1.msra.mxu0 0.0
  %3263 = vmatprep.subr.mxu0 0.0
  %3264 = vmatpush1.msra.mxu0 0.0
  %3265 = vmatprep.subr.mxu0 0.0
  %3266 = vmatpush1.msra.mxu0 0.0
  %3267 = vmatprep.subr.mxu0 0.0
  %3268 = vmatpush1.msra.mxu0 0.0
  %3269 = vmatprep.subr.mxu0 0.0
  %3270 = vmatpush1.msra.mxu0 0.0
  %3271 = vmatprep.subr.mxu0 0.0
  %3272 = vmatpush1.msra.mxu0 0.0
  %3273 = vmatprep.subr.mxu0 0.0
  %3274 = vmatpush1.msra.mxu0 0.0
  %3275 = vmatprep.subr.mxu0 0.0
  %3276 = vmatpush1.msra.mxu0 0.0
  %3277 = vmatprep.subr.mxu0 0.0
  %3278 = vmatpush1.msra.mxu0 0.0
  %3279 = vmatprep.mubr.f32.mxu0 0.0
  %v3280 = vand.u32 %v3112, 4294901760
  %3281 = vmatmul.mubr.f32.gmra.mrb[0].mxu0 %v3280
  %v3282 = vpop.f32.mrb[0].mxu0
  %v3283 = vadd.f32 %v3192, %v3282
  %v3284 = vpop.f32.mrb[0].mxu0
  %3285 = vmatprep.mubr.f32.mxu0 0.0
  %v3286 = vand.u32 %v3114, 4294901760
  %3287 = vmatmul.mubr.f32.gmra.mrb[0].mxu0 %v3286
  %v3288 = vpop.f32.mrb[0].mxu0
  %v3289 = vadd.f32 %v3202, %v3288
  %v3290 = vpop.f32.mrb[0].mxu0
  %3291 = vdwg.mxu0
  %3292 = vmatprep.subr.mxu0 0.0
  %v3293 = vand.u32 %v3108, 4294901760
  %v3294 = vsub.f32 %v3108, %v3293
  %3295 = vmatpush1.msra.mxu0 %v3294
  %3296 = vmatprep.subr.mxu0 0.0
  %v3297 = vand.u32 %v3116, 4294901760
  %v3298 = vsub.f32 %v3116, %v3297
  %3299 = vmatpush1.msra.mxu0 %v3298
  %3300 = vmatprep.subr.mxu0 0.0
  %3301 = vmatpush1.msra.mxu0 0.0
  %3302 = vmatprep.subr.mxu0 0.0
  %3303 = vmatpush1.msra.mxu0 0.0
  %3304 = vmatprep.subr.mxu0 0.0
  %3305 = vmatpush1.msra.mxu0 0.0
  %3306 = vmatprep.subr.mxu0 0.0
  %3307 = vmatpush1.msra.mxu0 0.0
  %3308 = vmatprep.subr.mxu0 0.0
  %3309 = vmatpush1.msra.mxu0 0.0
  %3310 = vmatprep.subr.mxu0 0.0
  %3311 = vmatpush1.msra.mxu0 0.0
  %3312 = vmatprep.subr.mxu0 0.0
  %3313 = vmatpush1.msra.mxu0 0.0
  %3314 = vmatprep.subr.mxu0 0.0
  %3315 = vmatpush1.msra.mxu0 0.0
  %3316 = vmatprep.subr.mxu0 0.0
  %3317 = vmatpush1.msra.mxu0 0.0
  %3318 = vmatprep.subr.mxu0 0.0
  %3319 = vmatpush1.msra.mxu0 0.0
  %3320 = vmatprep.subr.mxu0 0.0
  %3321 = vmatpush1.msra.mxu0 0.0
  %3322 = vmatprep.subr.mxu0 0.0
  %3323 = vmatpush1.msra.mxu0 0.0
  %3324 = vmatprep.subr.mxu0 0.0
  %3325 = vmatpush1.msra.mxu0 0.0
  %3326 = vmatprep.subr.mxu0 0.0
  %3327 = vmatpush1.msra.mxu0 0.0
  %3328 = vmatprep.subr.mxu0 0.0
  %3329 = vmatpush1.msra.mxu0 0.0
  %3330 = vmatprep.subr.mxu0 0.0
  %3331 = vmatpush1.msra.mxu0 0.0
  %3332 = vmatprep.subr.mxu0 0.0
  %3333 = vmatpush1.msra.mxu0 0.0
  %3334 = vmatprep.subr.mxu0 0.0
  %3335 = vmatpush1.msra.mxu0 0.0
  %3336 = vmatprep.subr.mxu0 0.0
  %3337 = vmatpush1.msra.mxu0 0.0
  %3338 = vmatprep.subr.mxu0 0.0
  %3339 = vmatpush1.msra.mxu0 0.0
  %3340 = vmatprep.subr.mxu0 0.0
  %3341 = vmatpush1.msra.mxu0 0.0
  %3342 = vmatprep.subr.mxu0 0.0
  %3343 = vmatpush1.msra.mxu0 0.0
  %3344 = vmatprep.subr.mxu0 0.0
  %3345 = vmatpush1.msra.mxu0 0.0
  %3346 = vmatprep.subr.mxu0 0.0
  %3347 = vmatpush1.msra.mxu0 0.0
  %3348 = vmatprep.subr.mxu0 0.0
  %3349 = vmatpush1.msra.mxu0 0.0
  %3350 = vmatprep.subr.mxu0 0.0
  %3351 = vmatpush1.msra.mxu0 0.0
  %3352 = vmatprep.subr.mxu0 0.0
  %3353 = vmatpush1.msra.mxu0 0.0
  %3354 = vmatprep.subr.mxu0 0.0
  %3355 = vmatpush1.msra.mxu0 0.0
  %3356 = vmatprep.subr.mxu0 0.0
  %3357 = vmatpush1.msra.mxu0 0.0
  %3358 = vmatprep.subr.mxu0 0.0
  %3359 = vmatpush1.msra.mxu0 0.0
  %3360 = vmatprep.mubr.f32.mxu0 0.0
  %v3361 = vand.u32 %v3112, 4294901760
  %v3362 = vsub.f32 %v3112, %v3361
  %3363 = vmatmul.mubr.f32.gmra.mrb[0].mxu0 %v3362
  %v3364 = vpop.f32.mrb[0].mxu0
  %v3365 = vadd.f32 %v3283, %v3364
  %v3366 = vpop.f32.mrb[0].mxu0
  %3367 = vmatprep.mubr.f32.mxu0 0.0
  %v3368 = vand.u32 %v3114, 4294901760
  %v3369 = vsub.f32 %v3114, %v3368
  %3370 = vmatmul.mubr.f32.gmra.mrb[0].mxu0 %v3369
  %v3371 = vpop.f32.mrb[0].mxu0
  %v3372 = vadd.f32 %v3289, %v3371
  %v3373 = vpop.f32.mrb[0].mxu0
  %3374 = vdwg.mxu0
  %3375 = vmatprep.subr.mxu0 0.0
  %v3376 = vand.u32 %v3108, 4294901760
  %3377 = vmatpush1.msra.mxu0 %v3376
  %3378 = vmatprep.subr.mxu0 0.0
  %v3379 = vand.u32 %v3116, 4294901760
  %3380 = vmatpush1.msra.mxu0 %v3379
  %3381 = vmatprep.subr.mxu0 0.0
  %3382 = vmatpush1.msra.mxu0 0.0
  %3383 = vmatprep.subr.mxu0 0.0
  %3384 = vmatpush1.msra.mxu0 0.0
  %3385 = vmatprep.subr.mxu0 0.0
  %3386 = vmatpush1.msra.mxu0 0.0
  %3387 = vmatprep.subr.mxu0 0.0
  %3388 = vmatpush1.msra.mxu0 0.0
  %3389 = vmatprep.subr.mxu0 0.0
  %3390 = vmatpush1.msra.mxu0 0.0
  %3391 = vmatprep.subr.mxu0 0.0
  %3392 = vmatpush1.msra.mxu0 0.0
  %3393 = vmatprep.subr.mxu0 0.0
  %3394 = vmatpush1.msra.mxu0 0.0
  %3395 = vmatprep.subr.mxu0 0.0
  %3396 = vmatpush1.msra.mxu0 0.0
  %3397 = vmatprep.subr.mxu0 0.0
  %3398 = vmatpush1.msra.mxu0 0.0
  %3399 = vmatprep.subr.mxu0 0.0
  %3400 = vmatpush1.msra.mxu0 0.0
  %3401 = vmatprep.subr.mxu0 0.0
  %3402 = vmatpush1.msra.mxu0 0.0
  %3403 = vmatprep.subr.mxu0 0.0
  %3404 = vmatpush1.msra.mxu0 0.0
  %3405 = vmatprep.subr.mxu0 0.0
  %3406 = vmatpush1.msra.mxu0 0.0
  %3407 = vmatprep.subr.mxu0 0.0
  %3408 = vmatpush1.msra.mxu0 0.0
  %3409 = vmatprep.subr.mxu0 0.0
  %3410 = vmatpush1.msra.mxu0 0.0
  %3411 = vmatprep.subr.mxu0 0.0
  %3412 = vmatpush1.msra.mxu0 0.0
  %3413 = vmatprep.subr.mxu0 0.0
  %3414 = vmatpush1.msra.mxu0 0.0
  %3415 = vmatprep.subr.mxu0 0.0
  %3416 = vmatpush1.msra.mxu0 0.0
  %3417 = vmatprep.subr.mxu0 0.0
  %3418 = vmatpush1.msra.mxu0 0.0
  %3419 = vmatprep.subr.mxu0 0.0
  %3420 = vmatpush1.msra.mxu0 0.0
  %3421 = vmatprep.subr.mxu0 0.0
  %3422 = vmatpush1.msra.mxu0 0.0
  %3423 = vmatprep.subr.mxu0 0.0
  %3424 = vmatpush1.msra.mxu0 0.0
  %3425 = vmatprep.subr.mxu0 0.0
  %3426 = vmatpush1.msra.mxu0 0.0
  %3427 = vmatprep.subr.mxu0 0.0
  %3428 = vmatpush1.msra.mxu0 0.0
  %3429 = vmatprep.subr.mxu0 0.0
  %3430 = vmatpush1.msra.mxu0 0.0
  %3431 = vmatprep.subr.mxu0 0.0
  %3432 = vmatpush1.msra.mxu0 0.0
  %3433 = vmatprep.subr.mxu0 0.0
  %3434 = vmatpush1.msra.mxu0 0.0
  %3435 = vmatprep.subr.mxu0 0.0
  %3436 = vmatpush1.msra.mxu0 0.0
  %3437 = vmatprep.subr.mxu0 0.0
  %3438 = vmatpush1.msra.mxu0 0.0
  %3439 = vmatprep.subr.mxu0 0.0
  %3440 = vmatpush1.msra.mxu0 0.0
  %3441 = vmatprep.mubr.f32.mxu0 0.0
  %v3442 = vand.u32 %v3112, 4294901760
  %v3443 = vsub.f32 %v3112, %v3442
  %v3444 = vand.u32 %v3443, 4294901760
  %3445 = vmatmul.mubr.f32.gmra.mrb[0].mxu0 %v3444
  %v3446 = vpop.f32.mrb[0].mxu0
  %v3447 = vadd.f32 %v3365, %v3446
  %v3448 = vpop.f32.mrb[0].mxu0
  %3449 = vmatprep.mubr.f32.mxu0 0.0
  %v3450 = vand.u32 %v3114, 4294901760
  %v3451 = vsub.f32 %v3114, %v3450
  %v3452 = vand.u32 %v3451, 4294901760
  %3453 = vmatmul.mubr.f32.gmra.mrb[0].mxu0 %v3452
  %v3454 = vpop.f32.mrb[0].mxu0
  %v3455 = vadd.f32 %v3372, %v3454
  %v3456 = vpop.f32.mrb[0].mxu0
  %3457 = vdwg.mxu0
  %3458 = vmatprep.subr.mxu0 0.0
  %v3459 = vand.u32 %v3108, 4294901760
  %v3460 = vsub.f32 %v3108, %v3459
  %v3461 = vand.u32 %v3460, 4294901760
  %3462 = vmatpush1.msra.mxu0 %v3461
  %3463 = vmatprep.subr.mxu0 0.0
  %v3464 = vand.u32 %v3116, 4294901760
  %v3465 = vsub.f32 %v3116, %v3464
  %v3466 = vand.u32 %v3465, 4294901760
  %3467 = vmatpush1.msra.mxu0 %v3466
  %3468 = vmatprep.subr.mxu0 0.0
  %3469 = vmatpush1.msra.mxu0 0.0
  %3470 = vmatprep.subr.mxu0 0.0
  %3471 = vmatpush1.msra.mxu0 0.0
  %3472 = vmatprep.subr.mxu0 0.0
  %3473 = vmatpush1.msra.mxu0 0.0
  %3474 = vmatprep.subr.mxu0 0.0
  %3475 = vmatpush1.msra.mxu0 0.0
  %3476 = vmatprep.subr.mxu0 0.0
  %3477 = vmatpush1.msra.mxu0 0.0
  %3478 = vmatprep.subr.mxu0 0.0
  %3479 = vmatpush1.msra.mxu0 0.0
  %3480 = vmatprep.subr.mxu0 0.0
  %3481 = vmatpush1.msra.mxu0 0.0
  %3482 = vmatprep.subr.mxu0 0.0
  %3483 = vmatpush1.msra.mxu0 0.0
  %3484 = vmatprep.subr.mxu0 0.0
  %3485 = vmatpush1.msra.mxu0 0.0
  %3486 = vmatprep.subr.mxu0 0.0
  %3487 = vmatpush1.msra.mxu0 0.0
  %3488 = vmatprep.subr.mxu0 0.0
  %3489 = vmatpush1.msra.mxu0 0.0
  %3490 = vmatprep.subr.mxu0 0.0
  %3491 = vmatpush1.msra.mxu0 0.0
  %3492 = vmatprep.subr.mxu0 0.0
  %3493 = vmatpush1.msra.mxu0 0.0
  %3494 = vmatprep.subr.mxu0 0.0
  %3495 = vmatpush1.msra.mxu0 0.0
  %3496 = vmatprep.subr.mxu0 0.0
  %3497 = vmatpush1.msra.mxu0 0.0
  %3498 = vmatprep.subr.mxu0 0.0
  %3499 = vmatpush1.msra.mxu0 0.0
  %3500 = vmatprep.subr.mxu0 0.0
  %3501 = vmatpush1.msra.mxu0 0.0
  %3502 = vmatprep.subr.mxu0 0.0
  %3503 = vmatpush1.msra.mxu0 0.0
  %3504 = vmatprep.subr.mxu0 0.0
  %3505 = vmatpush1.msra.mxu0 0.0
  %3506 = vmatprep.subr.mxu0 0.0
  %3507 = vmatpush1.msra.mxu0 0.0
  %3508 = vmatprep.subr.mxu0 0.0
  %3509 = vmatpush1.msra.mxu0 0.0
  %3510 = vmatprep.subr.mxu0 0.0
  %3511 = vmatpush1.msra.mxu0 0.0
  %3512 = vmatprep.subr.mxu0 0.0
  %3513 = vmatpush1.msra.mxu0 0.0
  %3514 = vmatprep.subr.mxu0 0.0
  %3515 = vmatpush1.msra.mxu0 0.0
  %3516 = vmatprep.subr.mxu0 0.0
  %3517 = vmatpush1.msra.mxu0 0.0
  %3518 = vmatprep.subr.mxu0 0.0
  %3519 = vmatpush1.msra.mxu0 0.0
  %3520 = vmatprep.subr.mxu0 0.0
  %3521 = vmatpush1.msra.mxu0 0.0
  %3522 = vmatprep.subr.mxu0 0.0
  %3523 = vmatpush1.msra.mxu0 0.0
  %3524 = vmatprep.subr.mxu0 0.0
  %3525 = vmatpush1.msra.mxu0 0.0
  %3526 = vmatprep.subr.mxu0 0.0
  %3527 = vmatpush1.msra.mxu0 0.0
  %3528 = vmatprep.mubr.f32.mxu0 0.0
  %v3529 = vand.u32 %v3112, 4294901760
  %3530 = vmatmul.mubr.f32.gmra.mrb[0].mxu0 %v3529
  %v3531 = vpop.f32.mrb[0].mxu0
  %v3532 = vadd.f32 %v3447, %v3531
  %v3533 = vpop.f32.mrb[0].mxu0
  %3534 = vmatprep.mubr.f32.mxu0 0.0
  %v3535 = vand.u32 %v3114, 4294901760
  %3536 = vmatmul.mubr.f32.gmra.mrb[0].mxu0 %v3535
  %v3537 = vpop.f32.mrb[0].mxu0
  %v3538 = vadd.f32 %v3455, %v3537
  %v3539 = vpop.f32.mrb[0].mxu0
  %3540 = vdwg.mxu0
  %3541 = vmatprep.subr.mxu0 0.0
  %v3542 = vand.u32 %v3108, 4294901760
  %3543 = vmatpush1.msra.mxu0 %v3542
  %3544 = vmatprep.subr.mxu0 0.0
  %v3545 = vand.u32 %v3116, 4294901760
  %3546 = vmatpush1.msra.mxu0 %v3545
  %3547 = vmatprep.subr.mxu0 0.0
  %3548 = vmatpush1.msra.mxu0 0.0
  %3549 = vmatprep.subr.mxu0 0.0
  %3550 = vmatpush1.msra.mxu0 0.0
  %3551 = vmatprep.subr.mxu0 0.0
  %3552 = vmatpush1.msra.mxu0 0.0
  %3553 = vmatprep.subr.mxu0 0.0
  %3554 = vmatpush1.msra.mxu0 0.0
  %3555 = vmatprep.subr.mxu0 0.0
  %3556 = vmatpush1.msra.mxu0 0.0
  %3557 = vmatprep.subr.mxu0 0.0
  %3558 = vmatpush1.msra.mxu0 0.0
  %3559 = vmatprep.subr.mxu0 0.0
  %3560 = vmatpush1.msra.mxu0 0.0
  %3561 = vmatprep.subr.mxu0 0.0
  %3562 = vmatpush1.msra.mxu0 0.0
  %3563 = vmatprep.subr.mxu0 0.0
  %3564 = vmatpush1.msra.mxu0 0.0
  %3565 = vmatprep.subr.mxu0 0.0
  %3566 = vmatpush1.msra.mxu0 0.0
  %3567 = vmatprep.subr.mxu0 0.0
  %3568 = vmatpush1.msra.mxu0 0.0
  %3569 = vmatprep.subr.mxu0 0.0
  %3570 = vmatpush1.msra.mxu0 0.0
  %3571 = vmatprep.subr.mxu0 0.0
  %3572 = vmatpush1.msra.mxu0 0.0
  %3573 = vmatprep.subr.mxu0 0.0
  %3574 = vmatpush1.msra.mxu0 0.0
  %3575 = vmatprep.subr.mxu0 0.0
  %3576 = vmatpush1.msra.mxu0 0.0
  %3577 = vmatprep.subr.mxu0 0.0
  %3578 = vmatpush1.msra.mxu0 0.0
  %3579 = vmatprep.subr.mxu0 0.0
  %3580 = vmatpush1.msra.mxu0 0.0
  %3581 = vmatprep.subr.mxu0 0.0
  %3582 = vmatpush1.msra.mxu0 0.0
  %3583 = vmatprep.subr.mxu0 0.0
  %3584 = vmatpush1.msra.mxu0 0.0
  %3585 = vmatprep.subr.mxu0 0.0
  %3586 = vmatpush1.msra.mxu0 0.0
  %3587 = vmatprep.subr.mxu0 0.0
  %3588 = vmatpush1.msra.mxu0 0.0
  %3589 = vmatprep.subr.mxu0 0.0
  %3590 = vmatpush1.msra.mxu0 0.0
  %3591 = vmatprep.subr.mxu0 0.0
  %3592 = vmatpush1.msra.mxu0 0.0
  %3593 = vmatprep.subr.mxu0 0.0
  %3594 = vmatpush1.msra.mxu0 0.0
  %3595 = vmatprep.subr.mxu0 0.0
  %3596 = vmatpush1.msra.mxu0 0.0
  %3597 = vmatprep.subr.mxu0 0.0
  %3598 = vmatpush1.msra.mxu0 0.0
  %3599 = vmatprep.subr.mxu0 0.0
  %3600 = vmatpush1.msra.mxu0 0.0
  %3601 = vmatprep.subr.mxu0 0.0
  %3602 = vmatpush1.msra.mxu0 0.0
  %3603 = vmatprep.subr.mxu0 0.0
  %3604 = vmatpush1.msra.mxu0 0.0
  %3605 = vmatprep.subr.mxu0 0.0
  %3606 = vmatpush1.msra.mxu0 0.0
  %3607 = vmatprep.mubr.f32.mxu0 0.0
  %v3608 = vand.u32 %v3112, 4294901760
  %3609 = vmatmul.mubr.f32.gmra.mrb[0].mxu0 %v3608
  %v3610 = vpop.f32.mrb[0].mxu0
  %v3611 = vadd.f32 %v3532, %v3610
  %v3612 = vpop.f32.mrb[0].mxu0
  %3613 = vmatprep.mubr.f32.mxu0 0.0
  %v3614 = vand.u32 %v3114, 4294901760
  %3615 = vmatmul.mubr.f32.gmra.mrb[0].mxu0 %v3614
  %v3616 = vpop.f32.mrb[0].mxu0
  %v3617 = vadd.f32 %v3538, %v3616
  %v3618 = vpop.f32.mrb[0].mxu0
  %3619 = vdwg.mxu0
  %3622 = vrot.lane.b32.xlu0 %v3611, 16
  %v3623 = vpop.permute.xlu0 %3622
  %3624 = vrot.lane.b32.xlu0 %v3617, 16
  %v3625 = vpop.permute.xlu0 %3624
  %v3628 = vsel %vm1508, %v3093, %v3623
  %v3629 = vsel %vm1508, %v3099, %v3625
  %v3630 = vld [vmem:[%s8] sm:$0xff]
  %v3631 = vld [vmem:[%s8 + $0x8] sm:$0xff]
  %v3632 = vld [vmem:[%s8 + $0x10] sm:$0xff]
  %v3633 = vld [vmem:[%s8 + $0x18] sm:$0xff]
  %v3635 = vsel %vm912, %v3628, 0
  %v3638 = vsel %vm912, %v3629, 0
  %3640 = vmatprep.subr.mxu0 0.0
  %v3641 = vand.u32 %v3630, 4294901760
  %3642 = vmatpush1.msra.mxu0 %v3641
  %3643 = vmatprep.subr.mxu0 0.0
  %v3644 = vand.u32 %v3631, 4294901760
  %3645 = vmatpush1.msra.mxu0 %v3644
  %3646 = vmatprep.subr.mxu0 0.0
  %v3647 = vand.u32 %v3632, 4294901760
  %3648 = vmatpush1.msra.mxu0 %v3647
  %3649 = vmatprep.subr.mxu0 0.0
  %v3650 = vand.u32 %v3633, 4294901760
  %3651 = vmatpush1.msra.mxu0 %v3650
  %3652 = vmatprep.subr.mxu0 0.0
  %3653 = vmatpush1.msra.mxu0 0.0
  %3654 = vmatprep.subr.mxu0 0.0
  %3655 = vmatpush1.msra.mxu0 0.0
  %3656 = vmatprep.subr.mxu0 0.0
  %3657 = vmatpush1.msra.mxu0 0.0
  %3658 = vmatprep.subr.mxu0 0.0
  %3659 = vmatpush1.msra.mxu0 0.0
  %3660 = vmatprep.subr.mxu0 0.0
  %3661 = vmatpush1.msra.mxu0 0.0
  %3662 = vmatprep.subr.mxu0 0.0
  %3663 = vmatpush1.msra.mxu0 0.0
  %3664 = vmatprep.subr.mxu0 0.0
  %3665 = vmatpush1.msra.mxu0 0.0
  %3666 = vmatprep.subr.mxu0 0.0
  %3667 = vmatpush1.msra.mxu0 0.0
  %3668 = vmatprep.subr.mxu0 0.0
  %3669 = vmatpush1.msra.mxu0 0.0
  %3670 = vmatprep.subr.mxu0 0.0
  %3671 = vmatpush1.msra.mxu0 0.0
  %3672 = vmatprep.subr.mxu0 0.0
  %3673 = vmatpush1.msra.mxu0 0.0
  %3674 = vmatprep.subr.mxu0 0.0
  %3675 = vmatpush1.msra.mxu0 0.0
  %3676 = vmatprep.subr.mxu0 0.0
  %3677 = vmatpush1.msra.mxu0 0.0
  %3678 = vmatprep.subr.mxu0 0.0
  %3679 = vmatpush1.msra.mxu0 0.0
  %3680 = vmatprep.subr.mxu0 0.0
  %3681 = vmatpush1.msra.mxu0 0.0
  %3682 = vmatprep.subr.mxu0 0.0
  %3683 = vmatpush1.msra.mxu0 0.0
  %3684 = vmatprep.subr.mxu0 0.0
  %3685 = vmatpush1.msra.mxu0 0.0
  %3686 = vmatprep.subr.mxu0 0.0
  %3687 = vmatpush1.msra.mxu0 0.0
  %3688 = vmatprep.subr.mxu0 0.0
  %3689 = vmatpush1.msra.mxu0 0.0
  %3690 = vmatprep.subr.mxu0 0.0
  %3691 = vmatpush1.msra.mxu0 0.0
  %3692 = vmatprep.subr.mxu0 0.0
  %3693 = vmatpush1.msra.mxu0 0.0
  %3694 = vmatprep.subr.mxu0 0.0
  %3695 = vmatpush1.msra.mxu0 0.0
  %3696 = vmatprep.subr.mxu0 0.0
  %3697 = vmatpush1.msra.mxu0 0.0
  %3698 = vmatprep.subr.mxu0 0.0
  %3699 = vmatpush1.msra.mxu0 0.0
  %3700 = vmatprep.subr.mxu0 0.0
  %3701 = vmatpush1.msra.mxu0 0.0
  %3702 = vmatprep.subr.mxu0 0.0
  %3703 = vmatpush1.msra.mxu0 0.0
  %3704 = vmatprep.subr.mxu0 0.0
  %3705 = vmatpush1.msra.mxu0 0.0
  %3706 = vmatprep.subr.mxu0 0.0
  %3707 = vmatpush1.msra.mxu0 0.0
  %3708 = vmatprep.mubr.f32.mxu0 0.0
  %v3709 = vand.u32 %v3635, 4294901760
  %v3710 = vsub.f32 %v3635, %v3709
  %v3711 = vand.u32 %v3710, 4294901760
  %v3712 = vsub.f32 %v3710, %v3711
  %v3713 = vand.u32 %v3712, 4294901760
  %3714 = vmatmul.mubr.f32.gmra.mrb[0].mxu0 %v3713
  %v3715 = vpop.f32.mrb[0].mxu0
  %v3716 = vadd.f32 0.0, %v3715
  %v3717 = vpop.f32.mrb[0].mxu0
  %3718 = vmatprep.mubr.f32.mxu0 0.0
  %v3719 = vand.u32 %v3638, 4294901760
  %v3720 = vsub.f32 %v3638, %v3719
  %v3721 = vand.u32 %v3720, 4294901760
  %v3722 = vsub.f32 %v3720, %v3721
  %v3723 = vand.u32 %v3722, 4294901760
  %3724 = vmatmul.mubr.f32.gmra.mrb[0].mxu0 %v3723
  %v3725 = vpop.f32.mrb[0].mxu0
  %v3726 = vadd.f32 0.0, %v3725
  %v3727 = vpop.f32.mrb[0].mxu0
  %3728 = vdwg.mxu0
  %3729 = vmatprep.subr.mxu0 0.0
  %v3730 = vand.u32 %v3630, 4294901760
  %v3731 = vsub.f32 %v3630, %v3730
  %v3732 = vand.u32 %v3731, 4294901760
  %v3733 = vsub.f32 %v3731, %v3732
  %v3734 = vand.u32 %v3733, 4294901760
  %3735 = vmatpush1.msra.mxu0 %v3734
  %3736 = vmatprep.subr.mxu0 0.0
  %v3737 = vand.u32 %v3631, 4294901760
  %v3738 = vsub.f32 %v3631, %v3737
  %v3739 = vand.u32 %v3738, 4294901760
  %v3740 = vsub.f32 %v3738, %v3739
  %v3741 = vand.u32 %v3740, 4294901760
  %3742 = vmatpush1.msra.mxu0 %v3741
  %3743 = vmatprep.subr.mxu0 0.0
  %v3744 = vand.u32 %v3632, 4294901760
  %v3745 = vsub.f32 %v3632, %v3744
  %v3746 = vand.u32 %v3745, 4294901760
  %v3747 = vsub.f32 %v3745, %v3746
  %v3748 = vand.u32 %v3747, 4294901760
  %3749 = vmatpush1.msra.mxu0 %v3748
  %3750 = vmatprep.subr.mxu0 0.0
  %v3751 = vand.u32 %v3633, 4294901760
  %v3752 = vsub.f32 %v3633, %v3751
  %v3753 = vand.u32 %v3752, 4294901760
  %v3754 = vsub.f32 %v3752, %v3753
  %v3755 = vand.u32 %v3754, 4294901760
  %3756 = vmatpush1.msra.mxu0 %v3755
  %3757 = vmatprep.subr.mxu0 0.0
  %3758 = vmatpush1.msra.mxu0 0.0
  %3759 = vmatprep.subr.mxu0 0.0
  %3760 = vmatpush1.msra.mxu0 0.0
  %3761 = vmatprep.subr.mxu0 0.0
  %3762 = vmatpush1.msra.mxu0 0.0
  %3763 = vmatprep.subr.mxu0 0.0
  %3764 = vmatpush1.msra.mxu0 0.0
  %3765 = vmatprep.subr.mxu0 0.0
  %3766 = vmatpush1.msra.mxu0 0.0
  %3767 = vmatprep.subr.mxu0 0.0
  %3768 = vmatpush1.msra.mxu0 0.0
  %3769 = vmatprep.subr.mxu0 0.0
  %3770 = vmatpush1.msra.mxu0 0.0
  %3771 = vmatprep.subr.mxu0 0.0
  %3772 = vmatpush1.msra.mxu0 0.0
  %3773 = vmatprep.subr.mxu0 0.0
  %3774 = vmatpush1.msra.mxu0 0.0
  %3775 = vmatprep.subr.mxu0 0.0
  %3776 = vmatpush1.msra.mxu0 0.0
  %3777 = vmatprep.subr.mxu0 0.0
  %3778 = vmatpush1.msra.mxu0 0.0
  %3779 = vmatprep.subr.mxu0 0.0
  %3780 = vmatpush1.msra.mxu0 0.0
  %3781 = vmatprep.subr.mxu0 0.0
  %3782 = vmatpush1.msra.mxu0 0.0
  %3783 = vmatprep.subr.mxu0 0.0
  %3784 = vmatpush1.msra.mxu0 0.0
  %3785 = vmatprep.subr.mxu0 0.0
  %3786 = vmatpush1.msra.mxu0 0.0
  %3787 = vmatprep.subr.mxu0 0.0
  %3788 = vmatpush1.msra.mxu0 0.0
  %3789 = vmatprep.subr.mxu0 0.0
  %3790 = vmatpush1.msra.mxu0 0.0
  %3791 = vmatprep.subr.mxu0 0.0
  %3792 = vmatpush1.msra.mxu0 0.0
  %3793 = vmatprep.subr.mxu0 0.0
  %3794 = vmatpush1.msra.mxu0 0.0
  %3795 = vmatprep.subr.mxu0 0.0
  %3796 = vmatpush1.msra.mxu0 0.0
  %3797 = vmatprep.subr.mxu0 0.0
  %3798 = vmatpush1.msra.mxu0 0.0
  %3799 = vmatprep.subr.mxu0 0.0
  %3800 = vmatpush1.msra.mxu0 0.0
  %3801 = vmatprep.subr.mxu0 0.0
  %3802 = vmatpush1.msra.mxu0 0.0
  %3803 = vmatprep.subr.mxu0 0.0
  %3804 = vmatpush1.msra.mxu0 0.0
  %3805 = vmatprep.subr.mxu0 0.0
  %3806 = vmatpush1.msra.mxu0 0.0
  %3807 = vmatprep.subr.mxu0 0.0
  %3808 = vmatpush1.msra.mxu0 0.0
  %3809 = vmatprep.subr.mxu0 0.0
  %3810 = vmatpush1.msra.mxu0 0.0
  %3811 = vmatprep.subr.mxu0 0.0
  %3812 = vmatpush1.msra.mxu0 0.0
  %3813 = vmatprep.mubr.f32.mxu0 0.0
  %v3814 = vand.u32 %v3635, 4294901760
  %3815 = vmatmul.mubr.f32.gmra.mrb[0].mxu0 %v3814
  %v3816 = vpop.f32.mrb[0].mxu0
  %v3817 = vadd.f32 %v3716, %v3816
  %v3818 = vpop.f32.mrb[0].mxu0
  %3819 = vmatprep.mubr.f32.mxu0 0.0
  %v3820 = vand.u32 %v3638, 4294901760
  %3821 = vmatmul.mubr.f32.gmra.mrb[0].mxu0 %v3820
  %v3822 = vpop.f32.mrb[0].mxu0
  %v3823 = vadd.f32 %v3726, %v3822
  %v3824 = vpop.f32.mrb[0].mxu0
  %3825 = vdwg.mxu0
  %3826 = vmatprep.subr.mxu0 0.0
  %v3827 = vand.u32 %v3630, 4294901760
  %v3828 = vsub.f32 %v3630, %v3827
  %3829 = vmatpush1.msra.mxu0 %v3828
  %3830 = vmatprep.subr.mxu0 0.0
  %v3831 = vand.u32 %v3631, 4294901760
  %v3832 = vsub.f32 %v3631, %v3831
  %3833 = vmatpush1.msra.mxu0 %v3832
  %3834 = vmatprep.subr.mxu0 0.0
  %v3835 = vand.u32 %v3632, 4294901760
  %v3836 = vsub.f32 %v3632, %v3835
  %3837 = vmatpush1.msra.mxu0 %v3836
  %3838 = vmatprep.subr.mxu0 0.0
  %v3839 = vand.u32 %v3633, 4294901760
  %v3840 = vsub.f32 %v3633, %v3839
  %3841 = vmatpush1.msra.mxu0 %v3840
  %3842 = vmatprep.subr.mxu0 0.0
  %3843 = vmatpush1.msra.mxu0 0.0
  %3844 = vmatprep.subr.mxu0 0.0
  %3845 = vmatpush1.msra.mxu0 0.0
  %3846 = vmatprep.subr.mxu0 0.0
  %3847 = vmatpush1.msra.mxu0 0.0
  %3848 = vmatprep.subr.mxu0 0.0
  %3849 = vmatpush1.msra.mxu0 0.0
  %3850 = vmatprep.subr.mxu0 0.0
  %3851 = vmatpush1.msra.mxu0 0.0
  %3852 = vmatprep.subr.mxu0 0.0
  %3853 = vmatpush1.msra.mxu0 0.0
  %3854 = vmatprep.subr.mxu0 0.0
  %3855 = vmatpush1.msra.mxu0 0.0
  %3856 = vmatprep.subr.mxu0 0.0
  %3857 = vmatpush1.msra.mxu0 0.0
  %3858 = vmatprep.subr.mxu0 0.0
  %3859 = vmatpush1.msra.mxu0 0.0
  %3860 = vmatprep.subr.mxu0 0.0
  %3861 = vmatpush1.msra.mxu0 0.0
  %3862 = vmatprep.subr.mxu0 0.0
  %3863 = vmatpush1.msra.mxu0 0.0
  %3864 = vmatprep.subr.mxu0 0.0
  %3865 = vmatpush1.msra.mxu0 0.0
  %3866 = vmatprep.subr.mxu0 0.0
  %3867 = vmatpush1.msra.mxu0 0.0
  %3868 = vmatprep.subr.mxu0 0.0
  %3869 = vmatpush1.msra.mxu0 0.0
  %3870 = vmatprep.subr.mxu0 0.0
  %3871 = vmatpush1.msra.mxu0 0.0
  %3872 = vmatprep.subr.mxu0 0.0
  %3873 = vmatpush1.msra.mxu0 0.0
  %3874 = vmatprep.subr.mxu0 0.0
  %3875 = vmatpush1.msra.mxu0 0.0
  %3876 = vmatprep.subr.mxu0 0.0
  %3877 = vmatpush1.msra.mxu0 0.0
  %3878 = vmatprep.subr.mxu0 0.0
  %3879 = vmatpush1.msra.mxu0 0.0
  %3880 = vmatprep.subr.mxu0 0.0
  %3881 = vmatpush1.msra.mxu0 0.0
  %3882 = vmatprep.subr.mxu0 0.0
  %3883 = vmatpush1.msra.mxu0 0.0
  %3884 = vmatprep.subr.mxu0 0.0
  %3885 = vmatpush1.msra.mxu0 0.0
  %3886 = vmatprep.subr.mxu0 0.0
  %3887 = vmatpush1.msra.mxu0 0.0
  %3888 = vmatprep.subr.mxu0 0.0
  %3889 = vmatpush1.msra.mxu0 0.0
  %3890 = vmatprep.subr.mxu0 0.0
  %3891 = vmatpush1.msra.mxu0 0.0
  %3892 = vmatprep.subr.mxu0 0.0
  %3893 = vmatpush1.msra.mxu0 0.0
  %3894 = vmatprep.subr.mxu0 0.0
  %3895 = vmatpush1.msra.mxu0 0.0
  %3896 = vmatprep.subr.mxu0 0.0
  %3897 = vmatpush1.msra.mxu0 0.0
  %3898 = vmatprep.mubr.f32.mxu0 0.0
  %v3899 = vand.u32 %v3635, 4294901760
  %v3900 = vsub.f32 %v3635, %v3899
  %3901 = vmatmul.mubr.f32.gmra.mrb[0].mxu0 %v3900
  %v3902 = vpop.f32.mrb[0].mxu0
  %v3903 = vadd.f32 %v3817, %v3902
  %v3904 = vpop.f32.mrb[0].mxu0
  %3905 = vmatprep.mubr.f32.mxu0 0.0
  %v3906 = vand.u32 %v3638, 4294901760
  %v3907 = vsub.f32 %v3638, %v3906
  %3908 = vmatmul.mubr.f32.gmra.mrb[0].mxu0 %v3907
  %v3909 = vpop.f32.mrb[0].mxu0
  %v3910 = vadd.f32 %v3823, %v3909
  %v3911 = vpop.f32.mrb[0].mxu0
  %3912 = vdwg.mxu0
  %3913 = vmatprep.subr.mxu0 0.0
  %v3914 = vand.u32 %v3630, 4294901760
  %3915 = vmatpush1.msra.mxu0 %v3914
  %3916 = vmatprep.subr.mxu0 0.0
  %v3917 = vand.u32 %v3631, 4294901760
  %3918 = vmatpush1.msra.mxu0 %v3917
  %3919 = vmatprep.subr.mxu0 0.0
  %v3920 = vand.u32 %v3632, 4294901760
  %3921 = vmatpush1.msra.mxu0 %v3920
  %3922 = vmatprep.subr.mxu0 0.0
  %v3923 = vand.u32 %v3633, 4294901760
  %3924 = vmatpush1.msra.mxu0 %v3923
  %3925 = vmatprep.subr.mxu0 0.0
  %3926 = vmatpush1.msra.mxu0 0.0
  %3927 = vmatprep.subr.mxu0 0.0
  %3928 = vmatpush1.msra.mxu0 0.0
  %3929 = vmatprep.subr.mxu0 0.0
  %3930 = vmatpush1.msra.mxu0 0.0
  %3931 = vmatprep.subr.mxu0 0.0
  %3932 = vmatpush1.msra.mxu0 0.0
  %3933 = vmatprep.subr.mxu0 0.0
  %3934 = vmatpush1.msra.mxu0 0.0
  %3935 = vmatprep.subr.mxu0 0.0
  %3936 = vmatpush1.msra.mxu0 0.0
  %3937 = vmatprep.subr.mxu0 0.0
  %3938 = vmatpush1.msra.mxu0 0.0
  %3939 = vmatprep.subr.mxu0 0.0
  %3940 = vmatpush1.msra.mxu0 0.0
  %3941 = vmatprep.subr.mxu0 0.0
  %3942 = vmatpush1.msra.mxu0 0.0
  %3943 = vmatprep.subr.mxu0 0.0
  %3944 = vmatpush1.msra.mxu0 0.0
  %3945 = vmatprep.subr.mxu0 0.0
  %3946 = vmatpush1.msra.mxu0 0.0
  %3947 = vmatprep.subr.mxu0 0.0
  %3948 = vmatpush1.msra.mxu0 0.0
  %3949 = vmatprep.subr.mxu0 0.0
  %3950 = vmatpush1.msra.mxu0 0.0
  %3951 = vmatprep.subr.mxu0 0.0
  %3952 = vmatpush1.msra.mxu0 0.0
  %3953 = vmatprep.subr.mxu0 0.0
  %3954 = vmatpush1.msra.mxu0 0.0
  %3955 = vmatprep.subr.mxu0 0.0
  %3956 = vmatpush1.msra.mxu0 0.0
  %3957 = vmatprep.subr.mxu0 0.0
  %3958 = vmatpush1.msra.mxu0 0.0
  %3959 = vmatprep.subr.mxu0 0.0
  %3960 = vmatpush1.msra.mxu0 0.0
  %3961 = vmatprep.subr.mxu0 0.0
  %3962 = vmatpush1.msra.mxu0 0.0
  %3963 = vmatprep.subr.mxu0 0.0
  %3964 = vmatpush1.msra.mxu0 0.0
  %3965 = vmatprep.subr.mxu0 0.0
  %3966 = vmatpush1.msra.mxu0 0.0
  %3967 = vmatprep.subr.mxu0 0.0
  %3968 = vmatpush1.msra.mxu0 0.0
  %3969 = vmatprep.subr.mxu0 0.0
  %3970 = vmatpush1.msra.mxu0 0.0
  %3971 = vmatprep.subr.mxu0 0.0
  %3972 = vmatpush1.msra.mxu0 0.0
  %3973 = vmatprep.subr.mxu0 0.0
  %3974 = vmatpush1.msra.mxu0 0.0
  %3975 = vmatprep.subr.mxu0 0.0
  %3976 = vmatpush1.msra.mxu0 0.0
  %3977 = vmatprep.subr.mxu0 0.0
  %3978 = vmatpush1.msra.mxu0 0.0
  %3979 = vmatprep.subr.mxu0 0.0
  %3980 = vmatpush1.msra.mxu0 0.0
  %3981 = vmatprep.mubr.f32.mxu0 0.0
  %v3982 = vand.u32 %v3635, 4294901760
  %v3983 = vsub.f32 %v3635, %v3982
  %v3984 = vand.u32 %v3983, 4294901760
  %3985 = vmatmul.mubr.f32.gmra.mrb[0].mxu0 %v3984
  %v3986 = vpop.f32.mrb[0].mxu0
  %v3987 = vadd.f32 %v3903, %v3986
  %v3988 = vpop.f32.mrb[0].mxu0
  %3989 = vmatprep.mubr.f32.mxu0 0.0
  %v3990 = vand.u32 %v3638, 4294901760
  %v3991 = vsub.f32 %v3638, %v3990
  %v3992 = vand.u32 %v3991, 4294901760
  %3993 = vmatmul.mubr.f32.gmra.mrb[0].mxu0 %v3992
  %v3994 = vpop.f32.mrb[0].mxu0
  %v3995 = vadd.f32 %v3910, %v3994
  %v3996 = vpop.f32.mrb[0].mxu0
  %3997 = vdwg.mxu0
  %3998 = vmatprep.subr.mxu0 0.0
  %v3999 = vand.u32 %v3630, 4294901760
  %v4000 = vsub.f32 %v3630, %v3999
  %v4001 = vand.u32 %v4000, 4294901760
  %4002 = vmatpush1.msra.mxu0 %v4001
  %4003 = vmatprep.subr.mxu0 0.0
  %v4004 = vand.u32 %v3631, 4294901760
  %v4005 = vsub.f32 %v3631, %v4004
  %v4006 = vand.u32 %v4005, 4294901760
  %4007 = vmatpush1.msra.mxu0 %v4006
  %4008 = vmatprep.subr.mxu0 0.0
  %v4009 = vand.u32 %v3632, 4294901760
  %v4010 = vsub.f32 %v3632, %v4009
  %v4011 = vand.u32 %v4010, 4294901760
  %4012 = vmatpush1.msra.mxu0 %v4011
  %4013 = vmatprep.subr.mxu0 0.0
  %v4014 = vand.u32 %v3633, 4294901760
  %v4015 = vsub.f32 %v3633, %v4014
  %v4016 = vand.u32 %v4015, 4294901760
  %4017 = vmatpush1.msra.mxu0 %v4016
  %4018 = vmatprep.subr.mxu0 0.0
  %4019 = vmatpush1.msra.mxu0 0.0
  %4020 = vmatprep.subr.mxu0 0.0
  %4021 = vmatpush1.msra.mxu0 0.0
  %4022 = vmatprep.subr.mxu0 0.0
  %4023 = vmatpush1.msra.mxu0 0.0
  %4024 = vmatprep.subr.mxu0 0.0
  %4025 = vmatpush1.msra.mxu0 0.0
  %4026 = vmatprep.subr.mxu0 0.0
  %4027 = vmatpush1.msra.mxu0 0.0
  %4028 = vmatprep.subr.mxu0 0.0
  %4029 = vmatpush1.msra.mxu0 0.0
  %4030 = vmatprep.subr.mxu0 0.0
  %4031 = vmatpush1.msra.mxu0 0.0
  %4032 = vmatprep.subr.mxu0 0.0
  %4033 = vmatpush1.msra.mxu0 0.0
  %4034 = vmatprep.subr.mxu0 0.0
  %4035 = vmatpush1.msra.mxu0 0.0
  %4036 = vmatprep.subr.mxu0 0.0
  %4037 = vmatpush1.msra.mxu0 0.0
  %4038 = vmatprep.subr.mxu0 0.0
  %4039 = vmatpush1.msra.mxu0 0.0
  %4040 = vmatprep.subr.mxu0 0.0
  %4041 = vmatpush1.msra.mxu0 0.0
  %4042 = vmatprep.subr.mxu0 0.0
  %4043 = vmatpush1.msra.mxu0 0.0
  %4044 = vmatprep.subr.mxu0 0.0
  %4045 = vmatpush1.msra.mxu0 0.0
  %4046 = vmatprep.subr.mxu0 0.0
  %4047 = vmatpush1.msra.mxu0 0.0
  %4048 = vmatprep.subr.mxu0 0.0
  %4049 = vmatpush1.msra.mxu0 0.0
  %4050 = vmatprep.subr.mxu0 0.0
  %4051 = vmatpush1.msra.mxu0 0.0
  %4052 = vmatprep.subr.mxu0 0.0
  %4053 = vmatpush1.msra.mxu0 0.0
  %4054 = vmatprep.subr.mxu0 0.0
  %4055 = vmatpush1.msra.mxu0 0.0
  %4056 = vmatprep.subr.mxu0 0.0
  %4057 = vmatpush1.msra.mxu0 0.0
  %4058 = vmatprep.subr.mxu0 0.0
  %4059 = vmatpush1.msra.mxu0 0.0
  %4060 = vmatprep.subr.mxu0 0.0
  %4061 = vmatpush1.msra.mxu0 0.0
  %4062 = vmatprep.subr.mxu0 0.0
  %4063 = vmatpush1.msra.mxu0 0.0
  %4064 = vmatprep.subr.mxu0 0.0
  %4065 = vmatpush1.msra.mxu0 0.0
  %4066 = vmatprep.subr.mxu0 0.0
  %4067 = vmatpush1.msra.mxu0 0.0
  %4068 = vmatprep.subr.mxu0 0.0
  %4069 = vmatpush1.msra.mxu0 0.0
  %4070 = vmatprep.subr.mxu0 0.0
  %4071 = vmatpush1.msra.mxu0 0.0
  %4072 = vmatprep.subr.mxu0 0.0
  %4073 = vmatpush1.msra.mxu0 0.0
  %4074 = vmatprep.mubr.f32.mxu0 0.0
  %v4075 = vand.u32 %v3635, 4294901760
  %4076 = vmatmul.mubr.f32.gmra.mrb[0].mxu0 %v4075
  %v4077 = vpop.f32.mrb[0].mxu0
  %v4078 = vadd.f32 %v3987, %v4077
  %v4079 = vpop.f32.mrb[0].mxu0
  %4080 = vmatprep.mubr.f32.mxu0 0.0
  %v4081 = vand.u32 %v3638, 4294901760
  %4082 = vmatmul.mubr.f32.gmra.mrb[0].mxu0 %v4081
  %v4083 = vpop.f32.mrb[0].mxu0
  %v4084 = vadd.f32 %v3995, %v4083
  %v4085 = vpop.f32.mrb[0].mxu0
  %4086 = vdwg.mxu0
  %4087 = vmatprep.subr.mxu0 0.0
  %v4088 = vand.u32 %v3630, 4294901760
  %4089 = vmatpush1.msra.mxu0 %v4088
  %4090 = vmatprep.subr.mxu0 0.0
  %v4091 = vand.u32 %v3631, 4294901760
  %4092 = vmatpush1.msra.mxu0 %v4091
  %4093 = vmatprep.subr.mxu0 0.0
  %v4094 = vand.u32 %v3632, 4294901760
  %4095 = vmatpush1.msra.mxu0 %v4094
  %4096 = vmatprep.subr.mxu0 0.0
  %v4097 = vand.u32 %v3633, 4294901760
  %4098 = vmatpush1.msra.mxu0 %v4097
  %4099 = vmatprep.subr.mxu0 0.0
  %4100 = vmatpush1.msra.mxu0 0.0
  %4101 = vmatprep.subr.mxu0 0.0
  %4102 = vmatpush1.msra.mxu0 0.0
  %4103 = vmatprep.subr.mxu0 0.0
  %4104 = vmatpush1.msra.mxu0 0.0
  %4105 = vmatprep.subr.mxu0 0.0
  %4106 = vmatpush1.msra.mxu0 0.0
  %4107 = vmatprep.subr.mxu0 0.0
  %4108 = vmatpush1.msra.mxu0 0.0
  %4109 = vmatprep.subr.mxu0 0.0
  %4110 = vmatpush1.msra.mxu0 0.0
  %4111 = vmatprep.subr.mxu0 0.0
  %4112 = vmatpush1.msra.mxu0 0.0
  %4113 = vmatprep.subr.mxu0 0.0
  %4114 = vmatpush1.msra.mxu0 0.0
  %4115 = vmatprep.subr.mxu0 0.0
  %4116 = vmatpush1.msra.mxu0 0.0
  %4117 = vmatprep.subr.mxu0 0.0
  %4118 = vmatpush1.msra.mxu0 0.0
  %4119 = vmatprep.subr.mxu0 0.0
  %4120 = vmatpush1.msra.mxu0 0.0
  %4121 = vmatprep.subr.mxu0 0.0
  %4122 = vmatpush1.msra.mxu0 0.0
  %4123 = vmatprep.subr.mxu0 0.0
  %4124 = vmatpush1.msra.mxu0 0.0
  %4125 = vmatprep.subr.mxu0 0.0
  %4126 = vmatpush1.msra.mxu0 0.0
  %4127 = vmatprep.subr.mxu0 0.0
  %4128 = vmatpush1.msra.mxu0 0.0
  %4129 = vmatprep.subr.mxu0 0.0
  %4130 = vmatpush1.msra.mxu0 0.0
  %4131 = vmatprep.subr.mxu0 0.0
  %4132 = vmatpush1.msra.mxu0 0.0
  %4133 = vmatprep.subr.mxu0 0.0
  %4134 = vmatpush1.msra.mxu0 0.0
  %4135 = vmatprep.subr.mxu0 0.0
  %4136 = vmatpush1.msra.mxu0 0.0
  %4137 = vmatprep.subr.mxu0 0.0
  %4138 = vmatpush1.msra.mxu0 0.0
  %4139 = vmatprep.subr.mxu0 0.0
  %4140 = vmatpush1.msra.mxu0 0.0
  %4141 = vmatprep.subr.mxu0 0.0
  %4142 = vmatpush1.msra.mxu0 0.0
  %4143 = vmatprep.subr.mxu0 0.0
  %4144 = vmatpush1.msra.mxu0 0.0
  %4145 = vmatprep.subr.mxu0 0.0
  %4146 = vmatpush1.msra.mxu0 0.0
  %4147 = vmatprep.subr.mxu0 0.0
  %4148 = vmatpush1.msra.mxu0 0.0
  %4149 = vmatprep.subr.mxu0 0.0
  %4150 = vmatpush1.msra.mxu0 0.0
  %4151 = vmatprep.subr.mxu0 0.0
  %4152 = vmatpush1.msra.mxu0 0.0
  %4153 = vmatprep.subr.mxu0 0.0
  %4154 = vmatpush1.msra.mxu0 0.0
  %4155 = vmatprep.mubr.f32.mxu0 0.0
  %v4156 = vand.u32 %v3635, 4294901760
  %4157 = vmatmul.mubr.f32.gmra.mrb[0].mxu0 %v4156
  %v4158 = vpop.f32.mrb[0].mxu0
  %v4159 = vadd.f32 %v4078, %v4158
  %v4160 = vpop.f32.mrb[0].mxu0
  %4161 = vmatprep.mubr.f32.mxu0 0.0
  %v4162 = vand.u32 %v3638, 4294901760
  %4163 = vmatmul.mubr.f32.gmra.mrb[0].mxu0 %v4162
  %v4164 = vpop.f32.mrb[0].mxu0
  %v4165 = vadd.f32 %v4084, %v4164
  %v4166 = vpop.f32.mrb[0].mxu0
  %4167 = vdwg.mxu0
  %v4168 = vadd.f32 %v900, %v4159
  %v4169 = vadd.f32 %v907, %v4165
  %v4170 = vld [vmem:[%s9] sm:$0x1]
  %v4172 = vlaneseq
  %v4173 = vshrl.u32 %v4172, 7
  %v4174 = vsub.s32 0, %v4173
  %v4175 = vrot.slane %v4170, %v4174
  %v4177 = vadd.f32 %v4168, %v4175
  %v4178 = vadd.f32 %v4169, %v4175
  %v4179 = vld [vmem:[%s10] sm:$0x1]
  %v4180 = vld [vmem:[%s11] sm:$0x1]
  %v4181 = vsel %vm912, %v4177, 0.0
  %4182 = vadd.xlane.f32.xlu0 %v4181
  %v4183 = vpop.xlane.xlu0 %4182
  %v4184 = vsel %vm916, %v4178, 0.0
  %4185 = vadd.xlane.f32.xlu0 %v4184
  %v4186 = vpop.xlane.xlu0 %4185
  %v4187 = vmul.f32 %v4183, %v920
  %v4188 = vmul.f32 %v4186, %v920
  %v4189 = vsub.f32 %v4177, %v4187
  %v4190 = vsub.f32 %v4178, %v4188
  %v4191 = vmul.f32 %v4189, %v4189
  %v4192 = vmul.f32 %v4190, %v4190
  %v4193 = vsel %vm912, %v4191, 0.0
  %4194 = vadd.xlane.f32.xlu0 %v4193
  %v4195 = vpop.xlane.xlu0 %4194
  %v4196 = vsel %vm916, %v4192, 0.0
  %4197 = vadd.xlane.f32.xlu0 %v4196
  %v4198 = vpop.xlane.xlu0 %4197
  %v4199 = vmul.f32 %v4195, %v920
  %v4200 = vmul.f32 %v4198, %v920
  %v4201 = vadd.f32 %v4199, 1e-12
  %v4202 = vadd.f32 %v4200, 1e-12
  %v4203 = vrsqrt.pop %v4201
  %v4204 = vrsqrt.pop %v4202
  %v4205 = vmul.f32 %v4189, %v4203
  %v4206 = vmul.f32 %v4190, %v4204
  %v4208 = vlaneseq
  %v4209 = vshrl.u32 %v4208, 7
  %v4210 = vsub.s32 0, %v4209
  %v4211 = vrot.slane %v4179, %v4210
  %v4213 = vmul.f32 %v4205, %v4211
  %v4214 = vmul.f32 %v4206, %v4211
  %v4216 = vlaneseq
  %v4217 = vshrl.u32 %v4216, 7
  %v4218 = vsub.s32 0, %v4217
  %v4219 = vrot.slane %v4180, %v4218
  %v4221 = vadd.f32 %v4213, %v4219
  %v4222 = vadd.f32 %v4214, %v4219
  %v4223 = vld [vmem:[%s12] sm:$0xff]
  %v4224 = vld [vmem:[%s12 + $0x8] sm:$0xff]
  %v4225 = vld [vmem:[%s12 + $0x10] sm:$0xff]
  %v4226 = vld [vmem:[%s12 + $0x18] sm:$0xff]
  %v4227 = vld [vmem:[%s13] sm:$0x1]
  %v4229 = vlaneseq
  %v4230 = vshrl.u32 %v4229, 7
  %v4231 = vsub.s32 0, %v4230
  %v4232 = vrot.slane %v4227, %v4231
  %v4235 = vsel %vm912, %v4221, 0
  %v4238 = vsel %vm912, %v4222, 0
  %4240 = vmatprep.subr.mxu0 0.0
  %v4241 = vand.u32 %v4223, 4294901760
  %4242 = vmatpush1.msra.mxu0 %v4241
  %4243 = vmatprep.subr.mxu0 0.0
  %v4244 = vand.u32 %v4224, 4294901760
  %4245 = vmatpush1.msra.mxu0 %v4244
  %4246 = vmatprep.subr.mxu0 0.0
  %v4247 = vand.u32 %v4225, 4294901760
  %4248 = vmatpush1.msra.mxu0 %v4247
  %4249 = vmatprep.subr.mxu0 0.0
  %v4250 = vand.u32 %v4226, 4294901760
  %4251 = vmatpush1.msra.mxu0 %v4250
  %4252 = vmatprep.subr.mxu0 0.0
  %4253 = vmatpush1.msra.mxu0 0.0
  %4254 = vmatprep.subr.mxu0 0.0
  %4255 = vmatpush1.msra.mxu0 0.0
  %4256 = vmatprep.subr.mxu0 0.0
  %4257 = vmatpush1.msra.mxu0 0.0
  %4258 = vmatprep.subr.mxu0 0.0
  %4259 = vmatpush1.msra.mxu0 0.0
  %4260 = vmatprep.subr.mxu0 0.0
  %4261 = vmatpush1.msra.mxu0 0.0
  %4262 = vmatprep.subr.mxu0 0.0
  %4263 = vmatpush1.msra.mxu0 0.0
  %4264 = vmatprep.subr.mxu0 0.0
  %4265 = vmatpush1.msra.mxu0 0.0
  %4266 = vmatprep.subr.mxu0 0.0
  %4267 = vmatpush1.msra.mxu0 0.0
  %4268 = vmatprep.subr.mxu0 0.0
  %4269 = vmatpush1.msra.mxu0 0.0
  %4270 = vmatprep.subr.mxu0 0.0
  %4271 = vmatpush1.msra.mxu0 0.0
  %4272 = vmatprep.subr.mxu0 0.0
  %4273 = vmatpush1.msra.mxu0 0.0
  %4274 = vmatprep.subr.mxu0 0.0
  %4275 = vmatpush1.msra.mxu0 0.0
  %4276 = vmatprep.subr.mxu0 0.0
  %4277 = vmatpush1.msra.mxu0 0.0
  %4278 = vmatprep.subr.mxu0 0.0
  %4279 = vmatpush1.msra.mxu0 0.0
  %4280 = vmatprep.subr.mxu0 0.0
  %4281 = vmatpush1.msra.mxu0 0.0
  %4282 = vmatprep.subr.mxu0 0.0
  %4283 = vmatpush1.msra.mxu0 0.0
  %4284 = vmatprep.subr.mxu0 0.0
  %4285 = vmatpush1.msra.mxu0 0.0
  %4286 = vmatprep.subr.mxu0 0.0
  %4287 = vmatpush1.msra.mxu0 0.0
  %4288 = vmatprep.subr.mxu0 0.0
  %4289 = vmatpush1.msra.mxu0 0.0
  %4290 = vmatprep.subr.mxu0 0.0
  %4291 = vmatpush1.msra.mxu0 0.0
  %4292 = vmatprep.subr.mxu0 0.0
  %4293 = vmatpush1.msra.mxu0 0.0
  %4294 = vmatprep.subr.mxu0 0.0
  %4295 = vmatpush1.msra.mxu0 0.0
  %4296 = vmatprep.subr.mxu0 0.0
  %4297 = vmatpush1.msra.mxu0 0.0
  %4298 = vmatprep.subr.mxu0 0.0
  %4299 = vmatpush1.msra.mxu0 0.0
  %4300 = vmatprep.subr.mxu0 0.0
  %4301 = vmatpush1.msra.mxu0 0.0
  %4302 = vmatprep.subr.mxu0 0.0
  %4303 = vmatpush1.msra.mxu0 0.0
  %4304 = vmatprep.subr.mxu0 0.0
  %4305 = vmatpush1.msra.mxu0 0.0
  %4306 = vmatprep.subr.mxu0 0.0
  %4307 = vmatpush1.msra.mxu0 0.0
  %4308 = vmatprep.mubr.f32.mxu0 0.0
  %v4309 = vand.u32 %v4235, 4294901760
  %v4310 = vsub.f32 %v4235, %v4309
  %v4311 = vand.u32 %v4310, 4294901760
  %v4312 = vsub.f32 %v4310, %v4311
  %v4313 = vand.u32 %v4312, 4294901760
  %4314 = vmatmul.mubr.f32.gmra.mrb[0].mxu0 %v4313
  %v4315 = vpop.f32.mrb[0].mxu0
  %v4316 = vadd.f32 %v4232, %v4315
  %v4317 = vpop.f32.mrb[0].mxu0
  %4318 = vmatprep.mubr.f32.mxu0 0.0
  %v4319 = vand.u32 %v4238, 4294901760
  %v4320 = vsub.f32 %v4238, %v4319
  %v4321 = vand.u32 %v4320, 4294901760
  %v4322 = vsub.f32 %v4320, %v4321
  %v4323 = vand.u32 %v4322, 4294901760
  %4324 = vmatmul.mubr.f32.gmra.mrb[0].mxu0 %v4323
  %v4325 = vpop.f32.mrb[0].mxu0
  %v4326 = vadd.f32 %v4232, %v4325
  %v4327 = vpop.f32.mrb[0].mxu0
  %4328 = vdwg.mxu0
  %4329 = vmatprep.subr.mxu0 0.0
  %v4330 = vand.u32 %v4223, 4294901760
  %v4331 = vsub.f32 %v4223, %v4330
  %v4332 = vand.u32 %v4331, 4294901760
  %v4333 = vsub.f32 %v4331, %v4332
  %v4334 = vand.u32 %v4333, 4294901760
  %4335 = vmatpush1.msra.mxu0 %v4334
  %4336 = vmatprep.subr.mxu0 0.0
  %v4337 = vand.u32 %v4224, 4294901760
  %v4338 = vsub.f32 %v4224, %v4337
  %v4339 = vand.u32 %v4338, 4294901760
  %v4340 = vsub.f32 %v4338, %v4339
  %v4341 = vand.u32 %v4340, 4294901760
  %4342 = vmatpush1.msra.mxu0 %v4341
  %4343 = vmatprep.subr.mxu0 0.0
  %v4344 = vand.u32 %v4225, 4294901760
  %v4345 = vsub.f32 %v4225, %v4344
  %v4346 = vand.u32 %v4345, 4294901760
  %v4347 = vsub.f32 %v4345, %v4346
  %v4348 = vand.u32 %v4347, 4294901760
  %4349 = vmatpush1.msra.mxu0 %v4348
  %4350 = vmatprep.subr.mxu0 0.0
  %v4351 = vand.u32 %v4226, 4294901760
  %v4352 = vsub.f32 %v4226, %v4351
  %v4353 = vand.u32 %v4352, 4294901760
  %v4354 = vsub.f32 %v4352, %v4353
  %v4355 = vand.u32 %v4354, 4294901760
  %4356 = vmatpush1.msra.mxu0 %v4355
  %4357 = vmatprep.subr.mxu0 0.0
  %4358 = vmatpush1.msra.mxu0 0.0
  %4359 = vmatprep.subr.mxu0 0.0
  %4360 = vmatpush1.msra.mxu0 0.0
  %4361 = vmatprep.subr.mxu0 0.0
  %4362 = vmatpush1.msra.mxu0 0.0
  %4363 = vmatprep.subr.mxu0 0.0
  %4364 = vmatpush1.msra.mxu0 0.0
  %4365 = vmatprep.subr.mxu0 0.0
  %4366 = vmatpush1.msra.mxu0 0.0
  %4367 = vmatprep.subr.mxu0 0.0
  %4368 = vmatpush1.msra.mxu0 0.0
  %4369 = vmatprep.subr.mxu0 0.0
  %4370 = vmatpush1.msra.mxu0 0.0
  %4371 = vmatprep.subr.mxu0 0.0
  %4372 = vmatpush1.msra.mxu0 0.0
  %4373 = vmatprep.subr.mxu0 0.0
  %4374 = vmatpush1.msra.mxu0 0.0
  %4375 = vmatprep.subr.mxu0 0.0
  %4376 = vmatpush1.msra.mxu0 0.0
  %4377 = vmatprep.subr.mxu0 0.0
  %4378 = vmatpush1.msra.mxu0 0.0
  %4379 = vmatprep.subr.mxu0 0.0
  %4380 = vmatpush1.msra.mxu0 0.0
  %4381 = vmatprep.subr.mxu0 0.0
  %4382 = vmatpush1.msra.mxu0 0.0
  %4383 = vmatprep.subr.mxu0 0.0
  %4384 = vmatpush1.msra.mxu0 0.0
  %4385 = vmatprep.subr.mxu0 0.0
  %4386 = vmatpush1.msra.mxu0 0.0
  %4387 = vmatprep.subr.mxu0 0.0
  %4388 = vmatpush1.msra.mxu0 0.0
  %4389 = vmatprep.subr.mxu0 0.0
  %4390 = vmatpush1.msra.mxu0 0.0
  %4391 = vmatprep.subr.mxu0 0.0
  %4392 = vmatpush1.msra.mxu0 0.0
  %4393 = vmatprep.subr.mxu0 0.0
  %4394 = vmatpush1.msra.mxu0 0.0
  %4395 = vmatprep.subr.mxu0 0.0
  %4396 = vmatpush1.msra.mxu0 0.0
  %4397 = vmatprep.subr.mxu0 0.0
  %4398 = vmatpush1.msra.mxu0 0.0
  %4399 = vmatprep.subr.mxu0 0.0
  %4400 = vmatpush1.msra.mxu0 0.0
  %4401 = vmatprep.subr.mxu0 0.0
  %4402 = vmatpush1.msra.mxu0 0.0
  %4403 = vmatprep.subr.mxu0 0.0
  %4404 = vmatpush1.msra.mxu0 0.0
  %4405 = vmatprep.subr.mxu0 0.0
  %4406 = vmatpush1.msra.mxu0 0.0
  %4407 = vmatprep.subr.mxu0 0.0
  %4408 = vmatpush1.msra.mxu0 0.0
  %4409 = vmatprep.subr.mxu0 0.0
  %4410 = vmatpush1.msra.mxu0 0.0
  %4411 = vmatprep.subr.mxu0 0.0
  %4412 = vmatpush1.msra.mxu0 0.0
  %4413 = vmatprep.mubr.f32.mxu0 0.0
  %v4414 = vand.u32 %v4235, 4294901760
  %4415 = vmatmul.mubr.f32.gmra.mrb[0].mxu0 %v4414
  %v4416 = vpop.f32.mrb[0].mxu0
  %v4417 = vadd.f32 %v4316, %v4416
  %v4418 = vpop.f32.mrb[0].mxu0
  %4419 = vmatprep.mubr.f32.mxu0 0.0
  %v4420 = vand.u32 %v4238, 4294901760
  %4421 = vmatmul.mubr.f32.gmra.mrb[0].mxu0 %v4420
  %v4422 = vpop.f32.mrb[0].mxu0
  %v4423 = vadd.f32 %v4326, %v4422
  %v4424 = vpop.f32.mrb[0].mxu0
  %4425 = vdwg.mxu0
  %4426 = vmatprep.subr.mxu0 0.0
  %v4427 = vand.u32 %v4223, 4294901760
  %v4428 = vsub.f32 %v4223, %v4427
  %4429 = vmatpush1.msra.mxu0 %v4428
  %4430 = vmatprep.subr.mxu0 0.0
  %v4431 = vand.u32 %v4224, 4294901760
  %v4432 = vsub.f32 %v4224, %v4431
  %4433 = vmatpush1.msra.mxu0 %v4432
  %4434 = vmatprep.subr.mxu0 0.0
  %v4435 = vand.u32 %v4225, 4294901760
  %v4436 = vsub.f32 %v4225, %v4435
  %4437 = vmatpush1.msra.mxu0 %v4436
  %4438 = vmatprep.subr.mxu0 0.0
  %v4439 = vand.u32 %v4226, 4294901760
  %v4440 = vsub.f32 %v4226, %v4439
  %4441 = vmatpush1.msra.mxu0 %v4440
  %4442 = vmatprep.subr.mxu0 0.0
  %4443 = vmatpush1.msra.mxu0 0.0
  %4444 = vmatprep.subr.mxu0 0.0
  %4445 = vmatpush1.msra.mxu0 0.0
  %4446 = vmatprep.subr.mxu0 0.0
  %4447 = vmatpush1.msra.mxu0 0.0
  %4448 = vmatprep.subr.mxu0 0.0
  %4449 = vmatpush1.msra.mxu0 0.0
  %4450 = vmatprep.subr.mxu0 0.0
  %4451 = vmatpush1.msra.mxu0 0.0
  %4452 = vmatprep.subr.mxu0 0.0
  %4453 = vmatpush1.msra.mxu0 0.0
  %4454 = vmatprep.subr.mxu0 0.0
  %4455 = vmatpush1.msra.mxu0 0.0
  %4456 = vmatprep.subr.mxu0 0.0
  %4457 = vmatpush1.msra.mxu0 0.0
  %4458 = vmatprep.subr.mxu0 0.0
  %4459 = vmatpush1.msra.mxu0 0.0
  %4460 = vmatprep.subr.mxu0 0.0
  %4461 = vmatpush1.msra.mxu0 0.0
  %4462 = vmatprep.subr.mxu0 0.0
  %4463 = vmatpush1.msra.mxu0 0.0
  %4464 = vmatprep.subr.mxu0 0.0
  %4465 = vmatpush1.msra.mxu0 0.0
  %4466 = vmatprep.subr.mxu0 0.0
  %4467 = vmatpush1.msra.mxu0 0.0
  %4468 = vmatprep.subr.mxu0 0.0
  %4469 = vmatpush1.msra.mxu0 0.0
  %4470 = vmatprep.subr.mxu0 0.0
  %4471 = vmatpush1.msra.mxu0 0.0
  %4472 = vmatprep.subr.mxu0 0.0
  %4473 = vmatpush1.msra.mxu0 0.0
  %4474 = vmatprep.subr.mxu0 0.0
  %4475 = vmatpush1.msra.mxu0 0.0
  %4476 = vmatprep.subr.mxu0 0.0
  %4477 = vmatpush1.msra.mxu0 0.0
  %4478 = vmatprep.subr.mxu0 0.0
  %4479 = vmatpush1.msra.mxu0 0.0
  %4480 = vmatprep.subr.mxu0 0.0
  %4481 = vmatpush1.msra.mxu0 0.0
  %4482 = vmatprep.subr.mxu0 0.0
  %4483 = vmatpush1.msra.mxu0 0.0
  %4484 = vmatprep.subr.mxu0 0.0
  %4485 = vmatpush1.msra.mxu0 0.0
  %4486 = vmatprep.subr.mxu0 0.0
  %4487 = vmatpush1.msra.mxu0 0.0
  %4488 = vmatprep.subr.mxu0 0.0
  %4489 = vmatpush1.msra.mxu0 0.0
  %4490 = vmatprep.subr.mxu0 0.0
  %4491 = vmatpush1.msra.mxu0 0.0
  %4492 = vmatprep.subr.mxu0 0.0
  %4493 = vmatpush1.msra.mxu0 0.0
  %4494 = vmatprep.subr.mxu0 0.0
  %4495 = vmatpush1.msra.mxu0 0.0
  %4496 = vmatprep.subr.mxu0 0.0
  %4497 = vmatpush1.msra.mxu0 0.0
  %4498 = vmatprep.mubr.f32.mxu0 0.0
  %v4499 = vand.u32 %v4235, 4294901760
  %v4500 = vsub.f32 %v4235, %v4499
  %4501 = vmatmul.mubr.f32.gmra.mrb[0].mxu0 %v4500
  %v4502 = vpop.f32.mrb[0].mxu0
  %v4503 = vadd.f32 %v4417, %v4502
  %v4504 = vpop.f32.mrb[0].mxu0
  %4505 = vmatprep.mubr.f32.mxu0 0.0
  %v4506 = vand.u32 %v4238, 4294901760
  %v4507 = vsub.f32 %v4238, %v4506
  %4508 = vmatmul.mubr.f32.gmra.mrb[0].mxu0 %v4507
  %v4509 = vpop.f32.mrb[0].mxu0
  %v4510 = vadd.f32 %v4423, %v4509
  %v4511 = vpop.f32.mrb[0].mxu0
  %4512 = vdwg.mxu0
  %4513 = vmatprep.subr.mxu0 0.0
  %v4514 = vand.u32 %v4223, 4294901760
  %4515 = vmatpush1.msra.mxu0 %v4514
  %4516 = vmatprep.subr.mxu0 0.0
  %v4517 = vand.u32 %v4224, 4294901760
  %4518 = vmatpush1.msra.mxu0 %v4517
  %4519 = vmatprep.subr.mxu0 0.0
  %v4520 = vand.u32 %v4225, 4294901760
  %4521 = vmatpush1.msra.mxu0 %v4520
  %4522 = vmatprep.subr.mxu0 0.0
  %v4523 = vand.u32 %v4226, 4294901760
  %4524 = vmatpush1.msra.mxu0 %v4523
  %4525 = vmatprep.subr.mxu0 0.0
  %4526 = vmatpush1.msra.mxu0 0.0
  %4527 = vmatprep.subr.mxu0 0.0
  %4528 = vmatpush1.msra.mxu0 0.0
  %4529 = vmatprep.subr.mxu0 0.0
  %4530 = vmatpush1.msra.mxu0 0.0
  %4531 = vmatprep.subr.mxu0 0.0
  %4532 = vmatpush1.msra.mxu0 0.0
  %4533 = vmatprep.subr.mxu0 0.0
  %4534 = vmatpush1.msra.mxu0 0.0
  %4535 = vmatprep.subr.mxu0 0.0
  %4536 = vmatpush1.msra.mxu0 0.0
  %4537 = vmatprep.subr.mxu0 0.0
  %4538 = vmatpush1.msra.mxu0 0.0
  %4539 = vmatprep.subr.mxu0 0.0
  %4540 = vmatpush1.msra.mxu0 0.0
  %4541 = vmatprep.subr.mxu0 0.0
  %4542 = vmatpush1.msra.mxu0 0.0
  %4543 = vmatprep.subr.mxu0 0.0
  %4544 = vmatpush1.msra.mxu0 0.0
  %4545 = vmatprep.subr.mxu0 0.0
  %4546 = vmatpush1.msra.mxu0 0.0
  %4547 = vmatprep.subr.mxu0 0.0
  %4548 = vmatpush1.msra.mxu0 0.0
  %4549 = vmatprep.subr.mxu0 0.0
  %4550 = vmatpush1.msra.mxu0 0.0
  %4551 = vmatprep.subr.mxu0 0.0
  %4552 = vmatpush1.msra.mxu0 0.0
  %4553 = vmatprep.subr.mxu0 0.0
  %4554 = vmatpush1.msra.mxu0 0.0
  %4555 = vmatprep.subr.mxu0 0.0
  %4556 = vmatpush1.msra.mxu0 0.0
  %4557 = vmatprep.subr.mxu0 0.0
  %4558 = vmatpush1.msra.mxu0 0.0
  %4559 = vmatprep.subr.mxu0 0.0
  %4560 = vmatpush1.msra.mxu0 0.0
  %4561 = vmatprep.subr.mxu0 0.0
  %4562 = vmatpush1.msra.mxu0 0.0
  %4563 = vmatprep.subr.mxu0 0.0
  %4564 = vmatpush1.msra.mxu0 0.0
  %4565 = vmatprep.subr.mxu0 0.0
  %4566 = vmatpush1.msra.mxu0 0.0
  %4567 = vmatprep.subr.mxu0 0.0
  %4568 = vmatpush1.msra.mxu0 0.0
  %4569 = vmatprep.subr.mxu0 0.0
  %4570 = vmatpush1.msra.mxu0 0.0
  %4571 = vmatprep.subr.mxu0 0.0
  %4572 = vmatpush1.msra.mxu0 0.0
  %4573 = vmatprep.subr.mxu0 0.0
  %4574 = vmatpush1.msra.mxu0 0.0
  %4575 = vmatprep.subr.mxu0 0.0
  %4576 = vmatpush1.msra.mxu0 0.0
  %4577 = vmatprep.subr.mxu0 0.0
  %4578 = vmatpush1.msra.mxu0 0.0
  %4579 = vmatprep.subr.mxu0 0.0
  %4580 = vmatpush1.msra.mxu0 0.0
  %4581 = vmatprep.mubr.f32.mxu0 0.0
  %v4582 = vand.u32 %v4235, 4294901760
  %v4583 = vsub.f32 %v4235, %v4582
  %v4584 = vand.u32 %v4583, 4294901760
  %4585 = vmatmul.mubr.f32.gmra.mrb[0].mxu0 %v4584
  %v4586 = vpop.f32.mrb[0].mxu0
  %v4587 = vadd.f32 %v4503, %v4586
  %v4588 = vpop.f32.mrb[0].mxu0
  %4589 = vmatprep.mubr.f32.mxu0 0.0
  %v4590 = vand.u32 %v4238, 4294901760
  %v4591 = vsub.f32 %v4238, %v4590
  %v4592 = vand.u32 %v4591, 4294901760
  %4593 = vmatmul.mubr.f32.gmra.mrb[0].mxu0 %v4592
  %v4594 = vpop.f32.mrb[0].mxu0
  %v4595 = vadd.f32 %v4510, %v4594
  %v4596 = vpop.f32.mrb[0].mxu0
  %4597 = vdwg.mxu0
  %4598 = vmatprep.subr.mxu0 0.0
  %v4599 = vand.u32 %v4223, 4294901760
  %v4600 = vsub.f32 %v4223, %v4599
  %v4601 = vand.u32 %v4600, 4294901760
  %4602 = vmatpush1.msra.mxu0 %v4601
  %4603 = vmatprep.subr.mxu0 0.0
  %v4604 = vand.u32 %v4224, 4294901760
  %v4605 = vsub.f32 %v4224, %v4604
  %v4606 = vand.u32 %v4605, 4294901760
  %4607 = vmatpush1.msra.mxu0 %v4606
  %4608 = vmatprep.subr.mxu0 0.0
  %v4609 = vand.u32 %v4225, 4294901760
  %v4610 = vsub.f32 %v4225, %v4609
  %v4611 = vand.u32 %v4610, 4294901760
  %4612 = vmatpush1.msra.mxu0 %v4611
  %4613 = vmatprep.subr.mxu0 0.0
  %v4614 = vand.u32 %v4226, 4294901760
  %v4615 = vsub.f32 %v4226, %v4614
  %v4616 = vand.u32 %v4615, 4294901760
  %4617 = vmatpush1.msra.mxu0 %v4616
  %4618 = vmatprep.subr.mxu0 0.0
  %4619 = vmatpush1.msra.mxu0 0.0
  %4620 = vmatprep.subr.mxu0 0.0
  %4621 = vmatpush1.msra.mxu0 0.0
  %4622 = vmatprep.subr.mxu0 0.0
  %4623 = vmatpush1.msra.mxu0 0.0
  %4624 = vmatprep.subr.mxu0 0.0
  %4625 = vmatpush1.msra.mxu0 0.0
  %4626 = vmatprep.subr.mxu0 0.0
  %4627 = vmatpush1.msra.mxu0 0.0
  %4628 = vmatprep.subr.mxu0 0.0
  %4629 = vmatpush1.msra.mxu0 0.0
  %4630 = vmatprep.subr.mxu0 0.0
  %4631 = vmatpush1.msra.mxu0 0.0
  %4632 = vmatprep.subr.mxu0 0.0
  %4633 = vmatpush1.msra.mxu0 0.0
  %4634 = vmatprep.subr.mxu0 0.0
  %4635 = vmatpush1.msra.mxu0 0.0
  %4636 = vmatprep.subr.mxu0 0.0
  %4637 = vmatpush1.msra.mxu0 0.0
  %4638 = vmatprep.subr.mxu0 0.0
  %4639 = vmatpush1.msra.mxu0 0.0
  %4640 = vmatprep.subr.mxu0 0.0
  %4641 = vmatpush1.msra.mxu0 0.0
  %4642 = vmatprep.subr.mxu0 0.0
  %4643 = vmatpush1.msra.mxu0 0.0
  %4644 = vmatprep.subr.mxu0 0.0
  %4645 = vmatpush1.msra.mxu0 0.0
  %4646 = vmatprep.subr.mxu0 0.0
  %4647 = vmatpush1.msra.mxu0 0.0
  %4648 = vmatprep.subr.mxu0 0.0
  %4649 = vmatpush1.msra.mxu0 0.0
  %4650 = vmatprep.subr.mxu0 0.0
  %4651 = vmatpush1.msra.mxu0 0.0
  %4652 = vmatprep.subr.mxu0 0.0
  %4653 = vmatpush1.msra.mxu0 0.0
  %4654 = vmatprep.subr.mxu0 0.0
  %4655 = vmatpush1.msra.mxu0 0.0
  %4656 = vmatprep.subr.mxu0 0.0
  %4657 = vmatpush1.msra.mxu0 0.0
  %4658 = vmatprep.subr.mxu0 0.0
  %4659 = vmatpush1.msra.mxu0 0.0
  %4660 = vmatprep.subr.mxu0 0.0
  %4661 = vmatpush1.msra.mxu0 0.0
  %4662 = vmatprep.subr.mxu0 0.0
  %4663 = vmatpush1.msra.mxu0 0.0
  %4664 = vmatprep.subr.mxu0 0.0
  %4665 = vmatpush1.msra.mxu0 0.0
  %4666 = vmatprep.subr.mxu0 0.0
  %4667 = vmatpush1.msra.mxu0 0.0
  %4668 = vmatprep.subr.mxu0 0.0
  %4669 = vmatpush1.msra.mxu0 0.0
  %4670 = vmatprep.subr.mxu0 0.0
  %4671 = vmatpush1.msra.mxu0 0.0
  %4672 = vmatprep.subr.mxu0 0.0
  %4673 = vmatpush1.msra.mxu0 0.0
  %4674 = vmatprep.mubr.f32.mxu0 0.0
  %v4675 = vand.u32 %v4235, 4294901760
  %4676 = vmatmul.mubr.f32.gmra.mrb[0].mxu0 %v4675
  %v4677 = vpop.f32.mrb[0].mxu0
  %v4678 = vadd.f32 %v4587, %v4677
  %v4679 = vpop.f32.mrb[0].mxu0
  %4680 = vmatprep.mubr.f32.mxu0 0.0
  %v4681 = vand.u32 %v4238, 4294901760
  %4682 = vmatmul.mubr.f32.gmra.mrb[0].mxu0 %v4681
  %v4683 = vpop.f32.mrb[0].mxu0
  %v4684 = vadd.f32 %v4595, %v4683
  %v4685 = vpop.f32.mrb[0].mxu0
  %4686 = vdwg.mxu0
  %4687 = vmatprep.subr.mxu0 0.0
  %v4688 = vand.u32 %v4223, 4294901760
  %4689 = vmatpush1.msra.mxu0 %v4688
  %4690 = vmatprep.subr.mxu0 0.0
  %v4691 = vand.u32 %v4224, 4294901760
  %4692 = vmatpush1.msra.mxu0 %v4691
  %4693 = vmatprep.subr.mxu0 0.0
  %v4694 = vand.u32 %v4225, 4294901760
  %4695 = vmatpush1.msra.mxu0 %v4694
  %4696 = vmatprep.subr.mxu0 0.0
  %v4697 = vand.u32 %v4226, 4294901760
  %4698 = vmatpush1.msra.mxu0 %v4697
  %4699 = vmatprep.subr.mxu0 0.0
  %4700 = vmatpush1.msra.mxu0 0.0
  %4701 = vmatprep.subr.mxu0 0.0
  %4702 = vmatpush1.msra.mxu0 0.0
  %4703 = vmatprep.subr.mxu0 0.0
  %4704 = vmatpush1.msra.mxu0 0.0
  %4705 = vmatprep.subr.mxu0 0.0
  %4706 = vmatpush1.msra.mxu0 0.0
  %4707 = vmatprep.subr.mxu0 0.0
  %4708 = vmatpush1.msra.mxu0 0.0
  %4709 = vmatprep.subr.mxu0 0.0
  %4710 = vmatpush1.msra.mxu0 0.0
  %4711 = vmatprep.subr.mxu0 0.0
  %4712 = vmatpush1.msra.mxu0 0.0
  %4713 = vmatprep.subr.mxu0 0.0
  %4714 = vmatpush1.msra.mxu0 0.0
  %4715 = vmatprep.subr.mxu0 0.0
  %4716 = vmatpush1.msra.mxu0 0.0
  %4717 = vmatprep.subr.mxu0 0.0
  %4718 = vmatpush1.msra.mxu0 0.0
  %4719 = vmatprep.subr.mxu0 0.0
  %4720 = vmatpush1.msra.mxu0 0.0
  %4721 = vmatprep.subr.mxu0 0.0
  %4722 = vmatpush1.msra.mxu0 0.0
  %4723 = vmatprep.subr.mxu0 0.0
  %4724 = vmatpush1.msra.mxu0 0.0
  %4725 = vmatprep.subr.mxu0 0.0
  %4726 = vmatpush1.msra.mxu0 0.0
  %4727 = vmatprep.subr.mxu0 0.0
  %4728 = vmatpush1.msra.mxu0 0.0
  %4729 = vmatprep.subr.mxu0 0.0
  %4730 = vmatpush1.msra.mxu0 0.0
  %4731 = vmatprep.subr.mxu0 0.0
  %4732 = vmatpush1.msra.mxu0 0.0
  %4733 = vmatprep.subr.mxu0 0.0
  %4734 = vmatpush1.msra.mxu0 0.0
  %4735 = vmatprep.subr.mxu0 0.0
  %4736 = vmatpush1.msra.mxu0 0.0
  %4737 = vmatprep.subr.mxu0 0.0
  %4738 = vmatpush1.msra.mxu0 0.0
  %4739 = vmatprep.subr.mxu0 0.0
  %4740 = vmatpush1.msra.mxu0 0.0
  %4741 = vmatprep.subr.mxu0 0.0
  %4742 = vmatpush1.msra.mxu0 0.0
  %4743 = vmatprep.subr.mxu0 0.0
  %4744 = vmatpush1.msra.mxu0 0.0
  %4745 = vmatprep.subr.mxu0 0.0
  %4746 = vmatpush1.msra.mxu0 0.0
  %4747 = vmatprep.subr.mxu0 0.0
  %4748 = vmatpush1.msra.mxu0 0.0
  %4749 = vmatprep.subr.mxu0 0.0
  %4750 = vmatpush1.msra.mxu0 0.0
  %4751 = vmatprep.subr.mxu0 0.0
  %4752 = vmatpush1.msra.mxu0 0.0
  %4753 = vmatprep.subr.mxu0 0.0
  %4754 = vmatpush1.msra.mxu0 0.0
  %4755 = vmatprep.mubr.f32.mxu0 0.0
  %v4756 = vand.u32 %v4235, 4294901760
  %4757 = vmatmul.mubr.f32.gmra.mrb[0].mxu0 %v4756
  %v4758 = vpop.f32.mrb[0].mxu0
  %v4759 = vadd.f32 %v4678, %v4758
  %v4760 = vpop.f32.mrb[0].mxu0
  %4761 = vmatprep.mubr.f32.mxu0 0.0
  %v4762 = vand.u32 %v4238, 4294901760
  %4763 = vmatmul.mubr.f32.gmra.mrb[0].mxu0 %v4762
  %v4764 = vpop.f32.mrb[0].mxu0
  %v4765 = vadd.f32 %v4684, %v4764
  %v4766 = vpop.f32.mrb[0].mxu0
  %4767 = vdwg.mxu0
  %v4768 = vmul.f32 %v4759, 0.5
  %v4769 = vmul.f32 %v4765, 0.5
  %v4770 = vmul.f32 %v4759, 0.044715
  %v4771 = vmul.f32 %v4765, 0.044715
  %v4772 = vmul.f32 %v4770, %v4759
  %v4773 = vmul.f32 %v4771, %v4765
  %v4774 = vmul.f32 %v4772, %v4759
  %v4775 = vmul.f32 %v4773, %v4765
  %v4776 = vadd.f32 %v4759, %v4774
  %v4777 = vadd.f32 %v4765, %v4775
  %v4778 = vmul.f32 %v4776, 0.7978846
  %v4779 = vmul.f32 %v4777, 0.7978846
  %v4780 = vtanh.pop %v4778
  %v4781 = vtanh.pop %v4779
  %v4782 = vadd.f32 %v4780, 1.0
  %v4783 = vadd.f32 %v4781, 1.0
  %v4784 = vmul.f32 %v4768, %v4782
  %v4785 = vmul.f32 %v4769, %v4783
  %v4786 = vld [vmem:[%s14] sm:$0xff]
  %v4787 = vld [vmem:[%s14 + $0x8] sm:$0xff]
  %v4788 = vld [vmem:[%s14 + $0x10] sm:$0xff]
  %v4789 = vld [vmem:[%s14 + $0x18] sm:$0xff]
  %v4790 = vld [vmem:[%s14 + $0x20] sm:$0xff]
  %v4791 = vld [vmem:[%s14 + $0x28] sm:$0xff]
  %v4792 = vld [vmem:[%s14 + $0x30] sm:$0xff]
  %v4793 = vld [vmem:[%s14 + $0x38] sm:$0xff]
  %v4795 = vsel %vm89, %v4784, 0
  %v4798 = vsel %vm89, %v4785, 0
  %4800 = vmatprep.subr.mxu0 0.0
  %v4801 = vand.u32 %v4786, 4294901760
  %4802 = vmatpush1.msra.mxu0 %v4801
  %4803 = vmatprep.subr.mxu0 0.0
  %v4804 = vand.u32 %v4787, 4294901760
  %4805 = vmatpush1.msra.mxu0 %v4804
  %4806 = vmatprep.subr.mxu0 0.0
  %v4807 = vand.u32 %v4788, 4294901760
  %4808 = vmatpush1.msra.mxu0 %v4807
  %4809 = vmatprep.subr.mxu0 0.0
  %v4810 = vand.u32 %v4789, 4294901760
  %4811 = vmatpush1.msra.mxu0 %v4810
  %4812 = vmatprep.subr.mxu0 0.0
  %v4813 = vand.u32 %v4790, 4294901760
  %4814 = vmatpush1.msra.mxu0 %v4813
  %4815 = vmatprep.subr.mxu0 0.0
  %v4816 = vand.u32 %v4791, 4294901760
  %4817 = vmatpush1.msra.mxu0 %v4816
  %4818 = vmatprep.subr.mxu0 0.0
  %v4819 = vand.u32 %v4792, 4294901760
  %4820 = vmatpush1.msra.mxu0 %v4819
  %4821 = vmatprep.subr.mxu0 0.0
  %v4822 = vand.u32 %v4793, 4294901760
  %4823 = vmatpush1.msra.mxu0 %v4822
  %4824 = vmatprep.subr.mxu0 0.0
  %4825 = vmatpush1.msra.mxu0 0.0
  %4826 = vmatprep.subr.mxu0 0.0
  %4827 = vmatpush1.msra.mxu0 0.0
  %4828 = vmatprep.subr.mxu0 0.0
  %4829 = vmatpush1.msra.mxu0 0.0
  %4830 = vmatprep.subr.mxu0 0.0
  %4831 = vmatpush1.msra.mxu0 0.0
  %4832 = vmatprep.subr.mxu0 0.0
  %4833 = vmatpush1.msra.mxu0 0.0
  %4834 = vmatprep.subr.mxu0 0.0
  %4835 = vmatpush1.msra.mxu0 0.0
  %4836 = vmatprep.subr.mxu0 0.0
  %4837 = vmatpush1.msra.mxu0 0.0
  %4838 = vmatprep.subr.mxu0 0.0
  %4839 = vmatpush1.msra.mxu0 0.0
  %4840 = vmatprep.subr.mxu0 0.0
  %4841 = vmatpush1.msra.mxu0 0.0
  %4842 = vmatprep.subr.mxu0 0.0
  %4843 = vmatpush1.msra.mxu0 0.0
  %4844 = vmatprep.subr.mxu0 0.0
  %4845 = vmatpush1.msra.mxu0 0.0
  %4846 = vmatprep.subr.mxu0 0.0
  %4847 = vmatpush1.msra.mxu0 0.0
  %4848 = vmatprep.subr.mxu0 0.0
  %4849 = vmatpush1.msra.mxu0 0.0
  %4850 = vmatprep.subr.mxu0 0.0
  %4851 = vmatpush1.msra.mxu0 0.0
  %4852 = vmatprep.subr.mxu0 0.0
  %4853 = vmatpush1.msra.mxu0 0.0
  %4854 = vmatprep.subr.mxu0 0.0
  %4855 = vmatpush1.msra.mxu0 0.0
  %4856 = vmatprep.subr.mxu0 0.0
  %4857 = vmatpush1.msra.mxu0 0.0
  %4858 = vmatprep.subr.mxu0 0.0
  %4859 = vmatpush1.msra.mxu0 0.0
  %4860 = vmatprep.subr.mxu0 0.0
  %4861 = vmatpush1.msra.mxu0 0.0
  %4862 = vmatprep.subr.mxu0 0.0
  %4863 = vmatpush1.msra.mxu0 0.0
  %4864 = vmatprep.subr.mxu0 0.0
  %4865 = vmatpush1.msra.mxu0 0.0
  %4866 = vmatprep.subr.mxu0 0.0
  %4867 = vmatpush1.msra.mxu0 0.0
  %4868 = vmatprep.subr.mxu0 0.0
  %4869 = vmatpush1.msra.mxu0 0.0
  %4870 = vmatprep.subr.mxu0 0.0
  %4871 = vmatpush1.msra.mxu0 0.0
  %4872 = vmatprep.mubr.f32.mxu0 0.0
  %v4873 = vand.u32 %v4795, 4294901760
  %v4874 = vsub.f32 %v4795, %v4873
  %v4875 = vand.u32 %v4874, 4294901760
  %v4876 = vsub.f32 %v4874, %v4875
  %v4877 = vand.u32 %v4876, 4294901760
  %4878 = vmatmul.mubr.f32.gmra.mrb[0].mxu0 %v4877
  %v4879 = vpop.f32.mrb[0].mxu0
  %v4880 = vadd.f32 0.0, %v4879
  %v4881 = vpop.f32.mrb[0].mxu0
  %4882 = vmatprep.mubr.f32.mxu0 0.0
  %v4883 = vand.u32 %v4798, 4294901760
  %v4884 = vsub.f32 %v4798, %v4883
  %v4885 = vand.u32 %v4884, 4294901760
  %v4886 = vsub.f32 %v4884, %v4885
  %v4887 = vand.u32 %v4886, 4294901760
  %4888 = vmatmul.mubr.f32.gmra.mrb[0].mxu0 %v4887
  %v4889 = vpop.f32.mrb[0].mxu0
  %v4890 = vadd.f32 0.0, %v4889
  %v4891 = vpop.f32.mrb[0].mxu0
  %4892 = vdwg.mxu0
  %4893 = vmatprep.subr.mxu0 0.0
  %v4894 = vand.u32 %v4786, 4294901760
  %v4895 = vsub.f32 %v4786, %v4894
  %v4896 = vand.u32 %v4895, 4294901760
  %v4897 = vsub.f32 %v4895, %v4896
  %v4898 = vand.u32 %v4897, 4294901760
  %4899 = vmatpush1.msra.mxu0 %v4898
  %4900 = vmatprep.subr.mxu0 0.0
  %v4901 = vand.u32 %v4787, 4294901760
  %v4902 = vsub.f32 %v4787, %v4901
  %v4903 = vand.u32 %v4902, 4294901760
  %v4904 = vsub.f32 %v4902, %v4903
  %v4905 = vand.u32 %v4904, 4294901760
  %4906 = vmatpush1.msra.mxu0 %v4905
  %4907 = vmatprep.subr.mxu0 0.0
  %v4908 = vand.u32 %v4788, 4294901760
  %v4909 = vsub.f32 %v4788, %v4908
  %v4910 = vand.u32 %v4909, 4294901760
  %v4911 = vsub.f32 %v4909, %v4910
  %v4912 = vand.u32 %v4911, 4294901760
  %4913 = vmatpush1.msra.mxu0 %v4912
  %4914 = vmatprep.subr.mxu0 0.0
  %v4915 = vand.u32 %v4789, 4294901760
  %v4916 = vsub.f32 %v4789, %v4915
  %v4917 = vand.u32 %v4916, 4294901760
  %v4918 = vsub.f32 %v4916, %v4917
  %v4919 = vand.u32 %v4918, 4294901760
  %4920 = vmatpush1.msra.mxu0 %v4919
  %4921 = vmatprep.subr.mxu0 0.0
  %v4922 = vand.u32 %v4790, 4294901760
  %v4923 = vsub.f32 %v4790, %v4922
  %v4924 = vand.u32 %v4923, 4294901760
  %v4925 = vsub.f32 %v4923, %v4924
  %v4926 = vand.u32 %v4925, 4294901760
  %4927 = vmatpush1.msra.mxu0 %v4926
  %4928 = vmatprep.subr.mxu0 0.0
  %v4929 = vand.u32 %v4791, 4294901760
  %v4930 = vsub.f32 %v4791, %v4929
  %v4931 = vand.u32 %v4930, 4294901760
  %v4932 = vsub.f32 %v4930, %v4931
  %v4933 = vand.u32 %v4932, 4294901760
  %4934 = vmatpush1.msra.mxu0 %v4933
  %4935 = vmatprep.subr.mxu0 0.0
  %v4936 = vand.u32 %v4792, 4294901760
  %v4937 = vsub.f32 %v4792, %v4936
  %v4938 = vand.u32 %v4937, 4294901760
  %v4939 = vsub.f32 %v4937, %v4938
  %v4940 = vand.u32 %v4939, 4294901760
  %4941 = vmatpush1.msra.mxu0 %v4940
  %4942 = vmatprep.subr.mxu0 0.0
  %v4943 = vand.u32 %v4793, 4294901760
  %v4944 = vsub.f32 %v4793, %v4943
  %v4945 = vand.u32 %v4944, 4294901760
  %v4946 = vsub.f32 %v4944, %v4945
  %v4947 = vand.u32 %v4946, 4294901760
  %4948 = vmatpush1.msra.mxu0 %v4947
  %4949 = vmatprep.subr.mxu0 0.0
  %4950 = vmatpush1.msra.mxu0 0.0
  %4951 = vmatprep.subr.mxu0 0.0
  %4952 = vmatpush1.msra.mxu0 0.0
  %4953 = vmatprep.subr.mxu0 0.0
  %4954 = vmatpush1.msra.mxu0 0.0
  %4955 = vmatprep.subr.mxu0 0.0
  %4956 = vmatpush1.msra.mxu0 0.0
  %4957 = vmatprep.subr.mxu0 0.0
  %4958 = vmatpush1.msra.mxu0 0.0
  %4959 = vmatprep.subr.mxu0 0.0
  %4960 = vmatpush1.msra.mxu0 0.0
  %4961 = vmatprep.subr.mxu0 0.0
  %4962 = vmatpush1.msra.mxu0 0.0
  %4963 = vmatprep.subr.mxu0 0.0
  %4964 = vmatpush1.msra.mxu0 0.0
  %4965 = vmatprep.subr.mxu0 0.0
  %4966 = vmatpush1.msra.mxu0 0.0
  %4967 = vmatprep.subr.mxu0 0.0
  %4968 = vmatpush1.msra.mxu0 0.0
  %4969 = vmatprep.subr.mxu0 0.0
  %4970 = vmatpush1.msra.mxu0 0.0
  %4971 = vmatprep.subr.mxu0 0.0
  %4972 = vmatpush1.msra.mxu0 0.0
  %4973 = vmatprep.subr.mxu0 0.0
  %4974 = vmatpush1.msra.mxu0 0.0
  %4975 = vmatprep.subr.mxu0 0.0
  %4976 = vmatpush1.msra.mxu0 0.0
  %4977 = vmatprep.subr.mxu0 0.0
  %4978 = vmatpush1.msra.mxu0 0.0
  %4979 = vmatprep.subr.mxu0 0.0
  %4980 = vmatpush1.msra.mxu0 0.0
  %4981 = vmatprep.subr.mxu0 0.0
  %4982 = vmatpush1.msra.mxu0 0.0
  %4983 = vmatprep.subr.mxu0 0.0
  %4984 = vmatpush1.msra.mxu0 0.0
  %4985 = vmatprep.subr.mxu0 0.0
  %4986 = vmatpush1.msra.mxu0 0.0
  %4987 = vmatprep.subr.mxu0 0.0
  %4988 = vmatpush1.msra.mxu0 0.0
  %4989 = vmatprep.subr.mxu0 0.0
  %4990 = vmatpush1.msra.mxu0 0.0
  %4991 = vmatprep.subr.mxu0 0.0
  %4992 = vmatpush1.msra.mxu0 0.0
  %4993 = vmatprep.subr.mxu0 0.0
  %4994 = vmatpush1.msra.mxu0 0.0
  %4995 = vmatprep.subr.mxu0 0.0
  %4996 = vmatpush1.msra.mxu0 0.0
  %4997 = vmatprep.mubr.f32.mxu0 0.0
  %v4998 = vand.u32 %v4795, 4294901760
  %4999 = vmatmul.mubr.f32.gmra.mrb[0].mxu0 %v4998
  %v5000 = vpop.f32.mrb[0].mxu0
  %v5001 = vadd.f32 %v4880, %v5000
  %v5002 = vpop.f32.mrb[0].mxu0
  %5003 = vmatprep.mubr.f32.mxu0 0.0
  %v5004 = vand.u32 %v4798, 4294901760
  %5005 = vmatmul.mubr.f32.gmra.mrb[0].mxu0 %v5004
  %v5006 = vpop.f32.mrb[0].mxu0
  %v5007 = vadd.f32 %v4890, %v5006
  %v5008 = vpop.f32.mrb[0].mxu0
  %5009 = vdwg.mxu0
  %5010 = vmatprep.subr.mxu0 0.0
  %v5011 = vand.u32 %v4786, 4294901760
  %v5012 = vsub.f32 %v4786, %v5011
  %5013 = vmatpush1.msra.mxu0 %v5012
  %5014 = vmatprep.subr.mxu0 0.0
  %v5015 = vand.u32 %v4787, 4294901760
  %v5016 = vsub.f32 %v4787, %v5015
  %5017 = vmatpush1.msra.mxu0 %v5016
  %5018 = vmatprep.subr.mxu0 0.0
  %v5019 = vand.u32 %v4788, 4294901760
  %v5020 = vsub.f32 %v4788, %v5019
  %5021 = vmatpush1.msra.mxu0 %v5020
  %5022 = vmatprep.subr.mxu0 0.0
  %v5023 = vand.u32 %v4789, 4294901760
  %v5024 = vsub.f32 %v4789, %v5023
  %5025 = vmatpush1.msra.mxu0 %v5024
  %5026 = vmatprep.subr.mxu0 0.0
  %v5027 = vand.u32 %v4790, 4294901760
  %v5028 = vsub.f32 %v4790, %v5027
  %5029 = vmatpush1.msra.mxu0 %v5028
  %5030 = vmatprep.subr.mxu0 0.0
  %v5031 = vand.u32 %v4791, 4294901760
  %v5032 = vsub.f32 %v4791, %v5031
  %5033 = vmatpush1.msra.mxu0 %v5032
  %5034 = vmatprep.subr.mxu0 0.0
  %v5035 = vand.u32 %v4792, 4294901760
  %v5036 = vsub.f32 %v4792, %v5035
  %5037 = vmatpush1.msra.mxu0 %v5036
  %5038 = vmatprep.subr.mxu0 0.0
  %v5039 = vand.u32 %v4793, 4294901760
  %v5040 = vsub.f32 %v4793, %v5039
  %5041 = vmatpush1.msra.mxu0 %v5040
  %5042 = vmatprep.subr.mxu0 0.0
  %5043 = vmatpush1.msra.mxu0 0.0
  %5044 = vmatprep.subr.mxu0 0.0
  %5045 = vmatpush1.msra.mxu0 0.0
  %5046 = vmatprep.subr.mxu0 0.0
  %5047 = vmatpush1.msra.mxu0 0.0
  %5048 = vmatprep.subr.mxu0 0.0
  %5049 = vmatpush1.msra.mxu0 0.0
  %5050 = vmatprep.subr.mxu0 0.0
  %5051 = vmatpush1.msra.mxu0 0.0
  %5052 = vmatprep.subr.mxu0 0.0
  %5053 = vmatpush1.msra.mxu0 0.0
  %5054 = vmatprep.subr.mxu0 0.0
  %5055 = vmatpush1.msra.mxu0 0.0
  %5056 = vmatprep.subr.mxu0 0.0
  %5057 = vmatpush1.msra.mxu0 0.0
  %5058 = vmatprep.subr.mxu0 0.0
  %5059 = vmatpush1.msra.mxu0 0.0
  %5060 = vmatprep.subr.mxu0 0.0
  %5061 = vmatpush1.msra.mxu0 0.0
  %5062 = vmatprep.subr.mxu0 0.0
  %5063 = vmatpush1.msra.mxu0 0.0
  %5064 = vmatprep.subr.mxu0 0.0
  %5065 = vmatpush1.msra.mxu0 0.0
  %5066 = vmatprep.subr.mxu0 0.0
  %5067 = vmatpush1.msra.mxu0 0.0
  %5068 = vmatprep.subr.mxu0 0.0
  %5069 = vmatpush1.msra.mxu0 0.0
  %5070 = vmatprep.subr.mxu0 0.0
  %5071 = vmatpush1.msra.mxu0 0.0
  %5072 = vmatprep.subr.mxu0 0.0
  %5073 = vmatpush1.msra.mxu0 0.0
  %5074 = vmatprep.subr.mxu0 0.0
  %5075 = vmatpush1.msra.mxu0 0.0
  %5076 = vmatprep.subr.mxu0 0.0
  %5077 = vmatpush1.msra.mxu0 0.0
  %5078 = vmatprep.subr.mxu0 0.0
  %5079 = vmatpush1.msra.mxu0 0.0
  %5080 = vmatprep.subr.mxu0 0.0
  %5081 = vmatpush1.msra.mxu0 0.0
  %5082 = vmatprep.subr.mxu0 0.0
  %5083 = vmatpush1.msra.mxu0 0.0
  %5084 = vmatprep.subr.mxu0 0.0
  %5085 = vmatpush1.msra.mxu0 0.0
  %5086 = vmatprep.subr.mxu0 0.0
  %5087 = vmatpush1.msra.mxu0 0.0
  %5088 = vmatprep.subr.mxu0 0.0
  %5089 = vmatpush1.msra.mxu0 0.0
  %5090 = vmatprep.mubr.f32.mxu0 0.0
  %v5091 = vand.u32 %v4795, 4294901760
  %v5092 = vsub.f32 %v4795, %v5091
  %5093 = vmatmul.mubr.f32.gmra.mrb[0].mxu0 %v5092
  %v5094 = vpop.f32.mrb[0].mxu0
  %v5095 = vadd.f32 %v5001, %v5094
  %v5096 = vpop.f32.mrb[0].mxu0
  %5097 = vmatprep.mubr.f32.mxu0 0.0
  %v5098 = vand.u32 %v4798, 4294901760
  %v5099 = vsub.f32 %v4798, %v5098
  %5100 = vmatmul.mubr.f32.gmra.mrb[0].mxu0 %v5099
  %v5101 = vpop.f32.mrb[0].mxu0
  %v5102 = vadd.f32 %v5007, %v5101
  %v5103 = vpop.f32.mrb[0].mxu0
  %5104 = vdwg.mxu0
  %5105 = vmatprep.subr.mxu0 0.0
  %v5106 = vand.u32 %v4786, 4294901760
  %5107 = vmatpush1.msra.mxu0 %v5106
  %5108 = vmatprep.subr.mxu0 0.0
  %v5109 = vand.u32 %v4787, 4294901760
  %5110 = vmatpush1.msra.mxu0 %v5109
  %5111 = vmatprep.subr.mxu0 0.0
  %v5112 = vand.u32 %v4788, 4294901760
  %5113 = vmatpush1.msra.mxu0 %v5112
  %5114 = vmatprep.subr.mxu0 0.0
  %v5115 = vand.u32 %v4789, 4294901760
  %5116 = vmatpush1.msra.mxu0 %v5115
  %5117 = vmatprep.subr.mxu0 0.0
  %v5118 = vand.u32 %v4790, 4294901760
  %5119 = vmatpush1.msra.mxu0 %v5118
  %5120 = vmatprep.subr.mxu0 0.0
  %v5121 = vand.u32 %v4791, 4294901760
  %5122 = vmatpush1.msra.mxu0 %v5121
  %5123 = vmatprep.subr.mxu0 0.0
  %v5124 = vand.u32 %v4792, 4294901760
  %5125 = vmatpush1.msra.mxu0 %v5124
  %5126 = vmatprep.subr.mxu0 0.0
  %v5127 = vand.u32 %v4793, 4294901760
  %5128 = vmatpush1.msra.mxu0 %v5127
  %5129 = vmatprep.subr.mxu0 0.0
  %5130 = vmatpush1.msra.mxu0 0.0
  %5131 = vmatprep.subr.mxu0 0.0
  %5132 = vmatpush1.msra.mxu0 0.0
  %5133 = vmatprep.subr.mxu0 0.0
  %5134 = vmatpush1.msra.mxu0 0.0
  %5135 = vmatprep.subr.mxu0 0.0
  %5136 = vmatpush1.msra.mxu0 0.0
  %5137 = vmatprep.subr.mxu0 0.0
  %5138 = vmatpush1.msra.mxu0 0.0
  %5139 = vmatprep.subr.mxu0 0.0
  %5140 = vmatpush1.msra.mxu0 0.0
  %5141 = vmatprep.subr.mxu0 0.0
  %5142 = vmatpush1.msra.mxu0 0.0
  %5143 = vmatprep.subr.mxu0 0.0
  %5144 = vmatpush1.msra.mxu0 0.0
  %5145 = vmatprep.subr.mxu0 0.0
  %5146 = vmatpush1.msra.mxu0 0.0
  %5147 = vmatprep.subr.mxu0 0.0
  %5148 = vmatpush1.msra.mxu0 0.0
  %5149 = vmatprep.subr.mxu0 0.0
  %5150 = vmatpush1.msra.mxu0 0.0
  %5151 = vmatprep.subr.mxu0 0.0
  %5152 = vmatpush1.msra.mxu0 0.0
  %5153 = vmatprep.subr.mxu0 0.0
  %5154 = vmatpush1.msra.mxu0 0.0
  %5155 = vmatprep.subr.mxu0 0.0
  %5156 = vmatpush1.msra.mxu0 0.0
  %5157 = vmatprep.subr.mxu0 0.0
  %5158 = vmatpush1.msra.mxu0 0.0
  %5159 = vmatprep.subr.mxu0 0.0
  %5160 = vmatpush1.msra.mxu0 0.0
  %5161 = vmatprep.subr.mxu0 0.0
  %5162 = vmatpush1.msra.mxu0 0.0
  %5163 = vmatprep.subr.mxu0 0.0
  %5164 = vmatpush1.msra.mxu0 0.0
  %5165 = vmatprep.subr.mxu0 0.0
  %5166 = vmatpush1.msra.mxu0 0.0
  %5167 = vmatprep.subr.mxu0 0.0
  %5168 = vmatpush1.msra.mxu0 0.0
  %5169 = vmatprep.subr.mxu0 0.0
  %5170 = vmatpush1.msra.mxu0 0.0
  %5171 = vmatprep.subr.mxu0 0.0
  %5172 = vmatpush1.msra.mxu0 0.0
  %5173 = vmatprep.subr.mxu0 0.0
  %5174 = vmatpush1.msra.mxu0 0.0
  %5175 = vmatprep.subr.mxu0 0.0
  %5176 = vmatpush1.msra.mxu0 0.0
  %5177 = vmatprep.mubr.f32.mxu0 0.0
  %v5178 = vand.u32 %v4795, 4294901760
  %v5179 = vsub.f32 %v4795, %v5178
  %v5180 = vand.u32 %v5179, 4294901760
  %5181 = vmatmul.mubr.f32.gmra.mrb[0].mxu0 %v5180
  %v5182 = vpop.f32.mrb[0].mxu0
  %v5183 = vadd.f32 %v5095, %v5182
  %v5184 = vpop.f32.mrb[0].mxu0
  %5185 = vmatprep.mubr.f32.mxu0 0.0
  %v5186 = vand.u32 %v4798, 4294901760
  %v5187 = vsub.f32 %v4798, %v5186
  %v5188 = vand.u32 %v5187, 4294901760
  %5189 = vmatmul.mubr.f32.gmra.mrb[0].mxu0 %v5188
  %v5190 = vpop.f32.mrb[0].mxu0
  %v5191 = vadd.f32 %v5102, %v5190
  %v5192 = vpop.f32.mrb[0].mxu0
  %5193 = vdwg.mxu0
  %5194 = vmatprep.subr.mxu0 0.0
  %v5195 = vand.u32 %v4786, 4294901760
  %v5196 = vsub.f32 %v4786, %v5195
  %v5197 = vand.u32 %v5196, 4294901760
  %5198 = vmatpush1.msra.mxu0 %v5197
  %5199 = vmatprep.subr.mxu0 0.0
  %v5200 = vand.u32 %v4787, 4294901760
  %v5201 = vsub.f32 %v4787, %v5200
  %v5202 = vand.u32 %v5201, 4294901760
  %5203 = vmatpush1.msra.mxu0 %v5202
  %5204 = vmatprep.subr.mxu0 0.0
  %v5205 = vand.u32 %v4788, 4294901760
  %v5206 = vsub.f32 %v4788, %v5205
  %v5207 = vand.u32 %v5206, 4294901760
  %5208 = vmatpush1.msra.mxu0 %v5207
  %5209 = vmatprep.subr.mxu0 0.0
  %v5210 = vand.u32 %v4789, 4294901760
  %v5211 = vsub.f32 %v4789, %v5210
  %v5212 = vand.u32 %v5211, 4294901760
  %5213 = vmatpush1.msra.mxu0 %v5212
  %5214 = vmatprep.subr.mxu0 0.0
  %v5215 = vand.u32 %v4790, 4294901760
  %v5216 = vsub.f32 %v4790, %v5215
  %v5217 = vand.u32 %v5216, 4294901760
  %5218 = vmatpush1.msra.mxu0 %v5217
  %5219 = vmatprep.subr.mxu0 0.0
  %v5220 = vand.u32 %v4791, 4294901760
  %v5221 = vsub.f32 %v4791, %v5220
  %v5222 = vand.u32 %v5221, 4294901760
  %5223 = vmatpush1.msra.mxu0 %v5222
  %5224 = vmatprep.subr.mxu0 0.0
  %v5225 = vand.u32 %v4792, 4294901760
  %v5226 = vsub.f32 %v4792, %v5225
  %v5227 = vand.u32 %v5226, 4294901760
  %5228 = vmatpush1.msra.mxu0 %v5227
  %5229 = vmatprep.subr.mxu0 0.0
  %v5230 = vand.u32 %v4793, 4294901760
  %v5231 = vsub.f32 %v4793, %v5230
  %v5232 = vand.u32 %v5231, 4294901760
  %5233 = vmatpush1.msra.mxu0 %v5232
  %5234 = vmatprep.subr.mxu0 0.0
  %5235 = vmatpush1.msra.mxu0 0.0
  %5236 = vmatprep.subr.mxu0 0.0
  %5237 = vmatpush1.msra.mxu0 0.0
  %5238 = vmatprep.subr.mxu0 0.0
  %5239 = vmatpush1.msra.mxu0 0.0
  %5240 = vmatprep.subr.mxu0 0.0
  %5241 = vmatpush1.msra.mxu0 0.0
  %5242 = vmatprep.subr.mxu0 0.0
  %5243 = vmatpush1.msra.mxu0 0.0
  %5244 = vmatprep.subr.mxu0 0.0
  %5245 = vmatpush1.msra.mxu0 0.0
  %5246 = vmatprep.subr.mxu0 0.0
  %5247 = vmatpush1.msra.mxu0 0.0
  %5248 = vmatprep.subr.mxu0 0.0
  %5249 = vmatpush1.msra.mxu0 0.0
  %5250 = vmatprep.subr.mxu0 0.0
  %5251 = vmatpush1.msra.mxu0 0.0
  %5252 = vmatprep.subr.mxu0 0.0
  %5253 = vmatpush1.msra.mxu0 0.0
  %5254 = vmatprep.subr.mxu0 0.0
  %5255 = vmatpush1.msra.mxu0 0.0
  %5256 = vmatprep.subr.mxu0 0.0
  %5257 = vmatpush1.msra.mxu0 0.0
  %5258 = vmatprep.subr.mxu0 0.0
  %5259 = vmatpush1.msra.mxu0 0.0
  %5260 = vmatprep.subr.mxu0 0.0
  %5261 = vmatpush1.msra.mxu0 0.0
  %5262 = vmatprep.subr.mxu0 0.0
  %5263 = vmatpush1.msra.mxu0 0.0
  %5264 = vmatprep.subr.mxu0 0.0
  %5265 = vmatpush1.msra.mxu0 0.0
  %5266 = vmatprep.subr.mxu0 0.0
  %5267 = vmatpush1.msra.mxu0 0.0
  %5268 = vmatprep.subr.mxu0 0.0
  %5269 = vmatpush1.msra.mxu0 0.0
  %5270 = vmatprep.subr.mxu0 0.0
  %5271 = vmatpush1.msra.mxu0 0.0
  %5272 = vmatprep.subr.mxu0 0.0
  %5273 = vmatpush1.msra.mxu0 0.0
  %5274 = vmatprep.subr.mxu0 0.0
  %5275 = vmatpush1.msra.mxu0 0.0
  %5276 = vmatprep.subr.mxu0 0.0
  %5277 = vmatpush1.msra.mxu0 0.0
  %5278 = vmatprep.subr.mxu0 0.0
  %5279 = vmatpush1.msra.mxu0 0.0
  %5280 = vmatprep.subr.mxu0 0.0
  %5281 = vmatpush1.msra.mxu0 0.0
  %5282 = vmatprep.mubr.f32.mxu0 0.0
  %v5283 = vand.u32 %v4795, 4294901760
  %5284 = vmatmul.mubr.f32.gmra.mrb[0].mxu0 %v5283
  %v5285 = vpop.f32.mrb[0].mxu0
  %v5286 = vadd.f32 %v5183, %v5285
  %v5287 = vpop.f32.mrb[0].mxu0
  %5288 = vmatprep.mubr.f32.mxu0 0.0
  %v5289 = vand.u32 %v4798, 4294901760
  %5290 = vmatmul.mubr.f32.gmra.mrb[0].mxu0 %v5289
  %v5291 = vpop.f32.mrb[0].mxu0
  %v5292 = vadd.f32 %v5191, %v5291
  %v5293 = vpop.f32.mrb[0].mxu0
  %5294 = vdwg.mxu0
  %5295 = vmatprep.subr.mxu0 0.0
  %v5296 = vand.u32 %v4786, 4294901760
  %5297 = vmatpush1.msra.mxu0 %v5296
  %5298 = vmatprep.subr.mxu0 0.0
  %v5299 = vand.u32 %v4787, 4294901760
  %5300 = vmatpush1.msra.mxu0 %v5299
  %5301 = vmatprep.subr.mxu0 0.0
  %v5302 = vand.u32 %v4788, 4294901760
  %5303 = vmatpush1.msra.mxu0 %v5302
  %5304 = vmatprep.subr.mxu0 0.0
  %v5305 = vand.u32 %v4789, 4294901760
  %5306 = vmatpush1.msra.mxu0 %v5305
  %5307 = vmatprep.subr.mxu0 0.0
  %v5308 = vand.u32 %v4790, 4294901760
  %5309 = vmatpush1.msra.mxu0 %v5308
  %5310 = vmatprep.subr.mxu0 0.0
  %v5311 = vand.u32 %v4791, 4294901760
  %5312 = vmatpush1.msra.mxu0 %v5311
  %5313 = vmatprep.subr.mxu0 0.0
  %v5314 = vand.u32 %v4792, 4294901760
  %5315 = vmatpush1.msra.mxu0 %v5314
  %5316 = vmatprep.subr.mxu0 0.0
  %v5317 = vand.u32 %v4793, 4294901760
  %5318 = vmatpush1.msra.mxu0 %v5317
  %5319 = vmatprep.subr.mxu0 0.0
  %5320 = vmatpush1.msra.mxu0 0.0
  %5321 = vmatprep.subr.mxu0 0.0
  %5322 = vmatpush1.msra.mxu0 0.0
  %5323 = vmatprep.subr.mxu0 0.0
  %5324 = vmatpush1.msra.mxu0 0.0
  %5325 = vmatprep.subr.mxu0 0.0
  %5326 = vmatpush1.msra.mxu0 0.0
  %5327 = vmatprep.subr.mxu0 0.0
  %5328 = vmatpush1.msra.mxu0 0.0
  %5329 = vmatprep.subr.mxu0 0.0
  %5330 = vmatpush1.msra.mxu0 0.0
  %5331 = vmatprep.subr.mxu0 0.0
  %5332 = vmatpush1.msra.mxu0 0.0
  %5333 = vmatprep.subr.mxu0 0.0
  %5334 = vmatpush1.msra.mxu0 0.0
  %5335 = vmatprep.subr.mxu0 0.0
  %5336 = vmatpush1.msra.mxu0 0.0
  %5337 = vmatprep.subr.mxu0 0.0
  %5338 = vmatpush1.msra.mxu0 0.0
  %5339 = vmatprep.subr.mxu0 0.0
  %5340 = vmatpush1.msra.mxu0 0.0
  %5341 = vmatprep.subr.mxu0 0.0
  %5342 = vmatpush1.msra.mxu0 0.0
  %5343 = vmatprep.subr.mxu0 0.0
  %5344 = vmatpush1.msra.mxu0 0.0
  %5345 = vmatprep.subr.mxu0 0.0
  %5346 = vmatpush1.msra.mxu0 0.0
  %5347 = vmatprep.subr.mxu0 0.0
  %5348 = vmatpush1.msra.mxu0 0.0
  %5349 = vmatprep.subr.mxu0 0.0
  %5350 = vmatpush1.msra.mxu0 0.0
  %5351 = vmatprep.subr.mxu0 0.0
  %5352 = vmatpush1.msra.mxu0 0.0
  %5353 = vmatprep.subr.mxu0 0.0
  %5354 = vmatpush1.msra.mxu0 0.0
  %5355 = vmatprep.subr.mxu0 0.0
  %5356 = vmatpush1.msra.mxu0 0.0
  %5357 = vmatprep.subr.mxu0 0.0
  %5358 = vmatpush1.msra.mxu0 0.0
  %5359 = vmatprep.subr.mxu0 0.0
  %5360 = vmatpush1.msra.mxu0 0.0
  %5361 = vmatprep.subr.mxu0 0.0
  %5362 = vmatpush1.msra.mxu0 0.0
  %5363 = vmatprep.subr.mxu0 0.0
  %5364 = vmatpush1.msra.mxu0 0.0
  %5365 = vmatprep.subr.mxu0 0.0
  %5366 = vmatpush1.msra.mxu0 0.0
  %5367 = vmatprep.mubr.f32.mxu0 0.0
  %v5368 = vand.u32 %v4795, 4294901760
  %5369 = vmatmul.mubr.f32.gmra.mrb[0].mxu0 %v5368
  %v5370 = vpop.f32.mrb[0].mxu0
  %v5371 = vadd.f32 %v5286, %v5370
  %v5372 = vpop.f32.mrb[0].mxu0
  %5373 = vmatprep.mubr.f32.mxu0 0.0
  %v5374 = vand.u32 %v4798, 4294901760
  %5375 = vmatmul.mubr.f32.gmra.mrb[0].mxu0 %v5374
  %v5376 = vpop.f32.mrb[0].mxu0
  %v5377 = vadd.f32 %v5292, %v5376
  %v5378 = vpop.f32.mrb[0].mxu0
  %5379 = vdwg.mxu0
  %v5380 = vadd.f32 %v4177, %v5371
  %v5381 = vadd.f32 %v4178, %v5377
  %v5382 = vld [vmem:[%s15] sm:$0x1]
  %v5384 = vlaneseq
  %v5385 = vshrl.u32 %v5384, 7
  %v5386 = vsub.s32 0, %v5385
  %v5387 = vrot.slane %v5382, %v5386
  %v5389 = vadd.f32 %v5380, %v5387
  %v5390 = vadd.f32 %v5381, %v5387
  %s5391 = scalar_lea.vmem %s4, 1
  %v5392 = vld [vmem:[%s5391] sm:$0x1]
  %s5393 = scalar_lea.vmem %s5, 1
  %v5394 = vld [vmem:[%s5393] sm:$0x1]
  %v5395 = vsel %vm912, %v5389, 0.0
  %5396 = vadd.xlane.f32.xlu0 %v5395
  %v5397 = vpop.xlane.xlu0 %5396
  %v5398 = vsel %vm916, %v5390, 0.0
  %5399 = vadd.xlane.f32.xlu0 %v5398
  %v5400 = vpop.xlane.xlu0 %5399
  %v5401 = vmul.f32 %v5397, %v920
  %v5402 = vmul.f32 %v5400, %v920
  %v5403 = vsub.f32 %v5389, %v5401
  %v5404 = vsub.f32 %v5390, %v5402
  %v5405 = vmul.f32 %v5403, %v5403
  %v5406 = vmul.f32 %v5404, %v5404
  %v5407 = vsel %vm912, %v5405, 0.0
  %5408 = vadd.xlane.f32.xlu0 %v5407
  %v5409 = vpop.xlane.xlu0 %5408
  %v5410 = vsel %vm916, %v5406, 0.0
  %5411 = vadd.xlane.f32.xlu0 %v5410
  %v5412 = vpop.xlane.xlu0 %5411
  %v5413 = vmul.f32 %v5409, %v920
  %v5414 = vmul.f32 %v5412, %v920
  %v5415 = vadd.f32 %v5413, 1e-12
  %v5416 = vadd.f32 %v5414, 1e-12
  %v5417 = vrsqrt.pop %v5415
  %v5418 = vrsqrt.pop %v5416
  %v5419 = vmul.f32 %v5403, %v5417
  %v5420 = vmul.f32 %v5404, %v5418
  %v5422 = vlaneseq
  %v5423 = vshrl.u32 %v5422, 7
  %v5424 = vsub.s32 0, %v5423
  %v5425 = vrot.slane %v5392, %v5424
  %v5427 = vmul.f32 %v5419, %v5425
  %v5428 = vmul.f32 %v5420, %v5425
  %v5430 = vlaneseq
  %v5431 = vshrl.u32 %v5430, 7
  %v5432 = vsub.s32 0, %v5431
  %v5433 = vrot.slane %v5394, %v5432
  %v5435 = vadd.f32 %v5427, %v5433
  %v5436 = vadd.f32 %v5428, %v5433
  %s5437 = scalar_lea.vmem %s6, 32
  %v5438 = vld [vmem:[%s5437] sm:$0xff]
  %v5439 = vld [vmem:[%s5437 + $0x8] sm:$0xff]
  %v5440 = vld [vmem:[%s5437 + $0x10] sm:$0xff]
  %v5441 = vld [vmem:[%s5437 + $0x18] sm:$0xff]
  %s5442 = scalar_lea.vmem %s7, 1
  %v5443 = vld [vmem:[%s5442] sm:$0x1]
  %v5445 = vlaneseq
  %v5446 = vshrl.u32 %v5445, 7
  %v5447 = vsub.s32 0, %v5446
  %v5448 = vrot.slane %v5443, %v5447
  %v5451 = vsel %vm912, %v5435, 0
  %v5454 = vsel %vm912, %v5436, 0
  %5456 = vmatprep.subr.mxu0 0.0
  %v5457 = vand.u32 %v5438, 4294901760
  %5458 = vmatpush1.msra.mxu0 %v5457
  %5459 = vmatprep.subr.mxu0 0.0
  %v5460 = vand.u32 %v5439, 4294901760
  %5461 = vmatpush1.msra.mxu0 %v5460
  %5462 = vmatprep.subr.mxu0 0.0
  %v5463 = vand.u32 %v5440, 4294901760
  %5464 = vmatpush1.msra.mxu0 %v5463
  %5465 = vmatprep.subr.mxu0 0.0
  %v5466 = vand.u32 %v5441, 4294901760
  %5467 = vmatpush1.msra.mxu0 %v5466
  %5468 = vmatprep.subr.mxu0 0.0
  %5469 = vmatpush1.msra.mxu0 0.0
  %5470 = vmatprep.subr.mxu0 0.0
  %5471 = vmatpush1.msra.mxu0 0.0
  %5472 = vmatprep.subr.mxu0 0.0
  %5473 = vmatpush1.msra.mxu0 0.0
  %5474 = vmatprep.subr.mxu0 0.0
  %5475 = vmatpush1.msra.mxu0 0.0
  %5476 = vmatprep.subr.mxu0 0.0
  %5477 = vmatpush1.msra.mxu0 0.0
  %5478 = vmatprep.subr.mxu0 0.0
  %5479 = vmatpush1.msra.mxu0 0.0
  %5480 = vmatprep.subr.mxu0 0.0
  %5481 = vmatpush1.msra.mxu0 0.0
  %5482 = vmatprep.subr.mxu0 0.0
  %5483 = vmatpush1.msra.mxu0 0.0
  %5484 = vmatprep.subr.mxu0 0.0
  %5485 = vmatpush1.msra.mxu0 0.0
  %5486 = vmatprep.subr.mxu0 0.0
  %5487 = vmatpush1.msra.mxu0 0.0
  %5488 = vmatprep.subr.mxu0 0.0
  %5489 = vmatpush1.msra.mxu0 0.0
  %5490 = vmatprep.subr.mxu0 0.0
  %5491 = vmatpush1.msra.mxu0 0.0
  %5492 = vmatprep.subr.mxu0 0.0
  %5493 = vmatpush1.msra.mxu0 0.0
  %5494 = vmatprep.subr.mxu0 0.0
  %5495 = vmatpush1.msra.mxu0 0.0
  %5496 = vmatprep.subr.mxu0 0.0
  %5497 = vmatpush1.msra.mxu0 0.0
  %5498 = vmatprep.subr.mxu0 0.0
  %5499 = vmatpush1.msra.mxu0 0.0
  %5500 = vmatprep.subr.mxu0 0.0
  %5501 = vmatpush1.msra.mxu0 0.0
  %5502 = vmatprep.subr.mxu0 0.0
  %5503 = vmatpush1.msra.mxu0 0.0
  %5504 = vmatprep.subr.mxu0 0.0
  %5505 = vmatpush1.msra.mxu0 0.0
  %5506 = vmatprep.subr.mxu0 0.0
  %5507 = vmatpush1.msra.mxu0 0.0
  %5508 = vmatprep.subr.mxu0 0.0
  %5509 = vmatpush1.msra.mxu0 0.0
  %5510 = vmatprep.subr.mxu0 0.0
  %5511 = vmatpush1.msra.mxu0 0.0
  %5512 = vmatprep.subr.mxu0 0.0
  %5513 = vmatpush1.msra.mxu0 0.0
  %5514 = vmatprep.subr.mxu0 0.0
  %5515 = vmatpush1.msra.mxu0 0.0
  %5516 = vmatprep.subr.mxu0 0.0
  %5517 = vmatpush1.msra.mxu0 0.0
  %5518 = vmatprep.subr.mxu0 0.0
  %5519 = vmatpush1.msra.mxu0 0.0
  %5520 = vmatprep.subr.mxu0 0.0
  %5521 = vmatpush1.msra.mxu0 0.0
  %5522 = vmatprep.subr.mxu0 0.0
  %5523 = vmatpush1.msra.mxu0 0.0
  %5524 = vmatprep.mubr.f32.mxu0 0.0
  %v5525 = vand.u32 %v5451, 4294901760
  %v5526 = vsub.f32 %v5451, %v5525
  %v5527 = vand.u32 %v5526, 4294901760
  %v5528 = vsub.f32 %v5526, %v5527
  %v5529 = vand.u32 %v5528, 4294901760
  %5530 = vmatmul.mubr.f32.gmra.mrb[0].mxu0 %v5529
  %v5531 = vpop.f32.mrb[0].mxu0
  %v5532 = vadd.f32 %v5448, %v5531
  %v5533 = vpop.f32.mrb[0].mxu0
  %5534 = vmatprep.mubr.f32.mxu0 0.0
  %v5535 = vand.u32 %v5454, 4294901760
  %v5536 = vsub.f32 %v5454, %v5535
  %v5537 = vand.u32 %v5536, 4294901760
  %v5538 = vsub.f32 %v5536, %v5537
  %v5539 = vand.u32 %v5538, 4294901760
  %5540 = vmatmul.mubr.f32.gmra.mrb[0].mxu0 %v5539
  %v5541 = vpop.f32.mrb[0].mxu0
  %v5542 = vadd.f32 %v5448, %v5541
  %v5543 = vpop.f32.mrb[0].mxu0
  %5544 = vdwg.mxu0
  %5545 = vmatprep.subr.mxu0 0.0
  %v5546 = vand.u32 %v5438, 4294901760
  %v5547 = vsub.f32 %v5438, %v5546
  %v5548 = vand.u32 %v5547, 4294901760
  %v5549 = vsub.f32 %v5547, %v5548
  %v5550 = vand.u32 %v5549, 4294901760
  %5551 = vmatpush1.msra.mxu0 %v5550
  %5552 = vmatprep.subr.mxu0 0.0
  %v5553 = vand.u32 %v5439, 4294901760
  %v5554 = vsub.f32 %v5439, %v5553
  %v5555 = vand.u32 %v5554, 4294901760
  %v5556 = vsub.f32 %v5554, %v5555
  %v5557 = vand.u32 %v5556, 4294901760
  %5558 = vmatpush1.msra.mxu0 %v5557
  %5559 = vmatprep.subr.mxu0 0.0
  %v5560 = vand.u32 %v5440, 4294901760
  %v5561 = vsub.f32 %v5440, %v5560
  %v5562 = vand.u32 %v5561, 4294901760
  %v5563 = vsub.f32 %v5561, %v5562
  %v5564 = vand.u32 %v5563, 4294901760
  %5565 = vmatpush1.msra.mxu0 %v5564
  %5566 = vmatprep.subr.mxu0 0.0
  %v5567 = vand.u32 %v5441, 4294901760
  %v5568 = vsub.f32 %v5441, %v5567
  %v5569 = vand.u32 %v5568, 4294901760
  %v5570 = vsub.f32 %v5568, %v5569
  %v5571 = vand.u32 %v5570, 4294901760
  %5572 = vmatpush1.msra.mxu0 %v5571
  %5573 = vmatprep.subr.mxu0 0.0
  %5574 = vmatpush1.msra.mxu0 0.0
  %5575 = vmatprep.subr.mxu0 0.0
  %5576 = vmatpush1.msra.mxu0 0.0
  %5577 = vmatprep.subr.mxu0 0.0
  %5578 = vmatpush1.msra.mxu0 0.0
  %5579 = vmatprep.subr.mxu0 0.0
  %5580 = vmatpush1.msra.mxu0 0.0
  %5581 = vmatprep.subr.mxu0 0.0
  %5582 = vmatpush1.msra.mxu0 0.0
  %5583 = vmatprep.subr.mxu0 0.0
  %5584 = vmatpush1.msra.mxu0 0.0
  %5585 = vmatprep.subr.mxu0 0.0
  %5586 = vmatpush1.msra.mxu0 0.0
  %5587 = vmatprep.subr.mxu0 0.0
  %5588 = vmatpush1.msra.mxu0 0.0
  %5589 = vmatprep.subr.mxu0 0.0
  %5590 = vmatpush1.msra.mxu0 0.0
  %5591 = vmatprep.subr.mxu0 0.0
  %5592 = vmatpush1.msra.mxu0 0.0
  %5593 = vmatprep.subr.mxu0 0.0
  %5594 = vmatpush1.msra.mxu0 0.0
  %5595 = vmatprep.subr.mxu0 0.0
  %5596 = vmatpush1.msra.mxu0 0.0
  %5597 = vmatprep.subr.mxu0 0.0
  %5598 = vmatpush1.msra.mxu0 0.0
  %5599 = vmatprep.subr.mxu0 0.0
  %5600 = vmatpush1.msra.mxu0 0.0
  %5601 = vmatprep.subr.mxu0 0.0
  %5602 = vmatpush1.msra.mxu0 0.0
  %5603 = vmatprep.subr.mxu0 0.0
  %5604 = vmatpush1.msra.mxu0 0.0
  %5605 = vmatprep.subr.mxu0 0.0
  %5606 = vmatpush1.msra.mxu0 0.0
  %5607 = vmatprep.subr.mxu0 0.0
  %5608 = vmatpush1.msra.mxu0 0.0
  %5609 = vmatprep.subr.mxu0 0.0
  %5610 = vmatpush1.msra.mxu0 0.0
  %5611 = vmatprep.subr.mxu0 0.0
  %5612 = vmatpush1.msra.mxu0 0.0
  %5613 = vmatprep.subr.mxu0 0.0
  %5614 = vmatpush1.msra.mxu0 0.0
  %5615 = vmatprep.subr.mxu0 0.0
  %5616 = vmatpush1.msra.mxu0 0.0
  %5617 = vmatprep.subr.mxu0 0.0
  %5618 = vmatpush1.msra.mxu0 0.0
  %5619 = vmatprep.subr.mxu0 0.0
  %5620 = vmatpush1.msra.mxu0 0.0
  %5621 = vmatprep.subr.mxu0 0.0
  %5622 = vmatpush1.msra.mxu0 0.0
  %5623 = vmatprep.subr.mxu0 0.0
  %5624 = vmatpush1.msra.mxu0 0.0
  %5625 = vmatprep.subr.mxu0 0.0
  %5626 = vmatpush1.msra.mxu0 0.0
  %5627 = vmatprep.subr.mxu0 0.0
  %5628 = vmatpush1.msra.mxu0 0.0
  %5629 = vmatprep.mubr.f32.mxu0 0.0
  %v5630 = vand.u32 %v5451, 4294901760
  %5631 = vmatmul.mubr.f32.gmra.mrb[0].mxu0 %v5630
  %v5632 = vpop.f32.mrb[0].mxu0
  %v5633 = vadd.f32 %v5532, %v5632
  %v5634 = vpop.f32.mrb[0].mxu0
  %5635 = vmatprep.mubr.f32.mxu0 0.0
  %v5636 = vand.u32 %v5454, 4294901760
  %5637 = vmatmul.mubr.f32.gmra.mrb[0].mxu0 %v5636
  %v5638 = vpop.f32.mrb[0].mxu0
  %v5639 = vadd.f32 %v5542, %v5638
  %v5640 = vpop.f32.mrb[0].mxu0
  %5641 = vdwg.mxu0
  %5642 = vmatprep.subr.mxu0 0.0
  %v5643 = vand.u32 %v5438, 4294901760
  %v5644 = vsub.f32 %v5438, %v5643
  %5645 = vmatpush1.msra.mxu0 %v5644
  %5646 = vmatprep.subr.mxu0 0.0
  %v5647 = vand.u32 %v5439, 4294901760
  %v5648 = vsub.f32 %v5439, %v5647
  %5649 = vmatpush1.msra.mxu0 %v5648
  %5650 = vmatprep.subr.mxu0 0.0
  %v5651 = vand.u32 %v5440, 4294901760
  %v5652 = vsub.f32 %v5440, %v5651
  %5653 = vmatpush1.msra.mxu0 %v5652
  %5654 = vmatprep.subr.mxu0 0.0
  %v5655 = vand.u32 %v5441, 4294901760
  %v5656 = vsub.f32 %v5441, %v5655
  %5657 = vmatpush1.msra.mxu0 %v5656
  %5658 = vmatprep.subr.mxu0 0.0
  %5659 = vmatpush1.msra.mxu0 0.0
  %5660 = vmatprep.subr.mxu0 0.0
  %5661 = vmatpush1.msra.mxu0 0.0
  %5662 = vmatprep.subr.mxu0 0.0
  %5663 = vmatpush1.msra.mxu0 0.0
  %5664 = vmatprep.subr.mxu0 0.0
  %5665 = vmatpush1.msra.mxu0 0.0
  %5666 = vmatprep.subr.mxu0 0.0
  %5667 = vmatpush1.msra.mxu0 0.0
  %5668 = vmatprep.subr.mxu0 0.0
  %5669 = vmatpush1.msra.mxu0 0.0
  %5670 = vmatprep.subr.mxu0 0.0
  %5671 = vmatpush1.msra.mxu0 0.0
  %5672 = vmatprep.subr.mxu0 0.0
  %5673 = vmatpush1.msra.mxu0 0.0
  %5674 = vmatprep.subr.mxu0 0.0
  %5675 = vmatpush1.msra.mxu0 0.0
  %5676 = vmatprep.subr.mxu0 0.0
  %5677 = vmatpush1.msra.mxu0 0.0
  %5678 = vmatprep.subr.mxu0 0.0
  %5679 = vmatpush1.msra.mxu0 0.0
  %5680 = vmatprep.subr.mxu0 0.0
  %5681 = vmatpush1.msra.mxu0 0.0
  %5682 = vmatprep.subr.mxu0 0.0
  %5683 = vmatpush1.msra.mxu0 0.0
  %5684 = vmatprep.subr.mxu0 0.0
  %5685 = vmatpush1.msra.mxu0 0.0
  %5686 = vmatprep.subr.mxu0 0.0
  %5687 = vmatpush1.msra.mxu0 0.0
  %5688 = vmatprep.subr.mxu0 0.0
  %5689 = vmatpush1.msra.mxu0 0.0
  %5690 = vmatprep.subr.mxu0 0.0
  %5691 = vmatpush1.msra.mxu0 0.0
  %5692 = vmatprep.subr.mxu0 0.0
  %5693 = vmatpush1.msra.mxu0 0.0
  %5694 = vmatprep.subr.mxu0 0.0
  %5695 = vmatpush1.msra.mxu0 0.0
  %5696 = vmatprep.subr.mxu0 0.0
  %5697 = vmatpush1.msra.mxu0 0.0
  %5698 = vmatprep.subr.mxu0 0.0
  %5699 = vmatpush1.msra.mxu0 0.0
  %5700 = vmatprep.subr.mxu0 0.0
  %5701 = vmatpush1.msra.mxu0 0.0
  %5702 = vmatprep.subr.mxu0 0.0
  %5703 = vmatpush1.msra.mxu0 0.0
  %5704 = vmatprep.subr.mxu0 0.0
  %5705 = vmatpush1.msra.mxu0 0.0
  %5706 = vmatprep.subr.mxu0 0.0
  %5707 = vmatpush1.msra.mxu0 0.0
  %5708 = vmatprep.subr.mxu0 0.0
  %5709 = vmatpush1.msra.mxu0 0.0
  %5710 = vmatprep.subr.mxu0 0.0
  %5711 = vmatpush1.msra.mxu0 0.0
  %5712 = vmatprep.subr.mxu0 0.0
  %5713 = vmatpush1.msra.mxu0 0.0
  %5714 = vmatprep.mubr.f32.mxu0 0.0
  %v5715 = vand.u32 %v5451, 4294901760
  %v5716 = vsub.f32 %v5451, %v5715
  %5717 = vmatmul.mubr.f32.gmra.mrb[0].mxu0 %v5716
  %v5718 = vpop.f32.mrb[0].mxu0
  %v5719 = vadd.f32 %v5633, %v5718
  %v5720 = vpop.f32.mrb[0].mxu0
  %5721 = vmatprep.mubr.f32.mxu0 0.0
  %v5722 = vand.u32 %v5454, 4294901760
  %v5723 = vsub.f32 %v5454, %v5722
  %5724 = vmatmul.mubr.f32.gmra.mrb[0].mxu0 %v5723
  %v5725 = vpop.f32.mrb[0].mxu0
  %v5726 = vadd.f32 %v5639, %v5725
  %v5727 = vpop.f32.mrb[0].mxu0
  %5728 = vdwg.mxu0
  %5729 = vmatprep.subr.mxu0 0.0
  %v5730 = vand.u32 %v5438, 4294901760
  %5731 = vmatpush1.msra.mxu0 %v5730
  %5732 = vmatprep.subr.mxu0 0.0
  %v5733 = vand.u32 %v5439, 4294901760
  %5734 = vmatpush1.msra.mxu0 %v5733
  %5735 = vmatprep.subr.mxu0 0.0
  %v5736 = vand.u32 %v5440, 4294901760
  %5737 = vmatpush1.msra.mxu0 %v5736
  %5738 = vmatprep.subr.mxu0 0.0
  %v5739 = vand.u32 %v5441, 4294901760
  %5740 = vmatpush1.msra.mxu0 %v5739
  %5741 = vmatprep.subr.mxu0 0.0
  %5742 = vmatpush1.msra.mxu0 0.0
  %5743 = vmatprep.subr.mxu0 0.0
  %5744 = vmatpush1.msra.mxu0 0.0
  %5745 = vmatprep.subr.mxu0 0.0
  %5746 = vmatpush1.msra.mxu0 0.0
  %5747 = vmatprep.subr.mxu0 0.0
  %5748 = vmatpush1.msra.mxu0 0.0
  %5749 = vmatprep.subr.mxu0 0.0
  %5750 = vmatpush1.msra.mxu0 0.0
  %5751 = vmatprep.subr.mxu0 0.0
  %5752 = vmatpush1.msra.mxu0 0.0
  %5753 = vmatprep.subr.mxu0 0.0
  %5754 = vmatpush1.msra.mxu0 0.0
  %5755 = vmatprep.subr.mxu0 0.0
  %5756 = vmatpush1.msra.mxu0 0.0
  %5757 = vmatprep.subr.mxu0 0.0
  %5758 = vmatpush1.msra.mxu0 0.0
  %5759 = vmatprep.subr.mxu0 0.0
  %5760 = vmatpush1.msra.mxu0 0.0
  %5761 = vmatprep.subr.mxu0 0.0
  %5762 = vmatpush1.msra.mxu0 0.0
  %5763 = vmatprep.subr.mxu0 0.0
  %5764 = vmatpush1.msra.mxu0 0.0
  %5765 = vmatprep.subr.mxu0 0.0
  %5766 = vmatpush1.msra.mxu0 0.0
  %5767 = vmatprep.subr.mxu0 0.0
  %5768 = vmatpush1.msra.mxu0 0.0
  %5769 = vmatprep.subr.mxu0 0.0
  %5770 = vmatpush1.msra.mxu0 0.0
  %5771 = vmatprep.subr.mxu0 0.0
  %5772 = vmatpush1.msra.mxu0 0.0
  %5773 = vmatprep.subr.mxu0 0.0
  %5774 = vmatpush1.msra.mxu0 0.0
  %5775 = vmatprep.subr.mxu0 0.0
  %5776 = vmatpush1.msra.mxu0 0.0
  %5777 = vmatprep.subr.mxu0 0.0
  %5778 = vmatpush1.msra.mxu0 0.0
  %5779 = vmatprep.subr.mxu0 0.0
  %5780 = vmatpush1.msra.mxu0 0.0
  %5781 = vmatprep.subr.mxu0 0.0
  %5782 = vmatpush1.msra.mxu0 0.0
  %5783 = vmatprep.subr.mxu0 0.0
  %5784 = vmatpush1.msra.mxu0 0.0
  %5785 = vmatprep.subr.mxu0 0.0
  %5786 = vmatpush1.msra.mxu0 0.0
  %5787 = vmatprep.subr.mxu0 0.0
  %5788 = vmatpush1.msra.mxu0 0.0
  %5789 = vmatprep.subr.mxu0 0.0
  %5790 = vmatpush1.msra.mxu0 0.0
  %5791 = vmatprep.subr.mxu0 0.0
  %5792 = vmatpush1.msra.mxu0 0.0
  %5793 = vmatprep.subr.mxu0 0.0
  %5794 = vmatpush1.msra.mxu0 0.0
  %5795 = vmatprep.subr.mxu0 0.0
  %5796 = vmatpush1.msra.mxu0 0.0
  %5797 = vmatprep.mubr.f32.mxu0 0.0
  %v5798 = vand.u32 %v5451, 4294901760
  %v5799 = vsub.f32 %v5451, %v5798
  %v5800 = vand.u32 %v5799, 4294901760
  %5801 = vmatmul.mubr.f32.gmra.mrb[0].mxu0 %v5800
  %v5802 = vpop.f32.mrb[0].mxu0
  %v5803 = vadd.f32 %v5719, %v5802
  %v5804 = vpop.f32.mrb[0].mxu0
  %5805 = vmatprep.mubr.f32.mxu0 0.0
  %v5806 = vand.u32 %v5454, 4294901760
  %v5807 = vsub.f32 %v5454, %v5806
  %v5808 = vand.u32 %v5807, 4294901760
  %5809 = vmatmul.mubr.f32.gmra.mrb[0].mxu0 %v5808
  %v5810 = vpop.f32.mrb[0].mxu0
  %v5811 = vadd.f32 %v5726, %v5810
  %v5812 = vpop.f32.mrb[0].mxu0
  %5813 = vdwg.mxu0
  %5814 = vmatprep.subr.mxu0 0.0
  %v5815 = vand.u32 %v5438, 4294901760
  %v5816 = vsub.f32 %v5438, %v5815
  %v5817 = vand.u32 %v5816, 4294901760
  %5818 = vmatpush1.msra.mxu0 %v5817
  %5819 = vmatprep.subr.mxu0 0.0
  %v5820 = vand.u32 %v5439, 4294901760
  %v5821 = vsub.f32 %v5439, %v5820
  %v5822 = vand.u32 %v5821, 4294901760
  %5823 = vmatpush1.msra.mxu0 %v5822
  %5824 = vmatprep.subr.mxu0 0.0
  %v5825 = vand.u32 %v5440, 4294901760
  %v5826 = vsub.f32 %v5440, %v5825
  %v5827 = vand.u32 %v5826, 4294901760
  %5828 = vmatpush1.msra.mxu0 %v5827
  %5829 = vmatprep.subr.mxu0 0.0
  %v5830 = vand.u32 %v5441, 4294901760
  %v5831 = vsub.f32 %v5441, %v5830
  %v5832 = vand.u32 %v5831, 4294901760
  %5833 = vmatpush1.msra.mxu0 %v5832
  %5834 = vmatprep.subr.mxu0 0.0
  %5835 = vmatpush1.msra.mxu0 0.0
  %5836 = vmatprep.subr.mxu0 0.0
  %5837 = vmatpush1.msra.mxu0 0.0
  %5838 = vmatprep.subr.mxu0 0.0
  %5839 = vmatpush1.msra.mxu0 0.0
  %5840 = vmatprep.subr.mxu0 0.0
  %5841 = vmatpush1.msra.mxu0 0.0
  %5842 = vmatprep.subr.mxu0 0.0
  %5843 = vmatpush1.msra.mxu0 0.0
  %5844 = vmatprep.subr.mxu0 0.0
  %5845 = vmatpush1.msra.mxu0 0.0
  %5846 = vmatprep.subr.mxu0 0.0
  %5847 = vmatpush1.msra.mxu0 0.0
  %5848 = vmatprep.subr.mxu0 0.0
  %5849 = vmatpush1.msra.mxu0 0.0
  %5850 = vmatprep.subr.mxu0 0.0
  %5851 = vmatpush1.msra.mxu0 0.0
  %5852 = vmatprep.subr.mxu0 0.0
  %5853 = vmatpush1.msra.mxu0 0.0
  %5854 = vmatprep.subr.mxu0 0.0
  %5855 = vmatpush1.msra.mxu0 0.0
  %5856 = vmatprep.subr.mxu0 0.0
  %5857 = vmatpush1.msra.mxu0 0.0
  %5858 = vmatprep.subr.mxu0 0.0
  %5859 = vmatpush1.msra.mxu0 0.0
  %5860 = vmatprep.subr.mxu0 0.0
  %5861 = vmatpush1.msra.mxu0 0.0
  %5862 = vmatprep.subr.mxu0 0.0
  %5863 = vmatpush1.msra.mxu0 0.0
  %5864 = vmatprep.subr.mxu0 0.0
  %5865 = vmatpush1.msra.mxu0 0.0
  %5866 = vmatprep.subr.mxu0 0.0
  %5867 = vmatpush1.msra.mxu0 0.0
  %5868 = vmatprep.subr.mxu0 0.0
  %5869 = vmatpush1.msra.mxu0 0.0
  %5870 = vmatprep.subr.mxu0 0.0
  %5871 = vmatpush1.msra.mxu0 0.0
  %5872 = vmatprep.subr.mxu0 0.0
  %5873 = vmatpush1.msra.mxu0 0.0
  %5874 = vmatprep.subr.mxu0 0.0
  %5875 = vmatpush1.msra.mxu0 0.0
  %5876 = vmatprep.subr.mxu0 0.0
  %5877 = vmatpush1.msra.mxu0 0.0
  %5878 = vmatprep.subr.mxu0 0.0
  %5879 = vmatpush1.msra.mxu0 0.0
  %5880 = vmatprep.subr.mxu0 0.0
  %5881 = vmatpush1.msra.mxu0 0.0
  %5882 = vmatprep.subr.mxu0 0.0
  %5883 = vmatpush1.msra.mxu0 0.0
  %5884 = vmatprep.subr.mxu0 0.0
  %5885 = vmatpush1.msra.mxu0 0.0
  %5886 = vmatprep.subr.mxu0 0.0
  %5887 = vmatpush1.msra.mxu0 0.0
  %5888 = vmatprep.subr.mxu0 0.0
  %5889 = vmatpush1.msra.mxu0 0.0
  %5890 = vmatprep.mubr.f32.mxu0 0.0
  %v5891 = vand.u32 %v5451, 4294901760
  %5892 = vmatmul.mubr.f32.gmra.mrb[0].mxu0 %v5891
  %v5893 = vpop.f32.mrb[0].mxu0
  %v5894 = vadd.f32 %v5803, %v5893
  %v5895 = vpop.f32.mrb[0].mxu0
  %5896 = vmatprep.mubr.f32.mxu0 0.0
  %v5897 = vand.u32 %v5454, 4294901760
  %5898 = vmatmul.mubr.f32.gmra.mrb[0].mxu0 %v5897
  %v5899 = vpop.f32.mrb[0].mxu0
  %v5900 = vadd.f32 %v5811, %v5899
  %v5901 = vpop.f32.mrb[0].mxu0
  %5902 = vdwg.mxu0
  %5903 = vmatprep.subr.mxu0 0.0
  %v5904 = vand.u32 %v5438, 4294901760
  %5905 = vmatpush1.msra.mxu0 %v5904
  %5906 = vmatprep.subr.mxu0 0.0
  %v5907 = vand.u32 %v5439, 4294901760
  %5908 = vmatpush1.msra.mxu0 %v5907
  %5909 = vmatprep.subr.mxu0 0.0
  %v5910 = vand.u32 %v5440, 4294901760
  %5911 = vmatpush1.msra.mxu0 %v5910
  %5912 = vmatprep.subr.mxu0 0.0
  %v5913 = vand.u32 %v5441, 4294901760
  %5914 = vmatpush1.msra.mxu0 %v5913
  %5915 = vmatprep.subr.mxu0 0.0
  %5916 = vmatpush1.msra.mxu0 0.0
  %5917 = vmatprep.subr.mxu0 0.0
  %5918 = vmatpush1.msra.mxu0 0.0
  %5919 = vmatprep.subr.mxu0 0.0
  %5920 = vmatpush1.msra.mxu0 0.0
  %5921 = vmatprep.subr.mxu0 0.0
  %5922 = vmatpush1.msra.mxu0 0.0
  %5923 = vmatprep.subr.mxu0 0.0
  %5924 = vmatpush1.msra.mxu0 0.0
  %5925 = vmatprep.subr.mxu0 0.0
  %5926 = vmatpush1.msra.mxu0 0.0
  %5927 = vmatprep.subr.mxu0 0.0
  %5928 = vmatpush1.msra.mxu0 0.0
  %5929 = vmatprep.subr.mxu0 0.0
  %5930 = vmatpush1.msra.mxu0 0.0
  %5931 = vmatprep.subr.mxu0 0.0
  %5932 = vmatpush1.msra.mxu0 0.0
  %5933 = vmatprep.subr.mxu0 0.0
  %5934 = vmatpush1.msra.mxu0 0.0
  %5935 = vmatprep.subr.mxu0 0.0
  %5936 = vmatpush1.msra.mxu0 0.0
  %5937 = vmatprep.subr.mxu0 0.0
  %5938 = vmatpush1.msra.mxu0 0.0
  %5939 = vmatprep.subr.mxu0 0.0
  %5940 = vmatpush1.msra.mxu0 0.0
  %5941 = vmatprep.subr.mxu0 0.0
  %5942 = vmatpush1.msra.mxu0 0.0
  %5943 = vmatprep.subr.mxu0 0.0
  %5944 = vmatpush1.msra.mxu0 0.0
  %5945 = vmatprep.subr.mxu0 0.0
  %5946 = vmatpush1.msra.mxu0 0.0
  %5947 = vmatprep.subr.mxu0 0.0
  %5948 = vmatpush1.msra.mxu0 0.0
  %5949 = vmatprep.subr.mxu0 0.0
  %5950 = vmatpush1.msra.mxu0 0.0
  %5951 = vmatprep.subr.mxu0 0.0
  %5952 = vmatpush1.msra.mxu0 0.0
  %5953 = vmatprep.subr.mxu0 0.0
  %5954 = vmatpush1.msra.mxu0 0.0
  %5955 = vmatprep.subr.mxu0 0.0
  %5956 = vmatpush1.msra.mxu0 0.0
  %5957 = vmatprep.subr.mxu0 0.0
  %5958 = vmatpush1.msra.mxu0 0.0
  %5959 = vmatprep.subr.mxu0 0.0
  %5960 = vmatpush1.msra.mxu0 0.0
  %5961 = vmatprep.subr.mxu0 0.0
  %5962 = vmatpush1.msra.mxu0 0.0
  %5963 = vmatprep.subr.mxu0 0.0
  %5964 = vmatpush1.msra.mxu0 0.0
  %5965 = vmatprep.subr.mxu0 0.0
  %5966 = vmatpush1.msra.mxu0 0.0
  %5967 = vmatprep.subr.mxu0 0.0
  %5968 = vmatpush1.msra.mxu0 0.0
  %5969 = vmatprep.subr.mxu0 0.0
  %5970 = vmatpush1.msra.mxu0 0.0
  %5971 = vmatprep.mubr.f32.mxu0 0.0
  %v5972 = vand.u32 %v5451, 4294901760
  %5973 = vmatmul.mubr.f32.gmra.mrb[0].mxu0 %v5972
  %v5974 = vpop.f32.mrb[0].mxu0
  %v5975 = vadd.f32 %v5894, %v5974
  %v5976 = vpop.f32.mrb[0].mxu0
  %5977 = vmatprep.mubr.f32.mxu0 0.0
  %v5978 = vand.u32 %v5454, 4294901760
  %5979 = vmatmul.mubr.f32.gmra.mrb[0].mxu0 %v5978
  %v5980 = vpop.f32.mrb[0].mxu0
  %v5981 = vadd.f32 %v5900, %v5980
  %v5982 = vpop.f32.mrb[0].mxu0
  %5983 = vdwg.mxu0
  %5986 = vrot.lane.b32.xlu0 %v5975, 96
  %v5987 = vpop.permute.xlu0 %5986
  %5988 = vrot.lane.b32.xlu0 %v5981, 96
  %v5989 = vpop.permute.xlu0 %5988
  %v5990 = vsel %vm1508, %v5975, 0
  %v5992 = vsel %vm1508, %v5981, 0
  %v5994 = vsel %vm1508, %v5987, 0
  %v5996 = vsel %vm1508, %v5989, 0
  %5998 = vmatprep.subr.mxu0 0.0
  %v5999 = vand.u32 %v5994, 4294901760
  %6000 = vmatpush1.xpose.msra.mxu0 %v5999
  %6001 = vmatprep.subr.mxu0 0.0
  %v6002 = vand.u32 %v5996, 4294901760
  %6003 = vmatpush1.xpose.msra.mxu0 %v6002
  %6004 = vmatprep.subr.mxu0 0.0
  %6005 = vmatpush1.xpose.msra.mxu0 0.0
  %6006 = vmatprep.subr.mxu0 0.0
  %6007 = vmatpush1.xpose.msra.mxu0 0.0
  %6008 = vmatprep.subr.mxu0 0.0
  %6009 = vmatpush1.xpose.msra.mxu0 0.0
  %6010 = vmatprep.subr.mxu0 0.0
  %6011 = vmatpush1.xpose.msra.mxu0 0.0
  %6012 = vmatprep.subr.mxu0 0.0
  %6013 = vmatpush1.xpose.msra.mxu0 0.0
  %6014 = vmatprep.subr.mxu0 0.0
  %6015 = vmatpush1.xpose.msra.mxu0 0.0
  %6016 = vmatprep.subr.mxu0 0.0
  %6017 = vmatpush1.xpose.msra.mxu0 0.0
  %6018 = vmatprep.subr.mxu0 0.0
  %6019 = vmatpush1.xpose.msra.mxu0 0.0
  %6020 = vmatprep.subr.mxu0 0.0
  %6021 = vmatpush1.xpose.msra.mxu0 0.0
  %6022 = vmatprep.subr.mxu0 0.0
  %6023 = vmatpush1.xpose.msra.mxu0 0.0
  %6024 = vmatprep.subr.mxu0 0.0
  %6025 = vmatpush1.xpose.msra.mxu0 0.0
  %6026 = vmatprep.subr.mxu0 0.0
  %6027 = vmatpush1.xpose.msra.mxu0 0.0
  %6028 = vmatprep.subr.mxu0 0.0
  %6029 = vmatpush1.xpose.msra.mxu0 0.0
  %6030 = vmatprep.subr.mxu0 0.0
  %6031 = vmatpush1.xpose.msra.mxu0 0.0
  %6032 = vmatprep.subr.mxu0 0.0
  %6033 = vmatpush1.xpose.msra.mxu0 0.0
  %6034 = vmatprep.subr.mxu0 0.0
  %6035 = vmatpush1.xpose.msra.mxu0 0.0
  %6036 = vmatprep.subr.mxu0 0.0
  %6037 = vmatpush1.xpose.msra.mxu0 0.0
  %6038 = vmatprep.subr.mxu0 0.0
  %6039 = vmatpush1.xpose.msra.mxu0 0.0
  %6040 = vmatprep.subr.mxu0 0.0
  %6041 = vmatpush1.xpose.msra.mxu0 0.0
  %6042 = vmatprep.subr.mxu0 0.0
  %6043 = vmatpush1.xpose.msra.mxu0 0.0
  %6044 = vmatprep.subr.mxu0 0.0
  %6045 = vmatpush1.xpose.msra.mxu0 0.0
  %6046 = vmatprep.subr.mxu0 0.0
  %6047 = vmatpush1.xpose.msra.mxu0 0.0
  %6048 = vmatprep.subr.mxu0 0.0
  %6049 = vmatpush1.xpose.msra.mxu0 0.0
  %6050 = vmatprep.subr.mxu0 0.0
  %6051 = vmatpush1.xpose.msra.mxu0 0.0
  %6052 = vmatprep.subr.mxu0 0.0
  %6053 = vmatpush1.xpose.msra.mxu0 0.0
  %6054 = vmatprep.subr.mxu0 0.0
  %6055 = vmatpush1.xpose.msra.mxu0 0.0
  %6056 = vmatprep.subr.mxu0 0.0
  %6057 = vmatpush1.xpose.msra.mxu0 0.0
  %6058 = vmatprep.subr.mxu0 0.0
  %6059 = vmatpush1.xpose.msra.mxu0 0.0
  %6060 = vmatprep.subr.mxu0 0.0
  %6061 = vmatpush1.xpose.msra.mxu0 0.0
  %6062 = vmatprep.subr.mxu0 0.0
  %6063 = vmatpush1.xpose.msra.mxu0 0.0
  %6064 = vmatprep.mubr.f32.mxu0 0.0
  %v6065 = vand.u32 %v5990, 4294901760
  %v6066 = vsub.f32 %v5990, %v6065
  %v6067 = vand.u32 %v6066, 4294901760
  %v6068 = vsub.f32 %v6066, %v6067
  %v6069 = vand.u32 %v6068, 4294901760
  %6070 = vmatmul.mubr.f32.gmra.mrb[0].mxu0 %v6069
  %v6071 = vpop.f32.mrb[0].mxu0
  %v6072 = vadd.f32 0.0, %v6071
  %v6073 = vpop.f32.mrb[0].mxu0
  %6074 = vmatprep.mubr.f32.mxu0 0.0
  %v6075 = vand.u32 %v5992, 4294901760
  %v6076 = vsub.f32 %v5992, %v6075
  %v6077 = vand.u32 %v6076, 4294901760
  %v6078 = vsub.f32 %v6076, %v6077
  %v6079 = vand.u32 %v6078, 4294901760
  %6080 = vmatmul.mubr.f32.gmra.mrb[0].mxu0 %v6079
  %v6081 = vpop.f32.mrb[0].mxu0
  %v6082 = vadd.f32 0.0, %v6081
  %v6083 = vpop.f32.mrb[0].mxu0
  %6084 = vdwg.mxu0
  %6085 = vmatprep.subr.mxu0 0.0
  %v6086 = vand.u32 %v5994, 4294901760
  %v6087 = vsub.f32 %v5994, %v6086
  %v6088 = vand.u32 %v6087, 4294901760
  %v6089 = vsub.f32 %v6087, %v6088
  %v6090 = vand.u32 %v6089, 4294901760
  %6091 = vmatpush1.xpose.msra.mxu0 %v6090
  %6092 = vmatprep.subr.mxu0 0.0
  %v6093 = vand.u32 %v5996, 4294901760
  %v6094 = vsub.f32 %v5996, %v6093
  %v6095 = vand.u32 %v6094, 4294901760
  %v6096 = vsub.f32 %v6094, %v6095
  %v6097 = vand.u32 %v6096, 4294901760
  %6098 = vmatpush1.xpose.msra.mxu0 %v6097
  %6099 = vmatprep.subr.mxu0 0.0
  %6100 = vmatpush1.xpose.msra.mxu0 0.0
  %6101 = vmatprep.subr.mxu0 0.0
  %6102 = vmatpush1.xpose.msra.mxu0 0.0
  %6103 = vmatprep.subr.mxu0 0.0
  %6104 = vmatpush1.xpose.msra.mxu0 0.0
  %6105 = vmatprep.subr.mxu0 0.0
  %6106 = vmatpush1.xpose.msra.mxu0 0.0
  %6107 = vmatprep.subr.mxu0 0.0
  %6108 = vmatpush1.xpose.msra.mxu0 0.0
  %6109 = vmatprep.subr.mxu0 0.0
  %6110 = vmatpush1.xpose.msra.mxu0 0.0
  %6111 = vmatprep.subr.mxu0 0.0
  %6112 = vmatpush1.xpose.msra.mxu0 0.0
  %6113 = vmatprep.subr.mxu0 0.0
  %6114 = vmatpush1.xpose.msra.mxu0 0.0
  %6115 = vmatprep.subr.mxu0 0.0
  %6116 = vmatpush1.xpose.msra.mxu0 0.0
  %6117 = vmatprep.subr.mxu0 0.0
  %6118 = vmatpush1.xpose.msra.mxu0 0.0
  %6119 = vmatprep.subr.mxu0 0.0
  %6120 = vmatpush1.xpose.msra.mxu0 0.0
  %6121 = vmatprep.subr.mxu0 0.0
  %6122 = vmatpush1.xpose.msra.mxu0 0.0
  %6123 = vmatprep.subr.mxu0 0.0
  %6124 = vmatpush1.xpose.msra.mxu0 0.0
  %6125 = vmatprep.subr.mxu0 0.0
  %6126 = vmatpush1.xpose.msra.mxu0 0.0
  %6127 = vmatprep.subr.mxu0 0.0
  %6128 = vmatpush1.xpose.msra.mxu0 0.0
  %6129 = vmatprep.subr.mxu0 0.0
  %6130 = vmatpush1.xpose.msra.mxu0 0.0
  %6131 = vmatprep.subr.mxu0 0.0
  %6132 = vmatpush1.xpose.msra.mxu0 0.0
  %6133 = vmatprep.subr.mxu0 0.0
  %6134 = vmatpush1.xpose.msra.mxu0 0.0
  %6135 = vmatprep.subr.mxu0 0.0
  %6136 = vmatpush1.xpose.msra.mxu0 0.0
  %6137 = vmatprep.subr.mxu0 0.0
  %6138 = vmatpush1.xpose.msra.mxu0 0.0
  %6139 = vmatprep.subr.mxu0 0.0
  %6140 = vmatpush1.xpose.msra.mxu0 0.0
  %6141 = vmatprep.subr.mxu0 0.0
  %6142 = vmatpush1.xpose.msra.mxu0 0.0
  %6143 = vmatprep.subr.mxu0 0.0
  %6144 = vmatpush1.xpose.msra.mxu0 0.0
  %6145 = vmatprep.subr.mxu0 0.0
  %6146 = vmatpush1.xpose.msra.mxu0 0.0
  %6147 = vmatprep.subr.mxu0 0.0
  %6148 = vmatpush1.xpose.msra.mxu0 0.0
  %6149 = vmatprep.subr.mxu0 0.0
  %6150 = vmatpush1.xpose.msra.mxu0 0.0
  %6151 = vmatprep.subr.mxu0 0.0
  %6152 = vmatpush1.xpose.msra.mxu0 0.0
  %6153 = vmatprep.subr.mxu0 0.0
  %6154 = vmatpush1.xpose.msra.mxu0 0.0
  %6155 = vmatprep.subr.mxu0 0.0
  %6156 = vmatpush1.xpose.msra.mxu0 0.0
  %6157 = vmatprep.subr.mxu0 0.0
  %6158 = vmatpush1.xpose.msra.mxu0 0.0
  %6159 = vmatprep.mubr.f32.mxu0 0.0
  %v6160 = vand.u32 %v5990, 4294901760
  %6161 = vmatmul.mubr.f32.gmra.mrb[0].mxu0 %v6160
  %v6162 = vpop.f32.mrb[0].mxu0
  %v6163 = vadd.f32 %v6072, %v6162
  %v6164 = vpop.f32.mrb[0].mxu0
  %6165 = vmatprep.mubr.f32.mxu0 0.0
  %v6166 = vand.u32 %v5992, 4294901760
  %6167 = vmatmul.mubr.f32.gmra.mrb[0].mxu0 %v6166
  %v6168 = vpop.f32.mrb[0].mxu0
  %v6169 = vadd.f32 %v6082, %v6168
  %v6170 = vpop.f32.mrb[0].mxu0
  %6171 = vdwg.mxu0
  %6172 = vmatprep.subr.mxu0 0.0
  %v6173 = vand.u32 %v5994, 4294901760
  %v6174 = vsub.f32 %v5994, %v6173
  %6175 = vmatpush1.xpose.msra.mxu0 %v6174
  %6176 = vmatprep.subr.mxu0 0.0
  %v6177 = vand.u32 %v5996, 4294901760
  %v6178 = vsub.f32 %v5996, %v6177
  %6179 = vmatpush1.xpose.msra.mxu0 %v6178
  %6180 = vmatprep.subr.mxu0 0.0
  %6181 = vmatpush1.xpose.msra.mxu0 0.0
  %6182 = vmatprep.subr.mxu0 0.0
  %6183 = vmatpush1.xpose.msra.mxu0 0.0
  %6184 = vmatprep.subr.mxu0 0.0
  %6185 = vmatpush1.xpose.msra.mxu0 0.0
  %6186 = vmatprep.subr.mxu0 0.0
  %6187 = vmatpush1.xpose.msra.mxu0 0.0
  %6188 = vmatprep.subr.mxu0 0.0
  %6189 = vmatpush1.xpose.msra.mxu0 0.0
  %6190 = vmatprep.subr.mxu0 0.0
  %6191 = vmatpush1.xpose.msra.mxu0 0.0
  %6192 = vmatprep.subr.mxu0 0.0
  %6193 = vmatpush1.xpose.msra.mxu0 0.0
  %6194 = vmatprep.subr.mxu0 0.0
  %6195 = vmatpush1.xpose.msra.mxu0 0.0
  %6196 = vmatprep.subr.mxu0 0.0
  %6197 = vmatpush1.xpose.msra.mxu0 0.0
  %6198 = vmatprep.subr.mxu0 0.0
  %6199 = vmatpush1.xpose.msra.mxu0 0.0
  %6200 = vmatprep.subr.mxu0 0.0
  %6201 = vmatpush1.xpose.msra.mxu0 0.0
  %6202 = vmatprep.subr.mxu0 0.0
  %6203 = vmatpush1.xpose.msra.mxu0 0.0
  %6204 = vmatprep.subr.mxu0 0.0
  %6205 = vmatpush1.xpose.msra.mxu0 0.0
  %6206 = vmatprep.subr.mxu0 0.0
  %6207 = vmatpush1.xpose.msra.mxu0 0.0
  %6208 = vmatprep.subr.mxu0 0.0
  %6209 = vmatpush1.xpose.msra.mxu0 0.0
  %6210 = vmatprep.subr.mxu0 0.0
  %6211 = vmatpush1.xpose.msra.mxu0 0.0
  %6212 = vmatprep.subr.mxu0 0.0
  %6213 = vmatpush1.xpose.msra.mxu0 0.0
  %6214 = vmatprep.subr.mxu0 0.0
  %6215 = vmatpush1.xpose.msra.mxu0 0.0
  %6216 = vmatprep.subr.mxu0 0.0
  %6217 = vmatpush1.xpose.msra.mxu0 0.0
  %6218 = vmatprep.subr.mxu0 0.0
  %6219 = vmatpush1.xpose.msra.mxu0 0.0
  %6220 = vmatprep.subr.mxu0 0.0
  %6221 = vmatpush1.xpose.msra.mxu0 0.0
  %6222 = vmatprep.subr.mxu0 0.0
  %6223 = vmatpush1.xpose.msra.mxu0 0.0
  %6224 = vmatprep.subr.mxu0 0.0
  %6225 = vmatpush1.xpose.msra.mxu0 0.0
  %6226 = vmatprep.subr.mxu0 0.0
  %6227 = vmatpush1.xpose.msra.mxu0 0.0
  %6228 = vmatprep.subr.mxu0 0.0
  %6229 = vmatpush1.xpose.msra.mxu0 0.0
  %6230 = vmatprep.subr.mxu0 0.0
  %6231 = vmatpush1.xpose.msra.mxu0 0.0
  %6232 = vmatprep.subr.mxu0 0.0
  %6233 = vmatpush1.xpose.msra.mxu0 0.0
  %6234 = vmatprep.subr.mxu0 0.0
  %6235 = vmatpush1.xpose.msra.mxu0 0.0
  %6236 = vmatprep.subr.mxu0 0.0
  %6237 = vmatpush1.xpose.msra.mxu0 0.0
  %6238 = vmatprep.subr.mxu0 0.0
  %6239 = vmatpush1.xpose.msra.mxu0 0.0
  %6240 = vmatprep.mubr.f32.mxu0 0.0
  %v6241 = vand.u32 %v5990, 4294901760
  %v6242 = vsub.f32 %v5990, %v6241
  %6243 = vmatmul.mubr.f32.gmra.mrb[0].mxu0 %v6242
  %v6244 = vpop.f32.mrb[0].mxu0
  %v6245 = vadd.f32 %v6163, %v6244
  %v6246 = vpop.f32.mrb[0].mxu0
  %6247 = vmatprep.mubr.f32.mxu0 0.0
  %v6248 = vand.u32 %v5992, 4294901760
  %v6249 = vsub.f32 %v5992, %v6248
  %6250 = vmatmul.mubr.f32.gmra.mrb[0].mxu0 %v6249
  %v6251 = vpop.f32.mrb[0].mxu0
  %v6252 = vadd.f32 %v6169, %v6251
  %v6253 = vpop.f32.mrb[0].mxu0
  %6254 = vdwg.mxu0
  %6255 = vmatprep.subr.mxu0 0.0
  %v6256 = vand.u32 %v5994, 4294901760
  %6257 = vmatpush1.xpose.msra.mxu0 %v6256
  %6258 = vmatprep.subr.mxu0 0.0
  %v6259 = vand.u32 %v5996, 4294901760
  %6260 = vmatpush1.xpose.msra.mxu0 %v6259
  %6261 = vmatprep.subr.mxu0 0.0
  %6262 = vmatpush1.xpose.msra.mxu0 0.0
  %6263 = vmatprep.subr.mxu0 0.0
  %6264 = vmatpush1.xpose.msra.mxu0 0.0
  %6265 = vmatprep.subr.mxu0 0.0
  %6266 = vmatpush1.xpose.msra.mxu0 0.0
  %6267 = vmatprep.subr.mxu0 0.0
  %6268 = vmatpush1.xpose.msra.mxu0 0.0
  %6269 = vmatprep.subr.mxu0 0.0
  %6270 = vmatpush1.xpose.msra.mxu0 0.0
  %6271 = vmatprep.subr.mxu0 0.0
  %6272 = vmatpush1.xpose.msra.mxu0 0.0
  %6273 = vmatprep.subr.mxu0 0.0
  %6274 = vmatpush1.xpose.msra.mxu0 0.0
  %6275 = vmatprep.subr.mxu0 0.0
  %6276 = vmatpush1.xpose.msra.mxu0 0.0
  %6277 = vmatprep.subr.mxu0 0.0
  %6278 = vmatpush1.xpose.msra.mxu0 0.0
  %6279 = vmatprep.subr.mxu0 0.0
  %6280 = vmatpush1.xpose.msra.mxu0 0.0
  %6281 = vmatprep.subr.mxu0 0.0
  %6282 = vmatpush1.xpose.msra.mxu0 0.0
  %6283 = vmatprep.subr.mxu0 0.0
  %6284 = vmatpush1.xpose.msra.mxu0 0.0
  %6285 = vmatprep.subr.mxu0 0.0
  %6286 = vmatpush1.xpose.msra.mxu0 0.0
  %6287 = vmatprep.subr.mxu0 0.0
  %6288 = vmatpush1.xpose.msra.mxu0 0.0
  %6289 = vmatprep.subr.mxu0 0.0
  %6290 = vmatpush1.xpose.msra.mxu0 0.0
  %6291 = vmatprep.subr.mxu0 0.0
  %6292 = vmatpush1.xpose.msra.mxu0 0.0
  %6293 = vmatprep.subr.mxu0 0.0
  %6294 = vmatpush1.xpose.msra.mxu0 0.0
  %6295 = vmatprep.subr.mxu0 0.0
  %6296 = vmatpush1.xpose.msra.mxu0 0.0
  %6297 = vmatprep.subr.mxu0 0.0
  %6298 = vmatpush1.xpose.msra.mxu0 0.0
  %6299 = vmatprep.subr.mxu0 0.0
  %6300 = vmatpush1.xpose.msra.mxu0 0.0
  %6301 = vmatprep.subr.mxu0 0.0
  %6302 = vmatpush1.xpose.msra.mxu0 0.0
  %6303 = vmatprep.subr.mxu0 0.0
  %6304 = vmatpush1.xpose.msra.mxu0 0.0
  %6305 = vmatprep.subr.mxu0 0.0
  %6306 = vmatpush1.xpose.msra.mxu0 0.0
  %6307 = vmatprep.subr.mxu0 0.0
  %6308 = vmatpush1.xpose.msra.mxu0 0.0
  %6309 = vmatprep.subr.mxu0 0.0
  %6310 = vmatpush1.xpose.msra.mxu0 0.0
  %6311 = vmatprep.subr.mxu0 0.0
  %6312 = vmatpush1.xpose.msra.mxu0 0.0
  %6313 = vmatprep.subr.mxu0 0.0
  %6314 = vmatpush1.xpose.msra.mxu0 0.0
  %6315 = vmatprep.subr.mxu0 0.0
  %6316 = vmatpush1.xpose.msra.mxu0 0.0
  %6317 = vmatprep.subr.mxu0 0.0
  %6318 = vmatpush1.xpose.msra.mxu0 0.0
  %6319 = vmatprep.subr.mxu0 0.0
  %6320 = vmatpush1.xpose.msra.mxu0 0.0
  %6321 = vmatprep.mubr.f32.mxu0 0.0
  %v6322 = vand.u32 %v5990, 4294901760
  %v6323 = vsub.f32 %v5990, %v6322
  %v6324 = vand.u32 %v6323, 4294901760
  %6325 = vmatmul.mubr.f32.gmra.mrb[0].mxu0 %v6324
  %v6326 = vpop.f32.mrb[0].mxu0
  %v6327 = vadd.f32 %v6245, %v6326
  %v6328 = vpop.f32.mrb[0].mxu0
  %6329 = vmatprep.mubr.f32.mxu0 0.0
  %v6330 = vand.u32 %v5992, 4294901760
  %v6331 = vsub.f32 %v5992, %v6330
  %v6332 = vand.u32 %v6331, 4294901760
  %6333 = vmatmul.mubr.f32.gmra.mrb[0].mxu0 %v6332
  %v6334 = vpop.f32.mrb[0].mxu0
  %v6335 = vadd.f32 %v6252, %v6334
  %v6336 = vpop.f32.mrb[0].mxu0
  %6337 = vdwg.mxu0
  %6338 = vmatprep.subr.mxu0 0.0
  %v6339 = vand.u32 %v5994, 4294901760
  %v6340 = vsub.f32 %v5994, %v6339
  %v6341 = vand.u32 %v6340, 4294901760
  %6342 = vmatpush1.xpose.msra.mxu0 %v6341
  %6343 = vmatprep.subr.mxu0 0.0
  %v6344 = vand.u32 %v5996, 4294901760
  %v6345 = vsub.f32 %v5996, %v6344
  %v6346 = vand.u32 %v6345, 4294901760
  %6347 = vmatpush1.xpose.msra.mxu0 %v6346
  %6348 = vmatprep.subr.mxu0 0.0
  %6349 = vmatpush1.xpose.msra.mxu0 0.0
  %6350 = vmatprep.subr.mxu0 0.0
  %6351 = vmatpush1.xpose.msra.mxu0 0.0
  %6352 = vmatprep.subr.mxu0 0.0
  %6353 = vmatpush1.xpose.msra.mxu0 0.0
  %6354 = vmatprep.subr.mxu0 0.0
  %6355 = vmatpush1.xpose.msra.mxu0 0.0
  %6356 = vmatprep.subr.mxu0 0.0
  %6357 = vmatpush1.xpose.msra.mxu0 0.0
  %6358 = vmatprep.subr.mxu0 0.0
  %6359 = vmatpush1.xpose.msra.mxu0 0.0
  %6360 = vmatprep.subr.mxu0 0.0
  %6361 = vmatpush1.xpose.msra.mxu0 0.0
  %6362 = vmatprep.subr.mxu0 0.0
  %6363 = vmatpush1.xpose.msra.mxu0 0.0
  %6364 = vmatprep.subr.mxu0 0.0
  %6365 = vmatpush1.xpose.msra.mxu0 0.0
  %6366 = vmatprep.subr.mxu0 0.0
  %6367 = vmatpush1.xpose.msra.mxu0 0.0
  %6368 = vmatprep.subr.mxu0 0.0
  %6369 = vmatpush1.xpose.msra.mxu0 0.0
  %6370 = vmatprep.subr.mxu0 0.0
  %6371 = vmatpush1.xpose.msra.mxu0 0.0
  %6372 = vmatprep.subr.mxu0 0.0
  %6373 = vmatpush1.xpose.msra.mxu0 0.0
  %6374 = vmatprep.subr.mxu0 0.0
  %6375 = vmatpush1.xpose.msra.mxu0 0.0
  %6376 = vmatprep.subr.mxu0 0.0
  %6377 = vmatpush1.xpose.msra.mxu0 0.0
  %6378 = vmatprep.subr.mxu0 0.0
  %6379 = vmatpush1.xpose.msra.mxu0 0.0
  %6380 = vmatprep.subr.mxu0 0.0
  %6381 = vmatpush1.xpose.msra.mxu0 0.0
  %6382 = vmatprep.subr.mxu0 0.0
  %6383 = vmatpush1.xpose.msra.mxu0 0.0
  %6384 = vmatprep.subr.mxu0 0.0
  %6385 = vmatpush1.xpose.msra.mxu0 0.0
  %6386 = vmatprep.subr.mxu0 0.0
  %6387 = vmatpush1.xpose.msra.mxu0 0.0
  %6388 = vmatprep.subr.mxu0 0.0
  %6389 = vmatpush1.xpose.msra.mxu0 0.0
  %6390 = vmatprep.subr.mxu0 0.0
  %6391 = vmatpush1.xpose.msra.mxu0 0.0
  %6392 = vmatprep.subr.mxu0 0.0
  %6393 = vmatpush1.xpose.msra.mxu0 0.0
  %6394 = vmatprep.subr.mxu0 0.0
  %6395 = vmatpush1.xpose.msra.mxu0 0.0
  %6396 = vmatprep.subr.mxu0 0.0
  %6397 = vmatpush1.xpose.msra.mxu0 0.0
  %6398 = vmatprep.subr.mxu0 0.0
  %6399 = vmatpush1.xpose.msra.mxu0 0.0
  %6400 = vmatprep.subr.mxu0 0.0
  %6401 = vmatpush1.xpose.msra.mxu0 0.0
  %6402 = vmatprep.subr.mxu0 0.0
  %6403 = vmatpush1.xpose.msra.mxu0 0.0
  %6404 = vmatprep.subr.mxu0 0.0
  %6405 = vmatpush1.xpose.msra.mxu0 0.0
  %6406 = vmatprep.subr.mxu0 0.0
  %6407 = vmatpush1.xpose.msra.mxu0 0.0
  %6408 = vmatprep.mubr.f32.mxu0 0.0
  %v6409 = vand.u32 %v5990, 4294901760
  %6410 = vmatmul.mubr.f32.gmra.mrb[0].mxu0 %v6409
  %v6411 = vpop.f32.mrb[0].mxu0
  %v6412 = vadd.f32 %v6327, %v6411
  %v6413 = vpop.f32.mrb[0].mxu0
  %6414 = vmatprep.mubr.f32.mxu0 0.0
  %v6415 = vand.u32 %v5992, 4294901760
  %6416 = vmatmul.mubr.f32.gmra.mrb[0].mxu0 %v6415
  %v6417 = vpop.f32.mrb[0].mxu0
  %v6418 = vadd.f32 %v6335, %v6417
  %v6419 = vpop.f32.mrb[0].mxu0
  %6420 = vdwg.mxu0
  %6421 = vmatprep.subr.mxu0 0.0
  %v6422 = vand.u32 %v5994, 4294901760
  %6423 = vmatpush1.xpose.msra.mxu0 %v6422
  %6424 = vmatprep.subr.mxu0 0.0
  %v6425 = vand.u32 %v5996, 4294901760
  %6426 = vmatpush1.xpose.msra.mxu0 %v6425
  %6427 = vmatprep.subr.mxu0 0.0
  %6428 = vmatpush1.xpose.msra.mxu0 0.0
  %6429 = vmatprep.subr.mxu0 0.0
  %6430 = vmatpush1.xpose.msra.mxu0 0.0
  %6431 = vmatprep.subr.mxu0 0.0
  %6432 = vmatpush1.xpose.msra.mxu0 0.0
  %6433 = vmatprep.subr.mxu0 0.0
  %6434 = vmatpush1.xpose.msra.mxu0 0.0
  %6435 = vmatprep.subr.mxu0 0.0
  %6436 = vmatpush1.xpose.msra.mxu0 0.0
  %6437 = vmatprep.subr.mxu0 0.0
  %6438 = vmatpush1.xpose.msra.mxu0 0.0
  %6439 = vmatprep.subr.mxu0 0.0
  %6440 = vmatpush1.xpose.msra.mxu0 0.0
  %6441 = vmatprep.subr.mxu0 0.0
  %6442 = vmatpush1.xpose.msra.mxu0 0.0
  %6443 = vmatprep.subr.mxu0 0.0
  %6444 = vmatpush1.xpose.msra.mxu0 0.0
  %6445 = vmatprep.subr.mxu0 0.0
  %6446 = vmatpush1.xpose.msra.mxu0 0.0
  %6447 = vmatprep.subr.mxu0 0.0
  %6448 = vmatpush1.xpose.msra.mxu0 0.0
  %6449 = vmatprep.subr.mxu0 0.0
  %6450 = vmatpush1.xpose.msra.mxu0 0.0
  %6451 = vmatprep.subr.mxu0 0.0
  %6452 = vmatpush1.xpose.msra.mxu0 0.0
  %6453 = vmatprep.subr.mxu0 0.0
  %6454 = vmatpush1.xpose.msra.mxu0 0.0
  %6455 = vmatprep.subr.mxu0 0.0
  %6456 = vmatpush1.xpose.msra.mxu0 0.0
  %6457 = vmatprep.subr.mxu0 0.0
  %6458 = vmatpush1.xpose.msra.mxu0 0.0
  %6459 = vmatprep.subr.mxu0 0.0
  %6460 = vmatpush1.xpose.msra.mxu0 0.0
  %6461 = vmatprep.subr.mxu0 0.0
  %6462 = vmatpush1.xpose.msra.mxu0 0.0
  %6463 = vmatprep.subr.mxu0 0.0
  %6464 = vmatpush1.xpose.msra.mxu0 0.0
  %6465 = vmatprep.subr.mxu0 0.0
  %6466 = vmatpush1.xpose.msra.mxu0 0.0
  %6467 = vmatprep.subr.mxu0 0.0
  %6468 = vmatpush1.xpose.msra.mxu0 0.0
  %6469 = vmatprep.subr.mxu0 0.0
  %6470 = vmatpush1.xpose.msra.mxu0 0.0
  %6471 = vmatprep.subr.mxu0 0.0
  %6472 = vmatpush1.xpose.msra.mxu0 0.0
  %6473 = vmatprep.subr.mxu0 0.0
  %6474 = vmatpush1.xpose.msra.mxu0 0.0
  %6475 = vmatprep.subr.mxu0 0.0
  %6476 = vmatpush1.xpose.msra.mxu0 0.0
  %6477 = vmatprep.subr.mxu0 0.0
  %6478 = vmatpush1.xpose.msra.mxu0 0.0
  %6479 = vmatprep.subr.mxu0 0.0
  %6480 = vmatpush1.xpose.msra.mxu0 0.0
  %6481 = vmatprep.subr.mxu0 0.0
  %6482 = vmatpush1.xpose.msra.mxu0 0.0
  %6483 = vmatprep.subr.mxu0 0.0
  %6484 = vmatpush1.xpose.msra.mxu0 0.0
  %6485 = vmatprep.subr.mxu0 0.0
  %6486 = vmatpush1.xpose.msra.mxu0 0.0
  %6487 = vmatprep.mubr.f32.mxu0 0.0
  %v6488 = vand.u32 %v5990, 4294901760
  %6489 = vmatmul.mubr.f32.gmra.mrb[0].mxu0 %v6488
  %v6490 = vpop.f32.mrb[0].mxu0
  %v6491 = vadd.f32 %v6412, %v6490
  %v6492 = vpop.f32.mrb[0].mxu0
  %6493 = vmatprep.mubr.f32.mxu0 0.0
  %v6494 = vand.u32 %v5992, 4294901760
  %6495 = vmatmul.mubr.f32.gmra.mrb[0].mxu0 %v6494
  %v6496 = vpop.f32.mrb[0].mxu0
  %v6497 = vadd.f32 %v6418, %v6496
  %v6498 = vpop.f32.mrb[0].mxu0
  %6499 = vdwg.mxu0
  %6500 = vrot.lane.b32.xlu0 %v5975, 112
  %v6501 = vpop.permute.xlu0 %6500
  %6502 = vrot.lane.b32.xlu0 %v5981, 112
  %v6503 = vpop.permute.xlu0 %6502
  %6504 = vrot.lane.b32.xlu0 %v5975, 80
  %v6505 = vpop.permute.xlu0 %6504
  %6506 = vrot.lane.b32.xlu0 %v5981, 80
  %v6507 = vpop.permute.xlu0 %6506
  %v6508 = vsel %vm1508, %v6501, 0
  %v6510 = vsel %vm1508, %v6503, 0
  %v6512 = vsel %vm1508, %v6505, 0
  %v6514 = vsel %vm1508, %v6507, 0
  %6516 = vmatprep.subr.mxu0 0.0
  %v6517 = vand.u32 %v6512, 4294901760
  %6518 = vmatpush1.xpose.msra.mxu0 %v6517
  %6519 = vmatprep.subr.mxu0 0.0
  %v6520 = vand.u32 %v6514, 4294901760
  %6521 = vmatpush1.xpose.msra.mxu0 %v6520
  %6522 = vmatprep.subr.mxu0 0.0
  %6523 = vmatpush1.xpose.msra.mxu0 0.0
  %6524 = vmatprep.subr.mxu0 0.0
  %6525 = vmatpush1.xpose.msra.mxu0 0.0
  %6526 = vmatprep.subr.mxu0 0.0
  %6527 = vmatpush1.xpose.msra.mxu0 0.0
  %6528 = vmatprep.subr.mxu0 0.0
  %6529 = vmatpush1.xpose.msra.mxu0 0.0
  %6530 = vmatprep.subr.mxu0 0.0
  %6531 = vmatpush1.xpose.msra.mxu0 0.0
  %6532 = vmatprep.subr.mxu0 0.0
  %6533 = vmatpush1.xpose.msra.mxu0 0.0
  %6534 = vmatprep.subr.mxu0 0.0
  %6535 = vmatpush1.xpose.msra.mxu0 0.0
  %6536 = vmatprep.subr.mxu0 0.0
  %6537 = vmatpush1.xpose.msra.mxu0 0.0
  %6538 = vmatprep.subr.mxu0 0.0
  %6539 = vmatpush1.xpose.msra.mxu0 0.0
  %6540 = vmatprep.subr.mxu0 0.0
  %6541 = vmatpush1.xpose.msra.mxu0 0.0
  %6542 = vmatprep.subr.mxu0 0.0
  %6543 = vmatpush1.xpose.msra.mxu0 0.0
  %6544 = vmatprep.subr.mxu0 0.0
  %6545 = vmatpush1.xpose.msra.mxu0 0.0
  %6546 = vmatprep.subr.mxu0 0.0
  %6547 = vmatpush1.xpose.msra.mxu0 0.0
  %6548 = vmatprep.subr.mxu0 0.0
  %6549 = vmatpush1.xpose.msra.mxu0 0.0
  %6550 = vmatprep.subr.mxu0 0.0
  %6551 = vmatpush1.xpose.msra.mxu0 0.0
  %6552 = vmatprep.subr.mxu0 0.0
  %6553 = vmatpush1.xpose.msra.mxu0 0.0
  %6554 = vmatprep.subr.mxu0 0.0
  %6555 = vmatpush1.xpose.msra.mxu0 0.0
  %6556 = vmatprep.subr.mxu0 0.0
  %6557 = vmatpush1.xpose.msra.mxu0 0.0
  %6558 = vmatprep.subr.mxu0 0.0
  %6559 = vmatpush1.xpose.msra.mxu0 0.0
  %6560 = vmatprep.subr.mxu0 0.0
  %6561 = vmatpush1.xpose.msra.mxu0 0.0
  %6562 = vmatprep.subr.mxu0 0.0
  %6563 = vmatpush1.xpose.msra.mxu0 0.0
  %6564 = vmatprep.subr.mxu0 0.0
  %6565 = vmatpush1.xpose.msra.mxu0 0.0
  %6566 = vmatprep.subr.mxu0 0.0
  %6567 = vmatpush1.xpose.msra.mxu0 0.0
  %6568 = vmatprep.subr.mxu0 0.0
  %6569 = vmatpush1.xpose.msra.mxu0 0.0
  %6570 = vmatprep.subr.mxu0 0.0
  %6571 = vmatpush1.xpose.msra.mxu0 0.0
  %6572 = vmatprep.subr.mxu0 0.0
  %6573 = vmatpush1.xpose.msra.mxu0 0.0
  %6574 = vmatprep.subr.mxu0 0.0
  %6575 = vmatpush1.xpose.msra.mxu0 0.0
  %6576 = vmatprep.subr.mxu0 0.0
  %6577 = vmatpush1.xpose.msra.mxu0 0.0
  %6578 = vmatprep.subr.mxu0 0.0
  %6579 = vmatpush1.xpose.msra.mxu0 0.0
  %6580 = vmatprep.subr.mxu0 0.0
  %6581 = vmatpush1.xpose.msra.mxu0 0.0
  %6582 = vmatprep.mubr.f32.mxu0 0.0
  %v6583 = vand.u32 %v6508, 4294901760
  %v6584 = vsub.f32 %v6508, %v6583
  %v6585 = vand.u32 %v6584, 4294901760
  %v6586 = vsub.f32 %v6584, %v6585
  %v6587 = vand.u32 %v6586, 4294901760
  %6588 = vmatmul.mubr.f32.gmra.mrb[0].mxu0 %v6587
  %v6589 = vpop.f32.mrb[0].mxu0
  %v6590 = vadd.f32 0.0, %v6589
  %v6591 = vpop.f32.mrb[0].mxu0
  %6592 = vmatprep.mubr.f32.mxu0 0.0
  %v6593 = vand.u32 %v6510, 4294901760
  %v6594 = vsub.f32 %v6510, %v6593
  %v6595 = vand.u32 %v6594, 4294901760
  %v6596 = vsub.f32 %v6594, %v6595
  %v6597 = vand.u32 %v6596, 4294901760
  %6598 = vmatmul.mubr.f32.gmra.mrb[0].mxu0 %v6597
  %v6599 = vpop.f32.mrb[0].mxu0
  %v6600 = vadd.f32 0.0, %v6599
  %v6601 = vpop.f32.mrb[0].mxu0
  %6602 = vdwg.mxu0
  %6603 = vmatprep.subr.mxu0 0.0
  %v6604 = vand.u32 %v6512, 4294901760
  %v6605 = vsub.f32 %v6512, %v6604
  %v6606 = vand.u32 %v6605, 4294901760
  %v6607 = vsub.f32 %v6605, %v6606
  %v6608 = vand.u32 %v6607, 4294901760
  %6609 = vmatpush1.xpose.msra.mxu0 %v6608
  %6610 = vmatprep.subr.mxu0 0.0
  %v6611 = vand.u32 %v6514, 4294901760
  %v6612 = vsub.f32 %v6514, %v6611
  %v6613 = vand.u32 %v6612, 4294901760
  %v6614 = vsub.f32 %v6612, %v6613
  %v6615 = vand.u32 %v6614, 4294901760
  %6616 = vmatpush1.xpose.msra.mxu0 %v6615
  %6617 = vmatprep.subr.mxu0 0.0
  %6618 = vmatpush1.xpose.msra.mxu0 0.0
  %6619 = vmatprep.subr.mxu0 0.0
  %6620 = vmatpush1.xpose.msra.mxu0 0.0
  %6621 = vmatprep.subr.mxu0 0.0
  %6622 = vmatpush1.xpose.msra.mxu0 0.0
  %6623 = vmatprep.subr.mxu0 0.0
  %6624 = vmatpush1.xpose.msra.mxu0 0.0
  %6625 = vmatprep.subr.mxu0 0.0
  %6626 = vmatpush1.xpose.msra.mxu0 0.0
  %6627 = vmatprep.subr.mxu0 0.0
  %6628 = vmatpush1.xpose.msra.mxu0 0.0
  %6629 = vmatprep.subr.mxu0 0.0
  %6630 = vmatpush1.xpose.msra.mxu0 0.0
  %6631 = vmatprep.subr.mxu0 0.0
  %6632 = vmatpush1.xpose.msra.mxu0 0.0
  %6633 = vmatprep.subr.mxu0 0.0
  %6634 = vmatpush1.xpose.msra.mxu0 0.0
  %6635 = vmatprep.subr.mxu0 0.0
  %6636 = vmatpush1.xpose.msra.mxu0 0.0
  %6637 = vmatprep.subr.mxu0 0.0
  %6638 = vmatpush1.xpose.msra.mxu0 0.0
  %6639 = vmatprep.subr.mxu0 0.0
  %6640 = vmatpush1.xpose.msra.mxu0 0.0
  %6641 = vmatprep.subr.mxu0 0.0
  %6642 = vmatpush1.xpose.msra.mxu0 0.0
  %6643 = vmatprep.subr.mxu0 0.0
  %6644 = vmatpush1.xpose.msra.mxu0 0.0
  %6645 = vmatprep.subr.mxu0 0.0
  %6646 = vmatpush1.xpose.msra.mxu0 0.0
  %6647 = vmatprep.subr.mxu0 0.0
  %6648 = vmatpush1.xpose.msra.mxu0 0.0
  %6649 = vmatprep.subr.mxu0 0.0
  %6650 = vmatpush1.xpose.msra.mxu0 0.0
  %6651 = vmatprep.subr.mxu0 0.0
  %6652 = vmatpush1.xpose.msra.mxu0 0.0
  %6653 = vmatprep.subr.mxu0 0.0
  %6654 = vmatpush1.xpose.msra.mxu0 0.0
  %6655 = vmatprep.subr.mxu0 0.0
  %6656 = vmatpush1.xpose.msra.mxu0 0.0
  %6657 = vmatprep.subr.mxu0 0.0
  %6658 = vmatpush1.xpose.msra.mxu0 0.0
  %6659 = vmatprep.subr.mxu0 0.0
  %6660 = vmatpush1.xpose.msra.mxu0 0.0
  %6661 = vmatprep.subr.mxu0 0.0
  %6662 = vmatpush1.xpose.msra.mxu0 0.0
  %6663 = vmatprep.subr.mxu0 0.0
  %6664 = vmatpush1.xpose.msra.mxu0 0.0
  %6665 = vmatprep.subr.mxu0 0.0
  %6666 = vmatpush1.xpose.msra.mxu0 0.0
  %6667 = vmatprep.subr.mxu0 0.0
  %6668 = vmatpush1.xpose.msra.mxu0 0.0
  %6669 = vmatprep.subr.mxu0 0.0
  %6670 = vmatpush1.xpose.msra.mxu0 0.0
  %6671 = vmatprep.subr.mxu0 0.0
  %6672 = vmatpush1.xpose.msra.mxu0 0.0
  %6673 = vmatprep.subr.mxu0 0.0
  %6674 = vmatpush1.xpose.msra.mxu0 0.0
  %6675 = vmatprep.subr.mxu0 0.0
  %6676 = vmatpush1.xpose.msra.mxu0 0.0
  %6677 = vmatprep.mubr.f32.mxu0 0.0
  %v6678 = vand.u32 %v6508, 4294901760
  %6679 = vmatmul.mubr.f32.gmra.mrb[0].mxu0 %v6678
  %v6680 = vpop.f32.mrb[0].mxu0
  %v6681 = vadd.f32 %v6590, %v6680
  %v6682 = vpop.f32.mrb[0].mxu0
  %6683 = vmatprep.mubr.f32.mxu0 0.0
  %v6684 = vand.u32 %v6510, 4294901760
  %6685 = vmatmul.mubr.f32.gmra.mrb[0].mxu0 %v6684
  %v6686 = vpop.f32.mrb[0].mxu0
  %v6687 = vadd.f32 %v6600, %v6686
  %v6688 = vpop.f32.mrb[0].mxu0
  %6689 = vdwg.mxu0
  %6690 = vmatprep.subr.mxu0 0.0
  %v6691 = vand.u32 %v6512, 4294901760
  %v6692 = vsub.f32 %v6512, %v6691
  %6693 = vmatpush1.xpose.msra.mxu0 %v6692
  %6694 = vmatprep.subr.mxu0 0.0
  %v6695 = vand.u32 %v6514, 4294901760
  %v6696 = vsub.f32 %v6514, %v6695
  %6697 = vmatpush1.xpose.msra.mxu0 %v6696
  %6698 = vmatprep.subr.mxu0 0.0
  %6699 = vmatpush1.xpose.msra.mxu0 0.0
  %6700 = vmatprep.subr.mxu0 0.0
  %6701 = vmatpush1.xpose.msra.mxu0 0.0
  %6702 = vmatprep.subr.mxu0 0.0
  %6703 = vmatpush1.xpose.msra.mxu0 0.0
  %6704 = vmatprep.subr.mxu0 0.0
  %6705 = vmatpush1.xpose.msra.mxu0 0.0
  %6706 = vmatprep.subr.mxu0 0.0
  %6707 = vmatpush1.xpose.msra.mxu0 0.0
  %6708 = vmatprep.subr.mxu0 0.0
  %6709 = vmatpush1.xpose.msra.mxu0 0.0
  %6710 = vmatprep.subr.mxu0 0.0
  %6711 = vmatpush1.xpose.msra.mxu0 0.0
  %6712 = vmatprep.subr.mxu0 0.0
  %6713 = vmatpush1.xpose.msra.mxu0 0.0
  %6714 = vmatprep.subr.mxu0 0.0
  %6715 = vmatpush1.xpose.msra.mxu0 0.0
  %6716 = vmatprep.subr.mxu0 0.0
  %6717 = vmatpush1.xpose.msra.mxu0 0.0
  %6718 = vmatprep.subr.mxu0 0.0
  %6719 = vmatpush1.xpose.msra.mxu0 0.0
  %6720 = vmatprep.subr.mxu0 0.0
  %6721 = vmatpush1.xpose.msra.mxu0 0.0
  %6722 = vmatprep.subr.mxu0 0.0
  %6723 = vmatpush1.xpose.msra.mxu0 0.0
  %6724 = vmatprep.subr.mxu0 0.0
  %6725 = vmatpush1.xpose.msra.mxu0 0.0
  %6726 = vmatprep.subr.mxu0 0.0
  %6727 = vmatpush1.xpose.msra.mxu0 0.0
  %6728 = vmatprep.subr.mxu0 0.0
  %6729 = vmatpush1.xpose.msra.mxu0 0.0
  %6730 = vmatprep.subr.mxu0 0.0
  %6731 = vmatpush1.xpose.msra.mxu0 0.0
  %6732 = vmatprep.subr.mxu0 0.0
  %6733 = vmatpush1.xpose.msra.mxu0 0.0
  %6734 = vmatprep.subr.mxu0 0.0
  %6735 = vmatpush1.xpose.msra.mxu0 0.0
  %6736 = vmatprep.subr.mxu0 0.0
  %6737 = vmatpush1.xpose.msra.mxu0 0.0
  %6738 = vmatprep.subr.mxu0 0.0
  %6739 = vmatpush1.xpose.msra.mxu0 0.0
  %6740 = vmatprep.subr.mxu0 0.0
  %6741 = vmatpush1.xpose.msra.mxu0 0.0
  %6742 = vmatprep.subr.mxu0 0.0
  %6743 = vmatpush1.xpose.msra.mxu0 0.0
  %6744 = vmatprep.subr.mxu0 0.0
  %6745 = vmatpush1.xpose.msra.mxu0 0.0
  %6746 = vmatprep.subr.mxu0 0.0
  %6747 = vmatpush1.xpose.msra.mxu0 0.0
  %6748 = vmatprep.subr.mxu0 0.0
  %6749 = vmatpush1.xpose.msra.mxu0 0.0
  %6750 = vmatprep.subr.mxu0 0.0
  %6751 = vmatpush1.xpose.msra.mxu0 0.0
  %6752 = vmatprep.subr.mxu0 0.0
  %6753 = vmatpush1.xpose.msra.mxu0 0.0
  %6754 = vmatprep.subr.mxu0 0.0
  %6755 = vmatpush1.xpose.msra.mxu0 0.0
  %6756 = vmatprep.subr.mxu0 0.0
  %6757 = vmatpush1.xpose.msra.mxu0 0.0
  %6758 = vmatprep.mubr.f32.mxu0 0.0
  %v6759 = vand.u32 %v6508, 4294901760
  %v6760 = vsub.f32 %v6508, %v6759
  %6761 = vmatmul.mubr.f32.gmra.mrb[0].mxu0 %v6760
  %v6762 = vpop.f32.mrb[0].mxu0
  %v6763 = vadd.f32 %v6681, %v6762
  %v6764 = vpop.f32.mrb[0].mxu0
  %6765 = vmatprep.mubr.f32.mxu0 0.0
  %v6766 = vand.u32 %v6510, 4294901760
  %v6767 = vsub.f32 %v6510, %v6766
  %6768 = vmatmul.mubr.f32.gmra.mrb[0].mxu0 %v6767
  %v6769 = vpop.f32.mrb[0].mxu0
  %v6770 = vadd.f32 %v6687, %v6769
  %v6771 = vpop.f32.mrb[0].mxu0
  %6772 = vdwg.mxu0
  %6773 = vmatprep.subr.mxu0 0.0
  %v6774 = vand.u32 %v6512, 4294901760
  %6775 = vmatpush1.xpose.msra.mxu0 %v6774
  %6776 = vmatprep.subr.mxu0 0.0
  %v6777 = vand.u32 %v6514, 4294901760
  %6778 = vmatpush1.xpose.msra.mxu0 %v6777
  %6779 = vmatprep.subr.mxu0 0.0
  %6780 = vmatpush1.xpose.msra.mxu0 0.0
  %6781 = vmatprep.subr.mxu0 0.0
  %6782 = vmatpush1.xpose.msra.mxu0 0.0
  %6783 = vmatprep.subr.mxu0 0.0
  %6784 = vmatpush1.xpose.msra.mxu0 0.0
  %6785 = vmatprep.subr.mxu0 0.0
  %6786 = vmatpush1.xpose.msra.mxu0 0.0
  %6787 = vmatprep.subr.mxu0 0.0
  %6788 = vmatpush1.xpose.msra.mxu0 0.0
  %6789 = vmatprep.subr.mxu0 0.0
  %6790 = vmatpush1.xpose.msra.mxu0 0.0
  %6791 = vmatprep.subr.mxu0 0.0
  %6792 = vmatpush1.xpose.msra.mxu0 0.0
  %6793 = vmatprep.subr.mxu0 0.0
  %6794 = vmatpush1.xpose.msra.mxu0 0.0
  %6795 = vmatprep.subr.mxu0 0.0
  %6796 = vmatpush1.xpose.msra.mxu0 0.0
  %6797 = vmatprep.subr.mxu0 0.0
  %6798 = vmatpush1.xpose.msra.mxu0 0.0
  %6799 = vmatprep.subr.mxu0 0.0
  %6800 = vmatpush1.xpose.msra.mxu0 0.0
  %6801 = vmatprep.subr.mxu0 0.0
  %6802 = vmatpush1.xpose.msra.mxu0 0.0
  %6803 = vmatprep.subr.mxu0 0.0
  %6804 = vmatpush1.xpose.msra.mxu0 0.0
  %6805 = vmatprep.subr.mxu0 0.0
  %6806 = vmatpush1.xpose.msra.mxu0 0.0
  %6807 = vmatprep.subr.mxu0 0.0
  %6808 = vmatpush1.xpose.msra.mxu0 0.0
  %6809 = vmatprep.subr.mxu0 0.0
  %6810 = vmatpush1.xpose.msra.mxu0 0.0
  %6811 = vmatprep.subr.mxu0 0.0
  %6812 = vmatpush1.xpose.msra.mxu0 0.0
  %6813 = vmatprep.subr.mxu0 0.0
  %6814 = vmatpush1.xpose.msra.mxu0 0.0
  %6815 = vmatprep.subr.mxu0 0.0
  %6816 = vmatpush1.xpose.msra.mxu0 0.0
  %6817 = vmatprep.subr.mxu0 0.0
  %6818 = vmatpush1.xpose.msra.mxu0 0.0
  %6819 = vmatprep.subr.mxu0 0.0
  %6820 = vmatpush1.xpose.msra.mxu0 0.0
  %6821 = vmatprep.subr.mxu0 0.0
  %6822 = vmatpush1.xpose.msra.mxu0 0.0
  %6823 = vmatprep.subr.mxu0 0.0
  %6824 = vmatpush1.xpose.msra.mxu0 0.0
  %6825 = vmatprep.subr.mxu0 0.0
  %6826 = vmatpush1.xpose.msra.mxu0 0.0
  %6827 = vmatprep.subr.mxu0 0.0
  %6828 = vmatpush1.xpose.msra.mxu0 0.0
  %6829 = vmatprep.subr.mxu0 0.0
  %6830 = vmatpush1.xpose.msra.mxu0 0.0
  %6831 = vmatprep.subr.mxu0 0.0
  %6832 = vmatpush1.xpose.msra.mxu0 0.0
  %6833 = vmatprep.subr.mxu0 0.0
  %6834 = vmatpush1.xpose.msra.mxu0 0.0
  %6835 = vmatprep.subr.mxu0 0.0
  %6836 = vmatpush1.xpose.msra.mxu0 0.0
  %6837 = vmatprep.subr.mxu0 0.0
  %6838 = vmatpush1.xpose.msra.mxu0 0.0
  %6839 = vmatprep.mubr.f32.mxu0 0.0
  %v6840 = vand.u32 %v6508, 4294901760
  %v6841 = vsub.f32 %v6508, %v6840
  %v6842 = vand.u32 %v6841, 4294901760
  %6843 = vmatmul.mubr.f32.gmra.mrb[0].mxu0 %v6842
  %v6844 = vpop.f32.mrb[0].mxu0
  %v6845 = vadd.f32 %v6763, %v6844
  %v6846 = vpop.f32.mrb[0].mxu0
  %6847 = vmatprep.mubr.f32.mxu0 0.0
  %v6848 = vand.u32 %v6510, 4294901760
  %v6849 = vsub.f32 %v6510, %v6848
  %v6850 = vand.u32 %v6849, 4294901760
  %6851 = vmatmul.mubr.f32.gmra.mrb[0].mxu0 %v6850
  %v6852 = vpop.f32.mrb[0].mxu0
  %v6853 = vadd.f32 %v6770, %v6852
  %v6854 = vpop.f32.mrb[0].mxu0
  %6855 = vdwg.mxu0
  %6856 = vmatprep.subr.mxu0 0.0
  %v6857 = vand.u32 %v6512, 4294901760
  %v6858 = vsub.f32 %v6512, %v6857
  %v6859 = vand.u32 %v6858, 4294901760
  %6860 = vmatpush1.xpose.msra.mxu0 %v6859
  %6861 = vmatprep.subr.mxu0 0.0
  %v6862 = vand.u32 %v6514, 4294901760
  %v6863 = vsub.f32 %v6514, %v6862
  %v6864 = vand.u32 %v6863, 4294901760
  %6865 = vmatpush1.xpose.msra.mxu0 %v6864
  %6866 = vmatprep.subr.mxu0 0.0
  %6867 = vmatpush1.xpose.msra.mxu0 0.0
  %6868 = vmatprep.subr.mxu0 0.0
  %6869 = vmatpush1.xpose.msra.mxu0 0.0
  %6870 = vmatprep.subr.mxu0 0.0
  %6871 = vmatpush1.xpose.msra.mxu0 0.0
  %6872 = vmatprep.subr.mxu0 0.0
  %6873 = vmatpush1.xpose.msra.mxu0 0.0
  %6874 = vmatprep.subr.mxu0 0.0
  %6875 = vmatpush1.xpose.msra.mxu0 0.0
  %6876 = vmatprep.subr.mxu0 0.0
  %6877 = vmatpush1.xpose.msra.mxu0 0.0
  %6878 = vmatprep.subr.mxu0 0.0
  %6879 = vmatpush1.xpose.msra.mxu0 0.0
  %6880 = vmatprep.subr.mxu0 0.0
  %6881 = vmatpush1.xpose.msra.mxu0 0.0
  %6882 = vmatprep.subr.mxu0 0.0
  %6883 = vmatpush1.xpose.msra.mxu0 0.0
  %6884 = vmatprep.subr.mxu0 0.0
  %6885 = vmatpush1.xpose.msra.mxu0 0.0
  %6886 = vmatprep.subr.mxu0 0.0
  %6887 = vmatpush1.xpose.msra.mxu0 0.0
  %6888 = vmatprep.subr.mxu0 0.0
  %6889 = vmatpush1.xpose.msra.mxu0 0.0
  %6890 = vmatprep.subr.mxu0 0.0
  %6891 = vmatpush1.xpose.msra.mxu0 0.0
  %6892 = vmatprep.subr.mxu0 0.0
  %6893 = vmatpush1.xpose.msra.mxu0 0.0
  %6894 = vmatprep.subr.mxu0 0.0
  %6895 = vmatpush1.xpose.msra.mxu0 0.0
  %6896 = vmatprep.subr.mxu0 0.0
  %6897 = vmatpush1.xpose.msra.mxu0 0.0
  %6898 = vmatprep.subr.mxu0 0.0
  %6899 = vmatpush1.xpose.msra.mxu0 0.0
  %6900 = vmatprep.subr.mxu0 0.0
  %6901 = vmatpush1.xpose.msra.mxu0 0.0
  %6902 = vmatprep.subr.mxu0 0.0
  %6903 = vmatpush1.xpose.msra.mxu0 0.0
  %6904 = vmatprep.subr.mxu0 0.0
  %6905 = vmatpush1.xpose.msra.mxu0 0.0
  %6906 = vmatprep.subr.mxu0 0.0
  %6907 = vmatpush1.xpose.msra.mxu0 0.0
  %6908 = vmatprep.subr.mxu0 0.0
  %6909 = vmatpush1.xpose.msra.mxu0 0.0
  %6910 = vmatprep.subr.mxu0 0.0
  %6911 = vmatpush1.xpose.msra.mxu0 0.0
  %6912 = vmatprep.subr.mxu0 0.0
  %6913 = vmatpush1.xpose.msra.mxu0 0.0
  %6914 = vmatprep.subr.mxu0 0.0
  %6915 = vmatpush1.xpose.msra.mxu0 0.0
  %6916 = vmatprep.subr.mxu0 0.0
  %6917 = vmatpush1.xpose.msra.mxu0 0.0
  %6918 = vmatprep.subr.mxu0 0.0
  %6919 = vmatpush1.xpose.msra.mxu0 0.0
  %6920 = vmatprep.subr.mxu0 0.0
  %6921 = vmatpush1.xpose.msra.mxu0 0.0
  %6922 = vmatprep.subr.mxu0 0.0
  %6923 = vmatpush1.xpose.msra.mxu0 0.0
  %6924 = vmatprep.subr.mxu0 0.0
  %6925 = vmatpush1.xpose.msra.mxu0 0.0
  %6926 = vmatprep.mubr.f32.mxu0 0.0
  %v6927 = vand.u32 %v6508, 4294901760
  %6928 = vmatmul.mubr.f32.gmra.mrb[0].mxu0 %v6927
  %v6929 = vpop.f32.mrb[0].mxu0
  %v6930 = vadd.f32 %v6845, %v6929
  %v6931 = vpop.f32.mrb[0].mxu0
  %6932 = vmatprep.mubr.f32.mxu0 0.0
  %v6933 = vand.u32 %v6510, 4294901760
  %6934 = vmatmul.mubr.f32.gmra.mrb[0].mxu0 %v6933
  %v6935 = vpop.f32.mrb[0].mxu0
  %v6936 = vadd.f32 %v6853, %v6935
  %v6937 = vpop.f32.mrb[0].mxu0
  %6938 = vdwg.mxu0
  %6939 = vmatprep.subr.mxu0 0.0
  %v6940 = vand.u32 %v6512, 4294901760
  %6941 = vmatpush1.xpose.msra.mxu0 %v6940
  %6942 = vmatprep.subr.mxu0 0.0
  %v6943 = vand.u32 %v6514, 4294901760
  %6944 = vmatpush1.xpose.msra.mxu0 %v6943
  %6945 = vmatprep.subr.mxu0 0.0
  %6946 = vmatpush1.xpose.msra.mxu0 0.0
  %6947 = vmatprep.subr.mxu0 0.0
  %6948 = vmatpush1.xpose.msra.mxu0 0.0
  %6949 = vmatprep.subr.mxu0 0.0
  %6950 = vmatpush1.xpose.msra.mxu0 0.0
  %6951 = vmatprep.subr.mxu0 0.0
  %6952 = vmatpush1.xpose.msra.mxu0 0.0
  %6953 = vmatprep.subr.mxu0 0.0
  %6954 = vmatpush1.xpose.msra.mxu0 0.0
  %6955 = vmatprep.subr.mxu0 0.0
  %6956 = vmatpush1.xpose.msra.mxu0 0.0
  %6957 = vmatprep.subr.mxu0 0.0
  %6958 = vmatpush1.xpose.msra.mxu0 0.0
  %6959 = vmatprep.subr.mxu0 0.0
  %6960 = vmatpush1.xpose.msra.mxu0 0.0
  %6961 = vmatprep.subr.mxu0 0.0
  %6962 = vmatpush1.xpose.msra.mxu0 0.0
  %6963 = vmatprep.subr.mxu0 0.0
  %6964 = vmatpush1.xpose.msra.mxu0 0.0
  %6965 = vmatprep.subr.mxu0 0.0
  %6966 = vmatpush1.xpose.msra.mxu0 0.0
  %6967 = vmatprep.subr.mxu0 0.0
  %6968 = vmatpush1.xpose.msra.mxu0 0.0
  %6969 = vmatprep.subr.mxu0 0.0
  %6970 = vmatpush1.xpose.msra.mxu0 0.0
  %6971 = vmatprep.subr.mxu0 0.0
  %6972 = vmatpush1.xpose.msra.mxu0 0.0
  %6973 = vmatprep.subr.mxu0 0.0
  %6974 = vmatpush1.xpose.msra.mxu0 0.0
  %6975 = vmatprep.subr.mxu0 0.0
  %6976 = vmatpush1.xpose.msra.mxu0 0.0
  %6977 = vmatprep.subr.mxu0 0.0
  %6978 = vmatpush1.xpose.msra.mxu0 0.0
  %6979 = vmatprep.subr.mxu0 0.0
  %6980 = vmatpush1.xpose.msra.mxu0 0.0
  %6981 = vmatprep.subr.mxu0 0.0
  %6982 = vmatpush1.xpose.msra.mxu0 0.0
  %6983 = vmatprep.subr.mxu0 0.0
  %6984 = vmatpush1.xpose.msra.mxu0 0.0
  %6985 = vmatprep.subr.mxu0 0.0
  %6986 = vmatpush1.xpose.msra.mxu0 0.0
  %6987 = vmatprep.subr.mxu0 0.0
  %6988 = vmatpush1.xpose.msra.mxu0 0.0
  %6989 = vmatprep.subr.mxu0 0.0
  %6990 = vmatpush1.xpose.msra.mxu0 0.0
  %6991 = vmatprep.subr.mxu0 0.0
  %6992 = vmatpush1.xpose.msra.mxu0 0.0
  %6993 = vmatprep.subr.mxu0 0.0
  %6994 = vmatpush1.xpose.msra.mxu0 0.0
  %6995 = vmatprep.subr.mxu0 0.0
  %6996 = vmatpush1.xpose.msra.mxu0 0.0
  %6997 = vmatprep.subr.mxu0 0.0
  %6998 = vmatpush1.xpose.msra.mxu0 0.0
  %6999 = vmatprep.subr.mxu0 0.0
  %7000 = vmatpush1.xpose.msra.mxu0 0.0
  %7001 = vmatprep.subr.mxu0 0.0
  %7002 = vmatpush1.xpose.msra.mxu0 0.0
  %7003 = vmatprep.subr.mxu0 0.0
  %7004 = vmatpush1.xpose.msra.mxu0 0.0
  %7005 = vmatprep.mubr.f32.mxu0 0.0
  %v7006 = vand.u32 %v6508, 4294901760
  %7007 = vmatmul.mubr.f32.gmra.mrb[0].mxu0 %v7006
  %v7008 = vpop.f32.mrb[0].mxu0
  %v7009 = vadd.f32 %v6930, %v7008
  %v7010 = vpop.f32.mrb[0].mxu0
  %7011 = vmatprep.mubr.f32.mxu0 0.0
  %v7012 = vand.u32 %v6510, 4294901760
  %7013 = vmatmul.mubr.f32.gmra.mrb[0].mxu0 %v7012
  %v7014 = vpop.f32.mrb[0].mxu0
  %v7015 = vadd.f32 %v6936, %v7014
  %v7016 = vpop.f32.mrb[0].mxu0
  %7017 = vdwg.mxu0
  %v7020 = vrot.slane %v7009, 6
  %v7021 = vrot.slane %v7015, 6
  %v7022 = vsel %vm2539, %v7020, %v7021
  %v7025 = vsel %vm2539, %v6497, %v7020
  %v7026 = vadd.f32 %v6491, %v2546
  %v7027 = vadd.f32 %v7025, %v2547
  %v7028 = vadd.f32 %v7022, %v2548
  %v7029 = vsel %vm2552, %v7026, -inf
  %7030 = vmax.xlane.f32.xlu0 %v7029
  %v7031 = vpop.xlane.xlu0 %7030
  %v7032 = vsel %vm2552, %v7027, -inf
  %7033 = vmax.xlane.f32.xlu0 %v7032
  %v7034 = vpop.xlane.xlu0 %7033
  %v7035 = vsel %vm2559, %v7028, -inf
  %7036 = vmax.xlane.f32.xlu0 %v7035
  %v7037 = vpop.xlane.xlu0 %7036
  %v7038 = vsub.f32 %v7026, %v7031
  %v7039 = vsub.f32 %v7027, %v7034
  %v7040 = vsub.f32 %v7028, %v7037
  %v7041 = vmul.f32 %v7038, 1.442695
  %v7042 = vpow.pop %v7041
  %v7043 = vmul.f32 %v7039, 1.442695
  %v7044 = vpow.pop %v7043
  %v7045 = vmul.f32 %v7040, 1.442695
  %v7046 = vpow.pop %v7045
  %v7047 = vsel %vm2552, %v7042, 0.0
  %7048 = vadd.xlane.f32.xlu0 %v7047
  %v7049 = vpop.xlane.xlu0 %7048
  %v7050 = vsel %vm2552, %v7044, 0.0
  %7051 = vadd.xlane.f32.xlu0 %v7050
  %v7052 = vpop.xlane.xlu0 %7051
  %v7053 = vsel %vm2559, %v7046, 0.0
  %7054 = vadd.xlane.f32.xlu0 %v7053
  %v7055 = vpop.xlane.xlu0 %7054
  %v7056 = vrcp.pop %v7049
  %v7057 = vmul.f32 %v7042, %v7056
  %v7058 = vrcp.pop %v7052
  %v7059 = vmul.f32 %v7044, %v7058
  %v7060 = vrcp.pop %v7055
  %v7061 = vmul.f32 %v7046, %v7060
  %7062 = vrot.lane.b32.xlu0 %v5975, 64
  %v7063 = vpop.permute.xlu0 %7062
  %7064 = vrot.lane.b32.xlu0 %v5981, 64
  %v7065 = vpop.permute.xlu0 %7064
  %v7068 = vsel %vm2552, %v7057, 0
  %v7071 = vsel %vm2552, %v7059, 0
  %v7073 = vsel %vm2539, %v7065, 0
  %7075 = vmatprep.subr.mxu0 0.0
  %v7076 = vand.u32 %v7063, 4294901760
  %7077 = vmatpush1.msra.mxu0 %v7076
  %7078 = vmatprep.subr.mxu0 0.0
  %v7079 = vand.u32 %v7073, 4294901760
  %7080 = vmatpush1.msra.mxu0 %v7079
  %7081 = vmatprep.subr.mxu0 0.0
  %7082 = vmatpush1.msra.mxu0 0.0
  %7083 = vmatprep.subr.mxu0 0.0
  %7084 = vmatpush1.msra.mxu0 0.0
  %7085 = vmatprep.subr.mxu0 0.0
  %7086 = vmatpush1.msra.mxu0 0.0
  %7087 = vmatprep.subr.mxu0 0.0
  %7088 = vmatpush1.msra.mxu0 0.0
  %7089 = vmatprep.subr.mxu0 0.0
  %7090 = vmatpush1.msra.mxu0 0.0
  %7091 = vmatprep.subr.mxu0 0.0
  %7092 = vmatpush1.msra.mxu0 0.0
  %7093 = vmatprep.subr.mxu0 0.0
  %7094 = vmatpush1.msra.mxu0 0.0
  %7095 = vmatprep.subr.mxu0 0.0
  %7096 = vmatpush1.msra.mxu0 0.0
  %7097 = vmatprep.subr.mxu0 0.0
  %7098 = vmatpush1.msra.mxu0 0.0
  %7099 = vmatprep.subr.mxu0 0.0
  %7100 = vmatpush1.msra.mxu0 0.0
  %7101 = vmatprep.subr.mxu0 0.0
  %7102 = vmatpush1.msra.mxu0 0.0
  %7103 = vmatprep.subr.mxu0 0.0
  %7104 = vmatpush1.msra.mxu0 0.0
  %7105 = vmatprep.subr.mxu0 0.0
  %7106 = vmatpush1.msra.mxu0 0.0
  %7107 = vmatprep.subr.mxu0 0.0
  %7108 = vmatpush1.msra.mxu0 0.0
  %7109 = vmatprep.subr.mxu0 0.0
  %7110 = vmatpush1.msra.mxu0 0.0
  %7111 = vmatprep.subr.mxu0 0.0
  %7112 = vmatpush1.msra.mxu0 0.0
  %7113 = vmatprep.subr.mxu0 0.0
  %7114 = vmatpush1.msra.mxu0 0.0
  %7115 = vmatprep.subr.mxu0 0.0
  %7116 = vmatpush1.msra.mxu0 0.0
  %7117 = vmatprep.subr.mxu0 0.0
  %7118 = vmatpush1.msra.mxu0 0.0
  %7119 = vmatprep.subr.mxu0 0.0
  %7120 = vmatpush1.msra.mxu0 0.0
  %7121 = vmatprep.subr.mxu0 0.0
  %7122 = vmatpush1.msra.mxu0 0.0
  %7123 = vmatprep.subr.mxu0 0.0
  %7124 = vmatpush1.msra.mxu0 0.0
  %7125 = vmatprep.subr.mxu0 0.0
  %7126 = vmatpush1.msra.mxu0 0.0
  %7127 = vmatprep.subr.mxu0 0.0
  %7128 = vmatpush1.msra.mxu0 0.0
  %7129 = vmatprep.subr.mxu0 0.0
  %7130 = vmatpush1.msra.mxu0 0.0
  %7131 = vmatprep.subr.mxu0 0.0
  %7132 = vmatpush1.msra.mxu0 0.0
  %7133 = vmatprep.subr.mxu0 0.0
  %7134 = vmatpush1.msra.mxu0 0.0
  %7135 = vmatprep.subr.mxu0 0.0
  %7136 = vmatpush1.msra.mxu0 0.0
  %7137 = vmatprep.subr.mxu0 0.0
  %7138 = vmatpush1.msra.mxu0 0.0
  %7139 = vmatprep.subr.mxu0 0.0
  %7140 = vmatpush1.msra.mxu0 0.0
  %7141 = vmatprep.mubr.f32.mxu0 0.0
  %v7142 = vand.u32 %v7068, 4294901760
  %v7143 = vsub.f32 %v7068, %v7142
  %v7144 = vand.u32 %v7143, 4294901760
  %v7145 = vsub.f32 %v7143, %v7144
  %v7146 = vand.u32 %v7145, 4294901760
  %7147 = vmatmul.mubr.f32.gmra.mrb[0].mxu0 %v7146
  %v7148 = vpop.f32.mrb[0].mxu0
  %v7149 = vadd.f32 0.0, %v7148
  %v7150 = vpop.f32.mrb[0].mxu0
  %7151 = vmatprep.mubr.f32.mxu0 0.0
  %v7152 = vand.u32 %v7071, 4294901760
  %v7153 = vsub.f32 %v7071, %v7152
  %v7154 = vand.u32 %v7153, 4294901760
  %v7155 = vsub.f32 %v7153, %v7154
  %v7156 = vand.u32 %v7155, 4294901760
  %7157 = vmatmul.mubr.f32.gmra.mrb[0].mxu0 %v7156
  %v7158 = vpop.f32.mrb[0].mxu0
  %v7159 = vadd.f32 0.0, %v7158
  %v7160 = vpop.f32.mrb[0].mxu0
  %7161 = vdwg.mxu0
  %7162 = vmatprep.subr.mxu0 0.0
  %v7163 = vand.u32 %v7063, 4294901760
  %v7164 = vsub.f32 %v7063, %v7163
  %v7165 = vand.u32 %v7164, 4294901760
  %v7166 = vsub.f32 %v7164, %v7165
  %v7167 = vand.u32 %v7166, 4294901760
  %7168 = vmatpush1.msra.mxu0 %v7167
  %7169 = vmatprep.subr.mxu0 0.0
  %v7170 = vand.u32 %v7073, 4294901760
  %v7171 = vsub.f32 %v7073, %v7170
  %v7172 = vand.u32 %v7171, 4294901760
  %v7173 = vsub.f32 %v7171, %v7172
  %v7174 = vand.u32 %v7173, 4294901760
  %7175 = vmatpush1.msra.mxu0 %v7174
  %7176 = vmatprep.subr.mxu0 0.0
  %7177 = vmatpush1.msra.mxu0 0.0
  %7178 = vmatprep.subr.mxu0 0.0
  %7179 = vmatpush1.msra.mxu0 0.0
  %7180 = vmatprep.subr.mxu0 0.0
  %7181 = vmatpush1.msra.mxu0 0.0
  %7182 = vmatprep.subr.mxu0 0.0
  %7183 = vmatpush1.msra.mxu0 0.0
  %7184 = vmatprep.subr.mxu0 0.0
  %7185 = vmatpush1.msra.mxu0 0.0
  %7186 = vmatprep.subr.mxu0 0.0
  %7187 = vmatpush1.msra.mxu0 0.0
  %7188 = vmatprep.subr.mxu0 0.0
  %7189 = vmatpush1.msra.mxu0 0.0
  %7190 = vmatprep.subr.mxu0 0.0
  %7191 = vmatpush1.msra.mxu0 0.0
  %7192 = vmatprep.subr.mxu0 0.0
  %7193 = vmatpush1.msra.mxu0 0.0
  %7194 = vmatprep.subr.mxu0 0.0
  %7195 = vmatpush1.msra.mxu0 0.0
  %7196 = vmatprep.subr.mxu0 0.0
  %7197 = vmatpush1.msra.mxu0 0.0
  %7198 = vmatprep.subr.mxu0 0.0
  %7199 = vmatpush1.msra.mxu0 0.0
  %7200 = vmatprep.subr.mxu0 0.0
  %7201 = vmatpush1.msra.mxu0 0.0
  %7202 = vmatprep.subr.mxu0 0.0
  %7203 = vmatpush1.msra.mxu0 0.0
  %7204 = vmatprep.subr.mxu0 0.0
  %7205 = vmatpush1.msra.mxu0 0.0
  %7206 = vmatprep.subr.mxu0 0.0
  %7207 = vmatpush1.msra.mxu0 0.0
  %7208 = vmatprep.subr.mxu0 0.0
  %7209 = vmatpush1.msra.mxu0 0.0
  %7210 = vmatprep.subr.mxu0 0.0
  %7211 = vmatpush1.msra.mxu0 0.0
  %7212 = vmatprep.subr.mxu0 0.0
  %7213 = vmatpush1.msra.mxu0 0.0
  %7214 = vmatprep.subr.mxu0 0.0
  %7215 = vmatpush1.msra.mxu0 0.0
  %7216 = vmatprep.subr.mxu0 0.0
  %7217 = vmatpush1.msra.mxu0 0.0
  %7218 = vmatprep.subr.mxu0 0.0
  %7219 = vmatpush1.msra.mxu0 0.0
  %7220 = vmatprep.subr.mxu0 0.0
  %7221 = vmatpush1.msra.mxu0 0.0
  %7222 = vmatprep.subr.mxu0 0.0
  %7223 = vmatpush1.msra.mxu0 0.0
  %7224 = vmatprep.subr.mxu0 0.0
  %7225 = vmatpush1.msra.mxu0 0.0
  %7226 = vmatprep.subr.mxu0 0.0
  %7227 = vmatpush1.msra.mxu0 0.0
  %7228 = vmatprep.subr.mxu0 0.0
  %7229 = vmatpush1.msra.mxu0 0.0
  %7230 = vmatprep.subr.mxu0 0.0
  %7231 = vmatpush1.msra.mxu0 0.0
  %7232 = vmatprep.subr.mxu0 0.0
  %7233 = vmatpush1.msra.mxu0 0.0
  %7234 = vmatprep.subr.mxu0 0.0
  %7235 = vmatpush1.msra.mxu0 0.0
  %7236 = vmatprep.mubr.f32.mxu0 0.0
  %v7237 = vand.u32 %v7068, 4294901760
  %7238 = vmatmul.mubr.f32.gmra.mrb[0].mxu0 %v7237
  %v7239 = vpop.f32.mrb[0].mxu0
  %v7240 = vadd.f32 %v7149, %v7239
  %v7241 = vpop.f32.mrb[0].mxu0
  %7242 = vmatprep.mubr.f32.mxu0 0.0
  %v7243 = vand.u32 %v7071, 4294901760
  %7244 = vmatmul.mubr.f32.gmra.mrb[0].mxu0 %v7243
  %v7245 = vpop.f32.mrb[0].mxu0
  %v7246 = vadd.f32 %v7159, %v7245
  %v7247 = vpop.f32.mrb[0].mxu0
  %7248 = vdwg.mxu0
  %7249 = vmatprep.subr.mxu0 0.0
  %v7250 = vand.u32 %v7063, 4294901760
  %v7251 = vsub.f32 %v7063, %v7250
  %7252 = vmatpush1.msra.mxu0 %v7251
  %7253 = vmatprep.subr.mxu0 0.0
  %v7254 = vand.u32 %v7073, 4294901760
  %v7255 = vsub.f32 %v7073, %v7254
  %7256 = vmatpush1.msra.mxu0 %v7255
  %7257 = vmatprep.subr.mxu0 0.0
  %7258 = vmatpush1.msra.mxu0 0.0
  %7259 = vmatprep.subr.mxu0 0.0
  %7260 = vmatpush1.msra.mxu0 0.0
  %7261 = vmatprep.subr.mxu0 0.0
  %7262 = vmatpush1.msra.mxu0 0.0
  %7263 = vmatprep.subr.mxu0 0.0
  %7264 = vmatpush1.msra.mxu0 0.0
  %7265 = vmatprep.subr.mxu0 0.0
  %7266 = vmatpush1.msra.mxu0 0.0
  %7267 = vmatprep.subr.mxu0 0.0
  %7268 = vmatpush1.msra.mxu0 0.0
  %7269 = vmatprep.subr.mxu0 0.0
  %7270 = vmatpush1.msra.mxu0 0.0
  %7271 = vmatprep.subr.mxu0 0.0
  %7272 = vmatpush1.msra.mxu0 0.0
  %7273 = vmatprep.subr.mxu0 0.0
  %7274 = vmatpush1.msra.mxu0 0.0
  %7275 = vmatprep.subr.mxu0 0.0
  %7276 = vmatpush1.msra.mxu0 0.0
  %7277 = vmatprep.subr.mxu0 0.0
  %7278 = vmatpush1.msra.mxu0 0.0
  %7279 = vmatprep.subr.mxu0 0.0
  %7280 = vmatpush1.msra.mxu0 0.0
  %7281 = vmatprep.subr.mxu0 0.0
  %7282 = vmatpush1.msra.mxu0 0.0
  %7283 = vmatprep.subr.mxu0 0.0
  %7284 = vmatpush1.msra.mxu0 0.0
  %7285 = vmatprep.subr.mxu0 0.0
  %7286 = vmatpush1.msra.mxu0 0.0
  %7287 = vmatprep.subr.mxu0 0.0
  %7288 = vmatpush1.msra.mxu0 0.0
  %7289 = vmatprep.subr.mxu0 0.0
  %7290 = vmatpush1.msra.mxu0 0.0
  %7291 = vmatprep.subr.mxu0 0.0
  %7292 = vmatpush1.msra.mxu0 0.0
  %7293 = vmatprep.subr.mxu0 0.0
  %7294 = vmatpush1.msra.mxu0 0.0
  %7295 = vmatprep.subr.mxu0 0.0
  %7296 = vmatpush1.msra.mxu0 0.0
  %7297 = vmatprep.subr.mxu0 0.0
  %7298 = vmatpush1.msra.mxu0 0.0
  %7299 = vmatprep.subr.mxu0 0.0
  %7300 = vmatpush1.msra.mxu0 0.0
  %7301 = vmatprep.subr.mxu0 0.0
  %7302 = vmatpush1.msra.mxu0 0.0
  %7303 = vmatprep.subr.mxu0 0.0
  %7304 = vmatpush1.msra.mxu0 0.0
  %7305 = vmatprep.subr.mxu0 0.0
  %7306 = vmatpush1.msra.mxu0 0.0
  %7307 = vmatprep.subr.mxu0 0.0
  %7308 = vmatpush1.msra.mxu0 0.0
  %7309 = vmatprep.subr.mxu0 0.0
  %7310 = vmatpush1.msra.mxu0 0.0
  %7311 = vmatprep.subr.mxu0 0.0
  %7312 = vmatpush1.msra.mxu0 0.0
  %7313 = vmatprep.subr.mxu0 0.0
  %7314 = vmatpush1.msra.mxu0 0.0
  %7315 = vmatprep.subr.mxu0 0.0
  %7316 = vmatpush1.msra.mxu0 0.0
  %7317 = vmatprep.mubr.f32.mxu0 0.0
  %v7318 = vand.u32 %v7068, 4294901760
  %v7319 = vsub.f32 %v7068, %v7318
  %7320 = vmatmul.mubr.f32.gmra.mrb[0].mxu0 %v7319
  %v7321 = vpop.f32.mrb[0].mxu0
  %v7322 = vadd.f32 %v7240, %v7321
  %v7323 = vpop.f32.mrb[0].mxu0
  %7324 = vmatprep.mubr.f32.mxu0 0.0
  %v7325 = vand.u32 %v7071, 4294901760
  %v7326 = vsub.f32 %v7071, %v7325
  %7327 = vmatmul.mubr.f32.gmra.mrb[0].mxu0 %v7326
  %v7328 = vpop.f32.mrb[0].mxu0
  %v7329 = vadd.f32 %v7246, %v7328
  %v7330 = vpop.f32.mrb[0].mxu0
  %7331 = vdwg.mxu0
  %7332 = vmatprep.subr.mxu0 0.0
  %v7333 = vand.u32 %v7063, 4294901760
  %7334 = vmatpush1.msra.mxu0 %v7333
  %7335 = vmatprep.subr.mxu0 0.0
  %v7336 = vand.u32 %v7073, 4294901760
  %7337 = vmatpush1.msra.mxu0 %v7336
  %7338 = vmatprep.subr.mxu0 0.0
  %7339 = vmatpush1.msra.mxu0 0.0
  %7340 = vmatprep.subr.mxu0 0.0
  %7341 = vmatpush1.msra.mxu0 0.0
  %7342 = vmatprep.subr.mxu0 0.0
  %7343 = vmatpush1.msra.mxu0 0.0
  %7344 = vmatprep.subr.mxu0 0.0
  %7345 = vmatpush1.msra.mxu0 0.0
  %7346 = vmatprep.subr.mxu0 0.0
  %7347 = vmatpush1.msra.mxu0 0.0
  %7348 = vmatprep.subr.mxu0 0.0
  %7349 = vmatpush1.msra.mxu0 0.0
  %7350 = vmatprep.subr.mxu0 0.0
  %7351 = vmatpush1.msra.mxu0 0.0
  %7352 = vmatprep.subr.mxu0 0.0
  %7353 = vmatpush1.msra.mxu0 0.0
  %7354 = vmatprep.subr.mxu0 0.0
  %7355 = vmatpush1.msra.mxu0 0.0
  %7356 = vmatprep.subr.mxu0 0.0
  %7357 = vmatpush1.msra.mxu0 0.0
  %7358 = vmatprep.subr.mxu0 0.0
  %7359 = vmatpush1.msra.mxu0 0.0
  %7360 = vmatprep.subr.mxu0 0.0
  %7361 = vmatpush1.msra.mxu0 0.0
  %7362 = vmatprep.subr.mxu0 0.0
  %7363 = vmatpush1.msra.mxu0 0.0
  %7364 = vmatprep.subr.mxu0 0.0
  %7365 = vmatpush1.msra.mxu0 0.0
  %7366 = vmatprep.subr.mxu0 0.0
  %7367 = vmatpush1.msra.mxu0 0.0
  %7368 = vmatprep.subr.mxu0 0.0
  %7369 = vmatpush1.msra.mxu0 0.0
  %7370 = vmatprep.subr.mxu0 0.0
  %7371 = vmatpush1.msra.mxu0 0.0
  %7372 = vmatprep.subr.mxu0 0.0
  %7373 = vmatpush1.msra.mxu0 0.0
  %7374 = vmatprep.subr.mxu0 0.0
  %7375 = vmatpush1.msra.mxu0 0.0
  %7376 = vmatprep.subr.mxu0 0.0
  %7377 = vmatpush1.msra.mxu0 0.0
  %7378 = vmatprep.subr.mxu0 0.0
  %7379 = vmatpush1.msra.mxu0 0.0
  %7380 = vmatprep.subr.mxu0 0.0
  %7381 = vmatpush1.msra.mxu0 0.0
  %7382 = vmatprep.subr.mxu0 0.0
  %7383 = vmatpush1.msra.mxu0 0.0
  %7384 = vmatprep.subr.mxu0 0.0
  %7385 = vmatpush1.msra.mxu0 0.0
  %7386 = vmatprep.subr.mxu0 0.0
  %7387 = vmatpush1.msra.mxu0 0.0
  %7388 = vmatprep.subr.mxu0 0.0
  %7389 = vmatpush1.msra.mxu0 0.0
  %7390 = vmatprep.subr.mxu0 0.0
  %7391 = vmatpush1.msra.mxu0 0.0
  %7392 = vmatprep.subr.mxu0 0.0
  %7393 = vmatpush1.msra.mxu0 0.0
  %7394 = vmatprep.subr.mxu0 0.0
  %7395 = vmatpush1.msra.mxu0 0.0
  %7396 = vmatprep.subr.mxu0 0.0
  %7397 = vmatpush1.msra.mxu0 0.0
  %7398 = vmatprep.mubr.f32.mxu0 0.0
  %v7399 = vand.u32 %v7068, 4294901760
  %v7400 = vsub.f32 %v7068, %v7399
  %v7401 = vand.u32 %v7400, 4294901760
  %7402 = vmatmul.mubr.f32.gmra.mrb[0].mxu0 %v7401
  %v7403 = vpop.f32.mrb[0].mxu0
  %v7404 = vadd.f32 %v7322, %v7403
  %v7405 = vpop.f32.mrb[0].mxu0
  %7406 = vmatprep.mubr.f32.mxu0 0.0
  %v7407 = vand.u32 %v7071, 4294901760
  %v7408 = vsub.f32 %v7071, %v7407
  %v7409 = vand.u32 %v7408, 4294901760
  %7410 = vmatmul.mubr.f32.gmra.mrb[0].mxu0 %v7409
  %v7411 = vpop.f32.mrb[0].mxu0
  %v7412 = vadd.f32 %v7329, %v7411
  %v7413 = vpop.f32.mrb[0].mxu0
  %7414 = vdwg.mxu0
  %7415 = vmatprep.subr.mxu0 0.0
  %v7416 = vand.u32 %v7063, 4294901760
  %v7417 = vsub.f32 %v7063, %v7416
  %v7418 = vand.u32 %v7417, 4294901760
  %7419 = vmatpush1.msra.mxu0 %v7418
  %7420 = vmatprep.subr.mxu0 0.0
  %v7421 = vand.u32 %v7073, 4294901760
  %v7422 = vsub.f32 %v7073, %v7421
  %v7423 = vand.u32 %v7422, 4294901760
  %7424 = vmatpush1.msra.mxu0 %v7423
  %7425 = vmatprep.subr.mxu0 0.0
  %7426 = vmatpush1.msra.mxu0 0.0
  %7427 = vmatprep.subr.mxu0 0.0
  %7428 = vmatpush1.msra.mxu0 0.0
  %7429 = vmatprep.subr.mxu0 0.0
  %7430 = vmatpush1.msra.mxu0 0.0
  %7431 = vmatprep.subr.mxu0 0.0
  %7432 = vmatpush1.msra.mxu0 0.0
  %7433 = vmatprep.subr.mxu0 0.0
  %7434 = vmatpush1.msra.mxu0 0.0
  %7435 = vmatprep.subr.mxu0 0.0
  %7436 = vmatpush1.msra.mxu0 0.0
  %7437 = vmatprep.subr.mxu0 0.0
  %7438 = vmatpush1.msra.mxu0 0.0
  %7439 = vmatprep.subr.mxu0 0.0
  %7440 = vmatpush1.msra.mxu0 0.0
  %7441 = vmatprep.subr.mxu0 0.0
  %7442 = vmatpush1.msra.mxu0 0.0
  %7443 = vmatprep.subr.mxu0 0.0
  %7444 = vmatpush1.msra.mxu0 0.0
  %7445 = vmatprep.subr.mxu0 0.0
  %7446 = vmatpush1.msra.mxu0 0.0
  %7447 = vmatprep.subr.mxu0 0.0
  %7448 = vmatpush1.msra.mxu0 0.0
  %7449 = vmatprep.subr.mxu0 0.0
  %7450 = vmatpush1.msra.mxu0 0.0
  %7451 = vmatprep.subr.mxu0 0.0
  %7452 = vmatpush1.msra.mxu0 0.0
  %7453 = vmatprep.subr.mxu0 0.0
  %7454 = vmatpush1.msra.mxu0 0.0
  %7455 = vmatprep.subr.mxu0 0.0
  %7456 = vmatpush1.msra.mxu0 0.0
  %7457 = vmatprep.subr.mxu0 0.0
  %7458 = vmatpush1.msra.mxu0 0.0
  %7459 = vmatprep.subr.mxu0 0.0
  %7460 = vmatpush1.msra.mxu0 0.0
  %7461 = vmatprep.subr.mxu0 0.0
  %7462 = vmatpush1.msra.mxu0 0.0
  %7463 = vmatprep.subr.mxu0 0.0
  %7464 = vmatpush1.msra.mxu0 0.0
  %7465 = vmatprep.subr.mxu0 0.0
  %7466 = vmatpush1.msra.mxu0 0.0
  %7467 = vmatprep.subr.mxu0 0.0
  %7468 = vmatpush1.msra.mxu0 0.0
  %7469 = vmatprep.subr.mxu0 0.0
  %7470 = vmatpush1.msra.mxu0 0.0
  %7471 = vmatprep.subr.mxu0 0.0
  %7472 = vmatpush1.msra.mxu0 0.0
  %7473 = vmatprep.subr.mxu0 0.0
  %7474 = vmatpush1.msra.mxu0 0.0
  %7475 = vmatprep.subr.mxu0 0.0
  %7476 = vmatpush1.msra.mxu0 0.0
  %7477 = vmatprep.subr.mxu0 0.0
  %7478 = vmatpush1.msra.mxu0 0.0
  %7479 = vmatprep.subr.mxu0 0.0
  %7480 = vmatpush1.msra.mxu0 0.0
  %7481 = vmatprep.subr.mxu0 0.0
  %7482 = vmatpush1.msra.mxu0 0.0
  %7483 = vmatprep.subr.mxu0 0.0
  %7484 = vmatpush1.msra.mxu0 0.0
  %7485 = vmatprep.mubr.f32.mxu0 0.0
  %v7486 = vand.u32 %v7068, 4294901760
  %7487 = vmatmul.mubr.f32.gmra.mrb[0].mxu0 %v7486
  %v7488 = vpop.f32.mrb[0].mxu0
  %v7489 = vadd.f32 %v7404, %v7488
  %v7490 = vpop.f32.mrb[0].mxu0
  %7491 = vmatprep.mubr.f32.mxu0 0.0
  %v7492 = vand.u32 %v7071, 4294901760
  %7493 = vmatmul.mubr.f32.gmra.mrb[0].mxu0 %v7492
  %v7494 = vpop.f32.mrb[0].mxu0
  %v7495 = vadd.f32 %v7412, %v7494
  %v7496 = vpop.f32.mrb[0].mxu0
  %7497 = vdwg.mxu0
  %7498 = vmatprep.subr.mxu0 0.0
  %v7499 = vand.u32 %v7063, 4294901760
  %7500 = vmatpush1.msra.mxu0 %v7499
  %7501 = vmatprep.subr.mxu0 0.0
  %v7502 = vand.u32 %v7073, 4294901760
  %7503 = vmatpush1.msra.mxu0 %v7502
  %7504 = vmatprep.subr.mxu0 0.0
  %7505 = vmatpush1.msra.mxu0 0.0
  %7506 = vmatprep.subr.mxu0 0.0
  %7507 = vmatpush1.msra.mxu0 0.0
  %7508 = vmatprep.subr.mxu0 0.0
  %7509 = vmatpush1.msra.mxu0 0.0
  %7510 = vmatprep.subr.mxu0 0.0
  %7511 = vmatpush1.msra.mxu0 0.0
  %7512 = vmatprep.subr.mxu0 0.0
  %7513 = vmatpush1.msra.mxu0 0.0
  %7514 = vmatprep.subr.mxu0 0.0
  %7515 = vmatpush1.msra.mxu0 0.0
  %7516 = vmatprep.subr.mxu0 0.0
  %7517 = vmatpush1.msra.mxu0 0.0
  %7518 = vmatprep.subr.mxu0 0.0
  %7519 = vmatpush1.msra.mxu0 0.0
  %7520 = vmatprep.subr.mxu0 0.0
  %7521 = vmatpush1.msra.mxu0 0.0
  %7522 = vmatprep.subr.mxu0 0.0
  %7523 = vmatpush1.msra.mxu0 0.0
  %7524 = vmatprep.subr.mxu0 0.0
  %7525 = vmatpush1.msra.mxu0 0.0
  %7526 = vmatprep.subr.mxu0 0.0
  %7527 = vmatpush1.msra.mxu0 0.0
  %7528 = vmatprep.subr.mxu0 0.0
  %7529 = vmatpush1.msra.mxu0 0.0
  %7530 = vmatprep.subr.mxu0 0.0
  %7531 = vmatpush1.msra.mxu0 0.0
  %7532 = vmatprep.subr.mxu0 0.0
  %7533 = vmatpush1.msra.mxu0 0.0
  %7534 = vmatprep.subr.mxu0 0.0
  %7535 = vmatpush1.msra.mxu0 0.0
  %7536 = vmatprep.subr.mxu0 0.0
  %7537 = vmatpush1.msra.mxu0 0.0
  %7538 = vmatprep.subr.mxu0 0.0
  %7539 = vmatpush1.msra.mxu0 0.0
  %7540 = vmatprep.subr.mxu0 0.0
  %7541 = vmatpush1.msra.mxu0 0.0
  %7542 = vmatprep.subr.mxu0 0.0
  %7543 = vmatpush1.msra.mxu0 0.0
  %7544 = vmatprep.subr.mxu0 0.0
  %7545 = vmatpush1.msra.mxu0 0.0
  %7546 = vmatprep.subr.mxu0 0.0
  %7547 = vmatpush1.msra.mxu0 0.0
  %7548 = vmatprep.subr.mxu0 0.0
  %7549 = vmatpush1.msra.mxu0 0.0
  %7550 = vmatprep.subr.mxu0 0.0
  %7551 = vmatpush1.msra.mxu0 0.0
  %7552 = vmatprep.subr.mxu0 0.0
  %7553 = vmatpush1.msra.mxu0 0.0
  %7554 = vmatprep.subr.mxu0 0.0
  %7555 = vmatpush1.msra.mxu0 0.0
  %7556 = vmatprep.subr.mxu0 0.0
  %7557 = vmatpush1.msra.mxu0 0.0
  %7558 = vmatprep.subr.mxu0 0.0
  %7559 = vmatpush1.msra.mxu0 0.0
  %7560 = vmatprep.subr.mxu0 0.0
  %7561 = vmatpush1.msra.mxu0 0.0
  %7562 = vmatprep.subr.mxu0 0.0
  %7563 = vmatpush1.msra.mxu0 0.0
  %7564 = vmatprep.mubr.f32.mxu0 0.0
  %v7565 = vand.u32 %v7068, 4294901760
  %7566 = vmatmul.mubr.f32.gmra.mrb[0].mxu0 %v7565
  %v7567 = vpop.f32.mrb[0].mxu0
  %v7568 = vadd.f32 %v7489, %v7567
  %v7569 = vpop.f32.mrb[0].mxu0
  %7570 = vmatprep.mubr.f32.mxu0 0.0
  %v7571 = vand.u32 %v7071, 4294901760
  %7572 = vmatmul.mubr.f32.gmra.mrb[0].mxu0 %v7571
  %v7573 = vpop.f32.mrb[0].mxu0
  %v7574 = vadd.f32 %v7495, %v7573
  %v7575 = vpop.f32.mrb[0].mxu0
  %7576 = vdwg.mxu0
  %v7578 = vrot.slane %v7059, 2
  %v7579 = vrot.slane %v7061, 2
  %v7580 = vsel %vm3103, %v7578, %v7579
  %7581 = vrot.lane.b32.xlu0 %v5975, 48
  %v7582 = vpop.permute.xlu0 %7581
  %7583 = vrot.lane.b32.xlu0 %v5981, 48
  %v7584 = vpop.permute.xlu0 %7583
  %v7586 = vsel %vm2552, %v7580, 0
  %v7588 = vsel %vm2552, %v7579, 0
  %v7590 = vsel %vm2539, %v7584, 0
  %7592 = vmatprep.subr.mxu0 0.0
  %v7593 = vand.u32 %v7582, 4294901760
  %7594 = vmatpush1.msra.mxu0 %v7593
  %7595 = vmatprep.subr.mxu0 0.0
  %v7596 = vand.u32 %v7590, 4294901760
  %7597 = vmatpush1.msra.mxu0 %v7596
  %7598 = vmatprep.subr.mxu0 0.0
  %7599 = vmatpush1.msra.mxu0 0.0
  %7600 = vmatprep.subr.mxu0 0.0
  %7601 = vmatpush1.msra.mxu0 0.0
  %7602 = vmatprep.subr.mxu0 0.0
  %7603 = vmatpush1.msra.mxu0 0.0
  %7604 = vmatprep.subr.mxu0 0.0
  %7605 = vmatpush1.msra.mxu0 0.0
  %7606 = vmatprep.subr.mxu0 0.0
  %7607 = vmatpush1.msra.mxu0 0.0
  %7608 = vmatprep.subr.mxu0 0.0
  %7609 = vmatpush1.msra.mxu0 0.0
  %7610 = vmatprep.subr.mxu0 0.0
  %7611 = vmatpush1.msra.mxu0 0.0
  %7612 = vmatprep.subr.mxu0 0.0
  %7613 = vmatpush1.msra.mxu0 0.0
  %7614 = vmatprep.subr.mxu0 0.0
  %7615 = vmatpush1.msra.mxu0 0.0
  %7616 = vmatprep.subr.mxu0 0.0
  %7617 = vmatpush1.msra.mxu0 0.0
  %7618 = vmatprep.subr.mxu0 0.0
  %7619 = vmatpush1.msra.mxu0 0.0
  %7620 = vmatprep.subr.mxu0 0.0
  %7621 = vmatpush1.msra.mxu0 0.0
  %7622 = vmatprep.subr.mxu0 0.0
  %7623 = vmatpush1.msra.mxu0 0.0
  %7624 = vmatprep.subr.mxu0 0.0
  %7625 = vmatpush1.msra.mxu0 0.0
  %7626 = vmatprep.subr.mxu0 0.0
  %7627 = vmatpush1.msra.mxu0 0.0
  %7628 = vmatprep.subr.mxu0 0.0
  %7629 = vmatpush1.msra.mxu0 0.0
  %7630 = vmatprep.subr.mxu0 0.0
  %7631 = vmatpush1.msra.mxu0 0.0
  %7632 = vmatprep.subr.mxu0 0.0
  %7633 = vmatpush1.msra.mxu0 0.0
  %7634 = vmatprep.subr.mxu0 0.0
  %7635 = vmatpush1.msra.mxu0 0.0
  %7636 = vmatprep.subr.mxu0 0.0
  %7637 = vmatpush1.msra.mxu0 0.0
  %7638 = vmatprep.subr.mxu0 0.0
  %7639 = vmatpush1.msra.mxu0 0.0
  %7640 = vmatprep.subr.mxu0 0.0
  %7641 = vmatpush1.msra.mxu0 0.0
  %7642 = vmatprep.subr.mxu0 0.0
  %7643 = vmatpush1.msra.mxu0 0.0
  %7644 = vmatprep.subr.mxu0 0.0
  %7645 = vmatpush1.msra.mxu0 0.0
  %7646 = vmatprep.subr.mxu0 0.0
  %7647 = vmatpush1.msra.mxu0 0.0
  %7648 = vmatprep.subr.mxu0 0.0
  %7649 = vmatpush1.msra.mxu0 0.0
  %7650 = vmatprep.subr.mxu0 0.0
  %7651 = vmatpush1.msra.mxu0 0.0
  %7652 = vmatprep.subr.mxu0 0.0
  %7653 = vmatpush1.msra.mxu0 0.0
  %7654 = vmatprep.subr.mxu0 0.0
  %7655 = vmatpush1.msra.mxu0 0.0
  %7656 = vmatprep.subr.mxu0 0.0
  %7657 = vmatpush1.msra.mxu0 0.0
  %7658 = vmatprep.mubr.f32.mxu0 0.0
  %v7659 = vand.u32 %v7586, 4294901760
  %v7660 = vsub.f32 %v7586, %v7659
  %v7661 = vand.u32 %v7660, 4294901760
  %v7662 = vsub.f32 %v7660, %v7661
  %v7663 = vand.u32 %v7662, 4294901760
  %7664 = vmatmul.mubr.f32.gmra.mrb[0].mxu0 %v7663
  %v7665 = vpop.f32.mrb[0].mxu0
  %v7666 = vadd.f32 0.0, %v7665
  %v7667 = vpop.f32.mrb[0].mxu0
  %7668 = vmatprep.mubr.f32.mxu0 0.0
  %v7669 = vand.u32 %v7588, 4294901760
  %v7670 = vsub.f32 %v7588, %v7669
  %v7671 = vand.u32 %v7670, 4294901760
  %v7672 = vsub.f32 %v7670, %v7671
  %v7673 = vand.u32 %v7672, 4294901760
  %7674 = vmatmul.mubr.f32.gmra.mrb[0].mxu0 %v7673
  %v7675 = vpop.f32.mrb[0].mxu0
  %v7676 = vadd.f32 0.0, %v7675
  %v7677 = vpop.f32.mrb[0].mxu0
  %7678 = vdwg.mxu0
  %7679 = vmatprep.subr.mxu0 0.0
  %v7680 = vand.u32 %v7582, 4294901760
  %v7681 = vsub.f32 %v7582, %v7680
  %v7682 = vand.u32 %v7681, 4294901760
  %v7683 = vsub.f32 %v7681, %v7682
  %v7684 = vand.u32 %v7683, 4294901760
  %7685 = vmatpush1.msra.mxu0 %v7684
  %7686 = vmatprep.subr.mxu0 0.0
  %v7687 = vand.u32 %v7590, 4294901760
  %v7688 = vsub.f32 %v7590, %v7687
  %v7689 = vand.u32 %v7688, 4294901760
  %v7690 = vsub.f32 %v7688, %v7689
  %v7691 = vand.u32 %v7690, 4294901760
  %7692 = vmatpush1.msra.mxu0 %v7691
  %7693 = vmatprep.subr.mxu0 0.0
  %7694 = vmatpush1.msra.mxu0 0.0
  %7695 = vmatprep.subr.mxu0 0.0
  %7696 = vmatpush1.msra.mxu0 0.0
  %7697 = vmatprep.subr.mxu0 0.0
  %7698 = vmatpush1.msra.mxu0 0.0
  %7699 = vmatprep.subr.mxu0 0.0
  %7700 = vmatpush1.msra.mxu0 0.0
  %7701 = vmatprep.subr.mxu0 0.0
  %7702 = vmatpush1.msra.mxu0 0.0
  %7703 = vmatprep.subr.mxu0 0.0
  %7704 = vmatpush1.msra.mxu0 0.0
  %7705 = vmatprep.subr.mxu0 0.0
  %7706 = vmatpush1.msra.mxu0 0.0
  %7707 = vmatprep.subr.mxu0 0.0
  %7708 = vmatpush1.msra.mxu0 0.0
  %7709 = vmatprep.subr.mxu0 0.0
  %7710 = vmatpush1.msra.mxu0 0.0
  %7711 = vmatprep.subr.mxu0 0.0
  %7712 = vmatpush1.msra.mxu0 0.0
  %7713 = vmatprep.subr.mxu0 0.0
  %7714 = vmatpush1.msra.mxu0 0.0
  %7715 = vmatprep.subr.mxu0 0.0
  %7716 = vmatpush1.msra.mxu0 0.0
  %7717 = vmatprep.subr.mxu0 0.0
  %7718 = vmatpush1.msra.mxu0 0.0
  %7719 = vmatprep.subr.mxu0 0.0
  %7720 = vmatpush1.msra.mxu0 0.0
  %7721 = vmatprep.subr.mxu0 0.0
  %7722 = vmatpush1.msra.mxu0 0.0
  %7723 = vmatprep.subr.mxu0 0.0
  %7724 = vmatpush1.msra.mxu0 0.0
  %7725 = vmatprep.subr.mxu0 0.0
  %7726 = vmatpush1.msra.mxu0 0.0
  %7727 = vmatprep.subr.mxu0 0.0
  %7728 = vmatpush1.msra.mxu0 0.0
  %7729 = vmatprep.subr.mxu0 0.0
  %7730 = vmatpush1.msra.mxu0 0.0
  %7731 = vmatprep.subr.mxu0 0.0
  %7732 = vmatpush1.msra.mxu0 0.0
  %7733 = vmatprep.subr.mxu0 0.0
  %7734 = vmatpush1.msra.mxu0 0.0
  %7735 = vmatprep.subr.mxu0 0.0
  %7736 = vmatpush1.msra.mxu0 0.0
  %7737 = vmatprep.subr.mxu0 0.0
  %7738 = vmatpush1.msra.mxu0 0.0
  %7739 = vmatprep.subr.mxu0 0.0
  %7740 = vmatpush1.msra.mxu0 0.0
  %7741 = vmatprep.subr.mxu0 0.0
  %7742 = vmatpush1.msra.mxu0 0.0
  %7743 = vmatprep.subr.mxu0 0.0
  %7744 = vmatpush1.msra.mxu0 0.0
  %7745 = vmatprep.subr.mxu0 0.0
  %7746 = vmatpush1.msra.mxu0 0.0
  %7747 = vmatprep.subr.mxu0 0.0
  %7748 = vmatpush1.msra.mxu0 0.0
  %7749 = vmatprep.subr.mxu0 0.0
  %7750 = vmatpush1.msra.mxu0 0.0
  %7751 = vmatprep.subr.mxu0 0.0
  %7752 = vmatpush1.msra.mxu0 0.0
  %7753 = vmatprep.mubr.f32.mxu0 0.0
  %v7754 = vand.u32 %v7586, 4294901760
  %7755 = vmatmul.mubr.f32.gmra.mrb[0].mxu0 %v7754
  %v7756 = vpop.f32.mrb[0].mxu0
  %v7757 = vadd.f32 %v7666, %v7756
  %v7758 = vpop.f32.mrb[0].mxu0
  %7759 = vmatprep.mubr.f32.mxu0 0.0
  %v7760 = vand.u32 %v7588, 4294901760
  %7761 = vmatmul.mubr.f32.gmra.mrb[0].mxu0 %v7760
  %v7762 = vpop.f32.mrb[0].mxu0
  %v7763 = vadd.f32 %v7676, %v7762
  %v7764 = vpop.f32.mrb[0].mxu0
  %7765 = vdwg.mxu0
  %7766 = vmatprep.subr.mxu0 0.0
  %v7767 = vand.u32 %v7582, 4294901760
  %v7768 = vsub.f32 %v7582, %v7767
  %7769 = vmatpush1.msra.mxu0 %v7768
  %7770 = vmatprep.subr.mxu0 0.0
  %v7771 = vand.u32 %v7590, 4294901760
  %v7772 = vsub.f32 %v7590, %v7771
  %7773 = vmatpush1.msra.mxu0 %v7772
  %7774 = vmatprep.subr.mxu0 0.0
  %7775 = vmatpush1.msra.mxu0 0.0
  %7776 = vmatprep.subr.mxu0 0.0
  %7777 = vmatpush1.msra.mxu0 0.0
  %7778 = vmatprep.subr.mxu0 0.0
  %7779 = vmatpush1.msra.mxu0 0.0
  %7780 = vmatprep.subr.mxu0 0.0
  %7781 = vmatpush1.msra.mxu0 0.0
  %7782 = vmatprep.subr.mxu0 0.0
  %7783 = vmatpush1.msra.mxu0 0.0
  %7784 = vmatprep.subr.mxu0 0.0
  %7785 = vmatpush1.msra.mxu0 0.0
  %7786 = vmatprep.subr.mxu0 0.0
  %7787 = vmatpush1.msra.mxu0 0.0
  %7788 = vmatprep.subr.mxu0 0.0
  %7789 = vmatpush1.msra.mxu0 0.0
  %7790 = vmatprep.subr.mxu0 0.0
  %7791 = vmatpush1.msra.mxu0 0.0
  %7792 = vmatprep.subr.mxu0 0.0
  %7793 = vmatpush1.msra.mxu0 0.0
  %7794 = vmatprep.subr.mxu0 0.0
  %7795 = vmatpush1.msra.mxu0 0.0
  %7796 = vmatprep.subr.mxu0 0.0
  %7797 = vmatpush1.msra.mxu0 0.0
  %7798 = vmatprep.subr.mxu0 0.0
  %7799 = vmatpush1.msra.mxu0 0.0
  %7800 = vmatprep.subr.mxu0 0.0
  %7801 = vmatpush1.msra.mxu0 0.0
  %7802 = vmatprep.subr.mxu0 0.0
  %7803 = vmatpush1.msra.mxu0 0.0
  %7804 = vmatprep.subr.mxu0 0.0
  %7805 = vmatpush1.msra.mxu0 0.0
  %7806 = vmatprep.subr.mxu0 0.0
  %7807 = vmatpush1.msra.mxu0 0.0
  %7808 = vmatprep.subr.mxu0 0.0
  %7809 = vmatpush1.msra.mxu0 0.0
  %7810 = vmatprep.subr.mxu0 0.0
  %7811 = vmatpush1.msra.mxu0 0.0
  %7812 = vmatprep.subr.mxu0 0.0
  %7813 = vmatpush1.msra.mxu0 0.0
  %7814 = vmatprep.subr.mxu0 0.0
  %7815 = vmatpush1.msra.mxu0 0.0
  %7816 = vmatprep.subr.mxu0 0.0
  %7817 = vmatpush1.msra.mxu0 0.0
  %7818 = vmatprep.subr.mxu0 0.0
  %7819 = vmatpush1.msra.mxu0 0.0
  %7820 = vmatprep.subr.mxu0 0.0
  %7821 = vmatpush1.msra.mxu0 0.0
  %7822 = vmatprep.subr.mxu0 0.0
  %7823 = vmatpush1.msra.mxu0 0.0
  %7824 = vmatprep.subr.mxu0 0.0
  %7825 = vmatpush1.msra.mxu0 0.0
  %7826 = vmatprep.subr.mxu0 0.0
  %7827 = vmatpush1.msra.mxu0 0.0
  %7828 = vmatprep.subr.mxu0 0.0
  %7829 = vmatpush1.msra.mxu0 0.0
  %7830 = vmatprep.subr.mxu0 0.0
  %7831 = vmatpush1.msra.mxu0 0.0
  %7832 = vmatprep.subr.mxu0 0.0
  %7833 = vmatpush1.msra.mxu0 0.0
  %7834 = vmatprep.mubr.f32.mxu0 0.0
  %v7835 = vand.u32 %v7586, 4294901760
  %v7836 = vsub.f32 %v7586, %v7835
  %7837 = vmatmul.mubr.f32.gmra.mrb[0].mxu0 %v7836
  %v7838 = vpop.f32.mrb[0].mxu0
  %v7839 = vadd.f32 %v7757, %v7838
  %v7840 = vpop.f32.mrb[0].mxu0
  %7841 = vmatprep.mubr.f32.mxu0 0.0
  %v7842 = vand.u32 %v7588, 4294901760
  %v7843 = vsub.f32 %v7588, %v7842
  %7844 = vmatmul.mubr.f32.gmra.mrb[0].mxu0 %v7843
  %v7845 = vpop.f32.mrb[0].mxu0
  %v7846 = vadd.f32 %v7763, %v7845
  %v7847 = vpop.f32.mrb[0].mxu0
  %7848 = vdwg.mxu0
  %7849 = vmatprep.subr.mxu0 0.0
  %v7850 = vand.u32 %v7582, 4294901760
  %7851 = vmatpush1.msra.mxu0 %v7850
  %7852 = vmatprep.subr.mxu0 0.0
  %v7853 = vand.u32 %v7590, 4294901760
  %7854 = vmatpush1.msra.mxu0 %v7853
  %7855 = vmatprep.subr.mxu0 0.0
  %7856 = vmatpush1.msra.mxu0 0.0
  %7857 = vmatprep.subr.mxu0 0.0
  %7858 = vmatpush1.msra.mxu0 0.0
  %7859 = vmatprep.subr.mxu0 0.0
  %7860 = vmatpush1.msra.mxu0 0.0
  %7861 = vmatprep.subr.mxu0 0.0
  %7862 = vmatpush1.msra.mxu0 0.0
  %7863 = vmatprep.subr.mxu0 0.0
  %7864 = vmatpush1.msra.mxu0 0.0
  %7865 = vmatprep.subr.mxu0 0.0
  %7866 = vmatpush1.msra.mxu0 0.0
  %7867 = vmatprep.subr.mxu0 0.0
  %7868 = vmatpush1.msra.mxu0 0.0
  %7869 = vmatprep.subr.mxu0 0.0
  %7870 = vmatpush1.msra.mxu0 0.0
  %7871 = vmatprep.subr.mxu0 0.0
  %7872 = vmatpush1.msra.mxu0 0.0
  %7873 = vmatprep.subr.mxu0 0.0
  %7874 = vmatpush1.msra.mxu0 0.0
  %7875 = vmatprep.subr.mxu0 0.0
  %7876 = vmatpush1.msra.mxu0 0.0
  %7877 = vmatprep.subr.mxu0 0.0
  %7878 = vmatpush1.msra.mxu0 0.0
  %7879 = vmatprep.subr.mxu0 0.0
  %7880 = vmatpush1.msra.mxu0 0.0
  %7881 = vmatprep.subr.mxu0 0.0
  %7882 = vmatpush1.msra.mxu0 0.0
  %7883 = vmatprep.subr.mxu0 0.0
  %7884 = vmatpush1.msra.mxu0 0.0
  %7885 = vmatprep.subr.mxu0 0.0
  %7886 = vmatpush1.msra.mxu0 0.0
  %7887 = vmatprep.subr.mxu0 0.0
  %7888 = vmatpush1.msra.mxu0 0.0
  %7889 = vmatprep.subr.mxu0 0.0
  %7890 = vmatpush1.msra.mxu0 0.0
  %7891 = vmatprep.subr.mxu0 0.0
  %7892 = vmatpush1.msra.mxu0 0.0
  %7893 = vmatprep.subr.mxu0 0.0
  %7894 = vmatpush1.msra.mxu0 0.0
  %7895 = vmatprep.subr.mxu0 0.0
  %7896 = vmatpush1.msra.mxu0 0.0
  %7897 = vmatprep.subr.mxu0 0.0
  %7898 = vmatpush1.msra.mxu0 0.0
  %7899 = vmatprep.subr.mxu0 0.0
  %7900 = vmatpush1.msra.mxu0 0.0
  %7901 = vmatprep.subr.mxu0 0.0
  %7902 = vmatpush1.msra.mxu0 0.0
  %7903 = vmatprep.subr.mxu0 0.0
  %7904 = vmatpush1.msra.mxu0 0.0
  %7905 = vmatprep.subr.mxu0 0.0
  %7906 = vmatpush1.msra.mxu0 0.0
  %7907 = vmatprep.subr.mxu0 0.0
  %7908 = vmatpush1.msra.mxu0 0.0
  %7909 = vmatprep.subr.mxu0 0.0
  %7910 = vmatpush1.msra.mxu0 0.0
  %7911 = vmatprep.subr.mxu0 0.0
  %7912 = vmatpush1.msra.mxu0 0.0
  %7913 = vmatprep.subr.mxu0 0.0
  %7914 = vmatpush1.msra.mxu0 0.0
  %7915 = vmatprep.mubr.f32.mxu0 0.0
  %v7916 = vand.u32 %v7586, 4294901760
  %v7917 = vsub.f32 %v7586, %v7916
  %v7918 = vand.u32 %v7917, 4294901760
  %7919 = vmatmul.mubr.f32.gmra.mrb[0].mxu0 %v7918
  %v7920 = vpop.f32.mrb[0].mxu0
  %v7921 = vadd.f32 %v7839, %v7920
  %v7922 = vpop.f32.mrb[0].mxu0
  %7923 = vmatprep.mubr.f32.mxu0 0.0
  %v7924 = vand.u32 %v7588, 4294901760
  %v7925 = vsub.f32 %v7588, %v7924
  %v7926 = vand.u32 %v7925, 4294901760
  %7927 = vmatmul.mubr.f32.gmra.mrb[0].mxu0 %v7926
  %v7928 = vpop.f32.mrb[0].mxu0
  %v7929 = vadd.f32 %v7846, %v7928
  %v7930 = vpop.f32.mrb[0].mxu0
  %7931 = vdwg.mxu0
  %7932 = vmatprep.subr.mxu0 0.0
  %v7933 = vand.u32 %v7582, 4294901760
  %v7934 = vsub.f32 %v7582, %v7933
  %v7935 = vand.u32 %v7934, 4294901760
  %7936 = vmatpush1.msra.mxu0 %v7935
  %7937 = vmatprep.subr.mxu0 0.0
  %v7938 = vand.u32 %v7590, 4294901760
  %v7939 = vsub.f32 %v7590, %v7938
  %v7940 = vand.u32 %v7939, 4294901760
  %7941 = vmatpush1.msra.mxu0 %v7940
  %7942 = vmatprep.subr.mxu0 0.0
  %7943 = vmatpush1.msra.mxu0 0.0
  %7944 = vmatprep.subr.mxu0 0.0
  %7945 = vmatpush1.msra.mxu0 0.0
  %7946 = vmatprep.subr.mxu0 0.0
  %7947 = vmatpush1.msra.mxu0 0.0
  %7948 = vmatprep.subr.mxu0 0.0
  %7949 = vmatpush1.msra.mxu0 0.0
  %7950 = vmatprep.subr.mxu0 0.0
  %7951 = vmatpush1.msra.mxu0 0.0
  %7952 = vmatprep.subr.mxu0 0.0
  %7953 = vmatpush1.msra.mxu0 0.0
  %7954 = vmatprep.subr.mxu0 0.0
  %7955 = vmatpush1.msra.mxu0 0.0
  %7956 = vmatprep.subr.mxu0 0.0
  %7957 = vmatpush1.msra.mxu0 0.0
  %7958 = vmatprep.subr.mxu0 0.0
  %7959 = vmatpush1.msra.mxu0 0.0
  %7960 = vmatprep.subr.mxu0 0.0
  %7961 = vmatpush1.msra.mxu0 0.0
  %7962 = vmatprep.subr.mxu0 0.0
  %7963 = vmatpush1.msra.mxu0 0.0
  %7964 = vmatprep.subr.mxu0 0.0
  %7965 = vmatpush1.msra.mxu0 0.0
  %7966 = vmatprep.subr.mxu0 0.0
  %7967 = vmatpush1.msra.mxu0 0.0
  %7968 = vmatprep.subr.mxu0 0.0
  %7969 = vmatpush1.msra.mxu0 0.0
  %7970 = vmatprep.subr.mxu0 0.0
  %7971 = vmatpush1.msra.mxu0 0.0
  %7972 = vmatprep.subr.mxu0 0.0
  %7973 = vmatpush1.msra.mxu0 0.0
  %7974 = vmatprep.subr.mxu0 0.0
  %7975 = vmatpush1.msra.mxu0 0.0
  %7976 = vmatprep.subr.mxu0 0.0
  %7977 = vmatpush1.msra.mxu0 0.0
  %7978 = vmatprep.subr.mxu0 0.0
  %7979 = vmatpush1.msra.mxu0 0.0
  %7980 = vmatprep.subr.mxu0 0.0
  %7981 = vmatpush1.msra.mxu0 0.0
  %7982 = vmatprep.subr.mxu0 0.0
  %7983 = vmatpush1.msra.mxu0 0.0
  %7984 = vmatprep.subr.mxu0 0.0
  %7985 = vmatpush1.msra.mxu0 0.0
  %7986 = vmatprep.subr.mxu0 0.0
  %7987 = vmatpush1.msra.mxu0 0.0
  %7988 = vmatprep.subr.mxu0 0.0
  %7989 = vmatpush1.msra.mxu0 0.0
  %7990 = vmatprep.subr.mxu0 0.0
  %7991 = vmatpush1.msra.mxu0 0.0
  %7992 = vmatprep.subr.mxu0 0.0
  %7993 = vmatpush1.msra.mxu0 0.0
  %7994 = vmatprep.subr.mxu0 0.0
  %7995 = vmatpush1.msra.mxu0 0.0
  %7996 = vmatprep.subr.mxu0 0.0
  %7997 = vmatpush1.msra.mxu0 0.0
  %7998 = vmatprep.subr.mxu0 0.0
  %7999 = vmatpush1.msra.mxu0 0.0
  %8000 = vmatprep.subr.mxu0 0.0
  %8001 = vmatpush1.msra.mxu0 0.0
  %8002 = vmatprep.mubr.f32.mxu0 0.0
  %v8003 = vand.u32 %v7586, 4294901760
  %8004 = vmatmul.mubr.f32.gmra.mrb[0].mxu0 %v8003
  %v8005 = vpop.f32.mrb[0].mxu0
  %v8006 = vadd.f32 %v7921, %v8005
  %v8007 = vpop.f32.mrb[0].mxu0
  %8008 = vmatprep.mubr.f32.mxu0 0.0
  %v8009 = vand.u32 %v7588, 4294901760
  %8010 = vmatmul.mubr.f32.gmra.mrb[0].mxu0 %v8009
  %v8011 = vpop.f32.mrb[0].mxu0
  %v8012 = vadd.f32 %v7929, %v8011
  %v8013 = vpop.f32.mrb[0].mxu0
  %8014 = vdwg.mxu0
  %8015 = vmatprep.subr.mxu0 0.0
  %v8016 = vand.u32 %v7582, 4294901760
  %8017 = vmatpush1.msra.mxu0 %v8016
  %8018 = vmatprep.subr.mxu0 0.0
  %v8019 = vand.u32 %v7590, 4294901760
  %8020 = vmatpush1.msra.mxu0 %v8019
  %8021 = vmatprep.subr.mxu0 0.0
  %8022 = vmatpush1.msra.mxu0 0.0
  %8023 = vmatprep.subr.mxu0 0.0
  %8024 = vmatpush1.msra.mxu0 0.0
  %8025 = vmatprep.subr.mxu0 0.0
  %8026 = vmatpush1.msra.mxu0 0.0
  %8027 = vmatprep.subr.mxu0 0.0
  %8028 = vmatpush1.msra.mxu0 0.0
  %8029 = vmatprep.subr.mxu0 0.0
  %8030 = vmatpush1.msra.mxu0 0.0
  %8031 = vmatprep.subr.mxu0 0.0
  %8032 = vmatpush1.msra.mxu0 0.0
  %8033 = vmatprep.subr.mxu0 0.0
  %8034 = vmatpush1.msra.mxu0 0.0
  %8035 = vmatprep.subr.mxu0 0.0
  %8036 = vmatpush1.msra.mxu0 0.0
  %8037 = vmatprep.subr.mxu0 0.0
  %8038 = vmatpush1.msra.mxu0 0.0
  %8039 = vmatprep.subr.mxu0 0.0
  %8040 = vmatpush1.msra.mxu0 0.0
  %8041 = vmatprep.subr.mxu0 0.0
  %8042 = vmatpush1.msra.mxu0 0.0
  %8043 = vmatprep.subr.mxu0 0.0
  %8044 = vmatpush1.msra.mxu0 0.0
  %8045 = vmatprep.subr.mxu0 0.0
  %8046 = vmatpush1.msra.mxu0 0.0
  %8047 = vmatprep.subr.mxu0 0.0
  %8048 = vmatpush1.msra.mxu0 0.0
  %8049 = vmatprep.subr.mxu0 0.0
  %8050 = vmatpush1.msra.mxu0 0.0
  %8051 = vmatprep.subr.mxu0 0.0
  %8052 = vmatpush1.msra.mxu0 0.0
  %8053 = vmatprep.subr.mxu0 0.0
  %8054 = vmatpush1.msra.mxu0 0.0
  %8055 = vmatprep.subr.mxu0 0.0
  %8056 = vmatpush1.msra.mxu0 0.0
  %8057 = vmatprep.subr.mxu0 0.0
  %8058 = vmatpush1.msra.mxu0 0.0
  %8059 = vmatprep.subr.mxu0 0.0
  %8060 = vmatpush1.msra.mxu0 0.0
  %8061 = vmatprep.subr.mxu0 0.0
  %8062 = vmatpush1.msra.mxu0 0.0
  %8063 = vmatprep.subr.mxu0 0.0
  %8064 = vmatpush1.msra.mxu0 0.0
  %8065 = vmatprep.subr.mxu0 0.0
  %8066 = vmatpush1.msra.mxu0 0.0
  %8067 = vmatprep.subr.mxu0 0.0
  %8068 = vmatpush1.msra.mxu0 0.0
  %8069 = vmatprep.subr.mxu0 0.0
  %8070 = vmatpush1.msra.mxu0 0.0
  %8071 = vmatprep.subr.mxu0 0.0
  %8072 = vmatpush1.msra.mxu0 0.0
  %8073 = vmatprep.subr.mxu0 0.0
  %8074 = vmatpush1.msra.mxu0 0.0
  %8075 = vmatprep.subr.mxu0 0.0
  %8076 = vmatpush1.msra.mxu0 0.0
  %8077 = vmatprep.subr.mxu0 0.0
  %8078 = vmatpush1.msra.mxu0 0.0
  %8079 = vmatprep.subr.mxu0 0.0
  %8080 = vmatpush1.msra.mxu0 0.0
  %8081 = vmatprep.mubr.f32.mxu0 0.0
  %v8082 = vand.u32 %v7586, 4294901760
  %8083 = vmatmul.mubr.f32.gmra.mrb[0].mxu0 %v8082
  %v8084 = vpop.f32.mrb[0].mxu0
  %v8085 = vadd.f32 %v8006, %v8084
  %v8086 = vpop.f32.mrb[0].mxu0
  %8087 = vmatprep.mubr.f32.mxu0 0.0
  %v8088 = vand.u32 %v7588, 4294901760
  %8089 = vmatmul.mubr.f32.gmra.mrb[0].mxu0 %v8088
  %v8090 = vpop.f32.mrb[0].mxu0
  %v8091 = vadd.f32 %v8012, %v8090
  %v8092 = vpop.f32.mrb[0].mxu0
  %8093 = vdwg.mxu0
  %8096 = vrot.lane.b32.xlu0 %v8085, 16
  %v8097 = vpop.permute.xlu0 %8096
  %8098 = vrot.lane.b32.xlu0 %v8091, 16
  %v8099 = vpop.permute.xlu0 %8098
  %v8102 = vsel %vm1508, %v7568, %v8097
  %v8103 = vsel %vm1508, %v7574, %v8099
  %s8104 = scalar_lea.vmem %s8, 32
  %v8105 = vld [vmem:[%s8104] sm:$0xff]
  %v8106 = vld [vmem:[%s8104 + $0x8] sm:$0xff]
  %v8107 = vld [vmem:[%s8104 + $0x10] sm:$0xff]
  %v8108 = vld [vmem:[%s8104 + $0x18] sm:$0xff]
  %v8110 = vsel %vm912, %v8102, 0
  %v8113 = vsel %vm912, %v8103, 0
  %8115 = vmatprep.subr.mxu0 0.0
  %v8116 = vand.u32 %v8105, 4294901760
  %8117 = vmatpush1.msra.mxu0 %v8116
  %8118 = vmatprep.subr.mxu0 0.0
  %v8119 = vand.u32 %v8106, 4294901760
  %8120 = vmatpush1.msra.mxu0 %v8119
  %8121 = vmatprep.subr.mxu0 0.0
  %v8122 = vand.u32 %v8107, 4294901760
  %8123 = vmatpush1.msra.mxu0 %v8122
  %8124 = vmatprep.subr.mxu0 0.0
  %v8125 = vand.u32 %v8108, 4294901760
  %8126 = vmatpush1.msra.mxu0 %v8125
  %8127 = vmatprep.subr.mxu0 0.0
  %8128 = vmatpush1.msra.mxu0 0.0
  %8129 = vmatprep.subr.mxu0 0.0
  %8130 = vmatpush1.msra.mxu0 0.0
  %8131 = vmatprep.subr.mxu0 0.0
  %8132 = vmatpush1.msra.mxu0 0.0
  %8133 = vmatprep.subr.mxu0 0.0
  %8134 = vmatpush1.msra.mxu0 0.0
  %8135 = vmatprep.subr.mxu0 0.0
  %8136 = vmatpush1.msra.mxu0 0.0
  %8137 = vmatprep.subr.mxu0 0.0
  %8138 = vmatpush1.msra.mxu0 0.0
  %8139 = vmatprep.subr.mxu0 0.0
  %8140 = vmatpush1.msra.mxu0 0.0
  %8141 = vmatprep.subr.mxu0 0.0
  %8142 = vmatpush1.msra.mxu0 0.0
  %8143 = vmatprep.subr.mxu0 0.0
  %8144 = vmatpush1.msra.mxu0 0.0
  %8145 = vmatprep.subr.mxu0 0.0
  %8146 = vmatpush1.msra.mxu0 0.0
  %8147 = vmatprep.subr.mxu0 0.0
  %8148 = vmatpush1.msra.mxu0 0.0
  %8149 = vmatprep.subr.mxu0 0.0
  %8150 = vmatpush1.msra.mxu0 0.0
  %8151 = vmatprep.subr.mxu0 0.0
  %8152 = vmatpush1.msra.mxu0 0.0
  %8153 = vmatprep.subr.mxu0 0.0
  %8154 = vmatpush1.msra.mxu0 0.0
  %8155 = vmatprep.subr.mxu0 0.0
  %8156 = vmatpush1.msra.mxu0 0.0
  %8157 = vmatprep.subr.mxu0 0.0
  %8158 = vmatpush1.msra.mxu0 0.0
  %8159 = vmatprep.subr.mxu0 0.0
  %8160 = vmatpush1.msra.mxu0 0.0
  %8161 = vmatprep.subr.mxu0 0.0
  %8162 = vmatpush1.msra.mxu0 0.0
  %8163 = vmatprep.subr.mxu0 0.0
  %8164 = vmatpush1.msra.mxu0 0.0
  %8165 = vmatprep.subr.mxu0 0.0
  %8166 = vmatpush1.msra.mxu0 0.0
  %8167 = vmatprep.subr.mxu0 0.0
  %8168 = vmatpush1.msra.mxu0 0.0
  %8169 = vmatprep.subr.mxu0 0.0
  %8170 = vmatpush1.msra.mxu0 0.0
  %8171 = vmatprep.subr.mxu0 0.0
  %8172 = vmatpush1.msra.mxu0 0.0
  %8173 = vmatprep.subr.mxu0 0.0
  %8174 = vmatpush1.msra.mxu0 0.0
  %8175 = vmatprep.subr.mxu0 0.0
  %8176 = vmatpush1.msra.mxu0 0.0
  %8177 = vmatprep.subr.mxu0 0.0
  %8178 = vmatpush1.msra.mxu0 0.0
  %8179 = vmatprep.subr.mxu0 0.0
  %8180 = vmatpush1.msra.mxu0 0.0
  %8181 = vmatprep.subr.mxu0 0.0
  %8182 = vmatpush1.msra.mxu0 0.0
  %8183 = vmatprep.mubr.f32.mxu0 0.0
  %v8184 = vand.u32 %v8110, 4294901760
  %v8185 = vsub.f32 %v8110, %v8184
  %v8186 = vand.u32 %v8185, 4294901760
  %v8187 = vsub.f32 %v8185, %v8186
  %v8188 = vand.u32 %v8187, 4294901760
  %8189 = vmatmul.mubr.f32.gmra.mrb[0].mxu0 %v8188
  %v8190 = vpop.f32.mrb[0].mxu0
  %v8191 = vadd.f32 0.0, %v8190
  %v8192 = vpop.f32.mrb[0].mxu0
  %8193 = vmatprep.mubr.f32.mxu0 0.0
  %v8194 = vand.u32 %v8113, 4294901760
  %v8195 = vsub.f32 %v8113, %v8194
  %v8196 = vand.u32 %v8195, 4294901760
  %v8197 = vsub.f32 %v8195, %v8196
  %v8198 = vand.u32 %v8197, 4294901760
  %8199 = vmatmul.mubr.f32.gmra.mrb[0].mxu0 %v8198
  %v8200 = vpop.f32.mrb[0].mxu0
  %v8201 = vadd.f32 0.0, %v8200
  %v8202 = vpop.f32.mrb[0].mxu0
  %8203 = vdwg.mxu0
  %8204 = vmatprep.subr.mxu0 0.0
  %v8205 = vand.u32 %v8105, 4294901760
  %v8206 = vsub.f32 %v8105, %v8205
  %v8207 = vand.u32 %v8206, 4294901760
  %v8208 = vsub.f32 %v8206, %v8207
  %v8209 = vand.u32 %v8208, 4294901760
  %8210 = vmatpush1.msra.mxu0 %v8209
  %8211 = vmatprep.subr.mxu0 0.0
  %v8212 = vand.u32 %v8106, 4294901760
  %v8213 = vsub.f32 %v8106, %v8212
  %v8214 = vand.u32 %v8213, 4294901760
  %v8215 = vsub.f32 %v8213, %v8214
  %v8216 = vand.u32 %v8215, 4294901760
  %8217 = vmatpush1.msra.mxu0 %v8216
  %8218 = vmatprep.subr.mxu0 0.0
  %v8219 = vand.u32 %v8107, 4294901760
  %v8220 = vsub.f32 %v8107, %v8219
  %v8221 = vand.u32 %v8220, 4294901760
  %v8222 = vsub.f32 %v8220, %v8221
  %v8223 = vand.u32 %v8222, 4294901760
  %8224 = vmatpush1.msra.mxu0 %v8223
  %8225 = vmatprep.subr.mxu0 0.0
  %v8226 = vand.u32 %v8108, 4294901760
  %v8227 = vsub.f32 %v8108, %v8226
  %v8228 = vand.u32 %v8227, 4294901760
  %v8229 = vsub.f32 %v8227, %v8228
  %v8230 = vand.u32 %v8229, 4294901760
  %8231 = vmatpush1.msra.mxu0 %v8230
  %8232 = vmatprep.subr.mxu0 0.0
  %8233 = vmatpush1.msra.mxu0 0.0
  %8234 = vmatprep.subr.mxu0 0.0
  %8235 = vmatpush1.msra.mxu0 0.0
  %8236 = vmatprep.subr.mxu0 0.0
  %8237 = vmatpush1.msra.mxu0 0.0
  %8238 = vmatprep.subr.mxu0 0.0
  %8239 = vmatpush1.msra.mxu0 0.0
  %8240 = vmatprep.subr.mxu0 0.0
  %8241 = vmatpush1.msra.mxu0 0.0
  %8242 = vmatprep.subr.mxu0 0.0
  %8243 = vmatpush1.msra.mxu0 0.0
  %8244 = vmatprep.subr.mxu0 0.0
  %8245 = vmatpush1.msra.mxu0 0.0
  %8246 = vmatprep.subr.mxu0 0.0
  %8247 = vmatpush1.msra.mxu0 0.0
  %8248 = vmatprep.subr.mxu0 0.0
  %8249 = vmatpush1.msra.mxu0 0.0
  %8250 = vmatprep.subr.mxu0 0.0
  %8251 = vmatpush1.msra.mxu0 0.0
  %8252 = vmatprep.subr.mxu0 0.0
  %8253 = vmatpush1.msra.mxu0 0.0
  %8254 = vmatprep.subr.mxu0 0.0
  %8255 = vmatpush1.msra.mxu0 0.0
  %8256 = vmatprep.subr.mxu0 0.0
  %8257 = vmatpush1.msra.mxu0 0.0
  %8258 = vmatprep.subr.mxu0 0.0
  %8259 = vmatpush1.msra.mxu0 0.0
  %8260 = vmatprep.subr.mxu0 0.0
  %8261 = vmatpush1.msra.mxu0 0.0
  %8262 = vmatprep.subr.mxu0 0.0
  %8263 = vmatpush1.msra.mxu0 0.0
  %8264 = vmatprep.subr.mxu0 0.0
  %8265 = vmatpush1.msra.mxu0 0.0
  %8266 = vmatprep.subr.mxu0 0.0
  %8267 = vmatpush1.msra.mxu0 0.0
  %8268 = vmatprep.subr.mxu0 0.0
  %8269 = vmatpush1.msra.mxu0 0.0
  %8270 = vmatprep.subr.mxu0 0.0
  %8271 = vmatpush1.msra.mxu0 0.0
  %8272 = vmatprep.subr.mxu0 0.0
  %8273 = vmatpush1.msra.mxu0 0.0
  %8274 = vmatprep.subr.mxu0 0.0
  %8275 = vmatpush1.msra.mxu0 0.0
  %8276 = vmatprep.subr.mxu0 0.0
  %8277 = vmatpush1.msra.mxu0 0.0
  %8278 = vmatprep.subr.mxu0 0.0
  %8279 = vmatpush1.msra.mxu0 0.0
  %8280 = vmatprep.subr.mxu0 0.0
  %8281 = vmatpush1.msra.mxu0 0.0
  %8282 = vmatprep.subr.mxu0 0.0
  %8283 = vmatpush1.msra.mxu0 0.0
  %8284 = vmatprep.subr.mxu0 0.0
  %8285 = vmatpush1.msra.mxu0 0.0
  %8286 = vmatprep.subr.mxu0 0.0
  %8287 = vmatpush1.msra.mxu0 0.0
  %8288 = vmatprep.mubr.f32.mxu0 0.0
  %v8289 = vand.u32 %v8110, 4294901760
  %8290 = vmatmul.mubr.f32.gmra.mrb[0].mxu0 %v8289
  %v8291 = vpop.f32.mrb[0].mxu0
  %v8292 = vadd.f32 %v8191, %v8291
  %v8293 = vpop.f32.mrb[0].mxu0
  %8294 = vmatprep.mubr.f32.mxu0 0.0
  %v8295 = vand.u32 %v8113, 4294901760
  %8296 = vmatmul.mubr.f32.gmra.mrb[0].mxu0 %v8295
  %v8297 = vpop.f32.mrb[0].mxu0
  %v8298 = vadd.f32 %v8201, %v8297
  %v8299 = vpop.f32.mrb[0].mxu0
  %8300 = vdwg.mxu0
  %8301 = vmatprep.subr.mxu0 0.0
  %v8302 = vand.u32 %v8105, 4294901760
  %v8303 = vsub.f32 %v8105, %v8302
  %8304 = vmatpush1.msra.mxu0 %v8303
  %8305 = vmatprep.subr.mxu0 0.0
  %v8306 = vand.u32 %v8106, 4294901760
  %v8307 = vsub.f32 %v8106, %v8306
  %8308 = vmatpush1.msra.mxu0 %v8307
  %8309 = vmatprep.subr.mxu0 0.0
  %v8310 = vand.u32 %v8107, 4294901760
  %v8311 = vsub.f32 %v8107, %v8310
  %8312 = vmatpush1.msra.mxu0 %v8311
  %8313 = vmatprep.subr.mxu0 0.0
  %v8314 = vand.u32 %v8108, 4294901760
  %v8315 = vsub.f32 %v8108, %v8314
  %8316 = vmatpush1.msra.mxu0 %v8315
  %8317 = vmatprep.subr.mxu0 0.0
  %8318 = vmatpush1.msra.mxu0 0.0
  %8319 = vmatprep.subr.mxu0 0.0
  %8320 = vmatpush1.msra.mxu0 0.0
  %8321 = vmatprep.subr.mxu0 0.0
  %8322 = vmatpush1.msra.mxu0 0.0
  %8323 = vmatprep.subr.mxu0 0.0
  %8324 = vmatpush1.msra.mxu0 0.0
  %8325 = vmatprep.subr.mxu0 0.0
  %8326 = vmatpush1.msra.mxu0 0.0
  %8327 = vmatprep.subr.mxu0 0.0
  %8328 = vmatpush1.msra.mxu0 0.0
  %8329 = vmatprep.subr.mxu0 0.0
  %8330 = vmatpush1.msra.mxu0 0.0
  %8331 = vmatprep.subr.mxu0 0.0
  %8332 = vmatpush1.msra.mxu0 0.0
  %8333 = vmatprep.subr.mxu0 0.0
  %8334 = vmatpush1.msra.mxu0 0.0
  %8335 = vmatprep.subr.mxu0 0.0
  %8336 = vmatpush1.msra.mxu0 0.0
  %8337 = vmatprep.subr.mxu0 0.0
  %8338 = vmatpush1.msra.mxu0 0.0
  %8339 = vmatprep.subr.mxu0 0.0
  %8340 = vmatpush1.msra.mxu0 0.0
  %8341 = vmatprep.subr.mxu0 0.0
  %8342 = vmatpush1.msra.mxu0 0.0
  %8343 = vmatprep.subr.mxu0 0.0
  %8344 = vmatpush1.msra.mxu0 0.0
  %8345 = vmatprep.subr.mxu0 0.0
  %8346 = vmatpush1.msra.mxu0 0.0
  %8347 = vmatprep.subr.mxu0 0.0
  %8348 = vmatpush1.msra.mxu0 0.0
  %8349 = vmatprep.subr.mxu0 0.0
  %8350 = vmatpush1.msra.mxu0 0.0
  %8351 = vmatprep.subr.mxu0 0.0
  %8352 = vmatpush1.msra.mxu0 0.0
  %8353 = vmatprep.subr.mxu0 0.0
  %8354 = vmatpush1.msra.mxu0 0.0
  %8355 = vmatprep.subr.mxu0 0.0
  %8356 = vmatpush1.msra.mxu0 0.0
  %8357 = vmatprep.subr.mxu0 0.0
  %8358 = vmatpush1.msra.mxu0 0.0
  %8359 = vmatprep.subr.mxu0 0.0
  %8360 = vmatpush1.msra.mxu0 0.0
  %8361 = vmatprep.subr.mxu0 0.0
  %8362 = vmatpush1.msra.mxu0 0.0
  %8363 = vmatprep.subr.mxu0 0.0
  %8364 = vmatpush1.msra.mxu0 0.0
  %8365 = vmatprep.subr.mxu0 0.0
  %8366 = vmatpush1.msra.mxu0 0.0
  %8367 = vmatprep.subr.mxu0 0.0
  %8368 = vmatpush1.msra.mxu0 0.0
  %8369 = vmatprep.subr.mxu0 0.0
  %8370 = vmatpush1.msra.mxu0 0.0
  %8371 = vmatprep.subr.mxu0 0.0
  %8372 = vmatpush1.msra.mxu0 0.0
  %8373 = vmatprep.mubr.f32.mxu0 0.0
  %v8374 = vand.u32 %v8110, 4294901760
  %v8375 = vsub.f32 %v8110, %v8374
  %8376 = vmatmul.mubr.f32.gmra.mrb[0].mxu0 %v8375
  %v8377 = vpop.f32.mrb[0].mxu0
  %v8378 = vadd.f32 %v8292, %v8377
  %v8379 = vpop.f32.mrb[0].mxu0
  %8380 = vmatprep.mubr.f32.mxu0 0.0
  %v8381 = vand.u32 %v8113, 4294901760
  %v8382 = vsub.f32 %v8113, %v8381
  %8383 = vmatmul.mubr.f32.gmra.mrb[0].mxu0 %v8382
  %v8384 = vpop.f32.mrb[0].mxu0
  %v8385 = vadd.f32 %v8298, %v8384
  %v8386 = vpop.f32.mrb[0].mxu0
  %8387 = vdwg.mxu0
  %8388 = vmatprep.subr.mxu0 0.0
  %v8389 = vand.u32 %v8105, 4294901760
  %8390 = vmatpush1.msra.mxu0 %v8389
  %8391 = vmatprep.subr.mxu0 0.0
  %v8392 = vand.u32 %v8106, 4294901760
  %8393 = vmatpush1.msra.mxu0 %v8392
  %8394 = vmatprep.subr.mxu0 0.0
  %v8395 = vand.u32 %v8107, 4294901760
  %8396 = vmatpush1.msra.mxu0 %v8395
  %8397 = vmatprep.subr.mxu0 0.0
  %v8398 = vand.u32 %v8108, 4294901760
  %8399 = vmatpush1.msra.mxu0 %v8398
  %8400 = vmatprep.subr.mxu0 0.0
  %8401 = vmatpush1.msra.mxu0 0.0
  %8402 = vmatprep.subr.mxu0 0.0
  %8403 = vmatpush1.msra.mxu0 0.0
  %8404 = vmatprep.subr.mxu0 0.0
  %8405 = vmatpush1.msra.mxu0 0.0
  %8406 = vmatprep.subr.mxu0 0.0
  %8407 = vmatpush1.msra.mxu0 0.0
  %8408 = vmatprep.subr.mxu0 0.0
  %8409 = vmatpush1.msra.mxu0 0.0
  %8410 = vmatprep.subr.mxu0 0.0
  %8411 = vmatpush1.msra.mxu0 0.0
  %8412 = vmatprep.subr.mxu0 0.0
  %8413 = vmatpush1.msra.mxu0 0.0
  %8414 = vmatprep.subr.mxu0 0.0
  %8415 = vmatpush1.msra.mxu0 0.0
  %8416 = vmatprep.subr.mxu0 0.0
  %8417 = vmatpush1.msra.mxu0 0.0
  %8418 = vmatprep.subr.mxu0 0.0
  %8419 = vmatpush1.msra.mxu0 0.0
  %8420 = vmatprep.subr.mxu0 0.0
  %8421 = vmatpush1.msra.mxu0 0.0
  %8422 = vmatprep.subr.mxu0 0.0
  %8423 = vmatpush1.msra.mxu0 0.0
  %8424 = vmatprep.subr.mxu0 0.0
  %8425 = vmatpush1.msra.mxu0 0.0
  %8426 = vmatprep.subr.mxu0 0.0
  %8427 = vmatpush1.msra.mxu0 0.0
  %8428 = vmatprep.subr.mxu0 0.0
  %8429 = vmatpush1.msra.mxu0 0.0
  %8430 = vmatprep.subr.mxu0 0.0
  %8431 = vmatpush1.msra.mxu0 0.0
  %8432 = vmatprep.subr.mxu0 0.0
  %8433 = vmatpush1.msra.mxu0 0.0
  %8434 = vmatprep.subr.mxu0 0.0
  %8435 = vmatpush1.msra.mxu0 0.0
  %8436 = vmatprep.subr.mxu0 0.0
  %8437 = vmatpush1.msra.mxu0 0.0
  %8438 = vmatprep.subr.mxu0 0.0
  %8439 = vmatpush1.msra.mxu0 0.0
  %8440 = vmatprep.subr.mxu0 0.0
  %8441 = vmatpush1.msra.mxu0 0.0
  %8442 = vmatprep.subr.mxu0 0.0
  %8443 = vmatpush1.msra.mxu0 0.0
  %8444 = vmatprep.subr.mxu0 0.0
  %8445 = vmatpush1.msra.mxu0 0.0
  %8446 = vmatprep.subr.mxu0 0.0
  %8447 = vmatpush1.msra.mxu0 0.0
  %8448 = vmatprep.subr.mxu0 0.0
  %8449 = vmatpush1.msra.mxu0 0.0
  %8450 = vmatprep.subr.mxu0 0.0
  %8451 = vmatpush1.msra.mxu0 0.0
  %8452 = vmatprep.subr.mxu0 0.0
  %8453 = vmatpush1.msra.mxu0 0.0
  %8454 = vmatprep.subr.mxu0 0.0
  %8455 = vmatpush1.msra.mxu0 0.0
  %8456 = vmatprep.mubr.f32.mxu0 0.0
  %v8457 = vand.u32 %v8110, 4294901760
  %v8458 = vsub.f32 %v8110, %v8457
  %v8459 = vand.u32 %v8458, 4294901760
  %8460 = vmatmul.mubr.f32.gmra.mrb[0].mxu0 %v8459
  %v8461 = vpop.f32.mrb[0].mxu0
  %v8462 = vadd.f32 %v8378, %v8461
  %v8463 = vpop.f32.mrb[0].mxu0
  %8464 = vmatprep.mubr.f32.mxu0 0.0
  %v8465 = vand.u32 %v8113, 4294901760
  %v8466 = vsub.f32 %v8113, %v8465
  %v8467 = vand.u32 %v8466, 4294901760
  %8468 = vmatmul.mubr.f32.gmra.mrb[0].mxu0 %v8467
  %v8469 = vpop.f32.mrb[0].mxu0
  %v8470 = vadd.f32 %v8385, %v8469
  %v8471 = vpop.f32.mrb[0].mxu0
  %8472 = vdwg.mxu0
  %8473 = vmatprep.subr.mxu0 0.0
  %v8474 = vand.u32 %v8105, 4294901760
  %v8475 = vsub.f32 %v8105, %v8474
  %v8476 = vand.u32 %v8475, 4294901760
  %8477 = vmatpush1.msra.mxu0 %v8476
  %8478 = vmatprep.subr.mxu0 0.0
  %v8479 = vand.u32 %v8106, 4294901760
  %v8480 = vsub.f32 %v8106, %v8479
  %v8481 = vand.u32 %v8480, 4294901760
  %8482 = vmatpush1.msra.mxu0 %v8481
  %8483 = vmatprep.subr.mxu0 0.0
  %v8484 = vand.u32 %v8107, 4294901760
  %v8485 = vsub.f32 %v8107, %v8484
  %v8486 = vand.u32 %v8485, 4294901760
  %8487 = vmatpush1.msra.mxu0 %v8486
  %8488 = vmatprep.subr.mxu0 0.0
  %v8489 = vand.u32 %v8108, 4294901760
  %v8490 = vsub.f32 %v8108, %v8489
  %v8491 = vand.u32 %v8490, 4294901760
  %8492 = vmatpush1.msra.mxu0 %v8491
  %8493 = vmatprep.subr.mxu0 0.0
  %8494 = vmatpush1.msra.mxu0 0.0
  %8495 = vmatprep.subr.mxu0 0.0
  %8496 = vmatpush1.msra.mxu0 0.0
  %8497 = vmatprep.subr.mxu0 0.0
  %8498 = vmatpush1.msra.mxu0 0.0
  %8499 = vmatprep.subr.mxu0 0.0
  %8500 = vmatpush1.msra.mxu0 0.0
  %8501 = vmatprep.subr.mxu0 0.0
  %8502 = vmatpush1.msra.mxu0 0.0
  %8503 = vmatprep.subr.mxu0 0.0
  %8504 = vmatpush1.msra.mxu0 0.0
  %8505 = vmatprep.subr.mxu0 0.0
  %8506 = vmatpush1.msra.mxu0 0.0
  %8507 = vmatprep.subr.mxu0 0.0
  %8508 = vmatpush1.msra.mxu0 0.0
  %8509 = vmatprep.subr.mxu0 0.0
  %8510 = vmatpush1.msra.mxu0 0.0
  %8511 = vmatprep.subr.mxu0 0.0
  %8512 = vmatpush1.msra.mxu0 0.0
  %8513 = vmatprep.subr.mxu0 0.0
  %8514 = vmatpush1.msra.mxu0 0.0
  %8515 = vmatprep.subr.mxu0 0.0
  %8516 = vmatpush1.msra.mxu0 0.0
  %8517 = vmatprep.subr.mxu0 0.0
  %8518 = vmatpush1.msra.mxu0 0.0
  %8519 = vmatprep.subr.mxu0 0.0
  %8520 = vmatpush1.msra.mxu0 0.0
  %8521 = vmatprep.subr.mxu0 0.0
  %8522 = vmatpush1.msra.mxu0 0.0
  %8523 = vmatprep.subr.mxu0 0.0
  %8524 = vmatpush1.msra.mxu0 0.0
  %8525 = vmatprep.subr.mxu0 0.0
  %8526 = vmatpush1.msra.mxu0 0.0
  %8527 = vmatprep.subr.mxu0 0.0
  %8528 = vmatpush1.msra.mxu0 0.0
  %8529 = vmatprep.subr.mxu0 0.0
  %8530 = vmatpush1.msra.mxu0 0.0
  %8531 = vmatprep.subr.mxu0 0.0
  %8532 = vmatpush1.msra.mxu0 0.0
  %8533 = vmatprep.subr.mxu0 0.0
  %8534 = vmatpush1.msra.mxu0 0.0
  %8535 = vmatprep.subr.mxu0 0.0
  %8536 = vmatpush1.msra.mxu0 0.0
  %8537 = vmatprep.subr.mxu0 0.0
  %8538 = vmatpush1.msra.mxu0 0.0
  %8539 = vmatprep.subr.mxu0 0.0
  %8540 = vmatpush1.msra.mxu0 0.0
  %8541 = vmatprep.subr.mxu0 0.0
  %8542 = vmatpush1.msra.mxu0 0.0
  %8543 = vmatprep.subr.mxu0 0.0
  %8544 = vmatpush1.msra.mxu0 0.0
  %8545 = vmatprep.subr.mxu0 0.0
  %8546 = vmatpush1.msra.mxu0 0.0
  %8547 = vmatprep.subr.mxu0 0.0
  %8548 = vmatpush1.msra.mxu0 0.0
  %8549 = vmatprep.mubr.f32.mxu0 0.0
  %v8550 = vand.u32 %v8110, 4294901760
  %8551 = vmatmul.mubr.f32.gmra.mrb[0].mxu0 %v8550
  %v8552 = vpop.f32.mrb[0].mxu0
  %v8553 = vadd.f32 %v8462, %v8552
  %v8554 = vpop.f32.mrb[0].mxu0
  %8555 = vmatprep.mubr.f32.mxu0 0.0
  %v8556 = vand.u32 %v8113, 4294901760
  %8557 = vmatmul.mubr.f32.gmra.mrb[0].mxu0 %v8556
  %v8558 = vpop.f32.mrb[0].mxu0
  %v8559 = vadd.f32 %v8470, %v8558
  %v8560 = vpop.f32.mrb[0].mxu0
  %8561 = vdwg.mxu0
  %8562 = vmatprep.subr.mxu0 0.0
  %v8563 = vand.u32 %v8105, 4294901760
  %8564 = vmatpush1.msra.mxu0 %v8563
  %8565 = vmatprep.subr.mxu0 0.0
  %v8566 = vand.u32 %v8106, 4294901760
  %8567 = vmatpush1.msra.mxu0 %v8566
  %8568 = vmatprep.subr.mxu0 0.0
  %v8569 = vand.u32 %v8107, 4294901760
  %8570 = vmatpush1.msra.mxu0 %v8569
  %8571 = vmatprep.subr.mxu0 0.0
  %v8572 = vand.u32 %v8108, 4294901760
  %8573 = vmatpush1.msra.mxu0 %v8572
  %8574 = vmatprep.subr.mxu0 0.0
  %8575 = vmatpush1.msra.mxu0 0.0
  %8576 = vmatprep.subr.mxu0 0.0
  %8577 = vmatpush1.msra.mxu0 0.0
  %8578 = vmatprep.subr.mxu0 0.0
  %8579 = vmatpush1.msra.mxu0 0.0
  %8580 = vmatprep.subr.mxu0 0.0
  %8581 = vmatpush1.msra.mxu0 0.0
  %8582 = vmatprep.subr.mxu0 0.0
  %8583 = vmatpush1.msra.mxu0 0.0
  %8584 = vmatprep.subr.mxu0 0.0
  %8585 = vmatpush1.msra.mxu0 0.0
  %8586 = vmatprep.subr.mxu0 0.0
  %8587 = vmatpush1.msra.mxu0 0.0
  %8588 = vmatprep.subr.mxu0 0.0
  %8589 = vmatpush1.msra.mxu0 0.0
  %8590 = vmatprep.subr.mxu0 0.0
  %8591 = vmatpush1.msra.mxu0 0.0
  %8592 = vmatprep.subr.mxu0 0.0
  %8593 = vmatpush1.msra.mxu0 0.0
  %8594 = vmatprep.subr.mxu0 0.0
  %8595 = vmatpush1.msra.mxu0 0.0
  %8596 = vmatprep.subr.mxu0 0.0
  %8597 = vmatpush1.msra.mxu0 0.0
  %8598 = vmatprep.subr.mxu0 0.0
  %8599 = vmatpush1.msra.mxu0 0.0
  %8600 = vmatprep.subr.mxu0 0.0
  %8601 = vmatpush1.msra.mxu0 0.0
  %8602 = vmatprep.subr.mxu0 0.0
  %8603 = vmatpush1.msra.mxu0 0.0
  %8604 = vmatprep.subr.mxu0 0.0
  %8605 = vmatpush1.msra.mxu0 0.0
  %8606 = vmatprep.subr.mxu0 0.0
  %8607 = vmatpush1.msra.mxu0 0.0
  %8608 = vmatprep.subr.mxu0 0.0
  %8609 = vmatpush1.msra.mxu0 0.0
  %8610 = vmatprep.subr.mxu0 0.0
  %8611 = vmatpush1.msra.mxu0 0.0
  %8612 = vmatprep.subr.mxu0 0.0
  %8613 = vmatpush1.msra.mxu0 0.0
  %8614 = vmatprep.subr.mxu0 0.0
  %8615 = vmatpush1.msra.mxu0 0.0
  %8616 = vmatprep.subr.mxu0 0.0
  %8617 = vmatpush1.msra.mxu0 0.0
  %8618 = vmatprep.subr.mxu0 0.0
  %8619 = vmatpush1.msra.mxu0 0.0
  %8620 = vmatprep.subr.mxu0 0.0
  %8621 = vmatpush1.msra.mxu0 0.0
  %8622 = vmatprep.subr.mxu0 0.0
  %8623 = vmatpush1.msra.mxu0 0.0
  %8624 = vmatprep.subr.mxu0 0.0
  %8625 = vmatpush1.msra.mxu0 0.0
  %8626 = vmatprep.subr.mxu0 0.0
  %8627 = vmatpush1.msra.mxu0 0.0
  %8628 = vmatprep.subr.mxu0 0.0
  %8629 = vmatpush1.msra.mxu0 0.0
  %8630 = vmatprep.mubr.f32.mxu0 0.0
  %v8631 = vand.u32 %v8110, 4294901760
  %8632 = vmatmul.mubr.f32.gmra.mrb[0].mxu0 %v8631
  %v8633 = vpop.f32.mrb[0].mxu0
  %v8634 = vadd.f32 %v8553, %v8633
  %v8635 = vpop.f32.mrb[0].mxu0
  %8636 = vmatprep.mubr.f32.mxu0 0.0
  %v8637 = vand.u32 %v8113, 4294901760
  %8638 = vmatmul.mubr.f32.gmra.mrb[0].mxu0 %v8637
  %v8639 = vpop.f32.mrb[0].mxu0
  %v8640 = vadd.f32 %v8559, %v8639
  %v8641 = vpop.f32.mrb[0].mxu0
  %8642 = vdwg.mxu0
  %v8643 = vadd.f32 %v5389, %v8634
  %v8644 = vadd.f32 %v5390, %v8640
  %s8645 = scalar_lea.vmem %s9, 1
  %v8646 = vld [vmem:[%s8645] sm:$0x1]
  %v8648 = vlaneseq
  %v8649 = vshrl.u32 %v8648, 7
  %v8650 = vsub.s32 0, %v8649
  %v8651 = vrot.slane %v8646, %v8650
  %v8653 = vadd.f32 %v8643, %v8651
  %v8654 = vadd.f32 %v8644, %v8651
  %s8655 = scalar_lea.vmem %s10, 1
  %v8656 = vld [vmem:[%s8655] sm:$0x1]
  %s8657 = scalar_lea.vmem %s11, 1
  %v8658 = vld [vmem:[%s8657] sm:$0x1]
  %v8659 = vsel %vm912, %v8653, 0.0
  %8660 = vadd.xlane.f32.xlu0 %v8659
  %v8661 = vpop.xlane.xlu0 %8660
  %v8662 = vsel %vm916, %v8654, 0.0
  %8663 = vadd.xlane.f32.xlu0 %v8662
  %v8664 = vpop.xlane.xlu0 %8663
  %v8665 = vmul.f32 %v8661, %v920
  %v8666 = vmul.f32 %v8664, %v920
  %v8667 = vsub.f32 %v8653, %v8665
  %v8668 = vsub.f32 %v8654, %v8666
  %v8669 = vmul.f32 %v8667, %v8667
  %v8670 = vmul.f32 %v8668, %v8668
  %v8671 = vsel %vm912, %v8669, 0.0
  %8672 = vadd.xlane.f32.xlu0 %v8671
  %v8673 = vpop.xlane.xlu0 %8672
  %v8674 = vsel %vm916, %v8670, 0.0
  %8675 = vadd.xlane.f32.xlu0 %v8674
  %v8676 = vpop.xlane.xlu0 %8675
  %v8677 = vmul.f32 %v8673, %v920
  %v8678 = vmul.f32 %v8676, %v920
  %v8679 = vadd.f32 %v8677, 1e-12
  %v8680 = vadd.f32 %v8678, 1e-12
  %v8681 = vrsqrt.pop %v8679
  %v8682 = vrsqrt.pop %v8680
  %v8683 = vmul.f32 %v8667, %v8681
  %v8684 = vmul.f32 %v8668, %v8682
  %v8686 = vlaneseq
  %v8687 = vshrl.u32 %v8686, 7
  %v8688 = vsub.s32 0, %v8687
  %v8689 = vrot.slane %v8656, %v8688
  %v8691 = vmul.f32 %v8683, %v8689
  %v8692 = vmul.f32 %v8684, %v8689
  %v8694 = vlaneseq
  %v8695 = vshrl.u32 %v8694, 7
  %v8696 = vsub.s32 0, %v8695
  %v8697 = vrot.slane %v8658, %v8696
  %v8699 = vadd.f32 %v8691, %v8697
  %v8700 = vadd.f32 %v8692, %v8697
  %s8701 = scalar_lea.vmem %s12, 32
  %v8702 = vld [vmem:[%s8701] sm:$0xff]
  %v8703 = vld [vmem:[%s8701 + $0x8] sm:$0xff]
  %v8704 = vld [vmem:[%s8701 + $0x10] sm:$0xff]
  %v8705 = vld [vmem:[%s8701 + $0x18] sm:$0xff]
  %s8706 = scalar_lea.vmem %s13, 1
  %v8707 = vld [vmem:[%s8706] sm:$0x1]
  %v8709 = vlaneseq
  %v8710 = vshrl.u32 %v8709, 7
  %v8711 = vsub.s32 0, %v8710
  %v8712 = vrot.slane %v8707, %v8711
  %v8715 = vsel %vm912, %v8699, 0
  %v8718 = vsel %vm912, %v8700, 0
  %8720 = vmatprep.subr.mxu0 0.0
  %v8721 = vand.u32 %v8702, 4294901760
  %8722 = vmatpush1.msra.mxu0 %v8721
  %8723 = vmatprep.subr.mxu0 0.0
  %v8724 = vand.u32 %v8703, 4294901760
  %8725 = vmatpush1.msra.mxu0 %v8724
  %8726 = vmatprep.subr.mxu0 0.0
  %v8727 = vand.u32 %v8704, 4294901760
  %8728 = vmatpush1.msra.mxu0 %v8727
  %8729 = vmatprep.subr.mxu0 0.0
  %v8730 = vand.u32 %v8705, 4294901760
  %8731 = vmatpush1.msra.mxu0 %v8730
  %8732 = vmatprep.subr.mxu0 0.0
  %8733 = vmatpush1.msra.mxu0 0.0
  %8734 = vmatprep.subr.mxu0 0.0
  %8735 = vmatpush1.msra.mxu0 0.0
  %8736 = vmatprep.subr.mxu0 0.0
  %8737 = vmatpush1.msra.mxu0 0.0
  %8738 = vmatprep.subr.mxu0 0.0
  %8739 = vmatpush1.msra.mxu0 0.0
  %8740 = vmatprep.subr.mxu0 0.0
  %8741 = vmatpush1.msra.mxu0 0.0
  %8742 = vmatprep.subr.mxu0 0.0
  %8743 = vmatpush1.msra.mxu0 0.0
  %8744 = vmatprep.subr.mxu0 0.0
  %8745 = vmatpush1.msra.mxu0 0.0
  %8746 = vmatprep.subr.mxu0 0.0
  %8747 = vmatpush1.msra.mxu0 0.0
  %8748 = vmatprep.subr.mxu0 0.0
  %8749 = vmatpush1.msra.mxu0 0.0
  %8750 = vmatprep.subr.mxu0 0.0
  %8751 = vmatpush1.msra.mxu0 0.0
  %8752 = vmatprep.subr.mxu0 0.0
  %8753 = vmatpush1.msra.mxu0 0.0
  %8754 = vmatprep.subr.mxu0 0.0
  %8755 = vmatpush1.msra.mxu0 0.0
  %8756 = vmatprep.subr.mxu0 0.0
  %8757 = vmatpush1.msra.mxu0 0.0
  %8758 = vmatprep.subr.mxu0 0.0
  %8759 = vmatpush1.msra.mxu0 0.0
  %8760 = vmatprep.subr.mxu0 0.0
  %8761 = vmatpush1.msra.mxu0 0.0
  %8762 = vmatprep.subr.mxu0 0.0
  %8763 = vmatpush1.msra.mxu0 0.0
  %8764 = vmatprep.subr.mxu0 0.0
  %8765 = vmatpush1.msra.mxu0 0.0
  %8766 = vmatprep.subr.mxu0 0.0
  %8767 = vmatpush1.msra.mxu0 0.0
  %8768 = vmatprep.subr.mxu0 0.0
  %8769 = vmatpush1.msra.mxu0 0.0
  %8770 = vmatprep.subr.mxu0 0.0
  %8771 = vmatpush1.msra.mxu0 0.0
  %8772 = vmatprep.subr.mxu0 0.0
  %8773 = vmatpush1.msra.mxu0 0.0
  %8774 = vmatprep.subr.mxu0 0.0
  %8775 = vmatpush1.msra.mxu0 0.0
  %8776 = vmatprep.subr.mxu0 0.0
  %8777 = vmatpush1.msra.mxu0 0.0
  %8778 = vmatprep.subr.mxu0 0.0
  %8779 = vmatpush1.msra.mxu0 0.0
  %8780 = vmatprep.subr.mxu0 0.0
  %8781 = vmatpush1.msra.mxu0 0.0
  %8782 = vmatprep.subr.mxu0 0.0
  %8783 = vmatpush1.msra.mxu0 0.0
  %8784 = vmatprep.subr.mxu0 0.0
  %8785 = vmatpush1.msra.mxu0 0.0
  %8786 = vmatprep.subr.mxu0 0.0
  %8787 = vmatpush1.msra.mxu0 0.0
  %8788 = vmatprep.mubr.f32.mxu0 0.0
  %v8789 = vand.u32 %v8715, 4294901760
  %v8790 = vsub.f32 %v8715, %v8789
  %v8791 = vand.u32 %v8790, 4294901760
  %v8792 = vsub.f32 %v8790, %v8791
  %v8793 = vand.u32 %v8792, 4294901760
  %8794 = vmatmul.mubr.f32.gmra.mrb[0].mxu0 %v8793
  %v8795 = vpop.f32.mrb[0].mxu0
  %v8796 = vadd.f32 %v8712, %v8795
  %v8797 = vpop.f32.mrb[0].mxu0
  %8798 = vmatprep.mubr.f32.mxu0 0.0
  %v8799 = vand.u32 %v8718, 4294901760
  %v8800 = vsub.f32 %v8718, %v8799
  %v8801 = vand.u32 %v8800, 4294901760
  %v8802 = vsub.f32 %v8800, %v8801
  %v8803 = vand.u32 %v8802, 4294901760
  %8804 = vmatmul.mubr.f32.gmra.mrb[0].mxu0 %v8803
  %v8805 = vpop.f32.mrb[0].mxu0
  %v8806 = vadd.f32 %v8712, %v8805
  %v8807 = vpop.f32.mrb[0].mxu0
  %8808 = vdwg.mxu0
  %8809 = vmatprep.subr.mxu0 0.0
  %v8810 = vand.u32 %v8702, 4294901760
  %v8811 = vsub.f32 %v8702, %v8810
  %v8812 = vand.u32 %v8811, 4294901760
  %v8813 = vsub.f32 %v8811, %v8812
  %v8814 = vand.u32 %v8813, 4294901760
  %8815 = vmatpush1.msra.mxu0 %v8814
  %8816 = vmatprep.subr.mxu0 0.0
  %v8817 = vand.u32 %v8703, 4294901760
  %v8818 = vsub.f32 %v8703, %v8817
  %v8819 = vand.u32 %v8818, 4294901760
  %v8820 = vsub.f32 %v8818, %v8819
  %v8821 = vand.u32 %v8820, 4294901760
  %8822 = vmatpush1.msra.mxu0 %v8821
  %8823 = vmatprep.subr.mxu0 0.0
  %v8824 = vand.u32 %v8704, 4294901760
  %v8825 = vsub.f32 %v8704, %v8824
  %v8826 = vand.u32 %v8825, 4294901760
  %v8827 = vsub.f32 %v8825, %v8826
  %v8828 = vand.u32 %v8827, 4294901760
  %8829 = vmatpush1.msra.mxu0 %v8828
  %8830 = vmatprep.subr.mxu0 0.0
  %v8831 = vand.u32 %v8705, 4294901760
  %v8832 = vsub.f32 %v8705, %v8831
  %v8833 = vand.u32 %v8832, 4294901760
  %v8834 = vsub.f32 %v8832, %v8833
  %v8835 = vand.u32 %v8834, 4294901760
  %8836 = vmatpush1.msra.mxu0 %v8835
  %8837 = vmatprep.subr.mxu0 0.0
  %8838 = vmatpush1.msra.mxu0 0.0
  %8839 = vmatprep.subr.mxu0 0.0
  %8840 = vmatpush1.msra.mxu0 0.0
  %8841 = vmatprep.subr.mxu0 0.0
  %8842 = vmatpush1.msra.mxu0 0.0
  %8843 = vmatprep.subr.mxu0 0.0
  %8844 = vmatpush1.msra.mxu0 0.0
  %8845 = vmatprep.subr.mxu0 0.0
  %8846 = vmatpush1.msra.mxu0 0.0
  %8847 = vmatprep.subr.mxu0 0.0
  %8848 = vmatpush1.msra.mxu0 0.0
  %8849 = vmatprep.subr.mxu0 0.0
  %8850 = vmatpush1.msra.mxu0 0.0
  %8851 = vmatprep.subr.mxu0 0.0
  %8852 = vmatpush1.msra.mxu0 0.0
  %8853 = vmatprep.subr.mxu0 0.0
  %8854 = vmatpush1.msra.mxu0 0.0
  %8855 = vmatprep.subr.mxu0 0.0
  %8856 = vmatpush1.msra.mxu0 0.0
  %8857 = vmatprep.subr.mxu0 0.0
  %8858 = vmatpush1.msra.mxu0 0.0
  %8859 = vmatprep.subr.mxu0 0.0
  %8860 = vmatpush1.msra.mxu0 0.0
  %8861 = vmatprep.subr.mxu0 0.0
  %8862 = vmatpush1.msra.mxu0 0.0
  %8863 = vmatprep.subr.mxu0 0.0
  %8864 = vmatpush1.msra.mxu0 0.0
  %8865 = vmatprep.subr.mxu0 0.0
  %8866 = vmatpush1.msra.mxu0 0.0
  %8867 = vmatprep.subr.mxu0 0.0
  %8868 = vmatpush1.msra.mxu0 0.0
  %8869 = vmatprep.subr.mxu0 0.0
  %8870 = vmatpush1.msra.mxu0 0.0
  %8871 = vmatprep.subr.mxu0 0.0
  %8872 = vmatpush1.msra.mxu0 0.0
  %8873 = vmatprep.subr.mxu0 0.0
  %8874 = vmatpush1.msra.mxu0 0.0
  %8875 = vmatprep.subr.mxu0 0.0
  %8876 = vmatpush1.msra.mxu0 0.0
  %8877 = vmatprep.subr.mxu0 0.0
  %8878 = vmatpush1.msra.mxu0 0.0
  %8879 = vmatprep.subr.mxu0 0.0
  %8880 = vmatpush1.msra.mxu0 0.0
  %8881 = vmatprep.subr.mxu0 0.0
  %8882 = vmatpush1.msra.mxu0 0.0
  %8883 = vmatprep.subr.mxu0 0.0
  %8884 = vmatpush1.msra.mxu0 0.0
  %8885 = vmatprep.subr.mxu0 0.0
  %8886 = vmatpush1.msra.mxu0 0.0
  %8887 = vmatprep.subr.mxu0 0.0
  %8888 = vmatpush1.msra.mxu0 0.0
  %8889 = vmatprep.subr.mxu0 0.0
  %8890 = vmatpush1.msra.mxu0 0.0
  %8891 = vmatprep.subr.mxu0 0.0
  %8892 = vmatpush1.msra.mxu0 0.0
  %8893 = vmatprep.mubr.f32.mxu0 0.0
  %v8894 = vand.u32 %v8715, 4294901760
  %8895 = vmatmul.mubr.f32.gmra.mrb[0].mxu0 %v8894
  %v8896 = vpop.f32.mrb[0].mxu0
  %v8897 = vadd.f32 %v8796, %v8896
  %v8898 = vpop.f32.mrb[0].mxu0
  %8899 = vmatprep.mubr.f32.mxu0 0.0
  %v8900 = vand.u32 %v8718, 4294901760
  %8901 = vmatmul.mubr.f32.gmra.mrb[0].mxu0 %v8900
  %v8902 = vpop.f32.mrb[0].mxu0
  %v8903 = vadd.f32 %v8806, %v8902
  %v8904 = vpop.f32.mrb[0].mxu0
  %8905 = vdwg.mxu0
  %8906 = vmatprep.subr.mxu0 0.0
  %v8907 = vand.u32 %v8702, 4294901760
  %v8908 = vsub.f32 %v8702, %v8907
  %8909 = vmatpush1.msra.mxu0 %v8908
  %8910 = vmatprep.subr.mxu0 0.0
  %v8911 = vand.u32 %v8703, 4294901760
  %v8912 = vsub.f32 %v8703, %v8911
  %8913 = vmatpush1.msra.mxu0 %v8912
  %8914 = vmatprep.subr.mxu0 0.0
  %v8915 = vand.u32 %v8704, 4294901760
  %v8916 = vsub.f32 %v8704, %v8915
  %8917 = vmatpush1.msra.mxu0 %v8916
  %8918 = vmatprep.subr.mxu0 0.0
  %v8919 = vand.u32 %v8705, 4294901760
  %v8920 = vsub.f32 %v8705, %v8919
  %8921 = vmatpush1.msra.mxu0 %v8920
  %8922 = vmatprep.subr.mxu0 0.0
  %8923 = vmatpush1.msra.mxu0 0.0
  %8924 = vmatprep.subr.mxu0 0.0
  %8925 = vmatpush1.msra.mxu0 0.0
  %8926 = vmatprep.subr.mxu0 0.0
  %8927 = vmatpush1.msra.mxu0 0.0
  %8928 = vmatprep.subr.mxu0 0.0
  %8929 = vmatpush1.msra.mxu0 0.0
  %8930 = vmatprep.subr.mxu0 0.0
  %8931 = vmatpush1.msra.mxu0 0.0
  %8932 = vmatprep.subr.mxu0 0.0
  %8933 = vmatpush1.msra.mxu0 0.0
  %8934 = vmatprep.subr.mxu0 0.0
  %8935 = vmatpush1.msra.mxu0 0.0
  %8936 = vmatprep.subr.mxu0 0.0
  %8937 = vmatpush1.msra.mxu0 0.0
  %8938 = vmatprep.subr.mxu0 0.0
  %8939 = vmatpush1.msra.mxu0 0.0
  %8940 = vmatprep.subr.mxu0 0.0
  %8941 = vmatpush1.msra.mxu0 0.0
  %8942 = vmatprep.subr.mxu0 0.0
  %8943 = vmatpush1.msra.mxu0 0.0
  %8944 = vmatprep.subr.mxu0 0.0
  %8945 = vmatpush1.msra.mxu0 0.0
  %8946 = vmatprep.subr.mxu0 0.0
  %8947 = vmatpush1.msra.mxu0 0.0
  %8948 = vmatprep.subr.mxu0 0.0
  %8949 = vmatpush1.msra.mxu0 0.0
  %8950 = vmatprep.subr.mxu0 0.0
  %8951 = vmatpush1.msra.mxu0 0.0
  %8952 = vmatprep.subr.mxu0 0.0
  %8953 = vmatpush1.msra.mxu0 0.0
  %8954 = vmatprep.subr.mxu0 0.0
  %8955 = vmatpush1.msra.mxu0 0.0
  %8956 = vmatprep.subr.mxu0 0.0
  %8957 = vmatpush1.msra.mxu0 0.0
  %8958 = vmatprep.subr.mxu0 0.0
  %8959 = vmatpush1.msra.mxu0 0.0
  %8960 = vmatprep.subr.mxu0 0.0
  %8961 = vmatpush1.msra.mxu0 0.0
  %8962 = vmatprep.subr.mxu0 0.0
  %8963 = vmatpush1.msra.mxu0 0.0
  %8964 = vmatprep.subr.mxu0 0.0
  %8965 = vmatpush1.msra.mxu0 0.0
  %8966 = vmatprep.subr.mxu0 0.0
  %8967 = vmatpush1.msra.mxu0 0.0
  %8968 = vmatprep.subr.mxu0 0.0
  %8969 = vmatpush1.msra.mxu0 0.0
  %8970 = vmatprep.subr.mxu0 0.0
  %8971 = vmatpush1.msra.mxu0 0.0
  %8972 = vmatprep.subr.mxu0 0.0
  %8973 = vmatpush1.msra.mxu0 0.0
  %8974 = vmatprep.subr.mxu0 0.0
  %8975 = vmatpush1.msra.mxu0 0.0
  %8976 = vmatprep.subr.mxu0 0.0
  %8977 = vmatpush1.msra.mxu0 0.0
  %8978 = vmatprep.mubr.f32.mxu0 0.0
  %v8979 = vand.u32 %v8715, 4294901760
  %v8980 = vsub.f32 %v8715, %v8979
  %8981 = vmatmul.mubr.f32.gmra.mrb[0].mxu0 %v8980
  %v8982 = vpop.f32.mrb[0].mxu0
  %v8983 = vadd.f32 %v8897, %v8982
  %v8984 = vpop.f32.mrb[0].mxu0
  %8985 = vmatprep.mubr.f32.mxu0 0.0
  %v8986 = vand.u32 %v8718, 4294901760
  %v8987 = vsub.f32 %v8718, %v8986
  %8988 = vmatmul.mubr.f32.gmra.mrb[0].mxu0 %v8987
  %v8989 = vpop.f32.mrb[0].mxu0
  %v8990 = vadd.f32 %v8903, %v8989
  %v8991 = vpop.f32.mrb[0].mxu0
  %8992 = vdwg.mxu0
  %8993 = vmatprep.subr.mxu0 0.0
  %v8994 = vand.u32 %v8702, 4294901760
  %8995 = vmatpush1.msra.mxu0 %v8994
  %8996 = vmatprep.subr.mxu0 0.0
  %v8997 = vand.u32 %v8703, 4294901760
  %8998 = vmatpush1.msra.mxu0 %v8997
  %8999 = vmatprep.subr.mxu0 0.0
  %v9000 = vand.u32 %v8704, 4294901760
  %9001 = vmatpush1.msra.mxu0 %v9000
  %9002 = vmatprep.subr.mxu0 0.0
  %v9003 = vand.u32 %v8705, 4294901760
  %9004 = vmatpush1.msra.mxu0 %v9003
  %9005 = vmatprep.subr.mxu0 0.0
  %9006 = vmatpush1.msra.mxu0 0.0
  %9007 = vmatprep.subr.mxu0 0.0
  %9008 = vmatpush1.msra.mxu0 0.0
  %9009 = vmatprep.subr.mxu0 0.0
  %9010 = vmatpush1.msra.mxu0 0.0
  %9011 = vmatprep.subr.mxu0 0.0
  %9012 = vmatpush1.msra.mxu0 0.0
  %9013 = vmatprep.subr.mxu0 0.0
  %9014 = vmatpush1.msra.mxu0 0.0
  %9015 = vmatprep.subr.mxu0 0.0
  %9016 = vmatpush1.msra.mxu0 0.0
  %9017 = vmatprep.subr.mxu0 0.0
  %9018 = vmatpush1.msra.mxu0 0.0
  %9019 = vmatprep.subr.mxu0 0.0
  %9020 = vmatpush1.msra.mxu0 0.0
  %9021 = vmatprep.subr.mxu0 0.0
  %9022 = vmatpush1.msra.mxu0 0.0
  %9023 = vmatprep.subr.mxu0 0.0
  %9024 = vmatpush1.msra.mxu0 0.0
  %9025 = vmatprep.subr.mxu0 0.0
  %9026 = vmatpush1.msra.mxu0 0.0
  %9027 = vmatprep.subr.mxu0 0.0
  %9028 = vmatpush1.msra.mxu0 0.0
  %9029 = vmatprep.subr.mxu0 0.0
  %9030 = vmatpush1.msra.mxu0 0.0
  %9031 = vmatprep.subr.mxu0 0.0
  %9032 = vmatpush1.msra.mxu0 0.0
  %9033 = vmatprep.subr.mxu0 0.0
  %9034 = vmatpush1.msra.mxu0 0.0
  %9035 = vmatprep.subr.mxu0 0.0
  %9036 = vmatpush1.msra.mxu0 0.0
  %9037 = vmatprep.subr.mxu0 0.0
  %9038 = vmatpush1.msra.mxu0 0.0
  %9039 = vmatprep.subr.mxu0 0.0
  %9040 = vmatpush1.msra.mxu0 0.0
  %9041 = vmatprep.subr.mxu0 0.0
  %9042 = vmatpush1.msra.mxu0 0.0
  %9043 = vmatprep.subr.mxu0 0.0
  %9044 = vmatpush1.msra.mxu0 0.0
  %9045 = vmatprep.subr.mxu0 0.0
  %9046 = vmatpush1.msra.mxu0 0.0
  %9047 = vmatprep.subr.mxu0 0.0
  %9048 = vmatpush1.msra.mxu0 0.0
  %9049 = vmatprep.subr.mxu0 0.0
  %9050 = vmatpush1.msra.mxu0 0.0
  %9051 = vmatprep.subr.mxu0 0.0
  %9052 = vmatpush1.msra.mxu0 0.0
  %9053 = vmatprep.subr.mxu0 0.0
  %9054 = vmatpush1.msra.mxu0 0.0
  %9055 = vmatprep.subr.mxu0 0.0
  %9056 = vmatpush1.msra.mxu0 0.0
  %9057 = vmatprep.subr.mxu0 0.0
  %9058 = vmatpush1.msra.mxu0 0.0
  %9059 = vmatprep.subr.mxu0 0.0
  %9060 = vmatpush1.msra.mxu0 0.0
  %9061 = vmatprep.mubr.f32.mxu0 0.0
  %v9062 = vand.u32 %v8715, 4294901760
  %v9063 = vsub.f32 %v8715, %v9062
  %v9064 = vand.u32 %v9063, 4294901760
  %9065 = vmatmul.mubr.f32.gmra.mrb[0].mxu0 %v9064
  %v9066 = vpop.f32.mrb[0].mxu0
  %v9067 = vadd.f32 %v8983, %v9066
  %v9068 = vpop.f32.mrb[0].mxu0
  %9069 = vmatprep.mubr.f32.mxu0 0.0
  %v9070 = vand.u32 %v8718, 4294901760
  %v9071 = vsub.f32 %v8718, %v9070
  %v9072 = vand.u32 %v9071, 4294901760
  %9073 = vmatmul.mubr.f32.gmra.mrb[0].mxu0 %v9072
  %v9074 = vpop.f32.mrb[0].mxu0
  %v9075 = vadd.f32 %v8990, %v9074
  %v9076 = vpop.f32.mrb[0].mxu0
  %9077 = vdwg.mxu0
  %9078 = vmatprep.subr.mxu0 0.0
  %v9079 = vand.u32 %v8702, 4294901760
  %v9080 = vsub.f32 %v8702, %v9079
  %v9081 = vand.u32 %v9080, 4294901760
  %9082 = vmatpush1.msra.mxu0 %v9081
  %9083 = vmatprep.subr.mxu0 0.0
  %v9084 = vand.u32 %v8703, 4294901760
  %v9085 = vsub.f32 %v8703, %v9084
  %v9086 = vand.u32 %v9085, 4294901760
  %9087 = vmatpush1.msra.mxu0 %v9086
  %9088 = vmatprep.subr.mxu0 0.0
  %v9089 = vand.u32 %v8704, 4294901760
  %v9090 = vsub.f32 %v8704, %v9089
  %v9091 = vand.u32 %v9090, 4294901760
  %9092 = vmatpush1.msra.mxu0 %v9091
  %9093 = vmatprep.subr.mxu0 0.0
  %v9094 = vand.u32 %v8705, 4294901760
  %v9095 = vsub.f32 %v8705, %v9094
  %v9096 = vand.u32 %v9095, 4294901760
  %9097 = vmatpush1.msra.mxu0 %v9096
  %9098 = vmatprep.subr.mxu0 0.0
  %9099 = vmatpush1.msra.mxu0 0.0
  %9100 = vmatprep.subr.mxu0 0.0
  %9101 = vmatpush1.msra.mxu0 0.0
  %9102 = vmatprep.subr.mxu0 0.0
  %9103 = vmatpush1.msra.mxu0 0.0
  %9104 = vmatprep.subr.mxu0 0.0
  %9105 = vmatpush1.msra.mxu0 0.0
  %9106 = vmatprep.subr.mxu0 0.0
  %9107 = vmatpush1.msra.mxu0 0.0
  %9108 = vmatprep.subr.mxu0 0.0
  %9109 = vmatpush1.msra.mxu0 0.0
  %9110 = vmatprep.subr.mxu0 0.0
  %9111 = vmatpush1.msra.mxu0 0.0
  %9112 = vmatprep.subr.mxu0 0.0
  %9113 = vmatpush1.msra.mxu0 0.0
  %9114 = vmatprep.subr.mxu0 0.0
  %9115 = vmatpush1.msra.mxu0 0.0
  %9116 = vmatprep.subr.mxu0 0.0
  %9117 = vmatpush1.msra.mxu0 0.0
  %9118 = vmatprep.subr.mxu0 0.0
  %9119 = vmatpush1.msra.mxu0 0.0
  %9120 = vmatprep.subr.mxu0 0.0
  %9121 = vmatpush1.msra.mxu0 0.0
  %9122 = vmatprep.subr.mxu0 0.0
  %9123 = vmatpush1.msra.mxu0 0.0
  %9124 = vmatprep.subr.mxu0 0.0
  %9125 = vmatpush1.msra.mxu0 0.0
  %9126 = vmatprep.subr.mxu0 0.0
  %9127 = vmatpush1.msra.mxu0 0.0
  %9128 = vmatprep.subr.mxu0 0.0
  %9129 = vmatpush1.msra.mxu0 0.0
  %9130 = vmatprep.subr.mxu0 0.0
  %9131 = vmatpush1.msra.mxu0 0.0
  %9132 = vmatprep.subr.mxu0 0.0
  %9133 = vmatpush1.msra.mxu0 0.0
  %9134 = vmatprep.subr.mxu0 0.0
  %9135 = vmatpush1.msra.mxu0 0.0
  %9136 = vmatprep.subr.mxu0 0.0
  %9137 = vmatpush1.msra.mxu0 0.0
  %9138 = vmatprep.subr.mxu0 0.0
  %9139 = vmatpush1.msra.mxu0 0.0
  %9140 = vmatprep.subr.mxu0 0.0
  %9141 = vmatpush1.msra.mxu0 0.0
  %9142 = vmatprep.subr.mxu0 0.0
  %9143 = vmatpush1.msra.mxu0 0.0
  %9144 = vmatprep.subr.mxu0 0.0
  %9145 = vmatpush1.msra.mxu0 0.0
  %9146 = vmatprep.subr.mxu0 0.0
  %9147 = vmatpush1.msra.mxu0 0.0
  %9148 = vmatprep.subr.mxu0 0.0
  %9149 = vmatpush1.msra.mxu0 0.0
  %9150 = vmatprep.subr.mxu0 0.0
  %9151 = vmatpush1.msra.mxu0 0.0
  %9152 = vmatprep.subr.mxu0 0.0
  %9153 = vmatpush1.msra.mxu0 0.0
  %9154 = vmatprep.mubr.f32.mxu0 0.0
  %v9155 = vand.u32 %v8715, 4294901760
  %9156 = vmatmul.mubr.f32.gmra.mrb[0].mxu0 %v9155
  %v9157 = vpop.f32.mrb[0].mxu0
  %v9158 = vadd.f32 %v9067, %v9157
  %v9159 = vpop.f32.mrb[0].mxu0
  %9160 = vmatprep.mubr.f32.mxu0 0.0
  %v9161 = vand.u32 %v8718, 4294901760
  %9162 = vmatmul.mubr.f32.gmra.mrb[0].mxu0 %v9161
  %v9163 = vpop.f32.mrb[0].mxu0
  %v9164 = vadd.f32 %v9075, %v9163
  %v9165 = vpop.f32.mrb[0].mxu0
  %9166 = vdwg.mxu0
  %9167 = vmatprep.subr.mxu0 0.0
  %v9168 = vand.u32 %v8702, 4294901760
  %9169 = vmatpush1.msra.mxu0 %v9168
  %9170 = vmatprep.subr.mxu0 0.0
  %v9171 = vand.u32 %v8703, 4294901760
  %9172 = vmatpush1.msra.mxu0 %v9171
  %9173 = vmatprep.subr.mxu0 0.0
  %v9174 = vand.u32 %v8704, 4294901760
  %9175 = vmatpush1.msra.mxu0 %v9174
  %9176 = vmatprep.subr.mxu0 0.0
  %v9177 = vand.u32 %v8705, 4294901760
  %9178 = vmatpush1.msra.mxu0 %v9177
  %9179 = vmatprep.subr.mxu0 0.0
  %9180 = vmatpush1.msra.mxu0 0.0
  %9181 = vmatprep.subr.mxu0 0.0
  %9182 = vmatpush1.msra.mxu0 0.0
  %9183 = vmatprep.subr.mxu0 0.0
  %9184 = vmatpush1.msra.mxu0 0.0
  %9185 = vmatprep.subr.mxu0 0.0
  %9186 = vmatpush1.msra.mxu0 0.0
  %9187 = vmatprep.subr.mxu0 0.0
  %9188 = vmatpush1.msra.mxu0 0.0
  %9189 = vmatprep.subr.mxu0 0.0
  %9190 = vmatpush1.msra.mxu0 0.0
  %9191 = vmatprep.subr.mxu0 0.0
  %9192 = vmatpush1.msra.mxu0 0.0
  %9193 = vmatprep.subr.mxu0 0.0
  %9194 = vmatpush1.msra.mxu0 0.0
  %9195 = vmatprep.subr.mxu0 0.0
  %9196 = vmatpush1.msra.mxu0 0.0
  %9197 = vmatprep.subr.mxu0 0.0
  %9198 = vmatpush1.msra.mxu0 0.0
  %9199 = vmatprep.subr.mxu0 0.0
  %9200 = vmatpush1.msra.mxu0 0.0
  %9201 = vmatprep.subr.mxu0 0.0
  %9202 = vmatpush1.msra.mxu0 0.0
  %9203 = vmatprep.subr.mxu0 0.0
  %9204 = vmatpush1.msra.mxu0 0.0
  %9205 = vmatprep.subr.mxu0 0.0
  %9206 = vmatpush1.msra.mxu0 0.0
  %9207 = vmatprep.subr.mxu0 0.0
  %9208 = vmatpush1.msra.mxu0 0.0
  %9209 = vmatprep.subr.mxu0 0.0
  %9210 = vmatpush1.msra.mxu0 0.0
  %9211 = vmatprep.subr.mxu0 0.0
  %9212 = vmatpush1.msra.mxu0 0.0
  %9213 = vmatprep.subr.mxu0 0.0
  %9214 = vmatpush1.msra.mxu0 0.0
  %9215 = vmatprep.subr.mxu0 0.0
  %9216 = vmatpush1.msra.mxu0 0.0
  %9217 = vmatprep.subr.mxu0 0.0
  %9218 = vmatpush1.msra.mxu0 0.0
  %9219 = vmatprep.subr.mxu0 0.0
  %9220 = vmatpush1.msra.mxu0 0.0
  %9221 = vmatprep.subr.mxu0 0.0
  %9222 = vmatpush1.msra.mxu0 0.0
  %9223 = vmatprep.subr.mxu0 0.0
  %9224 = vmatpush1.msra.mxu0 0.0
  %9225 = vmatprep.subr.mxu0 0.0
  %9226 = vmatpush1.msra.mxu0 0.0
  %9227 = vmatprep.subr.mxu0 0.0
  %9228 = vmatpush1.msra.mxu0 0.0
  %9229 = vmatprep.subr.mxu0 0.0
  %9230 = vmatpush1.msra.mxu0 0.0
  %9231 = vmatprep.subr.mxu0 0.0
  %9232 = vmatpush1.msra.mxu0 0.0
  %9233 = vmatprep.subr.mxu0 0.0
  %9234 = vmatpush1.msra.mxu0 0.0
  %9235 = vmatprep.mubr.f32.mxu0 0.0
  %v9236 = vand.u32 %v8715, 4294901760
  %9237 = vmatmul.mubr.f32.gmra.mrb[0].mxu0 %v9236
  %v9238 = vpop.f32.mrb[0].mxu0
  %v9239 = vadd.f32 %v9158, %v9238
  %v9240 = vpop.f32.mrb[0].mxu0
  %9241 = vmatprep.mubr.f32.mxu0 0.0
  %v9242 = vand.u32 %v8718, 4294901760
  %9243 = vmatmul.mubr.f32.gmra.mrb[0].mxu0 %v9242
  %v9244 = vpop.f32.mrb[0].mxu0
  %v9245 = vadd.f32 %v9164, %v9244
  %v9246 = vpop.f32.mrb[0].mxu0
  %9247 = vdwg.mxu0
  %v9248 = vmul.f32 %v9239, 0.5
  %v9249 = vmul.f32 %v9245, 0.5
  %v9250 = vmul.f32 %v9239, 0.044715
  %v9251 = vmul.f32 %v9245, 0.044715
  %v9252 = vmul.f32 %v9250, %v9239
  %v9253 = vmul.f32 %v9251, %v9245
  %v9254 = vmul.f32 %v9252, %v9239
  %v9255 = vmul.f32 %v9253, %v9245
  %v9256 = vadd.f32 %v9239, %v9254
  %v9257 = vadd.f32 %v9245, %v9255
  %v9258 = vmul.f32 %v9256, 0.7978846
  %v9259 = vmul.f32 %v9257, 0.7978846
  %v9260 = vtanh.pop %v9258
  %v9261 = vtanh.pop %v9259
  %v9262 = vadd.f32 %v9260, 1.0
  %v9263 = vadd.f32 %v9261, 1.0
  %v9264 = vmul.f32 %v9248, %v9262
  %v9265 = vmul.f32 %v9249, %v9263
  %s9266 = scalar_lea.vmem %s14, 64
  %v9267 = vld [vmem:[%s9266] sm:$0xff]
  %v9268 = vld [vmem:[%s9266 + $0x8] sm:$0xff]
  %v9269 = vld [vmem:[%s9266 + $0x10] sm:$0xff]
  %v9270 = vld [vmem:[%s9266 + $0x18] sm:$0xff]
  %v9271 = vld [vmem:[%s9266 + $0x20] sm:$0xff]
  %v9272 = vld [vmem:[%s9266 + $0x28] sm:$0xff]
  %v9273 = vld [vmem:[%s9266 + $0x30] sm:$0xff]
  %v9274 = vld [vmem:[%s9266 + $0x38] sm:$0xff]
  %v9276 = vsel %vm89, %v9264, 0
  %v9279 = vsel %vm89, %v9265, 0
  %9281 = vmatprep.subr.mxu0 0.0
  %v9282 = vand.u32 %v9267, 4294901760
  %9283 = vmatpush1.msra.mxu0 %v9282
  %9284 = vmatprep.subr.mxu0 0.0
  %v9285 = vand.u32 %v9268, 4294901760
  %9286 = vmatpush1.msra.mxu0 %v9285
  %9287 = vmatprep.subr.mxu0 0.0
  %v9288 = vand.u32 %v9269, 4294901760
  %9289 = vmatpush1.msra.mxu0 %v9288
  %9290 = vmatprep.subr.mxu0 0.0
  %v9291 = vand.u32 %v9270, 4294901760
  %9292 = vmatpush1.msra.mxu0 %v9291
  %9293 = vmatprep.subr.mxu0 0.0
  %v9294 = vand.u32 %v9271, 4294901760
  %9295 = vmatpush1.msra.mxu0 %v9294
  %9296 = vmatprep.subr.mxu0 0.0
  %v9297 = vand.u32 %v9272, 4294901760
  %9298 = vmatpush1.msra.mxu0 %v9297
  %9299 = vmatprep.subr.mxu0 0.0
  %v9300 = vand.u32 %v9273, 4294901760
  %9301 = vmatpush1.msra.mxu0 %v9300
  %9302 = vmatprep.subr.mxu0 0.0
  %v9303 = vand.u32 %v9274, 4294901760
  %9304 = vmatpush1.msra.mxu0 %v9303
  %9305 = vmatprep.subr.mxu0 0.0
  %9306 = vmatpush1.msra.mxu0 0.0
  %9307 = vmatprep.subr.mxu0 0.0
  %9308 = vmatpush1.msra.mxu0 0.0
  %9309 = vmatprep.subr.mxu0 0.0
  %9310 = vmatpush1.msra.mxu0 0.0
  %9311 = vmatprep.subr.mxu0 0.0
  %9312 = vmatpush1.msra.mxu0 0.0
  %9313 = vmatprep.subr.mxu0 0.0
  %9314 = vmatpush1.msra.mxu0 0.0
  %9315 = vmatprep.subr.mxu0 0.0
  %9316 = vmatpush1.msra.mxu0 0.0
  %9317 = vmatprep.subr.mxu0 0.0
  %9318 = vmatpush1.msra.mxu0 0.0
  %9319 = vmatprep.subr.mxu0 0.0
  %9320 = vmatpush1.msra.mxu0 0.0
  %9321 = vmatprep.subr.mxu0 0.0
  %9322 = vmatpush1.msra.mxu0 0.0
  %9323 = vmatprep.subr.mxu0 0.0
  %9324 = vmatpush1.msra.mxu0 0.0
  %9325 = vmatprep.subr.mxu0 0.0
  %9326 = vmatpush1.msra.mxu0 0.0
  %9327 = vmatprep.subr.mxu0 0.0
  %9328 = vmatpush1.msra.mxu0 0.0
  %9329 = vmatprep.subr.mxu0 0.0
  %9330 = vmatpush1.msra.mxu0 0.0
  %9331 = vmatprep.subr.mxu0 0.0
  %9332 = vmatpush1.msra.mxu0 0.0
  %9333 = vmatprep.subr.mxu0 0.0
  %9334 = vmatpush1.msra.mxu0 0.0
  %9335 = vmatprep.subr.mxu0 0.0
  %9336 = vmatpush1.msra.mxu0 0.0
  %9337 = vmatprep.subr.mxu0 0.0
  %9338 = vmatpush1.msra.mxu0 0.0
  %9339 = vmatprep.subr.mxu0 0.0
  %9340 = vmatpush1.msra.mxu0 0.0
  %9341 = vmatprep.subr.mxu0 0.0
  %9342 = vmatpush1.msra.mxu0 0.0
  %9343 = vmatprep.subr.mxu0 0.0
  %9344 = vmatpush1.msra.mxu0 0.0
  %9345 = vmatprep.subr.mxu0 0.0
  %9346 = vmatpush1.msra.mxu0 0.0
  %9347 = vmatprep.subr.mxu0 0.0
  %9348 = vmatpush1.msra.mxu0 0.0
  %9349 = vmatprep.subr.mxu0 0.0
  %9350 = vmatpush1.msra.mxu0 0.0
  %9351 = vmatprep.subr.mxu0 0.0
  %9352 = vmatpush1.msra.mxu0 0.0
  %9353 = vmatprep.mubr.f32.mxu0 0.0
  %v9354 = vand.u32 %v9276, 4294901760
  %v9355 = vsub.f32 %v9276, %v9354
  %v9356 = vand.u32 %v9355, 4294901760
  %v9357 = vsub.f32 %v9355, %v9356
  %v9358 = vand.u32 %v9357, 4294901760
  %9359 = vmatmul.mubr.f32.gmra.mrb[0].mxu0 %v9358
  %v9360 = vpop.f32.mrb[0].mxu0
  %v9361 = vadd.f32 0.0, %v9360
  %v9362 = vpop.f32.mrb[0].mxu0
  %9363 = vmatprep.mubr.f32.mxu0 0.0
  %v9364 = vand.u32 %v9279, 4294901760
  %v9365 = vsub.f32 %v9279, %v9364
  %v9366 = vand.u32 %v9365, 4294901760
  %v9367 = vsub.f32 %v9365, %v9366
  %v9368 = vand.u32 %v9367, 4294901760
  %9369 = vmatmul.mubr.f32.gmra.mrb[0].mxu0 %v9368
  %v9370 = vpop.f32.mrb[0].mxu0
  %v9371 = vadd.f32 0.0, %v9370
  %v9372 = vpop.f32.mrb[0].mxu0
  %9373 = vdwg.mxu0
  %9374 = vmatprep.subr.mxu0 0.0
  %v9375 = vand.u32 %v9267, 4294901760
  %v9376 = vsub.f32 %v9267, %v9375
  %v9377 = vand.u32 %v9376, 4294901760
  %v9378 = vsub.f32 %v9376, %v9377
  %v9379 = vand.u32 %v9378, 4294901760
  %9380 = vmatpush1.msra.mxu0 %v9379
  %9381 = vmatprep.subr.mxu0 0.0
  %v9382 = vand.u32 %v9268, 4294901760
  %v9383 = vsub.f32 %v9268, %v9382
  %v9384 = vand.u32 %v9383, 4294901760
  %v9385 = vsub.f32 %v9383, %v9384
  %v9386 = vand.u32 %v9385, 4294901760
  %9387 = vmatpush1.msra.mxu0 %v9386
  %9388 = vmatprep.subr.mxu0 0.0
  %v9389 = vand.u32 %v9269, 4294901760
  %v9390 = vsub.f32 %v9269, %v9389
  %v9391 = vand.u32 %v9390, 4294901760
  %v9392 = vsub.f32 %v9390, %v9391
  %v9393 = vand.u32 %v9392, 4294901760
  %9394 = vmatpush1.msra.mxu0 %v9393
  %9395 = vmatprep.subr.mxu0 0.0
  %v9396 = vand.u32 %v9270, 4294901760
  %v9397 = vsub.f32 %v9270, %v9396
  %v9398 = vand.u32 %v9397, 4294901760
  %v9399 = vsub.f32 %v9397, %v9398
  %v9400 = vand.u32 %v9399, 4294901760
  %9401 = vmatpush1.msra.mxu0 %v9400
  %9402 = vmatprep.subr.mxu0 0.0
  %v9403 = vand.u32 %v9271, 4294901760
  %v9404 = vsub.f32 %v9271, %v9403
  %v9405 = vand.u32 %v9404, 4294901760
  %v9406 = vsub.f32 %v9404, %v9405
  %v9407 = vand.u32 %v9406, 4294901760
  %9408 = vmatpush1.msra.mxu0 %v9407
  %9409 = vmatprep.subr.mxu0 0.0
  %v9410 = vand.u32 %v9272, 4294901760
  %v9411 = vsub.f32 %v9272, %v9410
  %v9412 = vand.u32 %v9411, 4294901760
  %v9413 = vsub.f32 %v9411, %v9412
  %v9414 = vand.u32 %v9413, 4294901760
  %9415 = vmatpush1.msra.mxu0 %v9414
  %9416 = vmatprep.subr.mxu0 0.0
  %v9417 = vand.u32 %v9273, 4294901760
  %v9418 = vsub.f32 %v9273, %v9417
  %v9419 = vand.u32 %v9418, 4294901760
  %v9420 = vsub.f32 %v9418, %v9419
  %v9421 = vand.u32 %v9420, 4294901760
  %9422 = vmatpush1.msra.mxu0 %v9421
  %9423 = vmatprep.subr.mxu0 0.0
  %v9424 = vand.u32 %v9274, 4294901760
  %v9425 = vsub.f32 %v9274, %v9424
  %v9426 = vand.u32 %v9425, 4294901760
  %v9427 = vsub.f32 %v9425, %v9426
  %v9428 = vand.u32 %v9427, 4294901760
  %9429 = vmatpush1.msra.mxu0 %v9428
  %9430 = vmatprep.subr.mxu0 0.0
  %9431 = vmatpush1.msra.mxu0 0.0
  %9432 = vmatprep.subr.mxu0 0.0
  %9433 = vmatpush1.msra.mxu0 0.0
  %9434 = vmatprep.subr.mxu0 0.0
  %9435 = vmatpush1.msra.mxu0 0.0
  %9436 = vmatprep.subr.mxu0 0.0
  %9437 = vmatpush1.msra.mxu0 0.0
  %9438 = vmatprep.subr.mxu0 0.0
  %9439 = vmatpush1.msra.mxu0 0.0
  %9440 = vmatprep.subr.mxu0 0.0
  %9441 = vmatpush1.msra.mxu0 0.0
  %9442 = vmatprep.subr.mxu0 0.0
  %9443 = vmatpush1.msra.mxu0 0.0
  %9444 = vmatprep.subr.mxu0 0.0
  %9445 = vmatpush1.msra.mxu0 0.0
  %9446 = vmatprep.subr.mxu0 0.0
  %9447 = vmatpush1.msra.mxu0 0.0
  %9448 = vmatprep.subr.mxu0 0.0
  %9449 = vmatpush1.msra.mxu0 0.0
  %9450 = vmatprep.subr.mxu0 0.0
  %9451 = vmatpush1.msra.mxu0 0.0
  %9452 = vmatprep.subr.mxu0 0.0
  %9453 = vmatpush1.msra.mxu0 0.0
  %9454 = vmatprep.subr.mxu0 0.0
  %9455 = vmatpush1.msra.mxu0 0.0
  %9456 = vmatprep.subr.mxu0 0.0
  %9457 = vmatpush1.msra.mxu0 0.0
  %9458 = vmatprep.subr.mxu0 0.0
  %9459 = vmatpush1.msra.mxu0 0.0
  %9460 = vmatprep.subr.mxu0 0.0
  %9461 = vmatpush1.msra.mxu0 0.0
  %9462 = vmatprep.subr.mxu0 0.0
  %9463 = vmatpush1.msra.mxu0 0.0
  %9464 = vmatprep.subr.mxu0 0.0
  %9465 = vmatpush1.msra.mxu0 0.0
  %9466 = vmatprep.subr.mxu0 0.0
  %9467 = vmatpush1.msra.mxu0 0.0
  %9468 = vmatprep.subr.mxu0 0.0
  %9469 = vmatpush1.msra.mxu0 0.0
  %9470 = vmatprep.subr.mxu0 0.0
  %9471 = vmatpush1.msra.mxu0 0.0
  %9472 = vmatprep.subr.mxu0 0.0
  %9473 = vmatpush1.msra.mxu0 0.0
  %9474 = vmatprep.subr.mxu0 0.0
  %9475 = vmatpush1.msra.mxu0 0.0
  %9476 = vmatprep.subr.mxu0 0.0
  %9477 = vmatpush1.msra.mxu0 0.0
  %9478 = vmatprep.mubr.f32.mxu0 0.0
  %v9479 = vand.u32 %v9276, 4294901760
  %9480 = vmatmul.mubr.f32.gmra.mrb[0].mxu0 %v9479
  %v9481 = vpop.f32.mrb[0].mxu0
  %v9482 = vadd.f32 %v9361, %v9481
  %v9483 = vpop.f32.mrb[0].mxu0
  %9484 = vmatprep.mubr.f32.mxu0 0.0
  %v9485 = vand.u32 %v9279, 4294901760
  %9486 = vmatmul.mubr.f32.gmra.mrb[0].mxu0 %v9485
  %v9487 = vpop.f32.mrb[0].mxu0
  %v9488 = vadd.f32 %v9371, %v9487
  %v9489 = vpop.f32.mrb[0].mxu0
  %9490 = vdwg.mxu0
  %9491 = vmatprep.subr.mxu0 0.0
  %v9492 = vand.u32 %v9267, 4294901760
  %v9493 = vsub.f32 %v9267, %v9492
  %9494 = vmatpush1.msra.mxu0 %v9493
  %9495 = vmatprep.subr.mxu0 0.0
  %v9496 = vand.u32 %v9268, 4294901760
  %v9497 = vsub.f32 %v9268, %v9496
  %9498 = vmatpush1.msra.mxu0 %v9497
  %9499 = vmatprep.subr.mxu0 0.0
  %v9500 = vand.u32 %v9269, 4294901760
  %v9501 = vsub.f32 %v9269, %v9500
  %9502 = vmatpush1.msra.mxu0 %v9501
  %9503 = vmatprep.subr.mxu0 0.0
  %v9504 = vand.u32 %v9270, 4294901760
  %v9505 = vsub.f32 %v9270, %v9504
  %9506 = vmatpush1.msra.mxu0 %v9505
  %9507 = vmatprep.subr.mxu0 0.0
  %v9508 = vand.u32 %v9271, 4294901760
  %v9509 = vsub.f32 %v9271, %v9508
  %9510 = vmatpush1.msra.mxu0 %v9509
  %9511 = vmatprep.subr.mxu0 0.0
  %v9512 = vand.u32 %v9272, 4294901760
  %v9513 = vsub.f32 %v9272, %v9512
  %9514 = vmatpush1.msra.mxu0 %v9513
  %9515 = vmatprep.subr.mxu0 0.0
  %v9516 = vand.u32 %v9273, 4294901760
  %v9517 = vsub.f32 %v9273, %v9516
  %9518 = vmatpush1.msra.mxu0 %v9517
  %9519 = vmatprep.subr.mxu0 0.0
  %v9520 = vand.u32 %v9274, 4294901760
  %v9521 = vsub.f32 %v9274, %v9520
  %9522 = vmatpush1.msra.mxu0 %v9521
  %9523 = vmatprep.subr.mxu0 0.0
  %9524 = vmatpush1.msra.mxu0 0.0
  %9525 = vmatprep.subr.mxu0 0.0
  %9526 = vmatpush1.msra.mxu0 0.0
  %9527 = vmatprep.subr.mxu0 0.0
  %9528 = vmatpush1.msra.mxu0 0.0
  %9529 = vmatprep.subr.mxu0 0.0
  %9530 = vmatpush1.msra.mxu0 0.0
  %9531 = vmatprep.subr.mxu0 0.0
  %9532 = vmatpush1.msra.mxu0 0.0
  %9533 = vmatprep.subr.mxu0 0.0
  %9534 = vmatpush1.msra.mxu0 0.0
  %9535 = vmatprep.subr.mxu0 0.0
  %9536 = vmatpush1.msra.mxu0 0.0
  %9537 = vmatprep.subr.mxu0 0.0
  %9538 = vmatpush1.msra.mxu0 0.0
  %9539 = vmatprep.subr.mxu0 0.0
  %9540 = vmatpush1.msra.mxu0 0.0
  %9541 = vmatprep.subr.mxu0 0.0
  %9542 = vmatpush1.msra.mxu0 0.0
  %9543 = vmatprep.subr.mxu0 0.0
  %9544 = vmatpush1.msra.mxu0 0.0
  %9545 = vmatprep.subr.mxu0 0.0
  %9546 = vmatpush1.msra.mxu0 0.0
  %9547 = vmatprep.subr.mxu0 0.0
  %9548 = vmatpush1.msra.mxu0 0.0
  %9549 = vmatprep.subr.mxu0 0.0
  %9550 = vmatpush1.msra.mxu0 0.0
  %9551 = vmatprep.subr.mxu0 0.0
  %9552 = vmatpush1.msra.mxu0 0.0
  %9553 = vmatprep.subr.mxu0 0.0
  %9554 = vmatpush1.msra.mxu0 0.0
  %9555 = vmatprep.subr.mxu0 0.0
  %9556 = vmatpush1.msra.mxu0 0.0
  %9557 = vmatprep.subr.mxu0 0.0
  %9558 = vmatpush1.msra.mxu0 0.0
  %9559 = vmatprep.subr.mxu0 0.0
  %9560 = vmatpush1.msra.mxu0 0.0
  %9561 = vmatprep.subr.mxu0 0.0
  %9562 = vmatpush1.msra.mxu0 0.0
  %9563 = vmatprep.subr.mxu0 0.0
  %9564 = vmatpush1.msra.mxu0 0.0
  %9565 = vmatprep.subr.mxu0 0.0
  %9566 = vmatpush1.msra.mxu0 0.0
  %9567 = vmatprep.subr.mxu0 0.0
  %9568 = vmatpush1.msra.mxu0 0.0
  %9569 = vmatprep.subr.mxu0 0.0
  %9570 = vmatpush1.msra.mxu0 0.0
  %9571 = vmatprep.mubr.f32.mxu0 0.0
  %v9572 = vand.u32 %v9276, 4294901760
  %v9573 = vsub.f32 %v9276, %v9572
  %9574 = vmatmul.mubr.f32.gmra.mrb[0].mxu0 %v9573
  %v9575 = vpop.f32.mrb[0].mxu0
  %v9576 = vadd.f32 %v9482, %v9575
  %v9577 = vpop.f32.mrb[0].mxu0
  %9578 = vmatprep.mubr.f32.mxu0 0.0
  %v9579 = vand.u32 %v9279, 4294901760
  %v9580 = vsub.f32 %v9279, %v9579
  %9581 = vmatmul.mubr.f32.gmra.mrb[0].mxu0 %v9580
  %v9582 = vpop.f32.mrb[0].mxu0
  %v9583 = vadd.f32 %v9488, %v9582
  %v9584 = vpop.f32.mrb[0].mxu0
  %9585 = vdwg.mxu0
  %9586 = vmatprep.subr.mxu0 0.0
  %v9587 = vand.u32 %v9267, 4294901760
  %9588 = vmatpush1.msra.mxu0 %v9587
  %9589 = vmatprep.subr.mxu0 0.0
  %v9590 = vand.u32 %v9268, 4294901760
  %9591 = vmatpush1.msra.mxu0 %v9590
  %9592 = vmatprep.subr.mxu0 0.0
  %v9593 = vand.u32 %v9269, 4294901760
  %9594 = vmatpush1.msra.mxu0 %v9593
  %9595 = vmatprep.subr.mxu0 0.0
  %v9596 = vand.u32 %v9270, 4294901760
  %9597 = vmatpush1.msra.mxu0 %v9596
  %9598 = vmatprep.subr.mxu0 0.0
  %v9599 = vand.u32 %v9271, 4294901760
  %9600 = vmatpush1.msra.mxu0 %v9599
  %9601 = vmatprep.subr.mxu0 0.0
  %v9602 = vand.u32 %v9272, 4294901760
  %9603 = vmatpush1.msra.mxu0 %v9602
  %9604 = vmatprep.subr.mxu0 0.0
  %v9605 = vand.u32 %v9273, 4294901760
  %9606 = vmatpush1.msra.mxu0 %v9605
  %9607 = vmatprep.subr.mxu0 0.0
  %v9608 = vand.u32 %v9274, 4294901760
  %9609 = vmatpush1.msra.mxu0 %v9608
  %9610 = vmatprep.subr.mxu0 0.0
  %9611 = vmatpush1.msra.mxu0 0.0
  %9612 = vmatprep.subr.mxu0 0.0
  %9613 = vmatpush1.msra.mxu0 0.0
  %9614 = vmatprep.subr.mxu0 0.0
  %9615 = vmatpush1.msra.mxu0 0.0
  %9616 = vmatprep.subr.mxu0 0.0
  %9617 = vmatpush1.msra.mxu0 0.0
  %9618 = vmatprep.subr.mxu0 0.0
  %9619 = vmatpush1.msra.mxu0 0.0
  %9620 = vmatprep.subr.mxu0 0.0
  %9621 = vmatpush1.msra.mxu0 0.0
  %9622 = vmatprep.subr.mxu0 0.0
  %9623 = vmatpush1.msra.mxu0 0.0
  %9624 = vmatprep.subr.mxu0 0.0
  %9625 = vmatpush1.msra.mxu0 0.0
  %9626 = vmatprep.subr.mxu0 0.0
  %9627 = vmatpush1.msra.mxu0 0.0
  %9628 = vmatprep.subr.mxu0 0.0
  %9629 = vmatpush1.msra.mxu0 0.0
  %9630 = vmatprep.subr.mxu0 0.0
  %9631 = vmatpush1.msra.mxu0 0.0
  %9632 = vmatprep.subr.mxu0 0.0
  %9633 = vmatpush1.msra.mxu0 0.0
  %9634 = vmatprep.subr.mxu0 0.0
  %9635 = vmatpush1.msra.mxu0 0.0
  %9636 = vmatprep.subr.mxu0 0.0
  %9637 = vmatpush1.msra.mxu0 0.0
  %9638 = vmatprep.subr.mxu0 0.0
  %9639 = vmatpush1.msra.mxu0 0.0
  %9640 = vmatprep.subr.mxu0 0.0
  %9641 = vmatpush1.msra.mxu0 0.0
  %9642 = vmatprep.subr.mxu0 0.0
  %9643 = vmatpush1.msra.mxu0 0.0
  %9644 = vmatprep.subr.mxu0 0.0
  %9645 = vmatpush1.msra.mxu0 0.0
  %9646 = vmatprep.subr.mxu0 0.0
  %9647 = vmatpush1.msra.mxu0 0.0
  %9648 = vmatprep.subr.mxu0 0.0
  %9649 = vmatpush1.msra.mxu0 0.0
  %9650 = vmatprep.subr.mxu0 0.0
  %9651 = vmatpush1.msra.mxu0 0.0
  %9652 = vmatprep.subr.mxu0 0.0
  %9653 = vmatpush1.msra.mxu0 0.0
  %9654 = vmatprep.subr.mxu0 0.0
  %9655 = vmatpush1.msra.mxu0 0.0
  %9656 = vmatprep.subr.mxu0 0.0
  %9657 = vmatpush1.msra.mxu0 0.0
  %9658 = vmatprep.mubr.f32.mxu0 0.0
  %v9659 = vand.u32 %v9276, 4294901760
  %v9660 = vsub.f32 %v9276, %v9659
  %v9661 = vand.u32 %v9660, 4294901760
  %9662 = vmatmul.mubr.f32.gmra.mrb[0].mxu0 %v9661
  %v9663 = vpop.f32.mrb[0].mxu0
  %v9664 = vadd.f32 %v9576, %v9663
  %v9665 = vpop.f32.mrb[0].mxu0
  %9666 = vmatprep.mubr.f32.mxu0 0.0
  %v9667 = vand.u32 %v9279, 4294901760
  %v9668 = vsub.f32 %v9279, %v9667
  %v9669 = vand.u32 %v9668, 4294901760
  %9670 = vmatmul.mubr.f32.gmra.mrb[0].mxu0 %v9669
  %v9671 = vpop.f32.mrb[0].mxu0
  %v9672 = vadd.f32 %v9583, %v9671
  %v9673 = vpop.f32.mrb[0].mxu0
  %9674 = vdwg.mxu0
  %9675 = vmatprep.subr.mxu0 0.0
  %v9676 = vand.u32 %v9267, 4294901760
  %v9677 = vsub.f32 %v9267, %v9676
  %v9678 = vand.u32 %v9677, 4294901760
  %9679 = vmatpush1.msra.mxu0 %v9678
  %9680 = vmatprep.subr.mxu0 0.0
  %v9681 = vand.u32 %v9268, 4294901760
  %v9682 = vsub.f32 %v9268, %v9681
  %v9683 = vand.u32 %v9682, 4294901760
  %9684 = vmatpush1.msra.mxu0 %v9683
  %9685 = vmatprep.subr.mxu0 0.0
  %v9686 = vand.u32 %v9269, 4294901760
  %v9687 = vsub.f32 %v9269, %v9686
  %v9688 = vand.u32 %v9687, 4294901760
  %9689 = vmatpush1.msra.mxu0 %v9688
  %9690 = vmatprep.subr.mxu0 0.0
  %v9691 = vand.u32 %v9270, 4294901760
  %v9692 = vsub.f32 %v9270, %v9691
  %v9693 = vand.u32 %v9692, 4294901760
  %9694 = vmatpush1.msra.mxu0 %v9693
  %9695 = vmatprep.subr.mxu0 0.0
  %v9696 = vand.u32 %v9271, 4294901760
  %v9697 = vsub.f32 %v9271, %v9696
  %v9698 = vand.u32 %v9697, 4294901760
  %9699 = vmatpush1.msra.mxu0 %v9698
  %9700 = vmatprep.subr.mxu0 0.0
  %v9701 = vand.u32 %v9272, 4294901760
  %v9702 = vsub.f32 %v9272, %v9701
  %v9703 = vand.u32 %v9702, 4294901760
  %9704 = vmatpush1.msra.mxu0 %v9703
  %9705 = vmatprep.subr.mxu0 0.0
  %v9706 = vand.u32 %v9273, 4294901760
  %v9707 = vsub.f32 %v9273, %v9706
  %v9708 = vand.u32 %v9707, 4294901760
  %9709 = vmatpush1.msra.mxu0 %v9708
  %9710 = vmatprep.subr.mxu0 0.0
  %v9711 = vand.u32 %v9274, 4294901760
  %v9712 = vsub.f32 %v9274, %v9711
  %v9713 = vand.u32 %v9712, 4294901760
  %9714 = vmatpush1.msra.mxu0 %v9713
  %9715 = vmatprep.subr.mxu0 0.0
  %9716 = vmatpush1.msra.mxu0 0.0
  %9717 = vmatprep.subr.mxu0 0.0
  %9718 = vmatpush1.msra.mxu0 0.0
  %9719 = vmatprep.subr.mxu0 0.0
  %9720 = vmatpush1.msra.mxu0 0.0
  %9721 = vmatprep.subr.mxu0 0.0
  %9722 = vmatpush1.msra.mxu0 0.0
  %9723 = vmatprep.subr.mxu0 0.0
  %9724 = vmatpush1.msra.mxu0 0.0
  %9725 = vmatprep.subr.mxu0 0.0
  %9726 = vmatpush1.msra.mxu0 0.0
  %9727 = vmatprep.subr.mxu0 0.0
  %9728 = vmatpush1.msra.mxu0 0.0
  %9729 = vmatprep.subr.mxu0 0.0
  %9730 = vmatpush1.msra.mxu0 0.0
  %9731 = vmatprep.subr.mxu0 0.0
  %9732 = vmatpush1.msra.mxu0 0.0
  %9733 = vmatprep.subr.mxu0 0.0
  %9734 = vmatpush1.msra.mxu0 0.0
  %9735 = vmatprep.subr.mxu0 0.0
  %9736 = vmatpush1.msra.mxu0 0.0
  %9737 = vmatprep.subr.mxu0 0.0
  %9738 = vmatpush1.msra.mxu0 0.0
  %9739 = vmatprep.subr.mxu0 0.0
  %9740 = vmatpush1.msra.mxu0 0.0
  %9741 = vmatprep.subr.mxu0 0.0
  %9742 = vmatpush1.msra.mxu0 0.0
  %9743 = vmatprep.subr.mxu0 0.0
  %9744 = vmatpush1.msra.mxu0 0.0
  %9745 = vmatprep.subr.mxu0 0.0
  %9746 = vmatpush1.msra.mxu0 0.0
  %9747 = vmatprep.subr.mxu0 0.0
  %9748 = vmatpush1.msra.mxu0 0.0
  %9749 = vmatprep.subr.mxu0 0.0
  %9750 = vmatpush1.msra.mxu0 0.0
  %9751 = vmatprep.subr.mxu0 0.0
  %9752 = vmatpush1.msra.mxu0 0.0
  %9753 = vmatprep.subr.mxu0 0.0
  %9754 = vmatpush1.msra.mxu0 0.0
  %9755 = vmatprep.subr.mxu0 0.0
  %9756 = vmatpush1.msra.mxu0 0.0
  %9757 = vmatprep.subr.mxu0 0.0
  %9758 = vmatpush1.msra.mxu0 0.0
  %9759 = vmatprep.subr.mxu0 0.0
  %9760 = vmatpush1.msra.mxu0 0.0
  %9761 = vmatprep.subr.mxu0 0.0
  %9762 = vmatpush1.msra.mxu0 0.0
  %9763 = vmatprep.mubr.f32.mxu0 0.0
  %v9764 = vand.u32 %v9276, 4294901760
  %9765 = vmatmul.mubr.f32.gmra.mrb[0].mxu0 %v9764
  %v9766 = vpop.f32.mrb[0].mxu0
  %v9767 = vadd.f32 %v9664, %v9766
  %v9768 = vpop.f32.mrb[0].mxu0
  %9769 = vmatprep.mubr.f32.mxu0 0.0
  %v9770 = vand.u32 %v9279, 4294901760
  %9771 = vmatmul.mubr.f32.gmra.mrb[0].mxu0 %v9770
  %v9772 = vpop.f32.mrb[0].mxu0
  %v9773 = vadd.f32 %v9672, %v9772
  %v9774 = vpop.f32.mrb[0].mxu0
  %9775 = vdwg.mxu0
  %9776 = vmatprep.subr.mxu0 0.0
  %v9777 = vand.u32 %v9267, 4294901760
  %9778 = vmatpush1.msra.mxu0 %v9777
  %9779 = vmatprep.subr.mxu0 0.0
  %v9780 = vand.u32 %v9268, 4294901760
  %9781 = vmatpush1.msra.mxu0 %v9780
  %9782 = vmatprep.subr.mxu0 0.0
  %v9783 = vand.u32 %v9269, 4294901760
  %9784 = vmatpush1.msra.mxu0 %v9783
  %9785 = vmatprep.subr.mxu0 0.0
  %v9786 = vand.u32 %v9270, 4294901760
  %9787 = vmatpush1.msra.mxu0 %v9786
  %9788 = vmatprep.subr.mxu0 0.0
  %v9789 = vand.u32 %v9271, 4294901760
  %9790 = vmatpush1.msra.mxu0 %v9789
  %9791 = vmatprep.subr.mxu0 0.0
  %v9792 = vand.u32 %v9272, 4294901760
  %9793 = vmatpush1.msra.mxu0 %v9792
  %9794 = vmatprep.subr.mxu0 0.0
  %v9795 = vand.u32 %v9273, 4294901760
  %9796 = vmatpush1.msra.mxu0 %v9795
  %9797 = vmatprep.subr.mxu0 0.0
  %v9798 = vand.u32 %v9274, 4294901760
  %9799 = vmatpush1.msra.mxu0 %v9798
  %9800 = vmatprep.subr.mxu0 0.0
  %9801 = vmatpush1.msra.mxu0 0.0
  %9802 = vmatprep.subr.mxu0 0.0
  %9803 = vmatpush1.msra.mxu0 0.0
  %9804 = vmatprep.subr.mxu0 0.0
  %9805 = vmatpush1.msra.mxu0 0.0
  %9806 = vmatprep.subr.mxu0 0.0
  %9807 = vmatpush1.msra.mxu0 0.0
  %9808 = vmatprep.subr.mxu0 0.0
  %9809 = vmatpush1.msra.mxu0 0.0
  %9810 = vmatprep.subr.mxu0 0.0
  %9811 = vmatpush1.msra.mxu0 0.0
  %9812 = vmatprep.subr.mxu0 0.0
  %9813 = vmatpush1.msra.mxu0 0.0
  %9814 = vmatprep.subr.mxu0 0.0
  %9815 = vmatpush1.msra.mxu0 0.0
  %9816 = vmatprep.subr.mxu0 0.0
  %9817 = vmatpush1.msra.mxu0 0.0
  %9818 = vmatprep.subr.mxu0 0.0
  %9819 = vmatpush1.msra.mxu0 0.0
  %9820 = vmatprep.subr.mxu0 0.0
  %9821 = vmatpush1.msra.mxu0 0.0
  %9822 = vmatprep.subr.mxu0 0.0
  %9823 = vmatpush1.msra.mxu0 0.0
  %9824 = vmatprep.subr.mxu0 0.0
  %9825 = vmatpush1.msra.mxu0 0.0
  %9826 = vmatprep.subr.mxu0 0.0
  %9827 = vmatpush1.msra.mxu0 0.0
  %9828 = vmatprep.subr.mxu0 0.0
  %9829 = vmatpush1.msra.mxu0 0.0
  %9830 = vmatprep.subr.mxu0 0.0
  %9831 = vmatpush1.msra.mxu0 0.0
  %9832 = vmatprep.subr.mxu0 0.0
  %9833 = vmatpush1.msra.mxu0 0.0
  %9834 = vmatprep.subr.mxu0 0.0
  %9835 = vmatpush1.msra.mxu0 0.0
  %9836 = vmatprep.subr.mxu0 0.0
  %9837 = vmatpush1.msra.mxu0 0.0
  %9838 = vmatprep.subr.mxu0 0.0
  %9839 = vmatpush1.msra.mxu0 0.0
  %9840 = vmatprep.subr.mxu0 0.0
  %9841 = vmatpush1.msra.mxu0 0.0
  %9842 = vmatprep.subr.mxu0 0.0
  %9843 = vmatpush1.msra.mxu0 0.0
  %9844 = vmatprep.subr.mxu0 0.0
  %9845 = vmatpush1.msra.mxu0 0.0
  %9846 = vmatprep.subr.mxu0 0.0
  %9847 = vmatpush1.msra.mxu0 0.0
  %9848 = vmatprep.mubr.f32.mxu0 0.0
  %v9849 = vand.u32 %v9276, 4294901760
  %9850 = vmatmul.mubr.f32.gmra.mrb[0].mxu0 %v9849
  %v9851 = vpop.f32.mrb[0].mxu0
  %v9852 = vadd.f32 %v9767, %v9851
  %v9853 = vpop.f32.mrb[0].mxu0
  %9854 = vmatprep.mubr.f32.mxu0 0.0
  %v9855 = vand.u32 %v9279, 4294901760
  %9856 = vmatmul.mubr.f32.gmra.mrb[0].mxu0 %v9855
  %v9857 = vpop.f32.mrb[0].mxu0
  %v9858 = vadd.f32 %v9773, %v9857
  %v9859 = vpop.f32.mrb[0].mxu0
  %9860 = vdwg.mxu0
  %v9861 = vadd.f32 %v8653, %v9852
  %v9862 = vadd.f32 %v8654, %v9858
  %s9863 = scalar_lea.vmem %s15, 1
  %v9864 = vld [vmem:[%s9863] sm:$0x1]
  %v9866 = vlaneseq
  %v9867 = vshrl.u32 %v9866, 7
  %v9868 = vsub.s32 0, %v9867
  %v9869 = vrot.slane %v9864, %v9868
  %v9871 = vadd.f32 %v9861, %v9869
  %v9872 = vadd.f32 %v9862, %v9869
  %v9873 = vld [vmem:[%s16] sm:$0x1]
  %v9874 = vld [vmem:[%s17] sm:$0x1]
  %v9875 = vsel %vm912, %v9871, 0.0
  %9876 = vadd.xlane.f32.xlu0 %v9875
  %v9877 = vpop.xlane.xlu0 %9876
  %v9878 = vsel %vm916, %v9872, 0.0
  %9879 = vadd.xlane.f32.xlu0 %v9878
  %v9880 = vpop.xlane.xlu0 %9879
  %v9881 = vmul.f32 %v9877, %v920
  %v9882 = vmul.f32 %v9880, %v920
  %v9883 = vsub.f32 %v9871, %v9881
  %v9884 = vsub.f32 %v9872, %v9882
  %v9885 = vmul.f32 %v9883, %v9883
  %v9886 = vmul.f32 %v9884, %v9884
  %v9887 = vsel %vm912, %v9885, 0.0
  %9888 = vadd.xlane.f32.xlu0 %v9887
  %v9889 = vpop.xlane.xlu0 %9888
  %v9890 = vsel %vm916, %v9886, 0.0
  %9891 = vadd.xlane.f32.xlu0 %v9890
  %v9892 = vpop.xlane.xlu0 %9891
  %v9893 = vmul.f32 %v9889, %v920
  %v9894 = vmul.f32 %v9892, %v920
  %v9895 = vadd.f32 %v9893, 1e-12
  %v9896 = vadd.f32 %v9894, 1e-12
  %v9897 = vrsqrt.pop %v9895
  %v9898 = vrsqrt.pop %v9896
  %v9899 = vmul.f32 %v9883, %v9897
  %v9900 = vmul.f32 %v9884, %v9898
  %v9902 = vlaneseq
  %v9903 = vshrl.u32 %v9902, 7
  %v9904 = vsub.s32 0, %v9903
  %v9905 = vrot.slane %v9873, %v9904
  %v9907 = vmul.f32 %v9899, %v9905
  %v9908 = vmul.f32 %v9900, %v9905
  %v9910 = vlaneseq
  %v9911 = vshrl.u32 %v9910, 7
  %v9912 = vsub.s32 0, %v9911
  %v9913 = vrot.slane %v9874, %v9912
  %v9915 = vadd.f32 %v9907, %v9913
  %v9916 = vadd.f32 %v9908, %v9913
  %9917 = vst.msk [vmem:[%s18] sm:$0xff] %vm912, %v9915
  %9918 = vst.msk [vmem:[%s18 + $0x8] sm:$0x3] %vm916, %v9916
  // Predicated region
  $region74: #{vit_forward.1} parent=0 // pred_check
    _
  $region75: #{vit_forward.1} parent=0 // pred_check_branch
    %9920 = sbr.rel (0) target = $region77
  $region76: #{vit_forward.1} parent=0 // pred_region
    _
  $region77: #{vit_forward.1} parent=0 // pred_fallthru
    _
  // Predicated region
  $region78: #{vit_forward.1} parent=0 // pred_check
    _
  $region79: #{vit_forward.1} parent=0 // pred_check_branch
    %9922 = sbr.rel (0) target = $region81
  $region80: #{vit_forward.1} parent=0 // pred_region
    _
  $region81: #{vit_forward.1} parent=0 // pred_fallthru
    _

</llo_original>
